<compile_context>
chip_gen: v6e
topology: v6e:2x2x1
jax: 0.10.0
libtpu: 0.0.40
codegen_flags: <defaults>
</compile_context>

<pallas_src>
import functools

import jax
import jax.numpy as jnp
from jax import lax
from jax.experimental import pallas as pl
from jax.experimental.pallas import tpu as pltpu

# ----------------------------- config (small, synthetic) ---------------------
VOCAB_SIZE = 50
TAG_SIZE = 10
STATUS_SIZE = 5
EMB_DIM = 32
HIDDEN = 32                  # GRU hidden size per direction (num_layers = 1)
D_MODEL = 2 * HIDDEN         # bi-GRU output width = transformer d_model = 64
N_HEAD = 4
HEAD_DIM = D_MODEL // N_HEAD
N_ENCODER = 2
DFF = 2048                   # nn.TransformerEncoderLayer default dim_feedforward
HEAD_HID = 100               # fc1 width of both output heads
HID_PAD = 128                # head hidden padded to a full lane tile
OUT_PAD = 128                # head logits padded to a full lane tile
GPAD = 128                   # per-direction GRU gate block padded to 128 lanes
QPAD = 128                   # per-tensor (q/k/v) block padded to 128 lanes
SLAB_W = 128                 # slab sub-block width
BATCH = 2
SEQ = 8
NEG = -1e9                   # "minus infinity" bias for padded logit columns


# ----------------------------- the fused forward kernel -----------------------
def _fused_forward_kernel(
    tok_ids_ref,                       # (M,1) i32, time-major rows t*B+b
    gt_ref, gs_ref,                    # (M,1) i32, time-major
    tok_emb_ref,                       # (V, EMB) f32
    tag_emb_ref,                       # (TAG, EMB) f32
    gru_wih_ref,                       # (EMB, 2*GPAD) bf16  [fwd gates | bwd gates]
    gru_bih_ref,                       # (1, 2*GPAD) f32     (b_hh r,z folded in)
    gru_whh_ref,                       # (2, H, 3H) bf16
    gru_bhn_ref,                       # (2, 1, H) f32
    wqkv_ref,                          # (L, E, 3*QPAD) bf16 (q/k/v tile-aligned)
    bqkv_ref,                          # (L, 1, 3*QPAD) f32
    wo_ref, bo_ref,                    # (L, E, E) bf16 / (L, 1, E) f32
    ln1g_ref, ln1b_ref,                # (L, 1, E) f32
    w1_ref, b1_ref,                    # (L, E, DFF) bf16 / (L, 1, DFF) f32
    w2_ref, b2_ref,                    # (L, DFF, E) bf16 / (L, 1, E) f32
    ln2g_ref, ln2b_ref,                # (L, 1, E) f32
    hsum_ref, hbc_ref,                 # (E, NH) f32 / (NH, E) f32 head masks
    rot_ref,                           # (B-1, M, M) f32 within-time batch rotations
    tag_w1_ref, tag_b1_ref,            # (E, 128) bf16 / (1, 128) f32
    tag_w2_ref, tag_b2_ref,            # (128, 128) bf16 / (1, 128) f32 (pad = NEG)
    st_w1e_ref, st_w1t_ref, st_b1_ref,  # (E,128) bf16 / (EMB,128) bf16 / (1,128) f32
    st_w2_ref, st_b2_ref,              # (128, 128) bf16 / (1, 128) f32 (pad = NEG)
    o_ref,                             # (M, 3*SLAB_W) f32 output slab
    xg_scr,                            # VMEM (M, 2*GPAD) f32 scratch
    gru_scr,                           # VMEM (M, E) f32 scratch
    *, n_batch, seq, hidden, n_layers, scale):
    B, T, H = n_batch, seq, hidden
    M = B * T
    E = 2 * H
    bf16 = jnp.bfloat16

    # ---------------- embeddings: one-hot matmul gathers (tables in VMEM) -----
    tok_ids = tok_ids_ref[...]                                   # (M, 1) i32
    vocab = tok_emb_ref.shape[0]
    tok_oh = (lax.broadcasted_iota(jnp.int32, (M, vocab), 1) == tok_ids
              ).astype(jnp.float32)
    x_emb = jnp.dot(tok_oh, tok_emb_ref[...],
                    preferred_element_type=jnp.float32)          # (M, EMB) time-major

    # ---------------- bidirectional GRU ----------------------------------------
    # Hoisted input-side gate matmul for BOTH directions (single matmul).
    xg_scr[...] = (jnp.dot(x_emb.astype(bf16), gru_wih_ref[...],
                           preferred_element_type=jnp.float32)
                   + gru_bih_ref[...])                           # (M, 2*GPAD)

    whh_f = gru_whh_ref[0]
    whh_b = gru_whh_ref[1]
    bhn_f = gru_bhn_ref[0]
    bhn_b = gru_bhn_ref[1]

    def gru_cell(xg, h, whh, bhn):
        hg = jnp.dot(h.astype(bf16), whh, preferred_element_type=jnp.float32)
        rz = jax.nn.sigmoid(xg[:, 0:2 * H] + hg[:, 0:2 * H])
        r = rz[:, 0:H]
        z = rz[:, H:2 * H]
        n = jnp.tanh(xg[:, 2 * H:3 * H] + r * (hg[:, 2 * H:3 * H] + bhn))
        return (1.0 - z) * n + z * h

    h_f = jnp.zeros((B, H), jnp.float32)
    h_b = jnp.zeros((B, H), jnp.float32)
    for s in range(T):                          # static unroll (T small)
        tb = T - 1 - s
        row_f = xg_scr[pl.ds(s * B, B), :]      # (B, 2*GPAD)
        row_b = xg_scr[pl.ds(tb * B, B), :]
        h_f = gru_cell(row_f[:, 0:3 * H], h_f, whh_f, bhn_f)
        h_b = gru_cell(row_b[:, GPAD:GPAD + 3 * H], h_b, whh_b, bhn_b)
        gru_scr[pl.ds(s * B, B), 0:H] = h_f
        gru_scr[pl.ds(tb * B, B), H:2 * H] = h_b

    x = gru_scr[...]                                             # (M, E) time-major

    # ---------------- transformer encoder layers -------------------------------
    hsum = hsum_ref[...]                                         # (E, NH)
    hbc = hbc_ref[...]                                           # (NH, E)

    def layer_norm(y, g, b):
        mu = jnp.mean(y, axis=-1, keepdims=True)
        var = jnp.mean(jnp.square(y - mu), axis=-1, keepdims=True)
        return (y - mu) * lax.rsqrt(var + 1e-5) * g + b

    for l in range(n_layers):
        # fused, tile-aligned QKV projection
        qkv = (jnp.dot(x.astype(bf16), wqkv_ref[l],
                       preferred_element_type=jnp.float32) + bqkv_ref[l])
        q = qkv[:, 0:E] * scale
        k = qkv[:, QPAD:QPAD + E]
        v = qkv[:, 2 * QPAD:2 * QPAD + E]

        # self-attention mixes the BATCH axis per time step (PyTorch quirk):
        # candidate j = "rotate by j within each time block of B rows".
        kv_rots = [(k, v)]
        kv_block = qkv[:, QPAD:3 * QPAD]                         # (M, 2*QPAD)
        for j in range(1, B):
            kvr = jnp.dot(rot_ref[j - 1], kv_block,
                          preferred_element_type=jnp.float32)
            kv_rots.append((kvr[:, 0:E], kvr[:, QPAD:QPAD + E]))

        scores = [jnp.dot(q * kj, hsum, preferred_element_type=jnp.float32)
                  for kj, _ in kv_rots]                          # each (M, NH)
        m = scores[0]
        for s2 in scores[1:]:
            m = jnp.maximum(m, s2)
        exps = [jnp.exp(s2 - m) for s2 in scores]
        denom = exps[0]
        for e2 in exps[1:]:
            denom = denom + e2
        inv = pl.reciprocal(denom, approx=True)                  # EUP slot, ~free

        attn = jnp.dot(exps[0] * inv, hbc,
                       preferred_element_type=jnp.float32) * kv_rots[0][1]
        for e2, (_, vj) in zip(exps[1:], kv_rots[1:]):
            attn = attn + jnp.dot(e2 * inv, hbc,
                                  preferred_element_type=jnp.float32) * vj

        attn = (jnp.dot(attn.astype(bf16), wo_ref[l],
                        preferred_element_type=jnp.float32) + bo_ref[l])
        x1 = layer_norm(x + attn, ln1g_ref[l], ln1b_ref[l])

        # feed-forward: bf16 weights, f32 accumulation
        hmid = (jnp.dot(x1.astype(bf16), w1_ref[l],
                        preferred_element_type=jnp.float32) + b1_ref[l])
        hmid = jnp.maximum(hmid, 0.0)
        ff = (jnp.dot(hmid.astype(bf16), w2_ref[l],
                      preferred_element_type=jnp.float32) + b2_ref[l])
        x = layer_norm(x1 + ff, ln2g_ref[l], ln2b_ref[l])

    # ---------------- output heads + per-example cross-entropy -----------------
    gt = gt_ref[...]
    gs = gs_ref[...]
    ntag = tag_emb_ref.shape[0]
    tag_oh = (lax.broadcasted_iota(jnp.int32, (M, ntag), 1) == gt
              ).astype(jnp.float32)
    tag_e = jnp.dot(tag_oh, tag_emb_ref[...],
                    preferred_element_type=jnp.float32)          # (M, EMB)

    xb = x.astype(bf16)
    th = jnp.maximum(
        jnp.dot(xb, tag_w1_ref[...], preferred_element_type=jnp.float32)
        + tag_b1_ref[...], 0.0)
    tag_logits = (jnp.dot(th.astype(bf16), tag_w2_ref[...],
                          preferred_element_type=jnp.float32)
                  + tag_b2_ref[...])                             # (M, 128), pad = NEG

    # status head on concat(enc, tag_emb): split weights so the concat never
    # materializes
    sh = jnp.maximum(
        jnp.dot(xb, st_w1e_ref[...], preferred_element_type=jnp.float32)
        + jnp.dot(tag_e.astype(bf16), st_w1t_ref[...],
                  preferred_element_type=jnp.float32)
        + st_b1_ref[...], 0.0)
    status_logits = (jnp.dot(sh.astype(bf16), st_w2_ref[...],
                             preferred_element_type=jnp.float32)
                     + st_b2_ref[...])                           # (M, 128), pad = NEG

    def nll(logits, labels):
        mx = jnp.max(logits, axis=-1, keepdims=True)
        lse = jnp.log(jnp.sum(jnp.exp(logits - mx), axis=-1, keepdims=True)) + mx
        cls = lax.broadcasted_iota(jnp.int32, logits.shape, 1)
        picked = jnp.sum(jnp.where(cls == labels, logits, 0.0),
                         axis=-1, keepdims=True)
        return lse - picked

    nll_t = nll(tag_logits, gt)                                  # (M, 1)
    nll_s = nll(status_logits, gs)                               # (M, 1)
    col = lax.broadcasted_iota(jnp.int32, (M, SLAB_W), 1)
    misc = (jnp.where(col == 0, nll_t, 0.0)
            + jnp.where(col == 1, nll_s, 0.0))                   # (M, 128)

    # single unmasked, lane-dense store: [tag(128) | status(128) | misc(128)]
    o_ref[...] = jnp.concatenate([tag_logits, status_logits, misc], axis=1)


def fused_forward(prep, tok_ids_tm, gt_tm, gs_tm, *, n_batch, seq):
    M = n_batch * seq
    kern = functools.partial(
        _fused_forward_kernel, n_batch=n_batch, seq=seq, hidden=HIDDEN,
        n_layers=N_ENCODER, scale=1.0 / (HEAD_DIM ** 0.5))
    return pl.pallas_call(
        kern,
        out_shape=jax.ShapeDtypeStruct((M, 3 * SLAB_W), jnp.float32),
        scratch_shapes=[pltpu.VMEM((M, 2 * GPAD), jnp.float32),
                        pltpu.VMEM((M, D_MODEL), jnp.float32)],
        compiler_params=pltpu.CompilerParams(vmem_limit_bytes=32 * 1024 * 1024),
    )(tok_ids_tm, gt_tm, gs_tm,
      prep["tok_emb"], prep["tag_emb_tbl"],
      prep["gru_wih"], prep["gru_bih"], prep["gru_whh"], prep["gru_bhn"],
      prep["wqkv"], prep["bqkv"], prep["wo"], prep["bo"],
      prep["ln1g"], prep["ln1b"],
      prep["w1"], prep["b1"], prep["w2"], prep["b2"],
      prep["ln2g"], prep["ln2b"],
      prep["hsum"], prep["hbc"], prep["rot"],
      prep["tag_w1"], prep["tag_b1"], prep["tag_w2"], prep["tag_b2"],
      prep["st_w1e"], prep["st_w1t"], prep["st_b1"],
      prep["st_w2"], prep["st_b2"])


# ----------------------------- params ------------------------------------------
def init_params(key):
    keys = iter(jax.random.split(key, 64))

    def nrm(shape, scale=0.1):
        return jax.random.normal(next(keys), shape, jnp.float32) * scale

    p = {}
    p["tok_emb"] = nrm((VOCAB_SIZE, EMB_DIM)).at[0].set(0.0)     # padding_idx=0
    p["tag_emb"] = nrm((TAG_SIZE, EMB_DIM)).at[0].set(0.0)       # padding_idx=0

    # bidirectional single-layer GRU (PyTorch layout)
    for d in ("fwd", "bwd"):
        p[f"gru_w_ih_{d}"] = nrm((3 * HIDDEN, EMB_DIM))
        p[f"gru_w_hh_{d}"] = nrm((3 * HIDDEN, HIDDEN))
        p[f"gru_b_ih_{d}"] = nrm((3 * HIDDEN,))
        p[f"gru_b_hh_{d}"] = nrm((3 * HIDDEN,))

    # transformer encoder layers (post-norm, relu, default dim_feedforward)
    p["enc"] = []
    for _ in range(N_ENCODER):
        p["enc"].append({
            "in_proj_w": nrm((3 * D_MODEL, D_MODEL)),
            "in_proj_b": nrm((3 * D_MODEL,)),
            "out_proj_w": nrm((D_MODEL, D_MODEL)),
            "out_proj_b": nrm((D_MODEL,)),
            "lin1_w": nrm((DFF, D_MODEL)),
            "lin1_b": nrm((DFF,)),
            "lin2_w": nrm((D_MODEL, DFF)),
            "lin2_b": nrm((D_MODEL,)),
            "ln1_g": jnp.ones((D_MODEL,), jnp.float32),
            "ln1_b": jnp.zeros((D_MODEL,), jnp.float32),
            "ln2_g": jnp.ones((D_MODEL,), jnp.float32),
            "ln2_b": jnp.zeros((D_MODEL,), jnp.float32),
        })

    # OutputLayerTag
    p["tag_fc1_w"] = nrm((HEAD_HID, D_MODEL)); p["tag_fc1_b"] = nrm((HEAD_HID,))
    p["tag_fc2_w"] = nrm((TAG_SIZE, HEAD_HID)); p["tag_fc2_b"] = nrm((TAG_SIZE,))
    # OutputLayerStatusCond (mirrored from OutputLayerTag)
    p["st_fc1_w"] = nrm((HEAD_HID, D_MODEL + EMB_DIM)); p["st_fc1_b"] = nrm((HEAD_HID,))
    p["st_fc2_w"] = nrm((STATUS_SIZE, HEAD_HID)); p["st_fc2_b"] = nrm((STATUS_SIZE,))
    return p


def prepare_params(p):
    """One-time re-layout of PyTorch-style params into kernel-ready tensors."""
    H = HIDDEN
    E = D_MODEL
    M = BATCH * SEQ
    prep = {"tok_emb": p["tok_emb"], "tag_emb_tbl": p["tag_emb"]}

    # ---- GRU: hoisted/padded input gates, recurrent weights -------------------
    def fold_bih(d):      # fold b_hh[r], b_hh[z] into the input-side bias
        b_hh = p[f"gru_b_hh_{d}"]
        return p[f"gru_b_ih_{d}"] + jnp.concatenate(
            [b_hh[:2 * H], jnp.zeros((H,), jnp.float32)])

    wih = jnp.zeros((EMB_DIM, 2 * GPAD), jnp.float32)
    wih = wih.at[:, 0:3 * H].set(p["gru_w_ih_fwd"].T)
    wih = wih.at[:, GPAD:GPAD + 3 * H].set(p["gru_w_ih_bwd"].T)
    prep["gru_wih"] = wih.astype(jnp.bfloat16)
    bih = jnp.zeros((1, 2 * GPAD), jnp.float32)
    bih = bih.at[0, 0:3 * H].set(fold_bih("fwd"))
    bih = bih.at[0, GPAD:GPAD + 3 * H].set(fold_bih("bwd"))
    prep["gru_bih"] = bih
    prep["gru_whh"] = jnp.stack(
        [p["gru_w_hh_fwd"].T, p["gru_w_hh_bwd"].T]).astype(jnp.bfloat16)
    prep["gru_bhn"] = jnp.stack(
        [p["gru_b_hh_fwd"][2 * H:], p["gru_b_hh_bwd"][2 * H:]]).reshape(2, 1, H)

    # ---- transformer encoder layers (stacked over the layer axis) -------------
    wqkv_l, bqkv_l = [], []
    for lp in p["enc"]:
        wq = lp["in_proj_w"][0:E].T
        wk = lp["in_proj_w"][E:2 * E].T
        wv = lp["in_proj_w"][2 * E:3 * E].T
        wqkv = jnp.zeros((E, 3 * QPAD), jnp.float32)
        wqkv = wqkv.at[:, 0:E].set(wq)
        wqkv = wqkv.at[:, QPAD:QPAD + E].set(wk)
        wqkv = wqkv.at[:, 2 * QPAD:2 * QPAD + E].set(wv)
        wqkv_l.append(wqkv)
        bqkv = jnp.zeros((1, 3 * QPAD), jnp.float32)
        bqkv = bqkv.at[0, 0:E].set(lp["in_proj_b"][0:E])
        bqkv = bqkv.at[0, QPAD:QPAD + E].set(lp["in_proj_b"][E:2 * E])
        bqkv = bqkv.at[0, 2 * QPAD:2 * QPAD + E].set(lp["in_proj_b"][2 * E:3 * E])
        bqkv_l.append(bqkv)
    prep["wqkv"] = jnp.stack(wqkv_l).astype(jnp.bfloat16)
    prep["bqkv"] = jnp.stack(bqkv_l)
    prep["wo"] = jnp.stack([lp["out_proj_w"].T for lp in p["enc"]]).astype(jnp.bfloat16)
    prep["bo"] = jnp.stack([lp["out_proj_b"].reshape(1, -1) for lp in p["enc"]])
    prep["ln1g"] = jnp.stack([lp["ln1_g"].reshape(1, -1) for lp in p["enc"]])
    prep["ln1b"] = jnp.stack([lp["ln1_b"].reshape(1, -1) for lp in p["enc"]])
    prep["w1"] = jnp.stack([lp["lin1_w"].T for lp in p["enc"]]).astype(jnp.bfloat16)
    prep["b1"] = jnp.stack([lp["lin1_b"].reshape(1, -1) for lp in p["enc"]])
    prep["w2"] = jnp.stack([lp["lin2_w"].T for lp in p["enc"]]).astype(jnp.bfloat16)
    prep["b2"] = jnp.stack([lp["lin2_b"].reshape(1, -1) for lp in p["enc"]])
    prep["ln2g"] = jnp.stack([lp["ln2_g"].reshape(1, -1) for lp in p["enc"]])
    prep["ln2b"] = jnp.stack([lp["ln2_b"].reshape(1, -1) for lp in p["enc"]])

    # ---- output heads (hidden padded 100->128, logits padded to 128) ----------
    tw1 = jnp.zeros((E, HID_PAD), jnp.float32).at[:, :HEAD_HID].set(p["tag_fc1_w"].T)
    tb1 = jnp.zeros((1, HID_PAD), jnp.float32).at[0, :HEAD_HID].set(p["tag_fc1_b"])
    tw2 = jnp.zeros((HID_PAD, OUT_PAD), jnp.float32
                    ).at[:HEAD_HID, :TAG_SIZE].set(p["tag_fc2_w"].T)
    tb2 = jnp.full((1, OUT_PAD), NEG, jnp.float32).at[0, :TAG_SIZE].set(p["tag_fc2_b"])
    st_w1 = p["st_fc1_w"].T                                      # (E + EMB, 100)
    sw1e = jnp.zeros((E, HID_PAD), jnp.float32).at[:, :HEAD_HID].set(st_w1[:E])
    sw1t = jnp.zeros((EMB_DIM, HID_PAD), jnp.float32).at[:, :HEAD_HID].set(st_w1[E:])
    sb1 = jnp.zeros((1, HID_PAD), jnp.float32).at[0, :HEAD_HID].set(p["st_fc1_b"])
    sw2 = jnp.zeros((HID_PAD, OUT_PAD), jnp.float32
                    ).at[:HEAD_HID, :STATUS_SIZE].set(p["st_fc2_w"].T)
    sb2 = jnp.full((1, OUT_PAD), NEG, jnp.float32).at[0, :STATUS_SIZE].set(p["st_fc2_b"])
    prep["tag_w1"] = tw1.astype(jnp.bfloat16); prep["tag_b1"] = tb1
    prep["tag_w2"] = tw2.astype(jnp.bfloat16); prep["tag_b2"] = tb2
    prep["st_w1e"] = sw1e.astype(jnp.bfloat16)
    prep["st_w1t"] = sw1t.astype(jnp.bfloat16)
    prep["st_b1"] = sb1
    prep["st_w2"] = sw2.astype(jnp.bfloat16); prep["st_b2"] = sb2

    # ---- constant head-selection masks & within-time-block batch rotations ----
    head_id = jnp.arange(E, dtype=jnp.int32) // HEAD_DIM
    hsum = (head_id[:, None] == jnp.arange(N_HEAD, dtype=jnp.int32)[None, :]
            ).astype(jnp.float32)                                # (E, NH)
    prep["hsum"] = hsum
    prep["hbc"] = hsum.T                                         # (NH, E)

    r = jnp.arange(M, dtype=jnp.int32)
    t_idx = r // BATCH
    b_idx = r % BATCH
    rots = []
    for j in range(1, BATCH):
        src = t_idx * BATCH + (b_idx + j) % BATCH
        rots.append((src[:, None] == jnp.arange(M, dtype=jnp.int32)[None, :]
                     ).astype(jnp.float32))
    prep["rot"] = jnp.stack(rots)                                # (B-1, M, M)
    return prep


# ----------------------------- forward -----------------------------------------
@jax.jit
def forward(prep, tokens, gold_tag, gold_status):
    """is_train=True path of NERStatusUniteComm.forward."""
    B, T = tokens.shape
    M = B * T
    # time-major row layout (row = t*B + b) fed to the single fused kernel
    tok_ids_tm = tokens.T.reshape(M, 1).astype(jnp.int32)
    gt_tm = gold_tag.T.reshape(M, 1).astype(jnp.int32)
    gs_tm = gold_status.T.reshape(M, 1).astype(jnp.int32)

    slab = fused_forward(prep, tok_ids_tm, gt_tm, gs_tm, n_batch=B, seq=T)

    slab_bt = slab.reshape(T, B, 3 * SLAB_W).transpose(1, 0, 2)   # (B, T, 384)
    tag_output = slab_bt[:, :, 0:TAG_SIZE]
    status_output = slab_bt[:, :, SLAB_W:SLAB_W + STATUS_SIZE]
    loss = jnp.mean(slab[:, 2 * SLAB_W]) + jnp.mean(slab[:, 2 * SLAB_W + 1])
    return loss, tag_output, status_output


if __name__ == "__main__":
    key = jax.random.PRNGKey(0)
    kp, kt, kg, ks = jax.random.split(key, 4)
    params = init_params(kp)
    prep = prepare_params(params)
    tokens = jax.random.randint(kt, (BATCH, SEQ), 1, VOCAB_SIZE, dtype=jnp.int32)
    gold_tag = jax.random.randint(kg, (BATCH, SEQ), 0, TAG_SIZE, dtype=jnp.int32)
    gold_status = jax.random.randint(ks, (BATCH, SEQ), 0, STATUS_SIZE, dtype=jnp.int32)

    loss, tag_out, status_out = forward(prep, tokens, gold_tag, gold_status)
    jax.block_until_ready((loss, tag_out, status_out))

    assert tag_out.shape == (BATCH, SEQ, TAG_SIZE)
    assert status_out.shape == (BATCH, SEQ, STATUS_SIZE)
    assert bool(jnp.isfinite(loss))
    print("KERNEL_OK")
</pallas_src>

<mosaic_0001>
module attributes {stable_mosaic.version = 11 : i64} {
  func.func @_fused_forward_kernel(%arg0: memref<16x1xi32, #tpu.memory_space<vmem>>, %arg1: memref<16x1xi32, #tpu.memory_space<vmem>>, %arg2: memref<16x1xi32, #tpu.memory_space<vmem>>, %arg3: memref<50x32xf32, #tpu.memory_space<vmem>>, %arg4: memref<10x32xf32, #tpu.memory_space<vmem>>, %arg5: memref<32x256xbf16, #tpu.memory_space<vmem>>, %arg6: memref<1x256xf32, #tpu.memory_space<vmem>>, %arg7: memref<2x32x96xbf16, #tpu.memory_space<vmem>>, %arg8: memref<2x1x32xf32, #tpu.memory_space<vmem>>, %arg9: memref<2x64x384xbf16, #tpu.memory_space<vmem>>, %arg10: memref<2x1x384xf32, #tpu.memory_space<vmem>>, %arg11: memref<2x64x64xbf16, #tpu.memory_space<vmem>>, %arg12: memref<2x1x64xf32, #tpu.memory_space<vmem>>, %arg13: memref<2x1x64xf32, #tpu.memory_space<vmem>>, %arg14: memref<2x1x64xf32, #tpu.memory_space<vmem>>, %arg15: memref<2x64x2048xbf16, #tpu.memory_space<vmem>>, %arg16: memref<2x1x2048xf32, #tpu.memory_space<vmem>>, %arg17: memref<2x2048x64xbf16, #tpu.memory_space<vmem>>, %arg18: memref<2x1x64xf32, #tpu.memory_space<vmem>>, %arg19: memref<2x1x64xf32, #tpu.memory_space<vmem>>, %arg20: memref<2x1x64xf32, #tpu.memory_space<vmem>>, %arg21: memref<64x4xf32, #tpu.memory_space<vmem>>, %arg22: memref<4x64xf32, #tpu.memory_space<vmem>>, %arg23: memref<1x16x16xf32, #tpu.memory_space<vmem>>, %arg24: memref<64x128xbf16, #tpu.memory_space<vmem>>, %arg25: memref<1x128xf32, #tpu.memory_space<vmem>>, %arg26: memref<128x128xbf16, #tpu.memory_space<vmem>>, %arg27: memref<1x128xf32, #tpu.memory_space<vmem>>, %arg28: memref<64x128xbf16, #tpu.memory_space<vmem>>, %arg29: memref<32x128xbf16, #tpu.memory_space<vmem>>, %arg30: memref<1x128xf32, #tpu.memory_space<vmem>>, %arg31: memref<128x128xbf16, #tpu.memory_space<vmem>>, %arg32: memref<1x128xf32, #tpu.memory_space<vmem>>, %arg33: memref<16x384xf32, #tpu.memory_space<vmem>>, %arg34: memref<16x256xf32, #tpu.memory_space<vmem>>, %arg35: memref<16x64xf32, #tpu.memory_space<vmem>>) attributes {dimension_semantics = [], scalar_prefetch = 0 : i64, scratch_operands = 2 : i64, tpu.core_type = #tpu.core_type<tc>} {
    %c0 = arith.constant 0 : index
    %c0_0 = arith.constant 0 : index
    %0 = vector.load %arg0[%c0, %c0_0] : memref<16x1xi32, #tpu.memory_space<vmem>>, vector<16x1xi32>
    %1 = tpu.iota {dimensions = array<i32: 1>} : vector<16x50xi32>
    %2 = vector.broadcast %0 : vector<16x1xi32> to vector<16x50xi32>
    %3 = arith.cmpi eq, %1, %2 : vector<16x50xi32>
    %4 = arith.extui %3 : vector<16x50xi1> to vector<16x50xi32>
    %5 = arith.sitofp %4 : vector<16x50xi32> to vector<16x50xf32>
    %c0_1 = arith.constant 0 : index
    %c0_2 = arith.constant 0 : index
    %6 = vector.load %arg3[%c0_1, %c0_2] : memref<50x32xf32, #tpu.memory_space<vmem>>, vector<50x32xf32>
    %cst = arith.constant dense<0.000000e+00> : vector<16x32xf32>
    %7 = tpu.matmul %5, %6, %cst {dimension_numbers = #tpu.dot_dimension_numbers<[1], [0], [0], [1], [0, 0, 1, 1], [], []>} : vector<16x50xf32>, vector<50x32xf32>, vector<16x32xf32> -> vector<16x32xf32>
    %8 = arith.truncf %7 : vector<16x32xf32> to vector<16x32xbf16>
    %c0_3 = arith.constant 0 : index
    %c0_4 = arith.constant 0 : index
    %9 = vector.load %arg5[%c0_3, %c0_4] : memref<32x256xbf16, #tpu.memory_space<vmem>>, vector<32x256xbf16>
    %cst_5 = arith.constant dense<0.000000e+00> : vector<16x256xf32>
    %10 = tpu.matmul %8, %9, %cst_5 {dimension_numbers = #tpu.dot_dimension_numbers<[1], [0], [0], [1], [0, 0, 1, 1], [], []>} : vector<16x32xbf16>, vector<32x256xbf16>, vector<16x256xf32> -> vector<16x256xf32>
    %c0_6 = arith.constant 0 : index
    %c0_7 = arith.constant 0 : index
    %11 = vector.load %arg6[%c0_6, %c0_7] : memref<1x256xf32, #tpu.memory_space<vmem>>, vector<1x256xf32>
    %12 = vector.broadcast %11 : vector<1x256xf32> to vector<16x256xf32>
    %13 = arith.addf %10, %12 : vector<16x256xf32>
    %c0_8 = arith.constant 0 : index
    %c0_9 = arith.constant 0 : index
    %14 = vector.load %arg34[%c0_8, %c0_9] : memref<16x256xf32, #tpu.memory_space<vmem>>, vector<16x256xf32>
    tpu.vector_store %arg34[%c0_8, %c0_9], %13 {strides = array<i32>} : memref<16x256xf32, #tpu.memory_space<vmem>>, vector<16x256xf32>,
    %c0_10 = arith.constant 0 : index
    %c0_11 = arith.constant 0 : index
    %c0_12 = arith.constant 0 : index
    %15 = vector.load %arg7[%c0_10, %c0_11, %c0_12] : memref<2x32x96xbf16, #tpu.memory_space<vmem>>, vector<1x32x96xbf16>
    %16 = vector.shape_cast %15 : vector<1x32x96xbf16> to vector<32x96xbf16>
    %c1 = arith.constant 1 : index
    %c0_13 = arith.constant 0 : index
    %c0_14 = arith.constant 0 : index
    %17 = vector.load %arg7[%c1, %c0_13, %c0_14] : memref<2x32x96xbf16, #tpu.memory_space<vmem>>, vector<1x32x96xbf16>
    %18 = vector.shape_cast %17 : vector<1x32x96xbf16> to vector<32x96xbf16>
    %c0_15 = arith.constant 0 : index
    %c0_16 = arith.constant 0 : index
    %c0_17 = arith.constant 0 : index
    %19 = vector.load %arg8[%c0_15, %c0_16, %c0_17] : memref<2x1x32xf32, #tpu.memory_space<vmem>>, vector<1x1x32xf32>
    %20 = vector.shape_cast %19 : vector<1x1x32xf32> to vector<1x32xf32>
    %c1_18 = arith.constant 1 : index
    %c0_19 = arith.constant 0 : index
    %c0_20 = arith.constant 0 : index
    %21 = vector.load %arg8[%c1_18, %c0_19, %c0_20] : memref<2x1x32xf32, #tpu.memory_space<vmem>>, vector<1x1x32xf32>
    %22 = vector.shape_cast %21 : vector<1x1x32xf32> to vector<1x32xf32>
    %cst_21 = arith.constant 0.000000e+00 : f32
    %23 = vector.broadcast %cst_21 : f32 to vector<2x32xf32>
    %cst_22 = arith.constant 0.000000e+00 : f32
    %24 = vector.broadcast %cst_22 : f32 to vector<2x32xf32>
    %c0_23 = arith.constant 0 : index
    %c0_24 = arith.constant 0 : index
    %25 = vector.load %arg34[%c0_23, %c0_24] : memref<16x256xf32, #tpu.memory_space<vmem>>, vector<2x256xf32>
    %c14 = arith.constant 14 : index
    %c0_25 = arith.constant 0 : index
    %26 = vector.load %arg34[%c14, %c0_25] : memref<16x256xf32, #tpu.memory_space<vmem>>, vector<2x256xf32>
    %27 = vector.extract_strided_slice %25 {offsets = [0, 0], sizes = [2, 96], strides = [1, 1]} : vector<2x256xf32> to vector<2x96xf32>
    %28 = arith.truncf %23 : vector<2x32xf32> to vector<2x32xbf16>
    %cst_26 = arith.constant dense<0.000000e+00> : vector<2x96xf32>
    %29 = tpu.matmul %28, %16, %cst_26 {dimension_numbers = #tpu.dot_dimension_numbers<[1], [0], [0], [1], [0, 0, 1, 1], [], []>} : vector<2x32xbf16>, vector<32x96xbf16>, vector<2x96xf32> -> vector<2x96xf32>
    %30 = vector.extract_strided_slice %27 {offsets = [0, 0], sizes = [2, 64], strides = [1, 1]} : vector<2x96xf32> to vector<2x64xf32>
    %31 = vector.extract_strided_slice %29 {offsets = [0, 0], sizes = [2, 64], strides = [1, 1]} : vector<2x96xf32> to vector<2x64xf32>
    %32 = arith.addf %30, %31 : vector<2x64xf32>
    %33 = arith.negf %32 : vector<2x64xf32>
    %34 = math.exp %33 : vector<2x64xf32>
    %cst_27 = arith.constant 1.000000e+00 : f32
    %35 = vector.broadcast %cst_27 : f32 to vector<2x64xf32>
    %36 = arith.addf %35, %34 : vector<2x64xf32>
    %37 = arith.divf %35, %36 : vector<2x64xf32>
    %38 = vector.extract_strided_slice %37 {offsets = [0, 0], sizes = [2, 32], strides = [1, 1]} : vector<2x64xf32> to vector<2x32xf32>
    %39 = vector.extract_strided_slice %37 {offsets = [0, 32], sizes = [2, 32], strides = [1, 1]} : vector<2x64xf32> to vector<2x32xf32>
    %40 = vector.extract_strided_slice %27 {offsets = [0, 64], sizes = [2, 32], strides = [1, 1]} : vector<2x96xf32> to vector<2x32xf32>
    %41 = vector.extract_strided_slice %29 {offsets = [0, 64], sizes = [2, 32], strides = [1, 1]} : vector<2x96xf32> to vector<2x32xf32>
    %42 = vector.broadcast %20 : vector<1x32xf32> to vector<2x32xf32>
    %43 = arith.addf %41, %42 : vector<2x32xf32>
    %44 = arith.mulf %38, %43 : vector<2x32xf32>
    %45 = arith.addf %40, %44 : vector<2x32xf32>
    %46 = math.tanh %45 : vector<2x32xf32>
    %cst_28 = arith.constant 1.000000e+00 : f32
    %47 = vector.broadcast %cst_28 : f32 to vector<2x32xf32>
    %48 = arith.subf %47, %39 : vector<2x32xf32>
    %49 = arith.mulf %48, %46 : vector<2x32xf32>
    %50 = arith.mulf %39, %23 : vector<2x32xf32>
    %51 = arith.addf %49, %50 : vector<2x32xf32>
    %52 = vector.extract_strided_slice %26 {offsets = [0, 128], sizes = [2, 96], strides = [1, 1]} : vector<2x256xf32> to vector<2x96xf32>
    %53 = arith.truncf %24 : vector<2x32xf32> to vector<2x32xbf16>
    %cst_29 = arith.constant dense<0.000000e+00> : vector<2x96xf32>
    %54 = tpu.matmul %53, %18, %cst_29 {dimension_numbers = #tpu.dot_dimension_numbers<[1], [0], [0], [1], [0, 0, 1, 1], [], []>} : vector<2x32xbf16>, vector<32x96xbf16>, vector<2x96xf32> -> vector<2x96xf32>
    %55 = vector.extract_strided_slice %52 {offsets = [0, 0], sizes = [2, 64], strides = [1, 1]} : vector<2x96xf32> to vector<2x64xf32>
    %56 = vector.extract_strided_slice %54 {offsets = [0, 0], sizes = [2, 64], strides = [1, 1]} : vector<2x96xf32> to vector<2x64xf32>
    %57 = arith.addf %55, %56 : vector<2x64xf32>
    %58 = arith.negf %57 : vector<2x64xf32>
    %59 = math.exp %58 : vector<2x64xf32>
    %cst_30 = arith.constant 1.000000e+00 : f32
    %60 = vector.broadcast %cst_30 : f32 to vector<2x64xf32>
    %61 = arith.addf %60, %59 : vector<2x64xf32>
    %62 = arith.divf %60, %61 : vector<2x64xf32>
    %63 = vector.extract_strided_slice %62 {offsets = [0, 0], sizes = [2, 32], strides = [1, 1]} : vector<2x64xf32> to vector<2x32xf32>
    %64 = vector.extract_strided_slice %62 {offsets = [0, 32], sizes = [2, 32], strides = [1, 1]} : vector<2x64xf32> to vector<2x32xf32>
    %65 = vector.extract_strided_slice %52 {offsets = [0, 64], sizes = [2, 32], strides = [1, 1]} : vector<2x96xf32> to vector<2x32xf32>
    %66 = vector.extract_strided_slice %54 {offsets = [0, 64], sizes = [2, 32], strides = [1, 1]} : vector<2x96xf32> to vector<2x32xf32>
    %67 = vector.broadcast %22 : vector<1x32xf32> to vector<2x32xf32>
    %68 = arith.addf %66, %67 : vector<2x32xf32>
    %69 = arith.mulf %63, %68 : vector<2x32xf32>
    %70 = arith.addf %65, %69 : vector<2x32xf32>
    %71 = math.tanh %70 : vector<2x32xf32>
    %cst_31 = arith.constant 1.000000e+00 : f32
    %72 = vector.broadcast %cst_31 : f32 to vector<2x32xf32>
    %73 = arith.subf %72, %64 : vector<2x32xf32>
    %74 = arith.mulf %73, %71 : vector<2x32xf32>
    %75 = arith.mulf %64, %24 : vector<2x32xf32>
    %76 = arith.addf %74, %75 : vector<2x32xf32>
    %c0_32 = arith.constant 0 : index
    %c0_33 = arith.constant 0 : index
    %77 = vector.load %arg35[%c0_32, %c0_33] : memref<16x64xf32, #tpu.memory_space<vmem>>, vector<2x32xf32>
    tpu.vector_store %arg35[%c0_32, %c0_33], %51 {strides = array<i32>} : memref<16x64xf32, #tpu.memory_space<vmem>>, vector<2x32xf32>,
    %c14_34 = arith.constant 14 : index
    %c32 = arith.constant 32 : index
    %78 = vector.load %arg35[%c14_34, %c32] : memref<16x64xf32, #tpu.memory_space<vmem>>, vector<2x32xf32>
    tpu.vector_store %arg35[%c14_34, %c32], %76 {strides = array<i32>} : memref<16x64xf32, #tpu.memory_space<vmem>>, vector<2x32xf32>,
    %c2 = arith.constant 2 : index
    %c0_35 = arith.constant 0 : index
    %79 = vector.load %arg34[%c2, %c0_35] : memref<16x256xf32, #tpu.memory_space<vmem>>, vector<2x256xf32>
    %c12 = arith.constant 12 : index
    %c0_36 = arith.constant 0 : index
    %80 = vector.load %arg34[%c12, %c0_36] : memref<16x256xf32, #tpu.memory_space<vmem>>, vector<2x256xf32>
    %81 = vector.extract_strided_slice %79 {offsets = [0, 0], sizes = [2, 96], strides = [1, 1]} : vector<2x256xf32> to vector<2x96xf32>
    %82 = arith.truncf %51 : vector<2x32xf32> to vector<2x32xbf16>
    %cst_37 = arith.constant dense<0.000000e+00> : vector<2x96xf32>
    %83 = tpu.matmul %82, %16, %cst_37 {dimension_numbers = #tpu.dot_dimension_numbers<[1], [0], [0], [1], [0, 0, 1, 1], [], []>} : vector<2x32xbf16>, vector<32x96xbf16>, vector<2x96xf32> -> vector<2x96xf32>
    %84 = vector.extract_strided_slice %81 {offsets = [0, 0], sizes = [2, 64], strides = [1, 1]} : vector<2x96xf32> to vector<2x64xf32>
    %85 = vector.extract_strided_slice %83 {offsets = [0, 0], sizes = [2, 64], strides = [1, 1]} : vector<2x96xf32> to vector<2x64xf32>
    %86 = arith.addf %84, %85 : vector<2x64xf32>
    %87 = arith.negf %86 : vector<2x64xf32>
    %88 = math.exp %87 : vector<2x64xf32>
    %cst_38 = arith.constant 1.000000e+00 : f32
    %89 = vector.broadcast %cst_38 : f32 to vector<2x64xf32>
    %90 = arith.addf %89, %88 : vector<2x64xf32>
    %91 = arith.divf %89, %90 : vector<2x64xf32>
    %92 = vector.extract_strided_slice %91 {offsets = [0, 0], sizes = [2, 32], strides = [1, 1]} : vector<2x64xf32> to vector<2x32xf32>
    %93 = vector.extract_strided_slice %91 {offsets = [0, 32], sizes = [2, 32], strides = [1, 1]} : vector<2x64xf32> to vector<2x32xf32>
    %94 = vector.extract_strided_slice %81 {offsets = [0, 64], sizes = [2, 32], strides = [1, 1]} : vector<2x96xf32> to vector<2x32xf32>
    %95 = vector.extract_strided_slice %83 {offsets = [0, 64], sizes = [2, 32], strides = [1, 1]} : vector<2x96xf32> to vector<2x32xf32>
    %96 = vector.broadcast %20 : vector<1x32xf32> to vector<2x32xf32>
    %97 = arith.addf %95, %96 : vector<2x32xf32>
    %98 = arith.mulf %92, %97 : vector<2x32xf32>
    %99 = arith.addf %94, %98 : vector<2x32xf32>
    %100 = math.tanh %99 : vector<2x32xf32>
    %cst_39 = arith.constant 1.000000e+00 : f32
    %101 = vector.broadcast %cst_39 : f32 to vector<2x32xf32>
    %102 = arith.subf %101, %93 : vector<2x32xf32>
    %103 = arith.mulf %102, %100 : vector<2x32xf32>
    %104 = arith.mulf %93, %51 : vector<2x32xf32>
    %105 = arith.addf %103, %104 : vector<2x32xf32>
    %106 = vector.extract_strided_slice %80 {offsets = [0, 128], sizes = [2, 96], strides = [1, 1]} : vector<2x256xf32> to vector<2x96xf32>
    %107 = arith.truncf %76 : vector<2x32xf32> to vector<2x32xbf16>
    %cst_40 = arith.constant dense<0.000000e+00> : vector<2x96xf32>
    %108 = tpu.matmul %107, %18, %cst_40 {dimension_numbers = #tpu.dot_dimension_numbers<[1], [0], [0], [1], [0, 0, 1, 1], [], []>} : vector<2x32xbf16>, vector<32x96xbf16>, vector<2x96xf32> -> vector<2x96xf32>
    %109 = vector.extract_strided_slice %106 {offsets = [0, 0], sizes = [2, 64], strides = [1, 1]} : vector<2x96xf32> to vector<2x64xf32>
    %110 = vector.extract_strided_slice %108 {offsets = [0, 0], sizes = [2, 64], strides = [1, 1]} : vector<2x96xf32> to vector<2x64xf32>
    %111 = arith.addf %109, %110 : vector<2x64xf32>
    %112 = arith.negf %111 : vector<2x64xf32>
    %113 = math.exp %112 : vector<2x64xf32>
    %cst_41 = arith.constant 1.000000e+00 : f32
    %114 = vector.broadcast %cst_41 : f32 to vector<2x64xf32>
    %115 = arith.addf %114, %113 : vector<2x64xf32>
    %116 = arith.divf %114, %115 : vector<2x64xf32>
    %117 = vector.extract_strided_slice %116 {offsets = [0, 0], sizes = [2, 32], strides = [1, 1]} : vector<2x64xf32> to vector<2x32xf32>
    %118 = vector.extract_strided_slice %116 {offsets = [0, 32], sizes = [2, 32], strides = [1, 1]} : vector<2x64xf32> to vector<2x32xf32>
    %119 = vector.extract_strided_slice %106 {offsets = [0, 64], sizes = [2, 32], strides = [1, 1]} : vector<2x96xf32> to vector<2x32xf32>
    %120 = vector.extract_strided_slice %108 {offsets = [0, 64], sizes = [2, 32], strides = [1, 1]} : vector<2x96xf32> to vector<2x32xf32>
    %121 = vector.broadcast %22 : vector<1x32xf32> to vector<2x32xf32>
    %122 = arith.addf %120, %121 : vector<2x32xf32>
    %123 = arith.mulf %117, %122 : vector<2x32xf32>
    %124 = arith.addf %119, %123 : vector<2x32xf32>
    %125 = math.tanh %124 : vector<2x32xf32>
    %cst_42 = arith.constant 1.000000e+00 : f32
    %126 = vector.broadcast %cst_42 : f32 to vector<2x32xf32>
    %127 = arith.subf %126, %118 : vector<2x32xf32>
    %128 = arith.mulf %127, %125 : vector<2x32xf32>
    %129 = arith.mulf %118, %76 : vector<2x32xf32>
    %130 = arith.addf %128, %129 : vector<2x32xf32>
    %c2_43 = arith.constant 2 : index
    %c0_44 = arith.constant 0 : index
    %131 = vector.load %arg35[%c2_43, %c0_44] : memref<16x64xf32, #tpu.memory_space<vmem>>, vector<2x32xf32>
    tpu.vector_store %arg35[%c2_43, %c0_44], %105 {strides = array<i32>} : memref<16x64xf32, #tpu.memory_space<vmem>>, vector<2x32xf32>,
    %c12_45 = arith.constant 12 : index
    %c32_46 = arith.constant 32 : index
    %132 = vector.load %arg35[%c12_45, %c32_46] : memref<16x64xf32, #tpu.memory_space<vmem>>, vector<2x32xf32>
    tpu.vector_store %arg35[%c12_45, %c32_46], %130 {strides = array<i32>} : memref<16x64xf32, #tpu.memory_space<vmem>>, vector<2x32xf32>,
    %c4 = arith.constant 4 : index
    %c0_47 = arith.constant 0 : index
    %133 = vector.load %arg34[%c4, %c0_47] : memref<16x256xf32, #tpu.memory_space<vmem>>, vector<2x256xf32>
    %c10 = arith.constant 10 : index
    %c0_48 = arith.constant 0 : index
    %134 = vector.load %arg34[%c10, %c0_48] : memref<16x256xf32, #tpu.memory_space<vmem>>, vector<2x256xf32>
    %135 = vector.extract_strided_slice %133 {offsets = [0, 0], sizes = [2, 96], strides = [1, 1]} : vector<2x256xf32> to vector<2x96xf32>
    %136 = arith.truncf %105 : vector<2x32xf32> to vector<2x32xbf16>
    %cst_49 = arith.constant dense<0.000000e+00> : vector<2x96xf32>
    %137 = tpu.matmul %136, %16, %cst_49 {dimension_numbers = #tpu.dot_dimension_numbers<[1], [0], [0], [1], [0, 0, 1, 1], [], []>} : vector<2x32xbf16>, vector<32x96xbf16>, vector<2x96xf32> -> vector<2x96xf32>
    %138 = vector.extract_strided_slice %135 {offsets = [0, 0], sizes = [2, 64], strides = [1, 1]} : vector<2x96xf32> to vector<2x64xf32>
    %139 = vector.extract_strided_slice %137 {offsets = [0, 0], sizes = [2, 64], strides = [1, 1]} : vector<2x96xf32> to vector<2x64xf32>
    %140 = arith.addf %138, %139 : vector<2x64xf32>
    %141 = arith.negf %140 : vector<2x64xf32>
    %142 = math.exp %141 : vector<2x64xf32>
    %cst_50 = arith.constant 1.000000e+00 : f32
    %143 = vector.broadcast %cst_50 : f32 to vector<2x64xf32>
    %144 = arith.addf %143, %142 : vector<2x64xf32>
    %145 = arith.divf %143, %144 : vector<2x64xf32>
    %146 = vector.extract_strided_slice %145 {offsets = [0, 0], sizes = [2, 32], strides = [1, 1]} : vector<2x64xf32> to vector<2x32xf32>
    %147 = vector.extract_strided_slice %145 {offsets = [0, 32], sizes = [2, 32], strides = [1, 1]} : vector<2x64xf32> to vector<2x32xf32>
    %148 = vector.extract_strided_slice %135 {offsets = [0, 64], sizes = [2, 32], strides = [1, 1]} : vector<2x96xf32> to vector<2x32xf32>
    %149 = vector.extract_strided_slice %137 {offsets = [0, 64], sizes = [2, 32], strides = [1, 1]} : vector<2x96xf32> to vector<2x32xf32>
    %150 = vector.broadcast %20 : vector<1x32xf32> to vector<2x32xf32>
    %151 = arith.addf %149, %150 : vector<2x32xf32>
    %152 = arith.mulf %146, %151 : vector<2x32xf32>
    %153 = arith.addf %148, %152 : vector<2x32xf32>
    %154 = math.tanh %153 : vector<2x32xf32>
    %cst_51 = arith.constant 1.000000e+00 : f32
    %155 = vector.broadcast %cst_51 : f32 to vector<2x32xf32>
    %156 = arith.subf %155, %147 : vector<2x32xf32>
    %157 = arith.mulf %156, %154 : vector<2x32xf32>
    %158 = arith.mulf %147, %105 : vector<2x32xf32>
    %159 = arith.addf %157, %158 : vector<2x32xf32>
    %160 = vector.extract_strided_slice %134 {offsets = [0, 128], sizes = [2, 96], strides = [1, 1]} : vector<2x256xf32> to vector<2x96xf32>
    %161 = arith.truncf %130 : vector<2x32xf32> to vector<2x32xbf16>
    %cst_52 = arith.constant dense<0.000000e+00> : vector<2x96xf32>
    %162 = tpu.matmul %161, %18, %cst_52 {dimension_numbers = #tpu.dot_dimension_numbers<[1], [0], [0], [1], [0, 0, 1, 1], [], []>} : vector<2x32xbf16>, vector<32x96xbf16>, vector<2x96xf32> -> vector<2x96xf32>
    %163 = vector.extract_strided_slice %160 {offsets = [0, 0], sizes = [2, 64], strides = [1, 1]} : vector<2x96xf32> to vector<2x64xf32>
    %164 = vector.extract_strided_slice %162 {offsets = [0, 0], sizes = [2, 64], strides = [1, 1]} : vector<2x96xf32> to vector<2x64xf32>
    %165 = arith.addf %163, %164 : vector<2x64xf32>
    %166 = arith.negf %165 : vector<2x64xf32>
    %167 = math.exp %166 : vector<2x64xf32>
    %cst_53 = arith.constant 1.000000e+00 : f32
    %168 = vector.broadcast %cst_53 : f32 to vector<2x64xf32>
    %169 = arith.addf %168, %167 : vector<2x64xf32>
    %170 = arith.divf %168, %169 : vector<2x64xf32>
    %171 = vector.extract_strided_slice %170 {offsets = [0, 0], sizes = [2, 32], strides = [1, 1]} : vector<2x64xf32> to vector<2x32xf32>
    %172 = vector.extract_strided_slice %170 {offsets = [0, 32], sizes = [2, 32], strides = [1, 1]} : vector<2x64xf32> to vector<2x32xf32>
    %173 = vector.extract_strided_slice %160 {offsets = [0, 64], sizes = [2, 32], strides = [1, 1]} : vector<2x96xf32> to vector<2x32xf32>
    %174 = vector.extract_strided_slice %162 {offsets = [0, 64], sizes = [2, 32], strides = [1, 1]} : vector<2x96xf32> to vector<2x32xf32>
    %175 = vector.broadcast %22 : vector<1x32xf32> to vector<2x32xf32>
    %176 = arith.addf %174, %175 : vector<2x32xf32>
    %177 = arith.mulf %171, %176 : vector<2x32xf32>
    %178 = arith.addf %173, %177 : vector<2x32xf32>
    %179 = math.tanh %178 : vector<2x32xf32>
    %cst_54 = arith.constant 1.000000e+00 : f32
    %180 = vector.broadcast %cst_54 : f32 to vector<2x32xf32>
    %181 = arith.subf %180, %172 : vector<2x32xf32>
    %182 = arith.mulf %181, %179 : vector<2x32xf32>
    %183 = arith.mulf %172, %130 : vector<2x32xf32>
    %184 = arith.addf %182, %183 : vector<2x32xf32>
    %c4_55 = arith.constant 4 : index
    %c0_56 = arith.constant 0 : index
    %185 = vector.load %arg35[%c4_55, %c0_56] : memref<16x64xf32, #tpu.memory_space<vmem>>, vector<2x32xf32>
    tpu.vector_store %arg35[%c4_55, %c0_56], %159 {strides = array<i32>} : memref<16x64xf32, #tpu.memory_space<vmem>>, vector<2x32xf32>,
    %c10_57 = arith.constant 10 : index
    %c32_58 = arith.constant 32 : index
    %186 = vector.load %arg35[%c10_57, %c32_58] : memref<16x64xf32, #tpu.memory_space<vmem>>, vector<2x32xf32>
    tpu.vector_store %arg35[%c10_57, %c32_58], %184 {strides = array<i32>} : memref<16x64xf32, #tpu.memory_space<vmem>>, vector<2x32xf32>,
    %c6 = arith.constant 6 : index
    %c0_59 = arith.constant 0 : index
    %187 = vector.load %arg34[%c6, %c0_59] : memref<16x256xf32, #tpu.memory_space<vmem>>, vector<2x256xf32>
    %c8 = arith.constant 8 : index
    %c0_60 = arith.constant 0 : index
    %188 = vector.load %arg34[%c8, %c0_60] : memref<16x256xf32, #tpu.memory_space<vmem>>, vector<2x256xf32>
    %189 = vector.extract_strided_slice %187 {offsets = [0, 0], sizes = [2, 96], strides = [1, 1]} : vector<2x256xf32> to vector<2x96xf32>
    %190 = arith.truncf %159 : vector<2x32xf32> to vector<2x32xbf16>
    %cst_61 = arith.constant dense<0.000000e+00> : vector<2x96xf32>
    %191 = tpu.matmul %190, %16, %cst_61 {dimension_numbers = #tpu.dot_dimension_numbers<[1], [0], [0], [1], [0, 0, 1, 1], [], []>} : vector<2x32xbf16>, vector<32x96xbf16>, vector<2x96xf32> -> vector<2x96xf32>
    %192 = vector.extract_strided_slice %189 {offsets = [0, 0], sizes = [2, 64], strides = [1, 1]} : vector<2x96xf32> to vector<2x64xf32>
    %193 = vector.extract_strided_slice %191 {offsets = [0, 0], sizes = [2, 64], strides = [1, 1]} : vector<2x96xf32> to vector<2x64xf32>
    %194 = arith.addf %192, %193 : vector<2x64xf32>
    %195 = arith.negf %194 : vector<2x64xf32>
    %196 = math.exp %195 : vector<2x64xf32>
    %cst_62 = arith.constant 1.000000e+00 : f32
    %197 = vector.broadcast %cst_62 : f32 to vector<2x64xf32>
    %198 = arith.addf %197, %196 : vector<2x64xf32>
    %199 = arith.divf %197, %198 : vector<2x64xf32>
    %200 = vector.extract_strided_slice %199 {offsets = [0, 0], sizes = [2, 32], strides = [1, 1]} : vector<2x64xf32> to vector<2x32xf32>
    %201 = vector.extract_strided_slice %199 {offsets = [0, 32], sizes = [2, 32], strides = [1, 1]} : vector<2x64xf32> to vector<2x32xf32>
    %202 = vector.extract_strided_slice %189 {offsets = [0, 64], sizes = [2, 32], strides = [1, 1]} : vector<2x96xf32> to vector<2x32xf32>
    %203 = vector.extract_strided_slice %191 {offsets = [0, 64], sizes = [2, 32], strides = [1, 1]} : vector<2x96xf32> to vector<2x32xf32>
    %204 = vector.broadcast %20 : vector<1x32xf32> to vector<2x32xf32>
    %205 = arith.addf %203, %204 : vector<2x32xf32>
    %206 = arith.mulf %200, %205 : vector<2x32xf32>
    %207 = arith.addf %202, %206 : vector<2x32xf32>
    %208 = math.tanh %207 : vector<2x32xf32>
    %cst_63 = arith.constant 1.000000e+00 : f32
    %209 = vector.broadcast %cst_63 : f32 to vector<2x32xf32>
    %210 = arith.subf %209, %201 : vector<2x32xf32>
    %211 = arith.mulf %210, %208 : vector<2x32xf32>
    %212 = arith.mulf %201, %159 : vector<2x32xf32>
    %213 = arith.addf %211, %212 : vector<2x32xf32>
    %214 = vector.extract_strided_slice %188 {offsets = [0, 128], sizes = [2, 96], strides = [1, 1]} : vector<2x256xf32> to vector<2x96xf32>
    %215 = arith.truncf %184 : vector<2x32xf32> to vector<2x32xbf16>
    %cst_64 = arith.constant dense<0.000000e+00> : vector<2x96xf32>
    %216 = tpu.matmul %215, %18, %cst_64 {dimension_numbers = #tpu.dot_dimension_numbers<[1], [0], [0], [1], [0, 0, 1, 1], [], []>} : vector<2x32xbf16>, vector<32x96xbf16>, vector<2x96xf32> -> vector<2x96xf32>
    %217 = vector.extract_strided_slice %214 {offsets = [0, 0], sizes = [2, 64], strides = [1, 1]} : vector<2x96xf32> to vector<2x64xf32>
    %218 = vector.extract_strided_slice %216 {offsets = [0, 0], sizes = [2, 64], strides = [1, 1]} : vector<2x96xf32> to vector<2x64xf32>
    %219 = arith.addf %217, %218 : vector<2x64xf32>
    %220 = arith.negf %219 : vector<2x64xf32>
    %221 = math.exp %220 : vector<2x64xf32>
    %cst_65 = arith.constant 1.000000e+00 : f32
    %222 = vector.broadcast %cst_65 : f32 to vector<2x64xf32>
    %223 = arith.addf %222, %221 : vector<2x64xf32>
    %224 = arith.divf %222, %223 : vector<2x64xf32>
    %225 = vector.extract_strided_slice %224 {offsets = [0, 0], sizes = [2, 32], strides = [1, 1]} : vector<2x64xf32> to vector<2x32xf32>
    %226 = vector.extract_strided_slice %224 {offsets = [0, 32], sizes = [2, 32], strides = [1, 1]} : vector<2x64xf32> to vector<2x32xf32>
    %227 = vector.extract_strided_slice %214 {offsets = [0, 64], sizes = [2, 32], strides = [1, 1]} : vector<2x96xf32> to vector<2x32xf32>
    %228 = vector.extract_strided_slice %216 {offsets = [0, 64], sizes = [2, 32], strides = [1, 1]} : vector<2x96xf32> to vector<2x32xf32>
    %229 = vector.broadcast %22 : vector<1x32xf32> to vector<2x32xf32>
    %230 = arith.addf %228, %229 : vector<2x32xf32>
    %231 = arith.mulf %225, %230 : vector<2x32xf32>
    %232 = arith.addf %227, %231 : vector<2x32xf32>
    %233 = math.tanh %232 : vector<2x32xf32>
    %cst_66 = arith.constant 1.000000e+00 : f32
    %234 = vector.broadcast %cst_66 : f32 to vector<2x32xf32>
    %235 = arith.subf %234, %226 : vector<2x32xf32>
    %236 = arith.mulf %235, %233 : vector<2x32xf32>
    %237 = arith.mulf %226, %184 : vector<2x32xf32>
    %238 = arith.addf %236, %237 : vector<2x32xf32>
    %c6_67 = arith.constant 6 : index
    %c0_68 = arith.constant 0 : index
    %239 = vector.load %arg35[%c6_67, %c0_68] : memref<16x64xf32, #tpu.memory_space<vmem>>, vector<2x32xf32>
    tpu.vector_store %arg35[%c6_67, %c0_68], %213 {strides = array<i32>} : memref<16x64xf32, #tpu.memory_space<vmem>>, vector<2x32xf32>,
    %c8_69 = arith.constant 8 : index
    %c32_70 = arith.constant 32 : index
    %240 = vector.load %arg35[%c8_69, %c32_70] : memref<16x64xf32, #tpu.memory_space<vmem>>, vector<2x32xf32>
    tpu.vector_store %arg35[%c8_69, %c32_70], %238 {strides = array<i32>} : memref<16x64xf32, #tpu.memory_space<vmem>>, vector<2x32xf32>,
    %c8_71 = arith.constant 8 : index
    %c0_72 = arith.constant 0 : index
    %241 = vector.load %arg34[%c8_71, %c0_72] : memref<16x256xf32, #tpu.memory_space<vmem>>, vector<2x256xf32>
    %c6_73 = arith.constant 6 : index
    %c0_74 = arith.constant 0 : index
    %242 = vector.load %arg34[%c6_73, %c0_74] : memref<16x256xf32, #tpu.memory_space<vmem>>, vector<2x256xf32>
    %243 = vector.extract_strided_slice %241 {offsets = [0, 0], sizes = [2, 96], strides = [1, 1]} : vector<2x256xf32> to vector<2x96xf32>
    %244 = arith.truncf %213 : vector<2x32xf32> to vector<2x32xbf16>
    %cst_75 = arith.constant dense<0.000000e+00> : vector<2x96xf32>
    %245 = tpu.matmul %244, %16, %cst_75 {dimension_numbers = #tpu.dot_dimension_numbers<[1], [0], [0], [1], [0, 0, 1, 1], [], []>} : vector<2x32xbf16>, vector<32x96xbf16>, vector<2x96xf32> -> vector<2x96xf32>
    %246 = vector.extract_strided_slice %243 {offsets = [0, 0], sizes = [2, 64], strides = [1, 1]} : vector<2x96xf32> to vector<2x64xf32>
    %247 = vector.extract_strided_slice %245 {offsets = [0, 0], sizes = [2, 64], strides = [1, 1]} : vector<2x96xf32> to vector<2x64xf32>
    %248 = arith.addf %246, %247 : vector<2x64xf32>
    %249 = arith.negf %248 : vector<2x64xf32>
    %250 = math.exp %249 : vector<2x64xf32>
    %cst_76 = arith.constant 1.000000e+00 : f32
    %251 = vector.broadcast %cst_76 : f32 to vector<2x64xf32>
    %252 = arith.addf %251, %250 : vector<2x64xf32>
    %253 = arith.divf %251, %252 : vector<2x64xf32>
    %254 = vector.extract_strided_slice %253 {offsets = [0, 0], sizes = [2, 32], strides = [1, 1]} : vector<2x64xf32> to vector<2x32xf32>
    %255 = vector.extract_strided_slice %253 {offsets = [0, 32], sizes = [2, 32], strides = [1, 1]} : vector<2x64xf32> to vector<2x32xf32>
    %256 = vector.extract_strided_slice %243 {offsets = [0, 64], sizes = [2, 32], strides = [1, 1]} : vector<2x96xf32> to vector<2x32xf32>
    %257 = vector.extract_strided_slice %245 {offsets = [0, 64], sizes = [2, 32], strides = [1, 1]} : vector<2x96xf32> to vector<2x32xf32>
    %258 = vector.broadcast %20 : vector<1x32xf32> to vector<2x32xf32>
    %259 = arith.addf %257, %258 : vector<2x32xf32>
    %260 = arith.mulf %254, %259 : vector<2x32xf32>
    %261 = arith.addf %256, %260 : vector<2x32xf32>
    %262 = math.tanh %261 : vector<2x32xf32>
    %cst_77 = arith.constant 1.000000e+00 : f32
    %263 = vector.broadcast %cst_77 : f32 to vector<2x32xf32>
    %264 = arith.subf %263, %255 : vector<2x32xf32>
    %265 = arith.mulf %264, %262 : vector<2x32xf32>
    %266 = arith.mulf %255, %213 : vector<2x32xf32>
    %267 = arith.addf %265, %266 : vector<2x32xf32>
    %268 = vector.extract_strided_slice %242 {offsets = [0, 128], sizes = [2, 96], strides = [1, 1]} : vector<2x256xf32> to vector<2x96xf32>
    %269 = arith.truncf %238 : vector<2x32xf32> to vector<2x32xbf16>
    %cst_78 = arith.constant dense<0.000000e+00> : vector<2x96xf32>
    %270 = tpu.matmul %269, %18, %cst_78 {dimension_numbers = #tpu.dot_dimension_numbers<[1], [0], [0], [1], [0, 0, 1, 1], [], []>} : vector<2x32xbf16>, vector<32x96xbf16>, vector<2x96xf32> -> vector<2x96xf32>
    %271 = vector.extract_strided_slice %268 {offsets = [0, 0], sizes = [2, 64], strides = [1, 1]} : vector<2x96xf32> to vector<2x64xf32>
    %272 = vector.extract_strided_slice %270 {offsets = [0, 0], sizes = [2, 64], strides = [1, 1]} : vector<2x96xf32> to vector<2x64xf32>
    %273 = arith.addf %271, %272 : vector<2x64xf32>
    %274 = arith.negf %273 : vector<2x64xf32>
    %275 = math.exp %274 : vector<2x64xf32>
    %cst_79 = arith.constant 1.000000e+00 : f32
    %276 = vector.broadcast %cst_79 : f32 to vector<2x64xf32>
    %277 = arith.addf %276, %275 : vector<2x64xf32>
    %278 = arith.divf %276, %277 : vector<2x64xf32>
    %279 = vector.extract_strided_slice %278 {offsets = [0, 0], sizes = [2, 32], strides = [1, 1]} : vector<2x64xf32> to vector<2x32xf32>
    %280 = vector.extract_strided_slice %278 {offsets = [0, 32], sizes = [2, 32], strides = [1, 1]} : vector<2x64xf32> to vector<2x32xf32>
    %281 = vector.extract_strided_slice %268 {offsets = [0, 64], sizes = [2, 32], strides = [1, 1]} : vector<2x96xf32> to vector<2x32xf32>
    %282 = vector.extract_strided_slice %270 {offsets = [0, 64], sizes = [2, 32], strides = [1, 1]} : vector<2x96xf32> to vector<2x32xf32>
    %283 = vector.broadcast %22 : vector<1x32xf32> to vector<2x32xf32>
    %284 = arith.addf %282, %283 : vector<2x32xf32>
    %285 = arith.mulf %279, %284 : vector<2x32xf32>
    %286 = arith.addf %281, %285 : vector<2x32xf32>
    %287 = math.tanh %286 : vector<2x32xf32>
    %cst_80 = arith.constant 1.000000e+00 : f32
    %288 = vector.broadcast %cst_80 : f32 to vector<2x32xf32>
    %289 = arith.subf %288, %280 : vector<2x32xf32>
    %290 = arith.mulf %289, %287 : vector<2x32xf32>
    %291 = arith.mulf %280, %238 : vector<2x32xf32>
    %292 = arith.addf %290, %291 : vector<2x32xf32>
    %c8_81 = arith.constant 8 : index
    %c0_82 = arith.constant 0 : index
    %293 = vector.load %arg35[%c8_81, %c0_82] : memref<16x64xf32, #tpu.memory_space<vmem>>, vector<2x32xf32>
    tpu.vector_store %arg35[%c8_81, %c0_82], %267 {strides = array<i32>} : memref<16x64xf32, #tpu.memory_space<vmem>>, vector<2x32xf32>,
    %c6_83 = arith.constant 6 : index
    %c32_84 = arith.constant 32 : index
    %294 = vector.load %arg35[%c6_83, %c32_84] : memref<16x64xf32, #tpu.memory_space<vmem>>, vector<2x32xf32>
    tpu.vector_store %arg35[%c6_83, %c32_84], %292 {strides = array<i32>} : memref<16x64xf32, #tpu.memory_space<vmem>>, vector<2x32xf32>,
    %c10_85 = arith.constant 10 : index
    %c0_86 = arith.constant 0 : index
    %295 = vector.load %arg34[%c10_85, %c0_86] : memref<16x256xf32, #tpu.memory_space<vmem>>, vector<2x256xf32>
    %c4_87 = arith.constant 4 : index
    %c0_88 = arith.constant 0 : index
    %296 = vector.load %arg34[%c4_87, %c0_88] : memref<16x256xf32, #tpu.memory_space<vmem>>, vector<2x256xf32>
    %297 = vector.extract_strided_slice %295 {offsets = [0, 0], sizes = [2, 96], strides = [1, 1]} : vector<2x256xf32> to vector<2x96xf32>
    %298 = arith.truncf %267 : vector<2x32xf32> to vector<2x32xbf16>
    %cst_89 = arith.constant dense<0.000000e+00> : vector<2x96xf32>
    %299 = tpu.matmul %298, %16, %cst_89 {dimension_numbers = #tpu.dot_dimension_numbers<[1], [0], [0], [1], [0, 0, 1, 1], [], []>} : vector<2x32xbf16>, vector<32x96xbf16>, vector<2x96xf32> -> vector<2x96xf32>
    %300 = vector.extract_strided_slice %297 {offsets = [0, 0], sizes = [2, 64], strides = [1, 1]} : vector<2x96xf32> to vector<2x64xf32>
    %301 = vector.extract_strided_slice %299 {offsets = [0, 0], sizes = [2, 64], strides = [1, 1]} : vector<2x96xf32> to vector<2x64xf32>
    %302 = arith.addf %300, %301 : vector<2x64xf32>
    %303 = arith.negf %302 : vector<2x64xf32>
    %304 = math.exp %303 : vector<2x64xf32>
    %cst_90 = arith.constant 1.000000e+00 : f32
    %305 = vector.broadcast %cst_90 : f32 to vector<2x64xf32>
    %306 = arith.addf %305, %304 : vector<2x64xf32>
    %307 = arith.divf %305, %306 : vector<2x64xf32>
    %308 = vector.extract_strided_slice %307 {offsets = [0, 0], sizes = [2, 32], strides = [1, 1]} : vector<2x64xf32> to vector<2x32xf32>
    %309 = vector.extract_strided_slice %307 {offsets = [0, 32], sizes = [2, 32], strides = [1, 1]} : vector<2x64xf32> to vector<2x32xf32>
    %310 = vector.extract_strided_slice %297 {offsets = [0, 64], sizes = [2, 32], strides = [1, 1]} : vector<2x96xf32> to vector<2x32xf32>
    %311 = vector.extract_strided_slice %299 {offsets = [0, 64], sizes = [2, 32], strides = [1, 1]} : vector<2x96xf32> to vector<2x32xf32>
    %312 = vector.broadcast %20 : vector<1x32xf32> to vector<2x32xf32>
    %313 = arith.addf %311, %312 : vector<2x32xf32>
    %314 = arith.mulf %308, %313 : vector<2x32xf32>
    %315 = arith.addf %310, %314 : vector<2x32xf32>
    %316 = math.tanh %315 : vector<2x32xf32>
    %cst_91 = arith.constant 1.000000e+00 : f32
    %317 = vector.broadcast %cst_91 : f32 to vector<2x32xf32>
    %318 = arith.subf %317, %309 : vector<2x32xf32>
    %319 = arith.mulf %318, %316 : vector<2x32xf32>
    %320 = arith.mulf %309, %267 : vector<2x32xf32>
    %321 = arith.addf %319, %320 : vector<2x32xf32>
    %322 = vector.extract_strided_slice %296 {offsets = [0, 128], sizes = [2, 96], strides = [1, 1]} : vector<2x256xf32> to vector<2x96xf32>
    %323 = arith.truncf %292 : vector<2x32xf32> to vector<2x32xbf16>
    %cst_92 = arith.constant dense<0.000000e+00> : vector<2x96xf32>
    %324 = tpu.matmul %323, %18, %cst_92 {dimension_numbers = #tpu.dot_dimension_numbers<[1], [0], [0], [1], [0, 0, 1, 1], [], []>} : vector<2x32xbf16>, vector<32x96xbf16>, vector<2x96xf32> -> vector<2x96xf32>
    %325 = vector.extract_strided_slice %322 {offsets = [0, 0], sizes = [2, 64], strides = [1, 1]} : vector<2x96xf32> to vector<2x64xf32>
    %326 = vector.extract_strided_slice %324 {offsets = [0, 0], sizes = [2, 64], strides = [1, 1]} : vector<2x96xf32> to vector<2x64xf32>
    %327 = arith.addf %325, %326 : vector<2x64xf32>
    %328 = arith.negf %327 : vector<2x64xf32>
    %329 = math.exp %328 : vector<2x64xf32>
    %cst_93 = arith.constant 1.000000e+00 : f32
    %330 = vector.broadcast %cst_93 : f32 to vector<2x64xf32>
    %331 = arith.addf %330, %329 : vector<2x64xf32>
    %332 = arith.divf %330, %331 : vector<2x64xf32>
    %333 = vector.extract_strided_slice %332 {offsets = [0, 0], sizes = [2, 32], strides = [1, 1]} : vector<2x64xf32> to vector<2x32xf32>
    %334 = vector.extract_strided_slice %332 {offsets = [0, 32], sizes = [2, 32], strides = [1, 1]} : vector<2x64xf32> to vector<2x32xf32>
    %335 = vector.extract_strided_slice %322 {offsets = [0, 64], sizes = [2, 32], strides = [1, 1]} : vector<2x96xf32> to vector<2x32xf32>
    %336 = vector.extract_strided_slice %324 {offsets = [0, 64], sizes = [2, 32], strides = [1, 1]} : vector<2x96xf32> to vector<2x32xf32>
    %337 = vector.broadcast %22 : vector<1x32xf32> to vector<2x32xf32>
    %338 = arith.addf %336, %337 : vector<2x32xf32>
    %339 = arith.mulf %333, %338 : vector<2x32xf32>
    %340 = arith.addf %335, %339 : vector<2x32xf32>
    %341 = math.tanh %340 : vector<2x32xf32>
    %cst_94 = arith.constant 1.000000e+00 : f32
    %342 = vector.broadcast %cst_94 : f32 to vector<2x32xf32>
    %343 = arith.subf %342, %334 : vector<2x32xf32>
    %344 = arith.mulf %343, %341 : vector<2x32xf32>
    %345 = arith.mulf %334, %292 : vector<2x32xf32>
    %346 = arith.addf %344, %345 : vector<2x32xf32>
    %c10_95 = arith.constant 10 : index
    %c0_96 = arith.constant 0 : index
    %347 = vector.load %arg35[%c10_95, %c0_96] : memref<16x64xf32, #tpu.memory_space<vmem>>, vector<2x32xf32>
    tpu.vector_store %arg35[%c10_95, %c0_96], %321 {strides = array<i32>} : memref<16x64xf32, #tpu.memory_space<vmem>>, vector<2x32xf32>,
    %c4_97 = arith.constant 4 : index
    %c32_98 = arith.constant 32 : index
    %348 = vector.load %arg35[%c4_97, %c32_98] : memref<16x64xf32, #tpu.memory_space<vmem>>, vector<2x32xf32>
    tpu.vector_store %arg35[%c4_97, %c32_98], %346 {strides = array<i32>} : memref<16x64xf32, #tpu.memory_space<vmem>>, vector<2x32xf32>,
    %c12_99 = arith.constant 12 : index
    %c0_100 = arith.constant 0 : index
    %349 = vector.load %arg34[%c12_99, %c0_100] : memref<16x256xf32, #tpu.memory_space<vmem>>, vector<2x256xf32>
    %c2_101 = arith.constant 2 : index
    %c0_102 = arith.constant 0 : index
    %350 = vector.load %arg34[%c2_101, %c0_102] : memref<16x256xf32, #tpu.memory_space<vmem>>, vector<2x256xf32>
    %351 = vector.extract_strided_slice %349 {offsets = [0, 0], sizes = [2, 96], strides = [1, 1]} : vector<2x256xf32> to vector<2x96xf32>
    %352 = arith.truncf %321 : vector<2x32xf32> to vector<2x32xbf16>
    %cst_103 = arith.constant dense<0.000000e+00> : vector<2x96xf32>
    %353 = tpu.matmul %352, %16, %cst_103 {dimension_numbers = #tpu.dot_dimension_numbers<[1], [0], [0], [1], [0, 0, 1, 1], [], []>} : vector<2x32xbf16>, vector<32x96xbf16>, vector<2x96xf32> -> vector<2x96xf32>
    %354 = vector.extract_strided_slice %351 {offsets = [0, 0], sizes = [2, 64], strides = [1, 1]} : vector<2x96xf32> to vector<2x64xf32>
    %355 = vector.extract_strided_slice %353 {offsets = [0, 0], sizes = [2, 64], strides = [1, 1]} : vector<2x96xf32> to vector<2x64xf32>
    %356 = arith.addf %354, %355 : vector<2x64xf32>
    %357 = arith.negf %356 : vector<2x64xf32>
    %358 = math.exp %357 : vector<2x64xf32>
    %cst_104 = arith.constant 1.000000e+00 : f32
    %359 = vector.broadcast %cst_104 : f32 to vector<2x64xf32>
    %360 = arith.addf %359, %358 : vector<2x64xf32>
    %361 = arith.divf %359, %360 : vector<2x64xf32>
    %362 = vector.extract_strided_slice %361 {offsets = [0, 0], sizes = [2, 32], strides = [1, 1]} : vector<2x64xf32> to vector<2x32xf32>
    %363 = vector.extract_strided_slice %361 {offsets = [0, 32], sizes = [2, 32], strides = [1, 1]} : vector<2x64xf32> to vector<2x32xf32>
    %364 = vector.extract_strided_slice %351 {offsets = [0, 64], sizes = [2, 32], strides = [1, 1]} : vector<2x96xf32> to vector<2x32xf32>
    %365 = vector.extract_strided_slice %353 {offsets = [0, 64], sizes = [2, 32], strides = [1, 1]} : vector<2x96xf32> to vector<2x32xf32>
    %366 = vector.broadcast %20 : vector<1x32xf32> to vector<2x32xf32>
    %367 = arith.addf %365, %366 : vector<2x32xf32>
    %368 = arith.mulf %362, %367 : vector<2x32xf32>
    %369 = arith.addf %364, %368 : vector<2x32xf32>
    %370 = math.tanh %369 : vector<2x32xf32>
    %cst_105 = arith.constant 1.000000e+00 : f32
    %371 = vector.broadcast %cst_105 : f32 to vector<2x32xf32>
    %372 = arith.subf %371, %363 : vector<2x32xf32>
    %373 = arith.mulf %372, %370 : vector<2x32xf32>
    %374 = arith.mulf %363, %321 : vector<2x32xf32>
    %375 = arith.addf %373, %374 : vector<2x32xf32>
    %376 = vector.extract_strided_slice %350 {offsets = [0, 128], sizes = [2, 96], strides = [1, 1]} : vector<2x256xf32> to vector<2x96xf32>
    %377 = arith.truncf %346 : vector<2x32xf32> to vector<2x32xbf16>
    %cst_106 = arith.constant dense<0.000000e+00> : vector<2x96xf32>
    %378 = tpu.matmul %377, %18, %cst_106 {dimension_numbers = #tpu.dot_dimension_numbers<[1], [0], [0], [1], [0, 0, 1, 1], [], []>} : vector<2x32xbf16>, vector<32x96xbf16>, vector<2x96xf32> -> vector<2x96xf32>
    %379 = vector.extract_strided_slice %376 {offsets = [0, 0], sizes = [2, 64], strides = [1, 1]} : vector<2x96xf32> to vector<2x64xf32>
    %380 = vector.extract_strided_slice %378 {offsets = [0, 0], sizes = [2, 64], strides = [1, 1]} : vector<2x96xf32> to vector<2x64xf32>
    %381 = arith.addf %379, %380 : vector<2x64xf32>
    %382 = arith.negf %381 : vector<2x64xf32>
    %383 = math.exp %382 : vector<2x64xf32>
    %cst_107 = arith.constant 1.000000e+00 : f32
    %384 = vector.broadcast %cst_107 : f32 to vector<2x64xf32>
    %385 = arith.addf %384, %383 : vector<2x64xf32>
    %386 = arith.divf %384, %385 : vector<2x64xf32>
    %387 = vector.extract_strided_slice %386 {offsets = [0, 0], sizes = [2, 32], strides = [1, 1]} : vector<2x64xf32> to vector<2x32xf32>
    %388 = vector.extract_strided_slice %386 {offsets = [0, 32], sizes = [2, 32], strides = [1, 1]} : vector<2x64xf32> to vector<2x32xf32>
    %389 = vector.extract_strided_slice %376 {offsets = [0, 64], sizes = [2, 32], strides = [1, 1]} : vector<2x96xf32> to vector<2x32xf32>
    %390 = vector.extract_strided_slice %378 {offsets = [0, 64], sizes = [2, 32], strides = [1, 1]} : vector<2x96xf32> to vector<2x32xf32>
    %391 = vector.broadcast %22 : vector<1x32xf32> to vector<2x32xf32>
    %392 = arith.addf %390, %391 : vector<2x32xf32>
    %393 = arith.mulf %387, %392 : vector<2x32xf32>
    %394 = arith.addf %389, %393 : vector<2x32xf32>
    %395 = math.tanh %394 : vector<2x32xf32>
    %cst_108 = arith.constant 1.000000e+00 : f32
    %396 = vector.broadcast %cst_108 : f32 to vector<2x32xf32>
    %397 = arith.subf %396, %388 : vector<2x32xf32>
    %398 = arith.mulf %397, %395 : vector<2x32xf32>
    %399 = arith.mulf %388, %346 : vector<2x32xf32>
    %400 = arith.addf %398, %399 : vector<2x32xf32>
    %c12_109 = arith.constant 12 : index
    %c0_110 = arith.constant 0 : index
    %401 = vector.load %arg35[%c12_109, %c0_110] : memref<16x64xf32, #tpu.memory_space<vmem>>, vector<2x32xf32>
    tpu.vector_store %arg35[%c12_109, %c0_110], %375 {strides = array<i32>} : memref<16x64xf32, #tpu.memory_space<vmem>>, vector<2x32xf32>,
    %c2_111 = arith.constant 2 : index
    %c32_112 = arith.constant 32 : index
    %402 = vector.load %arg35[%c2_111, %c32_112] : memref<16x64xf32, #tpu.memory_space<vmem>>, vector<2x32xf32>
    tpu.vector_store %arg35[%c2_111, %c32_112], %400 {strides = array<i32>} : memref<16x64xf32, #tpu.memory_space<vmem>>, vector<2x32xf32>,
    %c14_113 = arith.constant 14 : index
    %c0_114 = arith.constant 0 : index
    %403 = vector.load %arg34[%c14_113, %c0_114] : memref<16x256xf32, #tpu.memory_space<vmem>>, vector<2x256xf32>
    %c0_115 = arith.constant 0 : index
    %c0_116 = arith.constant 0 : index
    %404 = vector.load %arg34[%c0_115, %c0_116] : memref<16x256xf32, #tpu.memory_space<vmem>>, vector<2x256xf32>
    %405 = vector.extract_strided_slice %403 {offsets = [0, 0], sizes = [2, 96], strides = [1, 1]} : vector<2x256xf32> to vector<2x96xf32>
    %406 = arith.truncf %375 : vector<2x32xf32> to vector<2x32xbf16>
    %cst_117 = arith.constant dense<0.000000e+00> : vector<2x96xf32>
    %407 = tpu.matmul %406, %16, %cst_117 {dimension_numbers = #tpu.dot_dimension_numbers<[1], [0], [0], [1], [0, 0, 1, 1], [], []>} : vector<2x32xbf16>, vector<32x96xbf16>, vector<2x96xf32> -> vector<2x96xf32>
    %408 = vector.extract_strided_slice %405 {offsets = [0, 0], sizes = [2, 64], strides = [1, 1]} : vector<2x96xf32> to vector<2x64xf32>
    %409 = vector.extract_strided_slice %407 {offsets = [0, 0], sizes = [2, 64], strides = [1, 1]} : vector<2x96xf32> to vector<2x64xf32>
    %410 = arith.addf %408, %409 : vector<2x64xf32>
    %411 = arith.negf %410 : vector<2x64xf32>
    %412 = math.exp %411 : vector<2x64xf32>
    %cst_118 = arith.constant 1.000000e+00 : f32
    %413 = vector.broadcast %cst_118 : f32 to vector<2x64xf32>
    %414 = arith.addf %413, %412 : vector<2x64xf32>
    %415 = arith.divf %413, %414 : vector<2x64xf32>
    %416 = vector.extract_strided_slice %415 {offsets = [0, 0], sizes = [2, 32], strides = [1, 1]} : vector<2x64xf32> to vector<2x32xf32>
    %417 = vector.extract_strided_slice %415 {offsets = [0, 32], sizes = [2, 32], strides = [1, 1]} : vector<2x64xf32> to vector<2x32xf32>
    %418 = vector.extract_strided_slice %405 {offsets = [0, 64], sizes = [2, 32], strides = [1, 1]} : vector<2x96xf32> to vector<2x32xf32>
    %419 = vector.extract_strided_slice %407 {offsets = [0, 64], sizes = [2, 32], strides = [1, 1]} : vector<2x96xf32> to vector<2x32xf32>
    %420 = vector.broadcast %20 : vector<1x32xf32> to vector<2x32xf32>
    %421 = arith.addf %419, %420 : vector<2x32xf32>
    %422 = arith.mulf %416, %421 : vector<2x32xf32>
    %423 = arith.addf %418, %422 : vector<2x32xf32>
    %424 = math.tanh %423 : vector<2x32xf32>
    %cst_119 = arith.constant 1.000000e+00 : f32
    %425 = vector.broadcast %cst_119 : f32 to vector<2x32xf32>
    %426 = arith.subf %425, %417 : vector<2x32xf32>
    %427 = arith.mulf %426, %424 : vector<2x32xf32>
    %428 = arith.mulf %417, %375 : vector<2x32xf32>
    %429 = arith.addf %427, %428 : vector<2x32xf32>
    %430 = vector.extract_strided_slice %404 {offsets = [0, 128], sizes = [2, 96], strides = [1, 1]} : vector<2x256xf32> to vector<2x96xf32>
    %431 = arith.truncf %400 : vector<2x32xf32> to vector<2x32xbf16>
    %cst_120 = arith.constant dense<0.000000e+00> : vector<2x96xf32>
    %432 = tpu.matmul %431, %18, %cst_120 {dimension_numbers = #tpu.dot_dimension_numbers<[1], [0], [0], [1], [0, 0, 1, 1], [], []>} : vector<2x32xbf16>, vector<32x96xbf16>, vector<2x96xf32> -> vector<2x96xf32>
    %433 = vector.extract_strided_slice %430 {offsets = [0, 0], sizes = [2, 64], strides = [1, 1]} : vector<2x96xf32> to vector<2x64xf32>
    %434 = vector.extract_strided_slice %432 {offsets = [0, 0], sizes = [2, 64], strides = [1, 1]} : vector<2x96xf32> to vector<2x64xf32>
    %435 = arith.addf %433, %434 : vector<2x64xf32>
    %436 = arith.negf %435 : vector<2x64xf32>
    %437 = math.exp %436 : vector<2x64xf32>
    %cst_121 = arith.constant 1.000000e+00 : f32
    %438 = vector.broadcast %cst_121 : f32 to vector<2x64xf32>
    %439 = arith.addf %438, %437 : vector<2x64xf32>
    %440 = arith.divf %438, %439 : vector<2x64xf32>
    %441 = vector.extract_strided_slice %440 {offsets = [0, 0], sizes = [2, 32], strides = [1, 1]} : vector<2x64xf32> to vector<2x32xf32>
    %442 = vector.extract_strided_slice %440 {offsets = [0, 32], sizes = [2, 32], strides = [1, 1]} : vector<2x64xf32> to vector<2x32xf32>
    %443 = vector.extract_strided_slice %430 {offsets = [0, 64], sizes = [2, 32], strides = [1, 1]} : vector<2x96xf32> to vector<2x32xf32>
    %444 = vector.extract_strided_slice %432 {offsets = [0, 64], sizes = [2, 32], strides = [1, 1]} : vector<2x96xf32> to vector<2x32xf32>
    %445 = vector.broadcast %22 : vector<1x32xf32> to vector<2x32xf32>
    %446 = arith.addf %444, %445 : vector<2x32xf32>
    %447 = arith.mulf %441, %446 : vector<2x32xf32>
    %448 = arith.addf %443, %447 : vector<2x32xf32>
    %449 = math.tanh %448 : vector<2x32xf32>
    %cst_122 = arith.constant 1.000000e+00 : f32
    %450 = vector.broadcast %cst_122 : f32 to vector<2x32xf32>
    %451 = arith.subf %450, %442 : vector<2x32xf32>
    %452 = arith.mulf %451, %449 : vector<2x32xf32>
    %453 = arith.mulf %442, %400 : vector<2x32xf32>
    %454 = arith.addf %452, %453 : vector<2x32xf32>
    %c14_123 = arith.constant 14 : index
    %c0_124 = arith.constant 0 : index
    %455 = vector.load %arg35[%c14_123, %c0_124] : memref<16x64xf32, #tpu.memory_space<vmem>>, vector<2x32xf32>
    tpu.vector_store %arg35[%c14_123, %c0_124], %429 {strides = array<i32>} : memref<16x64xf32, #tpu.memory_space<vmem>>, vector<2x32xf32>,
    %c0_125 = arith.constant 0 : index
    %c32_126 = arith.constant 32 : index
    %456 = vector.load %arg35[%c0_125, %c32_126] : memref<16x64xf32, #tpu.memory_space<vmem>>, vector<2x32xf32>
    tpu.vector_store %arg35[%c0_125, %c32_126], %454 {strides = array<i32>} : memref<16x64xf32, #tpu.memory_space<vmem>>, vector<2x32xf32>,
    %c0_127 = arith.constant 0 : index
    %c0_128 = arith.constant 0 : index
    %457 = vector.load %arg35[%c0_127, %c0_128] : memref<16x64xf32, #tpu.memory_space<vmem>>, vector<16x64xf32>
    %c0_129 = arith.constant 0 : index
    %c0_130 = arith.constant 0 : index
    %458 = vector.load %arg21[%c0_129, %c0_130] : memref<64x4xf32, #tpu.memory_space<vmem>>, vector<64x4xf32>
    %c0_131 = arith.constant 0 : index
    %c0_132 = arith.constant 0 : index
    %459 = vector.load %arg22[%c0_131, %c0_132] : memref<4x64xf32, #tpu.memory_space<vmem>>, vector<4x64xf32>
    %460 = arith.truncf %457 : vector<16x64xf32> to vector<16x64xbf16>
    %c0_133 = arith.constant 0 : index
    %c0_134 = arith.constant 0 : index
    %c0_135 = arith.constant 0 : index
    %461 = vector.load %arg9[%c0_133, %c0_134, %c0_135] : memref<2x64x384xbf16, #tpu.memory_space<vmem>>, vector<1x64x384xbf16>
    %462 = vector.shape_cast %461 : vector<1x64x384xbf16> to vector<64x384xbf16>
    %cst_136 = arith.constant dense<0.000000e+00> : vector<16x384xf32>
    %463 = tpu.matmul %460, %462, %cst_136 {dimension_numbers = #tpu.dot_dimension_numbers<[1], [0], [0], [1], [0, 0, 1, 1], [], []>} : vector<16x64xbf16>, vector<64x384xbf16>, vector<16x384xf32> -> vector<16x384xf32>
    %c0_137 = arith.constant 0 : index
    %c0_138 = arith.constant 0 : index
    %c0_139 = arith.constant 0 : index
    %464 = vector.load %arg10[%c0_137, %c0_138, %c0_139] : memref<2x1x384xf32, #tpu.memory_space<vmem>>, vector<1x1x384xf32>
    %465 = vector.shape_cast %464 : vector<1x1x384xf32> to vector<1x384xf32>
    %466 = vector.broadcast %465 : vector<1x384xf32> to vector<16x384xf32>
    %467 = arith.addf %463, %466 : vector<16x384xf32>
    %468 = vector.extract_strided_slice %467 {offsets = [0, 0], sizes = [16, 64], strides = [1, 1]} : vector<16x384xf32> to vector<16x64xf32>
    %cst_140 = arith.constant 2.500000e-01 : f32
    %469 = vector.broadcast %cst_140 : f32 to vector<16x64xf32>
    %470 = arith.mulf %468, %469 : vector<16x64xf32>
    %471 = vector.extract_strided_slice %467 {offsets = [0, 128], sizes = [16, 64], strides = [1, 1]} : vector<16x384xf32> to vector<16x64xf32>
    %472 = vector.extract_strided_slice %467 {offsets = [0, 256], sizes = [16, 64], strides = [1, 1]} : vector<16x384xf32> to vector<16x64xf32>
    %473 = vector.extract_strided_slice %467 {offsets = [0, 128], sizes = [16, 256], strides = [1, 1]} : vector<16x384xf32> to vector<16x256xf32>
    %c0_141 = arith.constant 0 : index
    %c0_142 = arith.constant 0 : index
    %c0_143 = arith.constant 0 : index
    %474 = vector.load %arg23[%c0_141, %c0_142, %c0_143] : memref<1x16x16xf32, #tpu.memory_space<vmem>>, vector<1x16x16xf32>
    %475 = vector.shape_cast %474 : vector<1x16x16xf32> to vector<16x16xf32>
    %cst_144 = arith.constant dense<0.000000e+00> : vector<16x256xf32>
    %476 = tpu.matmul %475, %473, %cst_144 {dimension_numbers = #tpu.dot_dimension_numbers<[1], [0], [0], [1], [0, 0, 1, 1], [], []>} : vector<16x16xf32>, vector<16x256xf32>, vector<16x256xf32> -> vector<16x256xf32>
    %477 = vector.extract_strided_slice %476 {offsets = [0, 0], sizes = [16, 64], strides = [1, 1]} : vector<16x256xf32> to vector<16x64xf32>
    %478 = vector.extract_strided_slice %476 {offsets = [0, 128], sizes = [16, 64], strides = [1, 1]} : vector<16x256xf32> to vector<16x64xf32>
    %479 = arith.mulf %470, %471 : vector<16x64xf32>
    %cst_145 = arith.constant dense<0.000000e+00> : vector<16x4xf32>
    %480 = tpu.matmul %479, %458, %cst_145 {dimension_numbers = #tpu.dot_dimension_numbers<[1], [0], [0], [1], [0, 0, 1, 1], [], []>} : vector<16x64xf32>, vector<64x4xf32>, vector<16x4xf32> -> vector<16x4xf32>
    %481 = arith.mulf %470, %477 : vector<16x64xf32>
    %cst_146 = arith.constant dense<0.000000e+00> : vector<16x4xf32>
    %482 = tpu.matmul %481, %458, %cst_146 {dimension_numbers = #tpu.dot_dimension_numbers<[1], [0], [0], [1], [0, 0, 1, 1], [], []>} : vector<16x64xf32>, vector<64x4xf32>, vector<16x4xf32> -> vector<16x4xf32>
    %483 = arith.maximumf %480, %482 : vector<16x4xf32>
    %484 = arith.subf %480, %483 : vector<16x4xf32>
    %485 = math.exp %484 : vector<16x4xf32>
    %486 = arith.subf %482, %483 : vector<16x4xf32>
    %487 = math.exp %486 : vector<16x4xf32>
    %488 = arith.addf %485, %487 : vector<16x4xf32>
    %489 = tpu.reciprocal %488 {approx = true} : vector<16x4xf32> -> vector<16x4xf32>
    %490 = arith.mulf %485, %489 : vector<16x4xf32>
    %cst_147 = arith.constant dense<0.000000e+00> : vector<16x64xf32>
    %491 = tpu.matmul %490, %459, %cst_147 {dimension_numbers = #tpu.dot_dimension_numbers<[1], [0], [0], [1], [0, 0, 1, 1], [], []>} : vector<16x4xf32>, vector<4x64xf32>, vector<16x64xf32> -> vector<16x64xf32>
    %492 = arith.mulf %491, %472 : vector<16x64xf32>
    %493 = arith.mulf %487, %489 : vector<16x4xf32>
    %cst_148 = arith.constant dense<0.000000e+00> : vector<16x64xf32>
    %494 = tpu.matmul %493, %459, %cst_148 {dimension_numbers = #tpu.dot_dimension_numbers<[1], [0], [0], [1], [0, 0, 1, 1], [], []>} : vector<16x4xf32>, vector<4x64xf32>, vector<16x64xf32> -> vector<16x64xf32>
    %495 = arith.mulf %494, %478 : vector<16x64xf32>
    %496 = arith.addf %492, %495 : vector<16x64xf32>
    %497 = arith.truncf %496 : vector<16x64xf32> to vector<16x64xbf16>
    %c0_149 = arith.constant 0 : index
    %c0_150 = arith.constant 0 : index
    %c0_151 = arith.constant 0 : index
    %498 = vector.load %arg11[%c0_149, %c0_150, %c0_151] : memref<2x64x64xbf16, #tpu.memory_space<vmem>>, vector<1x64x64xbf16>
    %499 = vector.shape_cast %498 : vector<1x64x64xbf16> to vector<64x64xbf16>
    %cst_152 = arith.constant dense<0.000000e+00> : vector<16x64xf32>
    %500 = tpu.matmul %497, %499, %cst_152 {dimension_numbers = #tpu.dot_dimension_numbers<[1], [0], [0], [1], [0, 0, 1, 1], [], []>} : vector<16x64xbf16>, vector<64x64xbf16>, vector<16x64xf32> -> vector<16x64xf32>
    %c0_153 = arith.constant 0 : index
    %c0_154 = arith.constant 0 : index
    %c0_155 = arith.constant 0 : index
    %501 = vector.load %arg12[%c0_153, %c0_154, %c0_155] : memref<2x1x64xf32, #tpu.memory_space<vmem>>, vector<1x1x64xf32>
    %502 = vector.shape_cast %501 : vector<1x1x64xf32> to vector<1x64xf32>
    %503 = vector.broadcast %502 : vector<1x64xf32> to vector<16x64xf32>
    %504 = arith.addf %500, %503 : vector<16x64xf32>
    %505 = arith.addf %457, %504 : vector<16x64xf32>
    %c0_156 = arith.constant 0 : index
    %c0_157 = arith.constant 0 : index
    %c0_158 = arith.constant 0 : index
    %506 = vector.load %arg13[%c0_156, %c0_157, %c0_158] : memref<2x1x64xf32, #tpu.memory_space<vmem>>, vector<1x1x64xf32>
    %507 = vector.shape_cast %506 : vector<1x1x64xf32> to vector<1x64xf32>
    %c0_159 = arith.constant 0 : index
    %c0_160 = arith.constant 0 : index
    %c0_161 = arith.constant 0 : index
    %508 = vector.load %arg14[%c0_159, %c0_160, %c0_161] : memref<2x1x64xf32, #tpu.memory_space<vmem>>, vector<1x1x64xf32>
    %509 = vector.shape_cast %508 : vector<1x1x64xf32> to vector<1x64xf32>
    %cst_162 = arith.constant dense<0.000000e+00> : vector<16xf32>
    %510 = vector.multi_reduction <add>, %505, %cst_162 [1] : vector<16x64xf32> to vector<16xf32>
    %511 = vector.shape_cast %510 : vector<16xf32> to vector<16x1xf32>
    %cst_163 = arith.constant 6.400000e+01 : f32
    %512 = vector.broadcast %cst_163 : f32 to vector<16x1xf32>
    %513 = arith.divf %511, %512 : vector<16x1xf32>
    %514 = vector.broadcast %513 : vector<16x1xf32> to vector<16x64xf32>
    %515 = arith.subf %505, %514 : vector<16x64xf32>
    %516 = arith.mulf %515, %515 : vector<16x64xf32>
    %cst_164 = arith.constant dense<0.000000e+00> : vector<16xf32>
    %517 = vector.multi_reduction <add>, %516, %cst_164 [1] : vector<16x64xf32> to vector<16xf32>
    %518 = vector.shape_cast %517 : vector<16xf32> to vector<16x1xf32>
    %cst_165 = arith.constant 6.400000e+01 : f32
    %519 = vector.broadcast %cst_165 : f32 to vector<16x1xf32>
    %520 = arith.divf %518, %519 : vector<16x1xf32>
    %521 = vector.broadcast %513 : vector<16x1xf32> to vector<16x64xf32>
    %522 = arith.subf %505, %521 : vector<16x64xf32>
    %cst_166 = arith.constant 9.99999974E-6 : f32
    %523 = vector.broadcast %cst_166 : f32 to vector<16x1xf32>
    %524 = arith.addf %520, %523 : vector<16x1xf32>
    %525 = math.rsqrt %524 : vector<16x1xf32>
    %526 = vector.broadcast %525 : vector<16x1xf32> to vector<16x64xf32>
    %527 = arith.mulf %522, %526 : vector<16x64xf32>
    %528 = vector.broadcast %507 : vector<1x64xf32> to vector<16x64xf32>
    %529 = arith.mulf %527, %528 : vector<16x64xf32>
    %530 = vector.broadcast %509 : vector<1x64xf32> to vector<16x64xf32>
    %531 = arith.addf %529, %530 : vector<16x64xf32>
    %532 = arith.truncf %531 : vector<16x64xf32> to vector<16x64xbf16>
    %c0_167 = arith.constant 0 : index
    %c0_168 = arith.constant 0 : index
    %c0_169 = arith.constant 0 : index
    %533 = vector.load %arg15[%c0_167, %c0_168, %c0_169] : memref<2x64x2048xbf16, #tpu.memory_space<vmem>>, vector<1x64x2048xbf16>
    %534 = vector.shape_cast %533 : vector<1x64x2048xbf16> to vector<64x2048xbf16>
    %cst_170 = arith.constant dense<0.000000e+00> : vector<16x2048xf32>
    %535 = tpu.matmul %532, %534, %cst_170 {dimension_numbers = #tpu.dot_dimension_numbers<[1], [0], [0], [1], [0, 0, 1, 1], [], []>} : vector<16x64xbf16>, vector<64x2048xbf16>, vector<16x2048xf32> -> vector<16x2048xf32>
    %c0_171 = arith.constant 0 : index
    %c0_172 = arith.constant 0 : index
    %c0_173 = arith.constant 0 : index
    %536 = vector.load %arg16[%c0_171, %c0_172, %c0_173] : memref<2x1x2048xf32, #tpu.memory_space<vmem>>, vector<1x1x2048xf32>
    %537 = vector.shape_cast %536 : vector<1x1x2048xf32> to vector<1x2048xf32>
    %538 = vector.broadcast %537 : vector<1x2048xf32> to vector<16x2048xf32>
    %539 = arith.addf %535, %538 : vector<16x2048xf32>
    %cst_174 = arith.constant 0.000000e+00 : f32
    %540 = vector.broadcast %cst_174 : f32 to vector<16x2048xf32>
    %541 = arith.maximumf %539, %540 : vector<16x2048xf32>
    %542 = arith.truncf %541 : vector<16x2048xf32> to vector<16x2048xbf16>
    %c0_175 = arith.constant 0 : index
    %c0_176 = arith.constant 0 : index
    %c0_177 = arith.constant 0 : index
    %543 = vector.load %arg17[%c0_175, %c0_176, %c0_177] : memref<2x2048x64xbf16, #tpu.memory_space<vmem>>, vector<1x2048x64xbf16>
    %544 = vector.shape_cast %543 : vector<1x2048x64xbf16> to vector<2048x64xbf16>
    %cst_178 = arith.constant dense<0.000000e+00> : vector<16x64xf32>
    %545 = tpu.matmul %542, %544, %cst_178 {dimension_numbers = #tpu.dot_dimension_numbers<[1], [0], [0], [1], [0, 0, 1, 1], [], []>} : vector<16x2048xbf16>, vector<2048x64xbf16>, vector<16x64xf32> -> vector<16x64xf32>
    %c0_179 = arith.constant 0 : index
    %c0_180 = arith.constant 0 : index
    %c0_181 = arith.constant 0 : index
    %546 = vector.load %arg18[%c0_179, %c0_180, %c0_181] : memref<2x1x64xf32, #tpu.memory_space<vmem>>, vector<1x1x64xf32>
    %547 = vector.shape_cast %546 : vector<1x1x64xf32> to vector<1x64xf32>
    %548 = vector.broadcast %547 : vector<1x64xf32> to vector<16x64xf32>
    %549 = arith.addf %545, %548 : vector<16x64xf32>
    %550 = arith.addf %531, %549 : vector<16x64xf32>
    %c0_182 = arith.constant 0 : index
    %c0_183 = arith.constant 0 : index
    %c0_184 = arith.constant 0 : index
    %551 = vector.load %arg19[%c0_182, %c0_183, %c0_184] : memref<2x1x64xf32, #tpu.memory_space<vmem>>, vector<1x1x64xf32>
    %552 = vector.shape_cast %551 : vector<1x1x64xf32> to vector<1x64xf32>
    %c0_185 = arith.constant 0 : index
    %c0_186 = arith.constant 0 : index
    %c0_187 = arith.constant 0 : index
    %553 = vector.load %arg20[%c0_185, %c0_186, %c0_187] : memref<2x1x64xf32, #tpu.memory_space<vmem>>, vector<1x1x64xf32>
    %554 = vector.shape_cast %553 : vector<1x1x64xf32> to vector<1x64xf32>
    %cst_188 = arith.constant dense<0.000000e+00> : vector<16xf32>
    %555 = vector.multi_reduction <add>, %550, %cst_188 [1] : vector<16x64xf32> to vector<16xf32>
    %556 = vector.shape_cast %555 : vector<16xf32> to vector<16x1xf32>
    %cst_189 = arith.constant 6.400000e+01 : f32
    %557 = vector.broadcast %cst_189 : f32 to vector<16x1xf32>
    %558 = arith.divf %556, %557 : vector<16x1xf32>
    %559 = vector.broadcast %558 : vector<16x1xf32> to vector<16x64xf32>
    %560 = arith.subf %550, %559 : vector<16x64xf32>
    %561 = arith.mulf %560, %560 : vector<16x64xf32>
    %cst_190 = arith.constant dense<0.000000e+00> : vector<16xf32>
    %562 = vector.multi_reduction <add>, %561, %cst_190 [1] : vector<16x64xf32> to vector<16xf32>
    %563 = vector.shape_cast %562 : vector<16xf32> to vector<16x1xf32>
    %cst_191 = arith.constant 6.400000e+01 : f32
    %564 = vector.broadcast %cst_191 : f32 to vector<16x1xf32>
    %565 = arith.divf %563, %564 : vector<16x1xf32>
    %566 = vector.broadcast %558 : vector<16x1xf32> to vector<16x64xf32>
    %567 = arith.subf %550, %566 : vector<16x64xf32>
    %cst_192 = arith.constant 9.99999974E-6 : f32
    %568 = vector.broadcast %cst_192 : f32 to vector<16x1xf32>
    %569 = arith.addf %565, %568 : vector<16x1xf32>
    %570 = math.rsqrt %569 : vector<16x1xf32>
    %571 = vector.broadcast %570 : vector<16x1xf32> to vector<16x64xf32>
    %572 = arith.mulf %567, %571 : vector<16x64xf32>
    %573 = vector.broadcast %552 : vector<1x64xf32> to vector<16x64xf32>
    %574 = arith.mulf %572, %573 : vector<16x64xf32>
    %575 = vector.broadcast %554 : vector<1x64xf32> to vector<16x64xf32>
    %576 = arith.addf %574, %575 : vector<16x64xf32>
    %577 = arith.truncf %576 : vector<16x64xf32> to vector<16x64xbf16>
    %c1_193 = arith.constant 1 : index
    %c0_194 = arith.constant 0 : index
    %c0_195 = arith.constant 0 : index
    %578 = vector.load %arg9[%c1_193, %c0_194, %c0_195] : memref<2x64x384xbf16, #tpu.memory_space<vmem>>, vector<1x64x384xbf16>
    %579 = vector.shape_cast %578 : vector<1x64x384xbf16> to vector<64x384xbf16>
    %cst_196 = arith.constant dense<0.000000e+00> : vector<16x384xf32>
    %580 = tpu.matmul %577, %579, %cst_196 {dimension_numbers = #tpu.dot_dimension_numbers<[1], [0], [0], [1], [0, 0, 1, 1], [], []>} : vector<16x64xbf16>, vector<64x384xbf16>, vector<16x384xf32> -> vector<16x384xf32>
    %c1_197 = arith.constant 1 : index
    %c0_198 = arith.constant 0 : index
    %c0_199 = arith.constant 0 : index
    %581 = vector.load %arg10[%c1_197, %c0_198, %c0_199] : memref<2x1x384xf32, #tpu.memory_space<vmem>>, vector<1x1x384xf32>
    %582 = vector.shape_cast %581 : vector<1x1x384xf32> to vector<1x384xf32>
    %583 = vector.broadcast %582 : vector<1x384xf32> to vector<16x384xf32>
    %584 = arith.addf %580, %583 : vector<16x384xf32>
    %585 = vector.extract_strided_slice %584 {offsets = [0, 0], sizes = [16, 64], strides = [1, 1]} : vector<16x384xf32> to vector<16x64xf32>
    %cst_200 = arith.constant 2.500000e-01 : f32
    %586 = vector.broadcast %cst_200 : f32 to vector<16x64xf32>
    %587 = arith.mulf %585, %586 : vector<16x64xf32>
    %588 = vector.extract_strided_slice %584 {offsets = [0, 128], sizes = [16, 64], strides = [1, 1]} : vector<16x384xf32> to vector<16x64xf32>
    %589 = vector.extract_strided_slice %584 {offsets = [0, 256], sizes = [16, 64], strides = [1, 1]} : vector<16x384xf32> to vector<16x64xf32>
    %590 = vector.extract_strided_slice %584 {offsets = [0, 128], sizes = [16, 256], strides = [1, 1]} : vector<16x384xf32> to vector<16x256xf32>
    %c0_201 = arith.constant 0 : index
    %c0_202 = arith.constant 0 : index
    %c0_203 = arith.constant 0 : index
    %591 = vector.load %arg23[%c0_201, %c0_202, %c0_203] : memref<1x16x16xf32, #tpu.memory_space<vmem>>, vector<1x16x16xf32>
    %592 = vector.shape_cast %591 : vector<1x16x16xf32> to vector<16x16xf32>
    %cst_204 = arith.constant dense<0.000000e+00> : vector<16x256xf32>
    %593 = tpu.matmul %592, %590, %cst_204 {dimension_numbers = #tpu.dot_dimension_numbers<[1], [0], [0], [1], [0, 0, 1, 1], [], []>} : vector<16x16xf32>, vector<16x256xf32>, vector<16x256xf32> -> vector<16x256xf32>
    %594 = vector.extract_strided_slice %593 {offsets = [0, 0], sizes = [16, 64], strides = [1, 1]} : vector<16x256xf32> to vector<16x64xf32>
    %595 = vector.extract_strided_slice %593 {offsets = [0, 128], sizes = [16, 64], strides = [1, 1]} : vector<16x256xf32> to vector<16x64xf32>
    %596 = arith.mulf %587, %588 : vector<16x64xf32>
    %cst_205 = arith.constant dense<0.000000e+00> : vector<16x4xf32>
    %597 = tpu.matmul %596, %458, %cst_205 {dimension_numbers = #tpu.dot_dimension_numbers<[1], [0], [0], [1], [0, 0, 1, 1], [], []>} : vector<16x64xf32>, vector<64x4xf32>, vector<16x4xf32> -> vector<16x4xf32>
    %598 = arith.mulf %587, %594 : vector<16x64xf32>
    %cst_206 = arith.constant dense<0.000000e+00> : vector<16x4xf32>
    %599 = tpu.matmul %598, %458, %cst_206 {dimension_numbers = #tpu.dot_dimension_numbers<[1], [0], [0], [1], [0, 0, 1, 1], [], []>} : vector<16x64xf32>, vector<64x4xf32>, vector<16x4xf32> -> vector<16x4xf32>
    %600 = arith.maximumf %597, %599 : vector<16x4xf32>
    %601 = arith.subf %597, %600 : vector<16x4xf32>
    %602 = math.exp %601 : vector<16x4xf32>
    %603 = arith.subf %599, %600 : vector<16x4xf32>
    %604 = math.exp %603 : vector<16x4xf32>
    %605 = arith.addf %602, %604 : vector<16x4xf32>
    %606 = tpu.reciprocal %605 {approx = true} : vector<16x4xf32> -> vector<16x4xf32>
    %607 = arith.mulf %602, %606 : vector<16x4xf32>
    %cst_207 = arith.constant dense<0.000000e+00> : vector<16x64xf32>
    %608 = tpu.matmul %607, %459, %cst_207 {dimension_numbers = #tpu.dot_dimension_numbers<[1], [0], [0], [1], [0, 0, 1, 1], [], []>} : vector<16x4xf32>, vector<4x64xf32>, vector<16x64xf32> -> vector<16x64xf32>
    %609 = arith.mulf %608, %589 : vector<16x64xf32>
    %610 = arith.mulf %604, %606 : vector<16x4xf32>
    %cst_208 = arith.constant dense<0.000000e+00> : vector<16x64xf32>
    %611 = tpu.matmul %610, %459, %cst_208 {dimension_numbers = #tpu.dot_dimension_numbers<[1], [0], [0], [1], [0, 0, 1, 1], [], []>} : vector<16x4xf32>, vector<4x64xf32>, vector<16x64xf32> -> vector<16x64xf32>
    %612 = arith.mulf %611, %595 : vector<16x64xf32>
    %613 = arith.addf %609, %612 : vector<16x64xf32>
    %614 = arith.truncf %613 : vector<16x64xf32> to vector<16x64xbf16>
    %c1_209 = arith.constant 1 : index
    %c0_210 = arith.constant 0 : index
    %c0_211 = arith.constant 0 : index
    %615 = vector.load %arg11[%c1_209, %c0_210, %c0_211] : memref<2x64x64xbf16, #tpu.memory_space<vmem>>, vector<1x64x64xbf16>
    %616 = vector.shape_cast %615 : vector<1x64x64xbf16> to vector<64x64xbf16>
    %cst_212 = arith.constant dense<0.000000e+00> : vector<16x64xf32>
    %617 = tpu.matmul %614, %616, %cst_212 {dimension_numbers = #tpu.dot_dimension_numbers<[1], [0], [0], [1], [0, 0, 1, 1], [], []>} : vector<16x64xbf16>, vector<64x64xbf16>, vector<16x64xf32> -> vector<16x64xf32>
    %c1_213 = arith.constant 1 : index
    %c0_214 = arith.constant 0 : index
    %c0_215 = arith.constant 0 : index
    %618 = vector.load %arg12[%c1_213, %c0_214, %c0_215] : memref<2x1x64xf32, #tpu.memory_space<vmem>>, vector<1x1x64xf32>
    %619 = vector.shape_cast %618 : vector<1x1x64xf32> to vector<1x64xf32>
    %620 = vector.broadcast %619 : vector<1x64xf32> to vector<16x64xf32>
    %621 = arith.addf %617, %620 : vector<16x64xf32>
    %622 = arith.addf %576, %621 : vector<16x64xf32>
    %c1_216 = arith.constant 1 : index
    %c0_217 = arith.constant 0 : index
    %c0_218 = arith.constant 0 : index
    %623 = vector.load %arg13[%c1_216, %c0_217, %c0_218] : memref<2x1x64xf32, #tpu.memory_space<vmem>>, vector<1x1x64xf32>
    %624 = vector.shape_cast %623 : vector<1x1x64xf32> to vector<1x64xf32>
    %c1_219 = arith.constant 1 : index
    %c0_220 = arith.constant 0 : index
    %c0_221 = arith.constant 0 : index
    %625 = vector.load %arg14[%c1_219, %c0_220, %c0_221] : memref<2x1x64xf32, #tpu.memory_space<vmem>>, vector<1x1x64xf32>
    %626 = vector.shape_cast %625 : vector<1x1x64xf32> to vector<1x64xf32>
    %cst_222 = arith.constant dense<0.000000e+00> : vector<16xf32>
    %627 = vector.multi_reduction <add>, %622, %cst_222 [1] : vector<16x64xf32> to vector<16xf32>
    %628 = vector.shape_cast %627 : vector<16xf32> to vector<16x1xf32>
    %cst_223 = arith.constant 6.400000e+01 : f32
    %629 = vector.broadcast %cst_223 : f32 to vector<16x1xf32>
    %630 = arith.divf %628, %629 : vector<16x1xf32>
    %631 = vector.broadcast %630 : vector<16x1xf32> to vector<16x64xf32>
    %632 = arith.subf %622, %631 : vector<16x64xf32>
    %633 = arith.mulf %632, %632 : vector<16x64xf32>
    %cst_224 = arith.constant dense<0.000000e+00> : vector<16xf32>
    %634 = vector.multi_reduction <add>, %633, %cst_224 [1] : vector<16x64xf32> to vector<16xf32>
    %635 = vector.shape_cast %634 : vector<16xf32> to vector<16x1xf32>
    %cst_225 = arith.constant 6.400000e+01 : f32
    %636 = vector.broadcast %cst_225 : f32 to vector<16x1xf32>
    %637 = arith.divf %635, %636 : vector<16x1xf32>
    %638 = vector.broadcast %630 : vector<16x1xf32> to vector<16x64xf32>
    %639 = arith.subf %622, %638 : vector<16x64xf32>
    %cst_226 = arith.constant 9.99999974E-6 : f32
    %640 = vector.broadcast %cst_226 : f32 to vector<16x1xf32>
    %641 = arith.addf %637, %640 : vector<16x1xf32>
    %642 = math.rsqrt %641 : vector<16x1xf32>
    %643 = vector.broadcast %642 : vector<16x1xf32> to vector<16x64xf32>
    %644 = arith.mulf %639, %643 : vector<16x64xf32>
    %645 = vector.broadcast %624 : vector<1x64xf32> to vector<16x64xf32>
    %646 = arith.mulf %644, %645 : vector<16x64xf32>
    %647 = vector.broadcast %626 : vector<1x64xf32> to vector<16x64xf32>
    %648 = arith.addf %646, %647 : vector<16x64xf32>
    %649 = arith.truncf %648 : vector<16x64xf32> to vector<16x64xbf16>
    %c1_227 = arith.constant 1 : index
    %c0_228 = arith.constant 0 : index
    %c0_229 = arith.constant 0 : index
    %650 = vector.load %arg15[%c1_227, %c0_228, %c0_229] : memref<2x64x2048xbf16, #tpu.memory_space<vmem>>, vector<1x64x2048xbf16>
    %651 = vector.shape_cast %650 : vector<1x64x2048xbf16> to vector<64x2048xbf16>
    %cst_230 = arith.constant dense<0.000000e+00> : vector<16x2048xf32>
    %652 = tpu.matmul %649, %651, %cst_230 {dimension_numbers = #tpu.dot_dimension_numbers<[1], [0], [0], [1], [0, 0, 1, 1], [], []>} : vector<16x64xbf16>, vector<64x2048xbf16>, vector<16x2048xf32> -> vector<16x2048xf32>
    %c1_231 = arith.constant 1 : index
    %c0_232 = arith.constant 0 : index
    %c0_233 = arith.constant 0 : index
    %653 = vector.load %arg16[%c1_231, %c0_232, %c0_233] : memref<2x1x2048xf32, #tpu.memory_space<vmem>>, vector<1x1x2048xf32>
    %654 = vector.shape_cast %653 : vector<1x1x2048xf32> to vector<1x2048xf32>
    %655 = vector.broadcast %654 : vector<1x2048xf32> to vector<16x2048xf32>
    %656 = arith.addf %652, %655 : vector<16x2048xf32>
    %cst_234 = arith.constant 0.000000e+00 : f32
    %657 = vector.broadcast %cst_234 : f32 to vector<16x2048xf32>
    %658 = arith.maximumf %656, %657 : vector<16x2048xf32>
    %659 = arith.truncf %658 : vector<16x2048xf32> to vector<16x2048xbf16>
    %c1_235 = arith.constant 1 : index
    %c0_236 = arith.constant 0 : index
    %c0_237 = arith.constant 0 : index
    %660 = vector.load %arg17[%c1_235, %c0_236, %c0_237] : memref<2x2048x64xbf16, #tpu.memory_space<vmem>>, vector<1x2048x64xbf16>
    %661 = vector.shape_cast %660 : vector<1x2048x64xbf16> to vector<2048x64xbf16>
    %cst_238 = arith.constant dense<0.000000e+00> : vector<16x64xf32>
    %662 = tpu.matmul %659, %661, %cst_238 {dimension_numbers = #tpu.dot_dimension_numbers<[1], [0], [0], [1], [0, 0, 1, 1], [], []>} : vector<16x2048xbf16>, vector<2048x64xbf16>, vector<16x64xf32> -> vector<16x64xf32>
    %c1_239 = arith.constant 1 : index
    %c0_240 = arith.constant 0 : index
    %c0_241 = arith.constant 0 : index
    %663 = vector.load %arg18[%c1_239, %c0_240, %c0_241] : memref<2x1x64xf32, #tpu.memory_space<vmem>>, vector<1x1x64xf32>
    %664 = vector.shape_cast %663 : vector<1x1x64xf32> to vector<1x64xf32>
    %665 = vector.broadcast %664 : vector<1x64xf32> to vector<16x64xf32>
    %666 = arith.addf %662, %665 : vector<16x64xf32>
    %667 = arith.addf %648, %666 : vector<16x64xf32>
    %c1_242 = arith.constant 1 : index
    %c0_243 = arith.constant 0 : index
    %c0_244 = arith.constant 0 : index
    %668 = vector.load %arg19[%c1_242, %c0_243, %c0_244] : memref<2x1x64xf32, #tpu.memory_space<vmem>>, vector<1x1x64xf32>
    %669 = vector.shape_cast %668 : vector<1x1x64xf32> to vector<1x64xf32>
    %c1_245 = arith.constant 1 : index
    %c0_246 = arith.constant 0 : index
    %c0_247 = arith.constant 0 : index
    %670 = vector.load %arg20[%c1_245, %c0_246, %c0_247] : memref<2x1x64xf32, #tpu.memory_space<vmem>>, vector<1x1x64xf32>
    %671 = vector.shape_cast %670 : vector<1x1x64xf32> to vector<1x64xf32>
    %cst_248 = arith.constant dense<0.000000e+00> : vector<16xf32>
    %672 = vector.multi_reduction <add>, %667, %cst_248 [1] : vector<16x64xf32> to vector<16xf32>
    %673 = vector.shape_cast %672 : vector<16xf32> to vector<16x1xf32>
    %cst_249 = arith.constant 6.400000e+01 : f32
    %674 = vector.broadcast %cst_249 : f32 to vector<16x1xf32>
    %675 = arith.divf %673, %674 : vector<16x1xf32>
    %676 = vector.broadcast %675 : vector<16x1xf32> to vector<16x64xf32>
    %677 = arith.subf %667, %676 : vector<16x64xf32>
    %678 = arith.mulf %677, %677 : vector<16x64xf32>
    %cst_250 = arith.constant dense<0.000000e+00> : vector<16xf32>
    %679 = vector.multi_reduction <add>, %678, %cst_250 [1] : vector<16x64xf32> to vector<16xf32>
    %680 = vector.shape_cast %679 : vector<16xf32> to vector<16x1xf32>
    %cst_251 = arith.constant 6.400000e+01 : f32
    %681 = vector.broadcast %cst_251 : f32 to vector<16x1xf32>
    %682 = arith.divf %680, %681 : vector<16x1xf32>
    %683 = vector.broadcast %675 : vector<16x1xf32> to vector<16x64xf32>
    %684 = arith.subf %667, %683 : vector<16x64xf32>
    %cst_252 = arith.constant 9.99999974E-6 : f32
    %685 = vector.broadcast %cst_252 : f32 to vector<16x1xf32>
    %686 = arith.addf %682, %685 : vector<16x1xf32>
    %687 = math.rsqrt %686 : vector<16x1xf32>
    %688 = vector.broadcast %687 : vector<16x1xf32> to vector<16x64xf32>
    %689 = arith.mulf %684, %688 : vector<16x64xf32>
    %690 = vector.broadcast %669 : vector<1x64xf32> to vector<16x64xf32>
    %691 = arith.mulf %689, %690 : vector<16x64xf32>
    %692 = vector.broadcast %671 : vector<1x64xf32> to vector<16x64xf32>
    %693 = arith.addf %691, %692 : vector<16x64xf32>
    %c0_253 = arith.constant 0 : index
    %c0_254 = arith.constant 0 : index
    %694 = vector.load %arg1[%c0_253, %c0_254] : memref<16x1xi32, #tpu.memory_space<vmem>>, vector<16x1xi32>
    %c0_255 = arith.constant 0 : index
    %c0_256 = arith.constant 0 : index
    %695 = vector.load %arg2[%c0_255, %c0_256] : memref<16x1xi32, #tpu.memory_space<vmem>>, vector<16x1xi32>
    %696 = tpu.iota {dimensions = array<i32: 1>} : vector<16x10xi32>
    %697 = vector.broadcast %694 : vector<16x1xi32> to vector<16x10xi32>
    %698 = arith.cmpi eq, %696, %697 : vector<16x10xi32>
    %699 = arith.extui %698 : vector<16x10xi1> to vector<16x10xi32>
    %700 = arith.sitofp %699 : vector<16x10xi32> to vector<16x10xf32>
    %c0_257 = arith.constant 0 : index
    %c0_258 = arith.constant 0 : index
    %701 = vector.load %arg4[%c0_257, %c0_258] : memref<10x32xf32, #tpu.memory_space<vmem>>, vector<10x32xf32>
    %cst_259 = arith.constant dense<0.000000e+00> : vector<16x32xf32>
    %702 = tpu.matmul %700, %701, %cst_259 {dimension_numbers = #tpu.dot_dimension_numbers<[1], [0], [0], [1], [0, 0, 1, 1], [], []>} : vector<16x10xf32>, vector<10x32xf32>, vector<16x32xf32> -> vector<16x32xf32>
    %703 = arith.truncf %693 : vector<16x64xf32> to vector<16x64xbf16>
    %c0_260 = arith.constant 0 : index
    %c0_261 = arith.constant 0 : index
    %704 = vector.load %arg24[%c0_260, %c0_261] : memref<64x128xbf16, #tpu.memory_space<vmem>>, vector<64x128xbf16>
    %cst_262 = arith.constant dense<0.000000e+00> : vector<16x128xf32>
    %705 = tpu.matmul %703, %704, %cst_262 {dimension_numbers = #tpu.dot_dimension_numbers<[1], [0], [0], [1], [0, 0, 1, 1], [], []>} : vector<16x64xbf16>, vector<64x128xbf16>, vector<16x128xf32> -> vector<16x128xf32>
    %c0_263 = arith.constant 0 : index
    %c0_264 = arith.constant 0 : index
    %706 = vector.load %arg25[%c0_263, %c0_264] : memref<1x128xf32, #tpu.memory_space<vmem>>, vector<1x128xf32>
    %707 = vector.broadcast %706 : vector<1x128xf32> to vector<16x128xf32>
    %708 = arith.addf %705, %707 : vector<16x128xf32>
    %cst_265 = arith.constant 0.000000e+00 : f32
    %709 = vector.broadcast %cst_265 : f32 to vector<16x128xf32>
    %710 = arith.maximumf %708, %709 : vector<16x128xf32>
    %711 = arith.truncf %710 : vector<16x128xf32> to vector<16x128xbf16>
    %c0_266 = arith.constant 0 : index
    %c0_267 = arith.constant 0 : index
    %712 = vector.load %arg26[%c0_266, %c0_267] : memref<128x128xbf16, #tpu.memory_space<vmem>>, vector<128x128xbf16>
    %cst_268 = arith.constant dense<0.000000e+00> : vector<16x128xf32>
    %713 = tpu.matmul %711, %712, %cst_268 {dimension_numbers = #tpu.dot_dimension_numbers<[1], [0], [0], [1], [0, 0, 1, 1], [], []>} : vector<16x128xbf16>, vector<128x128xbf16>, vector<16x128xf32> -> vector<16x128xf32>
    %c0_269 = arith.constant 0 : index
    %c0_270 = arith.constant 0 : index
    %714 = vector.load %arg27[%c0_269, %c0_270] : memref<1x128xf32, #tpu.memory_space<vmem>>, vector<1x128xf32>
    %715 = vector.broadcast %714 : vector<1x128xf32> to vector<16x128xf32>
    %716 = arith.addf %713, %715 : vector<16x128xf32>
    %c0_271 = arith.constant 0 : index
    %c0_272 = arith.constant 0 : index
    %717 = vector.load %arg28[%c0_271, %c0_272] : memref<64x128xbf16, #tpu.memory_space<vmem>>, vector<64x128xbf16>
    %cst_273 = arith.constant dense<0.000000e+00> : vector<16x128xf32>
    %718 = tpu.matmul %703, %717, %cst_273 {dimension_numbers = #tpu.dot_dimension_numbers<[1], [0], [0], [1], [0, 0, 1, 1], [], []>} : vector<16x64xbf16>, vector<64x128xbf16>, vector<16x128xf32> -> vector<16x128xf32>
    %719 = arith.truncf %702 : vector<16x32xf32> to vector<16x32xbf16>
    %c0_274 = arith.constant 0 : index
    %c0_275 = arith.constant 0 : index
    %720 = vector.load %arg29[%c0_274, %c0_275] : memref<32x128xbf16, #tpu.memory_space<vmem>>, vector<32x128xbf16>
    %cst_276 = arith.constant dense<0.000000e+00> : vector<16x128xf32>
    %721 = tpu.matmul %719, %720, %cst_276 {dimension_numbers = #tpu.dot_dimension_numbers<[1], [0], [0], [1], [0, 0, 1, 1], [], []>} : vector<16x32xbf16>, vector<32x128xbf16>, vector<16x128xf32> -> vector<16x128xf32>
    %722 = arith.addf %718, %721 : vector<16x128xf32>
    %c0_277 = arith.constant 0 : index
    %c0_278 = arith.constant 0 : index
    %723 = vector.load %arg30[%c0_277, %c0_278] : memref<1x128xf32, #tpu.memory_space<vmem>>, vector<1x128xf32>
    %724 = vector.broadcast %723 : vector<1x128xf32> to vector<16x128xf32>
    %725 = arith.addf %722, %724 : vector<16x128xf32>
    %cst_279 = arith.constant 0.000000e+00 : f32
    %726 = vector.broadcast %cst_279 : f32 to vector<16x128xf32>
    %727 = arith.maximumf %725, %726 : vector<16x128xf32>
    %728 = arith.truncf %727 : vector<16x128xf32> to vector<16x128xbf16>
    %c0_280 = arith.constant 0 : index
    %c0_281 = arith.constant 0 : index
    %729 = vector.load %arg31[%c0_280, %c0_281] : memref<128x128xbf16, #tpu.memory_space<vmem>>, vector<128x128xbf16>
    %cst_282 = arith.constant dense<0.000000e+00> : vector<16x128xf32>
    %730 = tpu.matmul %728, %729, %cst_282 {dimension_numbers = #tpu.dot_dimension_numbers<[1], [0], [0], [1], [0, 0, 1, 1], [], []>} : vector<16x128xbf16>, vector<128x128xbf16>, vector<16x128xf32> -> vector<16x128xf32>
    %c0_283 = arith.constant 0 : index
    %c0_284 = arith.constant 0 : index
    %731 = vector.load %arg32[%c0_283, %c0_284] : memref<1x128xf32, #tpu.memory_space<vmem>>, vector<1x128xf32>
    %732 = vector.broadcast %731 : vector<1x128xf32> to vector<16x128xf32>
    %733 = arith.addf %730, %732 : vector<16x128xf32>
    %cst_285 = arith.constant dense<0xFF800000> : vector<16xf32>
    %734 = vector.multi_reduction <maximumf>, %716, %cst_285 [1] : vector<16x128xf32> to vector<16xf32>
    %735 = vector.shape_cast %734 : vector<16xf32> to vector<16x1xf32>
    %736 = vector.broadcast %735 : vector<16x1xf32> to vector<16x128xf32>
    %737 = arith.subf %716, %736 : vector<16x128xf32>
    %738 = math.exp %737 : vector<16x128xf32>
    %cst_286 = arith.constant dense<0.000000e+00> : vector<16xf32>
    %739 = vector.multi_reduction <add>, %738, %cst_286 [1] : vector<16x128xf32> to vector<16xf32>
    %740 = vector.shape_cast %739 : vector<16xf32> to vector<16x1xf32>
    %741 = math.log %740 : vector<16x1xf32>
    %742 = arith.addf %741, %735 : vector<16x1xf32>
    %743 = tpu.iota {dimensions = array<i32: 1>} : vector<16x128xi32>
    %744 = vector.broadcast %694 : vector<16x1xi32> to vector<16x128xi32>
    %745 = arith.cmpi eq, %743, %744 : vector<16x128xi32>
    %cst_287 = arith.constant 0.000000e+00 : f32
    %746 = vector.broadcast %cst_287 : f32 to vector<16x128xf32>
    %747 = arith.select %745, %716, %746 : vector<16x128xi1>, vector<16x128xf32>
    %cst_288 = arith.constant dense<0.000000e+00> : vector<16xf32>
    %748 = vector.multi_reduction <add>, %747, %cst_288 [1] : vector<16x128xf32> to vector<16xf32>
    %749 = vector.shape_cast %748 : vector<16xf32> to vector<16x1xf32>
    %750 = arith.subf %742, %749 : vector<16x1xf32>
    %cst_289 = arith.constant dense<0xFF800000> : vector<16xf32>
    %751 = vector.multi_reduction <maximumf>, %733, %cst_289 [1] : vector<16x128xf32> to vector<16xf32>
    %752 = vector.shape_cast %751 : vector<16xf32> to vector<16x1xf32>
    %753 = vector.broadcast %752 : vector<16x1xf32> to vector<16x128xf32>
    %754 = arith.subf %733, %753 : vector<16x128xf32>
    %755 = math.exp %754 : vector<16x128xf32>
    %cst_290 = arith.constant dense<0.000000e+00> : vector<16xf32>
    %756 = vector.multi_reduction <add>, %755, %cst_290 [1] : vector<16x128xf32> to vector<16xf32>
    %757 = vector.shape_cast %756 : vector<16xf32> to vector<16x1xf32>
    %758 = math.log %757 : vector<16x1xf32>
    %759 = arith.addf %758, %752 : vector<16x1xf32>
    %760 = tpu.iota {dimensions = array<i32: 1>} : vector<16x128xi32>
    %761 = vector.broadcast %695 : vector<16x1xi32> to vector<16x128xi32>
    %762 = arith.cmpi eq, %760, %761 : vector<16x128xi32>
    %cst_291 = arith.constant 0.000000e+00 : f32
    %763 = vector.broadcast %cst_291 : f32 to vector<16x128xf32>
    %764 = arith.select %762, %733, %763 : vector<16x128xi1>, vector<16x128xf32>
    %cst_292 = arith.constant dense<0.000000e+00> : vector<16xf32>
    %765 = vector.multi_reduction <add>, %764, %cst_292 [1] : vector<16x128xf32> to vector<16xf32>
    %766 = vector.shape_cast %765 : vector<16xf32> to vector<16x1xf32>
    %767 = arith.subf %759, %766 : vector<16x1xf32>
    %768 = tpu.iota {dimensions = array<i32: 1>} : vector<16x128xi32>
    %c0_i32 = arith.constant 0 : i32
    %769 = vector.broadcast %c0_i32 : i32 to vector<16x128xi32>
    %770 = arith.cmpi eq, %768, %769 : vector<16x128xi32>
    %cst_293 = arith.constant 0.000000e+00 : f32
    %771 = vector.shape_cast %750 : vector<16x1xf32> to vector<16x1xf32>
    %772 = vector.broadcast %771 : vector<16x1xf32> to vector<16x128xf32>
    %773 = vector.broadcast %cst_293 : f32 to vector<16x128xf32>
    %774 = arith.select %770, %772, %773 : vector<16x128xi1>, vector<16x128xf32>
    %c1_i32 = arith.constant 1 : i32
    %775 = vector.broadcast %c1_i32 : i32 to vector<16x128xi32>
    %776 = arith.cmpi eq, %768, %775 : vector<16x128xi32>
    %cst_294 = arith.constant 0.000000e+00 : f32
    %777 = vector.shape_cast %767 : vector<16x1xf32> to vector<16x1xf32>
    %778 = vector.broadcast %777 : vector<16x1xf32> to vector<16x128xf32>
    %779 = vector.broadcast %cst_294 : f32 to vector<16x128xf32>
    %780 = arith.select %776, %778, %779 : vector<16x128xi1>, vector<16x128xf32>
    %781 = arith.addf %774, %780 : vector<16x128xf32>
    %782 = tpu.concatenate %716, %733, %781 in 1 : vector<16x128xf32>, vector<16x128xf32>, vector<16x128xf32> -> vector<16x384xf32>
    %c0_295 = arith.constant 0 : index
    %c0_296 = arith.constant 0 : index
    %783 = vector.load %arg33[%c0_295, %c0_296] : memref<16x384xf32, #tpu.memory_space<vmem>>, vector<16x384xf32>
    tpu.vector_store %arg33[%c0_295, %c0_296], %782 {strides = array<i32>} : memref<16x384xf32, #tpu.memory_space<vmem>>, vector<16x384xf32>,
    return
  }
}

</mosaic_0001>

<llo_original>
// kernel: forward.1
$region0: #{forward.1}
  #allocation0 [shape = 'u32[]', space=smem, size = 0x4, offset = 0x4, fixed_abs, tag = 'smem constant byte address 0x4 - core index']
  #allocation1 [shape = 'u32[144,128]{1,0:T(1,128)}', space=vmem, size = 0x12000, scoped, tag = 'internal scratch']
  #allocation2 [shape = 'f32[16,256]{1,0:T(8,128)}', space=vmem, size = 0x4000, scoped, tag = 'scratch operand']
  #allocation3 [shape = 'f32[16,64]{1,0:T(8,128)}', space=vmem, size = 0x2000, scoped, tag = 'scratch operand']
  %s0 = inlined_call_operand.smem [shape: u32[34], index: -1, kind: input, shape index: {}]
  %s1 = sld [smem:[%s0]]
  %s2 = scalar_lea.smem %s0, 1
  %s3 = sld [smem:[%s2]]
  %s4 = scalar_lea.smem %s0, 2
  %s5 = sld [smem:[%s4]]
  %s6 = scalar_lea.smem %s0, 3
  %s7 = sld [smem:[%s6]]
  %s8 = scalar_lea.smem %s0, 4
  %s9 = sld [smem:[%s8]]
  %s10 = scalar_lea.smem %s0, 5
  %s11 = sld [smem:[%s10]]
  %s12 = scalar_lea.smem %s0, 6
  %s13 = sld [smem:[%s12]]
  %s14 = scalar_lea.smem %s0, 7
  %s15 = sld [smem:[%s14]]
  %s16 = scalar_lea.smem %s0, 8
  %s17 = sld [smem:[%s16]]
  %s18 = scalar_lea.smem %s0, 9
  %s19 = sld [smem:[%s18]]
  %s20 = scalar_lea.smem %s0, 10
  %s21 = sld [smem:[%s20]]
  %s22 = scalar_lea.smem %s0, 11
  %s23 = sld [smem:[%s22]]
  %s24 = scalar_lea.smem %s0, 12
  %s25 = sld [smem:[%s24]]
  %s26 = scalar_lea.smem %s0, 13
  %s27 = sld [smem:[%s26]]
  %s28 = scalar_lea.smem %s0, 14
  %s29 = sld [smem:[%s28]]
  %s30 = scalar_lea.smem %s0, 15
  %s31 = sld [smem:[%s30]]
  %s32 = scalar_lea.smem %s0, 16
  %s33 = sld [smem:[%s32]]
  %s34 = scalar_lea.smem %s0, 17
  %s35 = sld [smem:[%s34]]
  %s36 = scalar_lea.smem %s0, 18
  %s37 = sld [smem:[%s36]]
  %s38 = scalar_lea.smem %s0, 19
  %s39 = sld [smem:[%s38]]
  %s40 = scalar_lea.smem %s0, 20
  %s41 = sld [smem:[%s40]]
  %s42 = scalar_lea.smem %s0, 21
  %s43 = sld [smem:[%s42]]
  %s44 = scalar_lea.smem %s0, 22
  %s45 = sld [smem:[%s44]]
  %s46 = scalar_lea.smem %s0, 23
  %s47 = sld [smem:[%s46]]
  %s48 = scalar_lea.smem %s0, 24
  %s49 = sld [smem:[%s48]]
  %s50 = scalar_lea.smem %s0, 25
  %s51 = sld [smem:[%s50]]
  %s52 = scalar_lea.smem %s0, 26
  %s53 = sld [smem:[%s52]]
  %s54 = scalar_lea.smem %s0, 27
  %s55 = sld [smem:[%s54]]
  %s56 = scalar_lea.smem %s0, 28
  %s57 = sld [smem:[%s56]]
  %s58 = scalar_lea.smem %s0, 29
  %s59 = sld [smem:[%s58]]
  %s60 = scalar_lea.smem %s0, 30
  %s61 = sld [smem:[%s60]]
  %s62 = scalar_lea.smem %s0, 31
  %s63 = sld [smem:[%s62]]
  %s64 = scalar_lea.smem %s0, 32
  %s65 = sld [smem:[%s64]]
  %s66 = scalar_lea.smem %s0, 33
  %s67 = sld [smem:[%s66]]
  %s68 = sld [smem:[#allocation0]]
  $region142: #{forward.1} parent=0
    _
  %s70 = ssub.s32 1, %s68
  %s71 = scalar_select 0, %s70, %s68
  // Predicated region
  $region2: #{forward.1} parent=0 // pred_check
    _
  $region3: #{forward.1} parent=0 // pred_check_branch
    %73 = sbr.rel (0) target = $region5
  $region4: #{forward.1} parent=0 // pred_region
    _
  $region5: #{forward.1} parent=0 // pred_fallthru
    _
  // Predicated region
  $region6: #{forward.1} parent=0 // pred_check
    _
  $region7: #{forward.1} parent=0 // pred_check_branch
    %75 = sbr.rel (0) target = $region9
  $region8: #{forward.1} parent=0 // pred_region
    _
  $region9: #{forward.1} parent=0 // pred_fallthru
    _
  // Predicated region
  $region10: #{forward.1} parent=0 // pred_check
    _
  $region11: #{forward.1} parent=0 // pred_check_branch
    %77 = sbr.rel (0) target = $region13
  $region12: #{forward.1} parent=0 // pred_region
    _
  $region13: #{forward.1} parent=0 // pred_fallthru
    _
  // Predicated region
  $region14: #{forward.1} parent=0 // pred_check
    _
  $region15: #{forward.1} parent=0 // pred_check_branch
    %79 = sbr.rel (0) target = $region17
  $region16: #{forward.1} parent=0 // pred_region
    _
  $region17: #{forward.1} parent=0 // pred_fallthru
    _
  // Predicated region
  $region18: #{forward.1} parent=0 // pred_check
    _
  $region19: #{forward.1} parent=0 // pred_check_branch
    %81 = sbr.rel (0) target = $region21
  $region20: #{forward.1} parent=0 // pred_region
    _
  $region21: #{forward.1} parent=0 // pred_fallthru
    _
  // Predicated region
  $region22: #{forward.1} parent=0 // pred_check
    _
  $region23: #{forward.1} parent=0 // pred_check_branch
    %83 = sbr.rel (0) target = $region25
  $region24: #{forward.1} parent=0 // pred_region
    _
  $region25: #{forward.1} parent=0 // pred_fallthru
    _
  // Predicated region
  $region26: #{forward.1} parent=0 // pred_check
    _
  $region27: #{forward.1} parent=0 // pred_check_branch
    %85 = sbr.rel (0) target = $region29
  $region28: #{forward.1} parent=0 // pred_region
    _
  $region29: #{forward.1} parent=0 // pred_fallthru
    _
  // Predicated region
  $region30: #{forward.1} parent=0 // pred_check
    _
  $region31: #{forward.1} parent=0 // pred_check_branch
    %87 = sbr.rel (0) target = $region33
  $region32: #{forward.1} parent=0 // pred_region
    _
  $region33: #{forward.1} parent=0 // pred_fallthru
    _
  // Predicated region
  $region34: #{forward.1} parent=0 // pred_check
    _
  $region35: #{forward.1} parent=0 // pred_check_branch
    %89 = sbr.rel (0) target = $region37
  $region36: #{forward.1} parent=0 // pred_region
    _
  $region37: #{forward.1} parent=0 // pred_fallthru
    _
  // Predicated region
  $region38: #{forward.1} parent=0 // pred_check
    _
  $region39: #{forward.1} parent=0 // pred_check_branch
    %91 = sbr.rel (0) target = $region41
  $region40: #{forward.1} parent=0 // pred_region
    _
  $region41: #{forward.1} parent=0 // pred_fallthru
    _
  // Predicated region
  $region42: #{forward.1} parent=0 // pred_check
    _
  $region43: #{forward.1} parent=0 // pred_check_branch
    %93 = sbr.rel (0) target = $region45
  $region44: #{forward.1} parent=0 // pred_region
    _
  $region45: #{forward.1} parent=0 // pred_fallthru
    _
  // Predicated region
  $region46: #{forward.1} parent=0 // pred_check
    _
  $region47: #{forward.1} parent=0 // pred_check_branch
    %95 = sbr.rel (0) target = $region49
  $region48: #{forward.1} parent=0 // pred_region
    _
  $region49: #{forward.1} parent=0 // pred_fallthru
    _
  // Predicated region
  $region50: #{forward.1} parent=0 // pred_check
    _
  $region51: #{forward.1} parent=0 // pred_check_branch
    %97 = sbr.rel (0) target = $region53
  $region52: #{forward.1} parent=0 // pred_region
    _
  $region53: #{forward.1} parent=0 // pred_fallthru
    _
  // Predicated region
  $region54: #{forward.1} parent=0 // pred_check
    _
  $region55: #{forward.1} parent=0 // pred_check_branch
    %99 = sbr.rel (0) target = $region57
  $region56: #{forward.1} parent=0 // pred_region
    _
  $region57: #{forward.1} parent=0 // pred_fallthru
    _
  // Predicated region
  $region58: #{forward.1} parent=0 // pred_check
    _
  $region59: #{forward.1} parent=0 // pred_check_branch
    %101 = sbr.rel (0) target = $region61
  $region60: #{forward.1} parent=0 // pred_region
    _
  $region61: #{forward.1} parent=0 // pred_fallthru
    _
  // Predicated region
  $region62: #{forward.1} parent=0 // pred_check
    _
  $region63: #{forward.1} parent=0 // pred_check_branch
    %103 = sbr.rel (0) target = $region65
  $region64: #{forward.1} parent=0 // pred_region
    _
  $region65: #{forward.1} parent=0 // pred_fallthru
    _
  // Predicated region
  $region66: #{forward.1} parent=0 // pred_check
    _
  $region67: #{forward.1} parent=0 // pred_check_branch
    %105 = sbr.rel (0) target = $region69
  $region68: #{forward.1} parent=0 // pred_region
    _
  $region69: #{forward.1} parent=0 // pred_fallthru
    _
  // Predicated region
  $region70: #{forward.1} parent=0 // pred_check
    _
  $region71: #{forward.1} parent=0 // pred_check_branch
    %107 = sbr.rel (0) target = $region73
  $region72: #{forward.1} parent=0 // pred_region
    _
  $region73: #{forward.1} parent=0 // pred_fallthru
    _
  // Predicated region
  $region74: #{forward.1} parent=0 // pred_check
    _
  $region75: #{forward.1} parent=0 // pred_check_branch
    %109 = sbr.rel (0) target = $region77
  $region76: #{forward.1} parent=0 // pred_region
    _
  $region77: #{forward.1} parent=0 // pred_fallthru
    _
  // Predicated region
  $region78: #{forward.1} parent=0 // pred_check
    _
  $region79: #{forward.1} parent=0 // pred_check_branch
    %111 = sbr.rel (0) target = $region81
  $region80: #{forward.1} parent=0 // pred_region
    _
  $region81: #{forward.1} parent=0 // pred_fallthru
    _
  // Predicated region
  $region82: #{forward.1} parent=0 // pred_check
    _
  $region83: #{forward.1} parent=0 // pred_check_branch
    %113 = sbr.rel (0) target = $region85
  $region84: #{forward.1} parent=0 // pred_region
    _
  $region85: #{forward.1} parent=0 // pred_fallthru
    _
  // Predicated region
  $region86: #{forward.1} parent=0 // pred_check
    _
  $region87: #{forward.1} parent=0 // pred_check_branch
    %115 = sbr.rel (0) target = $region89
  $region88: #{forward.1} parent=0 // pred_region
    _
  $region89: #{forward.1} parent=0 // pred_fallthru
    _
  // Predicated region
  $region90: #{forward.1} parent=0 // pred_check
    _
  $region91: #{forward.1} parent=0 // pred_check_branch
    %117 = sbr.rel (0) target = $region93
  $region92: #{forward.1} parent=0 // pred_region
    _
  $region93: #{forward.1} parent=0 // pred_fallthru
    _
  // Predicated region
  $region94: #{forward.1} parent=0 // pred_check
    _
  $region95: #{forward.1} parent=0 // pred_check_branch
    %119 = sbr.rel (0) target = $region97
  $region96: #{forward.1} parent=0 // pred_region
    _
  $region97: #{forward.1} parent=0 // pred_fallthru
    _
  // Predicated region
  $region98: #{forward.1} parent=0 // pred_check
    _
  $region99: #{forward.1} parent=0 // pred_check_branch
    %121 = sbr.rel (0) target = $region101
  $region100: #{forward.1} parent=0 // pred_region
    _
  $region101: #{forward.1} parent=0 // pred_fallthru
    _
  // Predicated region
  $region102: #{forward.1} parent=0 // pred_check
    _
  $region103: #{forward.1} parent=0 // pred_check_branch
    %123 = sbr.rel (0) target = $region105
  $region104: #{forward.1} parent=0 // pred_region
    _
  $region105: #{forward.1} parent=0 // pred_fallthru
    _
  // Predicated region
  $region106: #{forward.1} parent=0 // pred_check
    _
  $region107: #{forward.1} parent=0 // pred_check_branch
    %125 = sbr.rel (0) target = $region109
  $region108: #{forward.1} parent=0 // pred_region
    _
  $region109: #{forward.1} parent=0 // pred_fallthru
    _
  // Predicated region
  $region110: #{forward.1} parent=0 // pred_check
    _
  $region111: #{forward.1} parent=0 // pred_check_branch
    %127 = sbr.rel (0) target = $region113
  $region112: #{forward.1} parent=0 // pred_region
    _
  $region113: #{forward.1} parent=0 // pred_fallthru
    _
  // Predicated region
  $region114: #{forward.1} parent=0 // pred_check
    _
  $region115: #{forward.1} parent=0 // pred_check_branch
    %129 = sbr.rel (0) target = $region117
  $region116: #{forward.1} parent=0 // pred_region
    _
  $region117: #{forward.1} parent=0 // pred_fallthru
    _
  // Predicated region
  $region118: #{forward.1} parent=0 // pred_check
    _
  $region119: #{forward.1} parent=0 // pred_check_branch
    %131 = sbr.rel (0) target = $region121
  $region120: #{forward.1} parent=0 // pred_region
    _
  $region121: #{forward.1} parent=0 // pred_fallthru
    _
  // Predicated region
  $region122: #{forward.1} parent=0 // pred_check
    _
  $region123: #{forward.1} parent=0 // pred_check_branch
    %133 = sbr.rel (0) target = $region125
  $region124: #{forward.1} parent=0 // pred_region
    _
  $region125: #{forward.1} parent=0 // pred_fallthru
    _
  // Predicated region
  $region126: #{forward.1} parent=0 // pred_check
    _
  $region127: #{forward.1} parent=0 // pred_check_branch
    %135 = sbr.rel (0) target = $region129
  $region128: #{forward.1} parent=0 // pred_region
    _
  $region129: #{forward.1} parent=0 // pred_fallthru
    _
  // Predicated region
  $region130: #{forward.1} parent=0 // pred_check
    _
  $region131: #{forward.1} parent=0 // pred_check_branch
    %137 = sbr.rel (0) target = $region133
  $region132: #{forward.1} parent=0 // pred_region
    _
  $region133: #{forward.1} parent=0 // pred_fallthru
    _
  %v139 = vld [vmem:[%s1] sm:$0xff]
  %v140 = vld [vmem:[%s1 + $0x8] sm:$0xff]
  %v141 = vlaneseq
  %v142 = vand.u32 %v141, 127
  %143 = vset.pattern.permute.xlu0 0
  %144 = vperm.xlu0 %143, %v139
  %v145 = vpop.permute.xlu0 %144
  %146 = vset.pattern.permute.xlu0 0
  %147 = vperm.xlu0 %146, %v140
  %v148 = vpop.permute.xlu0 %147
  %vm149 = vcmp.eq.s32.totalorder %v142, %v145
  %vm150 = vcmp.eq.s32.totalorder %v142, %v148
  %v151 = vsel %vm149, 1, 0
  %v152 = vsel %vm150, 1, 0
  %v153 = vcvt.s32.f32 %v151
  %v154 = vcvt.s32.f32 %v152
  %v155 = vld [vmem:[%s7] sm:$0xff]
  %v156 = vld [vmem:[%s7 + $0x8] sm:$0xff]
  %v157 = vld [vmem:[%s7 + $0x10] sm:$0xff]
  %v158 = vld [vmem:[%s7 + $0x18] sm:$0xff]
  %v159 = vld [vmem:[%s7 + $0x20] sm:$0xff]
  %v160 = vld [vmem:[%s7 + $0x28] sm:$0xff]
  %v161 = vld [vmem:[%s7 + $0x30] sm:$0x3]
  %vm162 = vcmask 408576
  %v164 = vsel %vm162, %v153, 0
  %v167 = vsel %vm162, %v154, 0
  %vm169 = vcmask 1041408
  %v171 = vsel %vm169, %v161, 0
  %173 = vmatprep.subr.mxu0 0.0
  %174 = vmatpush1.msra.mxu0 0.0
  %175 = vmatprep.subr.mxu0 0.0
  %176 = vmatpush1.msra.mxu0 0.0
  %177 = vmatprep.subr.mxu0 0.0
  %178 = vmatpush1.msra.mxu0 0.0
  %179 = vmatprep.subr.mxu0 0.0
  %180 = vmatpush1.msra.mxu0 0.0
  %181 = vmatprep.subr.mxu0 0.0
  %182 = vmatpush1.msra.mxu0 0.0
  %183 = vmatprep.subr.mxu0 0.0
  %184 = vmatpush1.msra.mxu0 0.0
  %185 = vmatprep.subr.mxu0 0.0
  %186 = vmatpush1.msra.mxu0 0.0
  %187 = vmatprep.subr.mxu0 0.0
  %188 = vmatpush1.msra.mxu0 0.0
  %189 = vmatprep.subr.mxu0 0.0
  %190 = vmatpush1.msra.mxu0 0.0
  %191 = vmatprep.subr.mxu0 0.0
  %192 = vmatpush1.msra.mxu0 %v171
  %193 = vmatprep.subr.mxu0 0.0
  %194 = vmatpush1.msra.mxu0 %v160
  %195 = vmatprep.subr.mxu0 0.0
  %196 = vmatpush1.msra.mxu0 %v159
  %197 = vmatprep.subr.mxu0 0.0
  %198 = vmatpush1.msra.mxu0 %v158
  %199 = vmatprep.subr.mxu0 0.0
  %200 = vmatpush1.msra.mxu0 %v157
  %201 = vmatprep.subr.mxu0 0.0
  %202 = vmatpush1.msra.mxu0 %v156
  %203 = vmatprep.subr.mxu0 0.0
  %204 = vmatpush1.msra.mxu0 %v155
  %205 = vmatprep.subr.mxu0 0.0
  %206 = vmatpush2.msra.mxu0 0.0
  %207 = vmatprep.subr.mxu0 0.0
  %208 = vmatpush2.msra.mxu0 0.0
  %209 = vmatprep.subr.mxu0 0.0
  %210 = vmatpush2.msra.mxu0 0.0
  %211 = vmatprep.subr.mxu0 0.0
  %212 = vmatpush2.msra.mxu0 0.0
  %213 = vmatprep.subr.mxu0 0.0
  %214 = vmatpush2.msra.mxu0 0.0
  %215 = vmatprep.subr.mxu0 0.0
  %216 = vmatpush2.msra.mxu0 0.0
  %217 = vmatprep.subr.mxu0 0.0
  %218 = vmatpush2.msra.mxu0 0.0
  %219 = vmatprep.subr.mxu0 0.0
  %220 = vmatpush2.msra.mxu0 0.0
  %221 = vmatprep.subr.mxu0 0.0
  %222 = vmatpush2.msra.mxu0 0.0
  %223 = vmatprep.subr.mxu0 0.0
  %224 = vmatpush2.msra.mxu0 0.0
  %225 = vmatprep.subr.mxu0 0.0
  %226 = vmatpush2.msra.mxu0 0.0
  %227 = vmatprep.subr.mxu0 0.0
  %228 = vmatpush2.msra.mxu0 0.0
  %229 = vmatprep.subr.mxu0 0.0
  %230 = vmatpush2.msra.mxu0 0.0
  %231 = vmatprep.subr.mxu0 0.0
  %232 = vmatpush2.msra.mxu0 0.0
  %233 = vmatprep.subr.mxu0 0.0
  %234 = vmatpush2.msra.mxu0 0.0
  %235 = vmatprep.subr.mxu0 0.0
  %236 = vmatpush2.msra.mxu0 0.0
  %237 = vmatprep.mubr.f32.mxu0 0.0
  %238 = vmatmul.mubr.f32.gmra.mxu0 %v164
  %v239 = vpop.f32.mrf.mxu0
  %v240 = vadd.f32 0.0, %v239
  %v241 = vpop.f32.mrf.mxu0
  %242 = vmatprep.mubr.f32.mxu0 0.0
  %243 = vmatmul.mubr.f32.gmra.mxu0 %v167
  %v244 = vpop.f32.mrf.mxu0
  %v245 = vadd.f32 0.0, %v244
  %v246 = vpop.f32.mrf.mxu0
  %247 = vdwg.mxu0
  %v248 = vpack.c.bf16 %v245, %v240
  %v249 = vld [vmem:[%s11] sm:$0xff]
  %v250 = vld [vmem:[%s11 + $0x8] sm:$0xff]
  %v251 = vld [vmem:[%s11 + $0x10] sm:$0xff]
  %v252 = vld [vmem:[%s11 + $0x18] sm:$0xff]
  %v253 = vld [vmem:[%s13] sm:$0x3]
  %v255 = vlaneseq
  %v256 = vshrl.u32 %v255, 7
  %v257 = vsub.s32 0, %v256
  %v258 = vrot.slane %v253, %v257
  %v259 = vlaneseq
  %v260 = vshrl.u32 %v259, 7
  %v261 = vsub.s32 1, %v260
  %v262 = vrot.slane %v253, %v261
  %v269 = vunpack.c.l.b16 %v249
  %v270 = vunpack.c.h.b16 %v249
  %v271 = vunpack.c.l.b16 %v250
  %v272 = vunpack.c.h.b16 %v250
  %v273 = vunpack.c.l.b16 %v251
  %v274 = vunpack.c.h.b16 %v251
  %v275 = vunpack.c.l.b16 %v252
  %v276 = vunpack.c.h.b16 %v252
  %v277 = vpack.c.b16 %v271, %v269
  %v278 = vpack.c.b16 %v272, %v270
  %v279 = vpack.c.b16 %v275, %v273
  %v280 = vpack.c.b16 %v276, %v274
  %vm285 = vcmask 261120
  %v287 = vsel %vm285, %v248, 0
  %289 = vmatprep.subr.bf16.mxu0 0
  %290 = vmatpush1.bf16.msra.mxu0 0
  %291 = vmatprep.subr.bf16.mxu0 0
  %292 = vmatpush1.bf16.msra.mxu0 0
  %293 = vmatprep.subr.bf16.mxu0 0
  %294 = vmatpush1.bf16.msra.mxu0 0
  %295 = vmatprep.subr.bf16.mxu0 0
  %296 = vmatpush1.bf16.msra.mxu0 0
  %297 = vmatprep.subr.bf16.mxu0 0
  %298 = vmatpush1.bf16.msra.mxu0 0
  %299 = vmatprep.subr.bf16.mxu0 0
  %300 = vmatpush1.bf16.msra.mxu0 0
  %301 = vmatprep.subr.bf16.mxu0 %v280
  %302 = vmatpush1.bf16.msra.mxu0 %v279
  %303 = vmatprep.subr.bf16.mxu0 %v278
  %304 = vmatpush1.bf16.msra.mxu0 %v277
  %305 = vmatprep.subr.bf16.mxu0 0
  %306 = vmatpush2.bf16.msra.mxu0 0
  %307 = vmatprep.subr.bf16.mxu0 0
  %308 = vmatpush2.bf16.msra.mxu0 0
  %309 = vmatprep.subr.bf16.mxu0 0
  %310 = vmatpush2.bf16.msra.mxu0 0
  %311 = vmatprep.subr.bf16.mxu0 0
  %312 = vmatpush2.bf16.msra.mxu0 0
  %313 = vmatprep.subr.bf16.mxu0 0
  %314 = vmatpush2.bf16.msra.mxu0 0
  %315 = vmatprep.subr.bf16.mxu0 0
  %316 = vmatpush2.bf16.msra.mxu0 0
  %317 = vmatprep.subr.bf16.mxu0 0
  %318 = vmatpush2.bf16.msra.mxu0 0
  %319 = vmatprep.subr.bf16.mxu0 0
  %320 = vmatpush2.bf16.msra.mxu0 0
  %321 = vmatprep.mubr.bf16.mxu0 0
  %322 = vmatmul.mubr.bf16.gmra.mxu0 %v287
  %v323 = vpop.f32.mrf.mxu0
  %v324 = vadd.f32 %v258, %v323
  %v325 = vpop.f32.mrf.mxu0
  %v326 = vadd.f32 %v262, %v325
  %v327 = vpop.f32.mrf.mxu0
  %v328 = vadd.f32 %v258, %v327
  %v329 = vpop.f32.mrf.mxu0
  %v330 = vadd.f32 %v262, %v329
  %331 = vdwg.mxu0
  %332 = vst [vmem:[#allocation2] sm:$0xff] %v324
  %333 = vst [vmem:[#allocation2 + $0x8] sm:$0xff] %v326
  %334 = vst [vmem:[#allocation2 + $0x10] sm:$0xff] %v328
  %335 = vst [vmem:[#allocation2 + $0x18] sm:$0xff] %v330
  %v336 = vld [vmem:[%s15] sm:$0xf]
  %v337 = vld [vmem:[%s15 + $0x4] sm:$0xf]
  %v338 = vld [vmem:[%s15 + $0x8] sm:$0xf]
  %v339 = vld [vmem:[%s15 + $0xc] sm:$0xf]
  %s340 = scalar_lea.vmem %s15, 16
  %v341 = vld [vmem:[%s340] sm:$0xf]
  %v342 = vld [vmem:[%s340 + $0x4] sm:$0xf]
  %v343 = vld [vmem:[%s340 + $0x8] sm:$0xf]
  %v344 = vld [vmem:[%s340 + $0xc] sm:$0xf]
  %v345 = vld [vmem:[%s17] sm:$0x1]
  %s346 = scalar_lea.vmem %s17, 1
  %v347 = vld [vmem:[%s346] sm:$0x1]
  %v348 = vld [vmem:[#allocation2] sm:$0x3]
  %v349 = vld [vmem:[#allocation2 + $0x18] sm:$0xc0]
  %v354 = vunpack.c.l.b16 %v336
  %v355 = vunpack.c.l.b16 %v337
  %v356 = vunpack.c.l.b16 %v338
  %v357 = vunpack.c.l.b16 %v339
  %v358 = vpack.c.b16 %v355, %v354
  %v359 = vpack.c.b16 %v357, %v356
  %v363 = vsel %vm285, 0, 0
  %365 = vmatprep.subr.bf16.mxu0 0
  %366 = vmatpush1.bf16.msra.mxu0 0
  %367 = vmatprep.subr.bf16.mxu0 0
  %368 = vmatpush1.bf16.msra.mxu0 0
  %369 = vmatprep.subr.bf16.mxu0 0
  %370 = vmatpush1.bf16.msra.mxu0 0
  %371 = vmatprep.subr.bf16.mxu0 0
  %372 = vmatpush1.bf16.msra.mxu0 0
  %373 = vmatprep.subr.bf16.mxu0 0
  %374 = vmatpush1.bf16.msra.mxu0 0
  %375 = vmatprep.subr.bf16.mxu0 0
  %376 = vmatpush1.bf16.msra.mxu0 0
  %377 = vmatprep.subr.bf16.mxu0 0
  %378 = vmatpush1.bf16.msra.mxu0 %v359
  %379 = vmatprep.subr.bf16.mxu0 0
  %380 = vmatpush1.bf16.msra.mxu0 %v358
  %381 = vmatprep.subr.bf16.mxu0 0
  %382 = vmatpush2.bf16.msra.mxu0 0
  %383 = vmatprep.subr.bf16.mxu0 0
  %384 = vmatpush2.bf16.msra.mxu0 0
  %385 = vmatprep.subr.bf16.mxu0 0
  %386 = vmatpush2.bf16.msra.mxu0 0
  %387 = vmatprep.subr.bf16.mxu0 0
  %388 = vmatpush2.bf16.msra.mxu0 0
  %389 = vmatprep.subr.bf16.mxu0 0
  %390 = vmatpush2.bf16.msra.mxu0 0
  %391 = vmatprep.subr.bf16.mxu0 0
  %392 = vmatpush2.bf16.msra.mxu0 0
  %393 = vmatprep.subr.bf16.mxu0 0
  %394 = vmatpush2.bf16.msra.mxu0 0
  %395 = vmatprep.subr.bf16.mxu0 0
  %396 = vmatpush2.bf16.msra.mxu0 0
  %397 = vmatprep.mubr.bf16.mxu0 0
  %398 = vmatmul.mubr.bf16.gmra.mxu0 %v363
  %v399 = vpop.f32.mrf.mxu0
  %v400 = vadd.f32 0.0, %v399
  %v401 = vpop.f32.mrf.mxu0
  %v402 = vpop.f32.mrf.mxu0
  %v403 = vpop.f32.mrf.mxu0
  %404 = vdwg.mxu0
  %v405 = vadd.f32 %v348, %v400
  %v406 = vxor.u32 %v405, 2147483648
  %v407 = vmul.f32 %v406, 1.442695
  %v408 = vpow.pop %v407
  %v409 = vadd.f32 %v408, 1.0
  %v410 = vrcp.pop %v409
  %v411 = vmul.f32 1.0, %v410
  %v413 = vlaneseq
  %v414 = vshrl.u32 %v413, 7
  %v415 = vsub.s32 0, %v414
  %v416 = vrot.slane %v345, %v415
  %417 = vrot.lane.b32.xlu0 %v416, 64
  %v418 = vpop.permute.xlu0 %417
  %v420 = vadd.f32 %v400, %v418
  %422 = vrot.lane.b32.xlu0 %v420, 64
  %v423 = vpop.permute.xlu0 %422
  %v425 = vmul.f32 %v411, %v423
  %427 = vrot.lane.b32.xlu0 %v425, 64
  %v428 = vpop.permute.xlu0 %427
  %v430 = vadd.f32 %v348, %v428
  %v431 = vtanh.pop %v430
  %v432 = vsub.f32 1.0, %v411
  %434 = vrot.lane.b32.xlu0 %v431, 96
  %v435 = vpop.permute.xlu0 %434
  %v437 = vmul.f32 %v432, %v435
  %v438 = vmul.f32 %v411, 0.0
  %v439 = vadd.f32 %v437, %v438
  %v444 = vunpack.c.l.b16 %v341
  %v445 = vunpack.c.l.b16 %v342
  %v446 = vunpack.c.l.b16 %v343
  %v447 = vunpack.c.l.b16 %v344
  %v448 = vpack.c.b16 %v445, %v444
  %v449 = vpack.c.b16 %v447, %v446
  %452 = vmatprep.subr.bf16.mxu0 0
  %453 = vmatpush1.bf16.msra.mxu0 0
  %454 = vmatprep.subr.bf16.mxu0 0
  %455 = vmatpush1.bf16.msra.mxu0 0
  %456 = vmatprep.subr.bf16.mxu0 0
  %457 = vmatpush1.bf16.msra.mxu0 0
  %458 = vmatprep.subr.bf16.mxu0 0
  %459 = vmatpush1.bf16.msra.mxu0 0
  %460 = vmatprep.subr.bf16.mxu0 0
  %461 = vmatpush1.bf16.msra.mxu0 0
  %462 = vmatprep.subr.bf16.mxu0 0
  %463 = vmatpush1.bf16.msra.mxu0 0
  %464 = vmatprep.subr.bf16.mxu0 0
  %465 = vmatpush1.bf16.msra.mxu0 %v449
  %466 = vmatprep.subr.bf16.mxu0 0
  %467 = vmatpush1.bf16.msra.mxu0 %v448
  %468 = vmatprep.subr.bf16.mxu0 0
  %469 = vmatpush2.bf16.msra.mxu0 0
  %470 = vmatprep.subr.bf16.mxu0 0
  %471 = vmatpush2.bf16.msra.mxu0 0
  %472 = vmatprep.subr.bf16.mxu0 0
  %473 = vmatpush2.bf16.msra.mxu0 0
  %474 = vmatprep.subr.bf16.mxu0 0
  %475 = vmatpush2.bf16.msra.mxu0 0
  %476 = vmatprep.subr.bf16.mxu0 0
  %477 = vmatpush2.bf16.msra.mxu0 0
  %478 = vmatprep.subr.bf16.mxu0 0
  %479 = vmatpush2.bf16.msra.mxu0 0
  %480 = vmatprep.subr.bf16.mxu0 0
  %481 = vmatpush2.bf16.msra.mxu0 0
  %482 = vmatprep.subr.bf16.mxu0 0
  %483 = vmatpush2.bf16.msra.mxu0 0
  %484 = vmatprep.mubr.bf16.mxu0 0
  %485 = vmatmul.mubr.bf16.gmra.mxu0 %v363
  %v486 = vpop.f32.mrf.mxu0
  %v487 = vadd.f32 0.0, %v486
  %v488 = vpop.f32.mrf.mxu0
  %v489 = vpop.f32.mrf.mxu0
  %v490 = vpop.f32.mrf.mxu0
  %491 = vdwg.mxu0
  %v493 = vrot.slane %v487, 2
  %v495 = vadd.f32 %v349, %v493
  %v496 = vxor.u32 %v495, 2147483648
  %v497 = vmul.f32 %v496, 1.442695
  %v498 = vpow.pop %v497
  %v499 = vadd.f32 %v498, 1.0
  %v500 = vrcp.pop %v499
  %v501 = vmul.f32 1.0, %v500
  %v503 = vlaneseq
  %v504 = vshrl.u32 %v503, 7
  %v505 = vsub.s32 0, %v504
  %v506 = vrot.slane %v347, %v505
  %507 = vrot.lane.b32.xlu0 %v506, 64
  %v508 = vpop.permute.xlu0 %507
  %v510 = vadd.f32 %v487, %v508
  %v512 = vrot.slane %v510, 2
  %513 = vrot.lane.b32.xlu0 %v512, 64
  %v514 = vpop.permute.xlu0 %513
  %v516 = vmul.f32 %v501, %v514
  %518 = vrot.lane.b32.xlu0 %v516, 64
  %v519 = vpop.permute.xlu0 %518
  %v521 = vadd.f32 %v349, %v519
  %v522 = vtanh.pop %v521
  %v523 = vsub.f32 1.0, %v501
  %525 = vrot.lane.b32.xlu0 %v522, 96
  %v526 = vpop.permute.xlu0 %525
  %v528 = vmul.f32 %v523, %v526
  %v529 = vmul.f32 %v501, 0.0
  %v530 = vadd.f32 %v528, %v529
  %532 = vrot.lane.b32.xlu0 %v439, 96
  %v533 = vpop.permute.xlu0 %532
  %vm535 = vcmask 254976
  %536 = vst.msk [vmem:[#allocation3] sm:$0x3] %vm535, %v533
  %vm537 = vcmask 523526
  %538 = vst.msk [vmem:[#allocation3 + $0x8] sm:$0xc0] %vm537, %v530
  %v539 = vld [vmem:[#allocation2] sm:$0xc]
  %v540 = vld [vmem:[#allocation2 + $0x18] sm:$0x30]
  %v541 = vpack.c.bf16 %v439, %v439
  %543 = vrot.lane.b32.xlu0 %v541, 96
  %v544 = vpop.permute.xlu0 %543
  %v546 = vsel %vm285, %v544, 0
  %548 = vmatprep.subr.bf16.mxu0 0
  %549 = vmatpush1.bf16.msra.mxu0 0
  %550 = vmatprep.subr.bf16.mxu0 0
  %551 = vmatpush1.bf16.msra.mxu0 0
  %552 = vmatprep.subr.bf16.mxu0 0
  %553 = vmatpush1.bf16.msra.mxu0 0
  %554 = vmatprep.subr.bf16.mxu0 0
  %555 = vmatpush1.bf16.msra.mxu0 0
  %556 = vmatprep.subr.bf16.mxu0 0
  %557 = vmatpush1.bf16.msra.mxu0 0
  %558 = vmatprep.subr.bf16.mxu0 0
  %559 = vmatpush1.bf16.msra.mxu0 0
  %560 = vmatprep.subr.bf16.mxu0 0
  %561 = vmatpush1.bf16.msra.mxu0 %v359
  %562 = vmatprep.subr.bf16.mxu0 0
  %563 = vmatpush1.bf16.msra.mxu0 %v358
  %564 = vmatprep.subr.bf16.mxu0 0
  %565 = vmatpush2.bf16.msra.mxu0 0
  %566 = vmatprep.subr.bf16.mxu0 0
  %567 = vmatpush2.bf16.msra.mxu0 0
  %568 = vmatprep.subr.bf16.mxu0 0
  %569 = vmatpush2.bf16.msra.mxu0 0
  %570 = vmatprep.subr.bf16.mxu0 0
  %571 = vmatpush2.bf16.msra.mxu0 0
  %572 = vmatprep.subr.bf16.mxu0 0
  %573 = vmatpush2.bf16.msra.mxu0 0
  %574 = vmatprep.subr.bf16.mxu0 0
  %575 = vmatpush2.bf16.msra.mxu0 0
  %576 = vmatprep.subr.bf16.mxu0 0
  %577 = vmatpush2.bf16.msra.mxu0 0
  %578 = vmatprep.subr.bf16.mxu0 0
  %579 = vmatpush2.bf16.msra.mxu0 0
  %580 = vmatprep.mubr.bf16.mxu0 0
  %581 = vmatmul.mubr.bf16.gmra.mxu0 %v546
  %v582 = vpop.f32.mrf.mxu0
  %v583 = vadd.f32 0.0, %v582
  %v584 = vpop.f32.mrf.mxu0
  %v585 = vpop.f32.mrf.mxu0
  %v586 = vpop.f32.mrf.mxu0
  %587 = vdwg.mxu0
  %v589 = vrot.slane %v583, 6
  %v591 = vadd.f32 %v539, %v589
  %v592 = vxor.u32 %v591, 2147483648
  %v593 = vmul.f32 %v592, 1.442695
  %v594 = vpow.pop %v593
  %v595 = vadd.f32 %v594, 1.0
  %v596 = vrcp.pop %v595
  %v597 = vmul.f32 1.0, %v596
  %v598 = vadd.f32 %v583, %v418
  %v600 = vrot.slane %v598, 6
  %601 = vrot.lane.b32.xlu0 %v600, 64
  %v602 = vpop.permute.xlu0 %601
  %v604 = vmul.f32 %v597, %v602
  %606 = vrot.lane.b32.xlu0 %v604, 64
  %v607 = vpop.permute.xlu0 %606
  %v609 = vadd.f32 %v539, %v607
  %v610 = vtanh.pop %v609
  %v611 = vsub.f32 1.0, %v597
  %613 = vrot.lane.b32.xlu0 %v610, 96
  %v614 = vpop.permute.xlu0 %613
  %v616 = vmul.f32 %v611, %v614
  %v617 = vrot.slane %v439, 6
  %v619 = vmul.f32 %v597, %v617
  %v620 = vadd.f32 %v616, %v619
  %v621 = vpack.c.bf16 %v530, %v530
  %v623 = vrot.slane %v621, 3
  %624 = vrot.lane.b32.xlu0 %v623, 96
  %v625 = vpop.permute.xlu0 %624
  %v627 = vsel %vm285, %v625, 0
  %629 = vmatprep.subr.bf16.mxu0 0
  %630 = vmatpush1.bf16.msra.mxu0 0
  %631 = vmatprep.subr.bf16.mxu0 0
  %632 = vmatpush1.bf16.msra.mxu0 0
  %633 = vmatprep.subr.bf16.mxu0 0
  %634 = vmatpush1.bf16.msra.mxu0 0
  %635 = vmatprep.subr.bf16.mxu0 0
  %636 = vmatpush1.bf16.msra.mxu0 0
  %637 = vmatprep.subr.bf16.mxu0 0
  %638 = vmatpush1.bf16.msra.mxu0 0
  %639 = vmatprep.subr.bf16.mxu0 0
  %640 = vmatpush1.bf16.msra.mxu0 0
  %641 = vmatprep.subr.bf16.mxu0 0
  %642 = vmatpush1.bf16.msra.mxu0 %v449
  %643 = vmatprep.subr.bf16.mxu0 0
  %644 = vmatpush1.bf16.msra.mxu0 %v448
  %645 = vmatprep.subr.bf16.mxu0 0
  %646 = vmatpush2.bf16.msra.mxu0 0
  %647 = vmatprep.subr.bf16.mxu0 0
  %648 = vmatpush2.bf16.msra.mxu0 0
  %649 = vmatprep.subr.bf16.mxu0 0
  %650 = vmatpush2.bf16.msra.mxu0 0
  %651 = vmatprep.subr.bf16.mxu0 0
  %652 = vmatpush2.bf16.msra.mxu0 0
  %653 = vmatprep.subr.bf16.mxu0 0
  %654 = vmatpush2.bf16.msra.mxu0 0
  %655 = vmatprep.subr.bf16.mxu0 0
  %656 = vmatpush2.bf16.msra.mxu0 0
  %657 = vmatprep.subr.bf16.mxu0 0
  %658 = vmatpush2.bf16.msra.mxu0 0
  %659 = vmatprep.subr.bf16.mxu0 0
  %660 = vmatpush2.bf16.msra.mxu0 0
  %661 = vmatprep.mubr.bf16.mxu0 0
  %662 = vmatmul.mubr.bf16.gmra.mxu0 %v627
  %v663 = vpop.f32.mrf.mxu0
  %v664 = vadd.f32 0.0, %v663
  %v665 = vpop.f32.mrf.mxu0
  %v666 = vpop.f32.mrf.mxu0
  %v667 = vpop.f32.mrf.mxu0
  %668 = vdwg.mxu0
  %v670 = vrot.slane %v664, 4
  %v672 = vadd.f32 %v540, %v670
  %v673 = vxor.u32 %v672, 2147483648
  %v674 = vmul.f32 %v673, 1.442695
  %v675 = vpow.pop %v674
  %v676 = vadd.f32 %v675, 1.0
  %v677 = vrcp.pop %v676
  %v678 = vmul.f32 1.0, %v677
  %v679 = vadd.f32 %v664, %v508
  %v681 = vrot.slane %v679, 4
  %682 = vrot.lane.b32.xlu0 %v681, 64
  %v683 = vpop.permute.xlu0 %682
  %v685 = vmul.f32 %v678, %v683
  %687 = vrot.lane.b32.xlu0 %v685, 64
  %v688 = vpop.permute.xlu0 %687
  %v690 = vadd.f32 %v540, %v688
  %v691 = vtanh.pop %v690
  %v692 = vsub.f32 1.0, %v678
  %694 = vrot.lane.b32.xlu0 %v691, 96
  %v695 = vpop.permute.xlu0 %694
  %v697 = vmul.f32 %v692, %v695
  %v699 = vrot.slane %v530, 2
  %v701 = vmul.f32 %v678, %v699
  %v702 = vadd.f32 %v697, %v701
  %704 = vrot.lane.b32.xlu0 %v620, 96
  %v705 = vpop.permute.xlu0 %704
  %vm707 = vcmask 257026
  %708 = vst.msk [vmem:[#allocation3] sm:$0xc] %vm707, %v705
  %vm709 = vcmask 521476
  %710 = vst.msk [vmem:[#allocation3 + $0x8] sm:$0x30] %vm709, %v702
  %v711 = vld [vmem:[#allocation2] sm:$0x30]
  %v712 = vld [vmem:[#allocation2 + $0x18] sm:$0xc]
  %v713 = vpack.c.bf16 %v620, %v620
  %v715 = vrot.slane %v713, 1
  %716 = vrot.lane.b32.xlu0 %v715, 96
  %v717 = vpop.permute.xlu0 %716
  %v719 = vsel %vm285, %v717, 0
  %721 = vmatprep.subr.bf16.mxu0 0
  %722 = vmatpush1.bf16.msra.mxu0 0
  %723 = vmatprep.subr.bf16.mxu0 0
  %724 = vmatpush1.bf16.msra.mxu0 0
  %725 = vmatprep.subr.bf16.mxu0 0
  %726 = vmatpush1.bf16.msra.mxu0 0
  %727 = vmatprep.subr.bf16.mxu0 0
  %728 = vmatpush1.bf16.msra.mxu0 0
  %729 = vmatprep.subr.bf16.mxu0 0
  %730 = vmatpush1.bf16.msra.mxu0 0
  %731 = vmatprep.subr.bf16.mxu0 0
  %732 = vmatpush1.bf16.msra.mxu0 0
  %733 = vmatprep.subr.bf16.mxu0 0
  %734 = vmatpush1.bf16.msra.mxu0 %v359
  %735 = vmatprep.subr.bf16.mxu0 0
  %736 = vmatpush1.bf16.msra.mxu0 %v358
  %737 = vmatprep.subr.bf16.mxu0 0
  %738 = vmatpush2.bf16.msra.mxu0 0
  %739 = vmatprep.subr.bf16.mxu0 0
  %740 = vmatpush2.bf16.msra.mxu0 0
  %741 = vmatprep.subr.bf16.mxu0 0
  %742 = vmatpush2.bf16.msra.mxu0 0
  %743 = vmatprep.subr.bf16.mxu0 0
  %744 = vmatpush2.bf16.msra.mxu0 0
  %745 = vmatprep.subr.bf16.mxu0 0
  %746 = vmatpush2.bf16.msra.mxu0 0
  %747 = vmatprep.subr.bf16.mxu0 0
  %748 = vmatpush2.bf16.msra.mxu0 0
  %749 = vmatprep.subr.bf16.mxu0 0
  %750 = vmatpush2.bf16.msra.mxu0 0
  %751 = vmatprep.subr.bf16.mxu0 0
  %752 = vmatpush2.bf16.msra.mxu0 0
  %753 = vmatprep.mubr.bf16.mxu0 0
  %754 = vmatmul.mubr.bf16.gmra.mxu0 %v719
  %v755 = vpop.f32.mrf.mxu0
  %v756 = vadd.f32 0.0, %v755
  %v757 = vpop.f32.mrf.mxu0
  %v758 = vpop.f32.mrf.mxu0
  %v759 = vpop.f32.mrf.mxu0
  %760 = vdwg.mxu0
  %v762 = vrot.slane %v756, 4
  %v764 = vadd.f32 %v711, %v762
  %v765 = vxor.u32 %v764, 2147483648
  %v766 = vmul.f32 %v765, 1.442695
  %v767 = vpow.pop %v766
  %v768 = vadd.f32 %v767, 1.0
  %v769 = vrcp.pop %v768
  %v770 = vmul.f32 1.0, %v769
  %v771 = vadd.f32 %v756, %v418
  %v773 = vrot.slane %v771, 4
  %774 = vrot.lane.b32.xlu0 %v773, 64
  %v775 = vpop.permute.xlu0 %774
  %v777 = vmul.f32 %v770, %v775
  %779 = vrot.lane.b32.xlu0 %v777, 64
  %v780 = vpop.permute.xlu0 %779
  %v782 = vadd.f32 %v711, %v780
  %v783 = vtanh.pop %v782
  %v784 = vsub.f32 1.0, %v770
  %786 = vrot.lane.b32.xlu0 %v783, 96
  %v787 = vpop.permute.xlu0 %786
  %v789 = vmul.f32 %v784, %v787
  %v790 = vrot.slane %v620, 6
  %v792 = vmul.f32 %v770, %v790
  %v793 = vadd.f32 %v789, %v792
  %v794 = vpack.c.bf16 %v702, %v702
  %v796 = vrot.slane %v794, 2
  %797 = vrot.lane.b32.xlu0 %v796, 96
  %v798 = vpop.permute.xlu0 %797
  %v800 = vsel %vm285, %v798, 0
  %802 = vmatprep.subr.bf16.mxu0 0
  %803 = vmatpush1.bf16.msra.mxu0 0
  %804 = vmatprep.subr.bf16.mxu0 0
  %805 = vmatpush1.bf16.msra.mxu0 0
  %806 = vmatprep.subr.bf16.mxu0 0
  %807 = vmatpush1.bf16.msra.mxu0 0
  %808 = vmatprep.subr.bf16.mxu0 0
  %809 = vmatpush1.bf16.msra.mxu0 0
  %810 = vmatprep.subr.bf16.mxu0 0
  %811 = vmatpush1.bf16.msra.mxu0 0
  %812 = vmatprep.subr.bf16.mxu0 0
  %813 = vmatpush1.bf16.msra.mxu0 0
  %814 = vmatprep.subr.bf16.mxu0 0
  %815 = vmatpush1.bf16.msra.mxu0 %v449
  %816 = vmatprep.subr.bf16.mxu0 0
  %817 = vmatpush1.bf16.msra.mxu0 %v448
  %818 = vmatprep.subr.bf16.mxu0 0
  %819 = vmatpush2.bf16.msra.mxu0 0
  %820 = vmatprep.subr.bf16.mxu0 0
  %821 = vmatpush2.bf16.msra.mxu0 0
  %822 = vmatprep.subr.bf16.mxu0 0
  %823 = vmatpush2.bf16.msra.mxu0 0
  %824 = vmatprep.subr.bf16.mxu0 0
  %825 = vmatpush2.bf16.msra.mxu0 0
  %826 = vmatprep.subr.bf16.mxu0 0
  %827 = vmatpush2.bf16.msra.mxu0 0
  %828 = vmatprep.subr.bf16.mxu0 0
  %829 = vmatpush2.bf16.msra.mxu0 0
  %830 = vmatprep.subr.bf16.mxu0 0
  %831 = vmatpush2.bf16.msra.mxu0 0
  %832 = vmatprep.subr.bf16.mxu0 0
  %833 = vmatpush2.bf16.msra.mxu0 0
  %834 = vmatprep.mubr.bf16.mxu0 0
  %835 = vmatmul.mubr.bf16.gmra.mxu0 %v800
  %v836 = vpop.f32.mrf.mxu0
  %v837 = vadd.f32 0.0, %v836
  %v838 = vpop.f32.mrf.mxu0
  %v839 = vpop.f32.mrf.mxu0
  %v840 = vpop.f32.mrf.mxu0
  %841 = vdwg.mxu0
  %v843 = vrot.slane %v837, 6
  %v845 = vadd.f32 %v712, %v843
  %v846 = vxor.u32 %v845, 2147483648
  %v847 = vmul.f32 %v846, 1.442695
  %v848 = vpow.pop %v847
  %v849 = vadd.f32 %v848, 1.0
  %v850 = vrcp.pop %v849
  %v851 = vmul.f32 1.0, %v850
  %v852 = vadd.f32 %v837, %v508
  %v854 = vrot.slane %v852, 6
  %855 = vrot.lane.b32.xlu0 %v854, 64
  %v856 = vpop.permute.xlu0 %855
  %v858 = vmul.f32 %v851, %v856
  %860 = vrot.lane.b32.xlu0 %v858, 64
  %v861 = vpop.permute.xlu0 %860
  %v863 = vadd.f32 %v712, %v861
  %v864 = vtanh.pop %v863
  %v865 = vsub.f32 1.0, %v851
  %867 = vrot.lane.b32.xlu0 %v864, 96
  %v868 = vpop.permute.xlu0 %867
  %v870 = vmul.f32 %v865, %v868
  %v872 = vrot.slane %v702, 2
  %v874 = vmul.f32 %v851, %v872
  %v875 = vadd.f32 %v870, %v874
  %877 = vrot.lane.b32.xlu0 %v793, 96
  %v878 = vpop.permute.xlu0 %877
  %vm880 = vcmask 259076
  %881 = vst.msk [vmem:[#allocation3] sm:$0x30] %vm880, %v878
  %vm882 = vcmask 519426
  %883 = vst.msk [vmem:[#allocation3 + $0x8] sm:$0xc] %vm882, %v875
  %v884 = vld [vmem:[#allocation2] sm:$0xc0]
  %v885 = vld [vmem:[#allocation2 + $0x18] sm:$0x3]
  %v886 = vpack.c.bf16 %v793, %v793
  %v888 = vrot.slane %v886, 2
  %889 = vrot.lane.b32.xlu0 %v888, 96
  %v890 = vpop.permute.xlu0 %889
  %v892 = vsel %vm285, %v890, 0
  %894 = vmatprep.subr.bf16.mxu0 0
  %895 = vmatpush1.bf16.msra.mxu0 0
  %896 = vmatprep.subr.bf16.mxu0 0
  %897 = vmatpush1.bf16.msra.mxu0 0
  %898 = vmatprep.subr.bf16.mxu0 0
  %899 = vmatpush1.bf16.msra.mxu0 0
  %900 = vmatprep.subr.bf16.mxu0 0
  %901 = vmatpush1.bf16.msra.mxu0 0
  %902 = vmatprep.subr.bf16.mxu0 0
  %903 = vmatpush1.bf16.msra.mxu0 0
  %904 = vmatprep.subr.bf16.mxu0 0
  %905 = vmatpush1.bf16.msra.mxu0 0
  %906 = vmatprep.subr.bf16.mxu0 0
  %907 = vmatpush1.bf16.msra.mxu0 %v359
  %908 = vmatprep.subr.bf16.mxu0 0
  %909 = vmatpush1.bf16.msra.mxu0 %v358
  %910 = vmatprep.subr.bf16.mxu0 0
  %911 = vmatpush2.bf16.msra.mxu0 0
  %912 = vmatprep.subr.bf16.mxu0 0
  %913 = vmatpush2.bf16.msra.mxu0 0
  %914 = vmatprep.subr.bf16.mxu0 0
  %915 = vmatpush2.bf16.msra.mxu0 0
  %916 = vmatprep.subr.bf16.mxu0 0
  %917 = vmatpush2.bf16.msra.mxu0 0
  %918 = vmatprep.subr.bf16.mxu0 0
  %919 = vmatpush2.bf16.msra.mxu0 0
  %920 = vmatprep.subr.bf16.mxu0 0
  %921 = vmatpush2.bf16.msra.mxu0 0
  %922 = vmatprep.subr.bf16.mxu0 0
  %923 = vmatpush2.bf16.msra.mxu0 0
  %924 = vmatprep.subr.bf16.mxu0 0
  %925 = vmatpush2.bf16.msra.mxu0 0
  %926 = vmatprep.mubr.bf16.mxu0 0
  %927 = vmatmul.mubr.bf16.gmra.mxu0 %v892
  %v928 = vpop.f32.mrf.mxu0
  %v929 = vadd.f32 0.0, %v928
  %v930 = vpop.f32.mrf.mxu0
  %v931 = vpop.f32.mrf.mxu0
  %v932 = vpop.f32.mrf.mxu0
  %933 = vdwg.mxu0
  %v935 = vrot.slane %v929, 2
  %v937 = vadd.f32 %v884, %v935
  %v938 = vxor.u32 %v937, 2147483648
  %v939 = vmul.f32 %v938, 1.442695
  %v940 = vpow.pop %v939
  %v941 = vadd.f32 %v940, 1.0
  %v942 = vrcp.pop %v941
  %v943 = vmul.f32 1.0, %v942
  %v944 = vadd.f32 %v929, %v418
  %v946 = vrot.slane %v944, 2
  %947 = vrot.lane.b32.xlu0 %v946, 64
  %v948 = vpop.permute.xlu0 %947
  %v950 = vmul.f32 %v943, %v948
  %952 = vrot.lane.b32.xlu0 %v950, 64
  %v953 = vpop.permute.xlu0 %952
  %v955 = vadd.f32 %v884, %v953
  %v956 = vtanh.pop %v955
  %v957 = vsub.f32 1.0, %v943
  %959 = vrot.lane.b32.xlu0 %v956, 96
  %v960 = vpop.permute.xlu0 %959
  %v962 = vmul.f32 %v957, %v960
  %v963 = vrot.slane %v793, 6
  %v965 = vmul.f32 %v943, %v963
  %v966 = vadd.f32 %v962, %v965
  %v967 = vpack.c.bf16 %v875, %v875
  %v969 = vrot.slane %v967, 1
  %970 = vrot.lane.b32.xlu0 %v969, 96
  %v971 = vpop.permute.xlu0 %970
  %v973 = vsel %vm285, %v971, 0
  %975 = vmatprep.subr.bf16.mxu0 0
  %976 = vmatpush1.bf16.msra.mxu0 0
  %977 = vmatprep.subr.bf16.mxu0 0
  %978 = vmatpush1.bf16.msra.mxu0 0
  %979 = vmatprep.subr.bf16.mxu0 0
  %980 = vmatpush1.bf16.msra.mxu0 0
  %981 = vmatprep.subr.bf16.mxu0 0
  %982 = vmatpush1.bf16.msra.mxu0 0
  %983 = vmatprep.subr.bf16.mxu0 0
  %984 = vmatpush1.bf16.msra.mxu0 0
  %985 = vmatprep.subr.bf16.mxu0 0
  %986 = vmatpush1.bf16.msra.mxu0 0
  %987 = vmatprep.subr.bf16.mxu0 0
  %988 = vmatpush1.bf16.msra.mxu0 %v449
  %989 = vmatprep.subr.bf16.mxu0 0
  %990 = vmatpush1.bf16.msra.mxu0 %v448
  %991 = vmatprep.subr.bf16.mxu0 0
  %992 = vmatpush2.bf16.msra.mxu0 0
  %993 = vmatprep.subr.bf16.mxu0 0
  %994 = vmatpush2.bf16.msra.mxu0 0
  %995 = vmatprep.subr.bf16.mxu0 0
  %996 = vmatpush2.bf16.msra.mxu0 0
  %997 = vmatprep.subr.bf16.mxu0 0
  %998 = vmatpush2.bf16.msra.mxu0 0
  %999 = vmatprep.subr.bf16.mxu0 0
  %1000 = vmatpush2.bf16.msra.mxu0 0
  %1001 = vmatprep.subr.bf16.mxu0 0
  %1002 = vmatpush2.bf16.msra.mxu0 0
  %1003 = vmatprep.subr.bf16.mxu0 0
  %1004 = vmatpush2.bf16.msra.mxu0 0
  %1005 = vmatprep.subr.bf16.mxu0 0
  %1006 = vmatpush2.bf16.msra.mxu0 0
  %1007 = vmatprep.mubr.bf16.mxu0 0
  %1008 = vmatmul.mubr.bf16.gmra.mxu0 %v973
  %v1009 = vpop.f32.mrf.mxu0
  %v1010 = vadd.f32 0.0, %v1009
  %v1011 = vpop.f32.mrf.mxu0
  %v1012 = vpop.f32.mrf.mxu0
  %v1013 = vpop.f32.mrf.mxu0
  %1014 = vdwg.mxu0
  %v1015 = vadd.f32 %v885, %v1010
  %v1016 = vxor.u32 %v1015, 2147483648
  %v1017 = vmul.f32 %v1016, 1.442695
  %v1018 = vpow.pop %v1017
  %v1019 = vadd.f32 %v1018, 1.0
  %v1020 = vrcp.pop %v1019
  %v1021 = vmul.f32 1.0, %v1020
  %v1022 = vadd.f32 %v1010, %v508
  %1024 = vrot.lane.b32.xlu0 %v1022, 64
  %v1025 = vpop.permute.xlu0 %1024
  %v1027 = vmul.f32 %v1021, %v1025
  %1029 = vrot.lane.b32.xlu0 %v1027, 64
  %v1030 = vpop.permute.xlu0 %1029
  %v1032 = vadd.f32 %v885, %v1030
  %v1033 = vtanh.pop %v1032
  %v1034 = vsub.f32 1.0, %v1021
  %1036 = vrot.lane.b32.xlu0 %v1033, 96
  %v1037 = vpop.permute.xlu0 %1036
  %v1039 = vmul.f32 %v1034, %v1037
  %v1041 = vrot.slane %v875, 2
  %v1043 = vmul.f32 %v1021, %v1041
  %v1044 = vadd.f32 %v1039, %v1043
  %1046 = vrot.lane.b32.xlu0 %v966, 96
  %v1047 = vpop.permute.xlu0 %1046
  %vm1049 = vcmask 261126
  %1050 = vst.msk [vmem:[#allocation3] sm:$0xc0] %vm1049, %v1047
  %vm1051 = vcmask 517376
  %1052 = vst.msk [vmem:[#allocation3 + $0x8] sm:$0x3] %vm1051, %v1044
  %v1053 = vld [vmem:[#allocation2 + $0x10] sm:$0x3]
  %v1054 = vld [vmem:[#allocation2 + $0x8] sm:$0xc0]
  %v1055 = vpack.c.bf16 %v966, %v966
  %v1057 = vrot.slane %v1055, 3
  %1058 = vrot.lane.b32.xlu0 %v1057, 96
  %v1059 = vpop.permute.xlu0 %1058
  %v1061 = vsel %vm285, %v1059, 0
  %1063 = vmatprep.subr.bf16.mxu0 0
  %1064 = vmatpush1.bf16.msra.mxu0 0
  %1065 = vmatprep.subr.bf16.mxu0 0
  %1066 = vmatpush1.bf16.msra.mxu0 0
  %1067 = vmatprep.subr.bf16.mxu0 0
  %1068 = vmatpush1.bf16.msra.mxu0 0
  %1069 = vmatprep.subr.bf16.mxu0 0
  %1070 = vmatpush1.bf16.msra.mxu0 0
  %1071 = vmatprep.subr.bf16.mxu0 0
  %1072 = vmatpush1.bf16.msra.mxu0 0
  %1073 = vmatprep.subr.bf16.mxu0 0
  %1074 = vmatpush1.bf16.msra.mxu0 0
  %1075 = vmatprep.subr.bf16.mxu0 0
  %1076 = vmatpush1.bf16.msra.mxu0 %v359
  %1077 = vmatprep.subr.bf16.mxu0 0
  %1078 = vmatpush1.bf16.msra.mxu0 %v358
  %1079 = vmatprep.subr.bf16.mxu0 0
  %1080 = vmatpush2.bf16.msra.mxu0 0
  %1081 = vmatprep.subr.bf16.mxu0 0
  %1082 = vmatpush2.bf16.msra.mxu0 0
  %1083 = vmatprep.subr.bf16.mxu0 0
  %1084 = vmatpush2.bf16.msra.mxu0 0
  %1085 = vmatprep.subr.bf16.mxu0 0
  %1086 = vmatpush2.bf16.msra.mxu0 0
  %1087 = vmatprep.subr.bf16.mxu0 0
  %1088 = vmatpush2.bf16.msra.mxu0 0
  %1089 = vmatprep.subr.bf16.mxu0 0
  %1090 = vmatpush2.bf16.msra.mxu0 0
  %1091 = vmatprep.subr.bf16.mxu0 0
  %1092 = vmatpush2.bf16.msra.mxu0 0
  %1093 = vmatprep.subr.bf16.mxu0 0
  %1094 = vmatpush2.bf16.msra.mxu0 0
  %1095 = vmatprep.mubr.bf16.mxu0 0
  %1096 = vmatmul.mubr.bf16.gmra.mxu0 %v1061
  %v1097 = vpop.f32.mrf.mxu0
  %v1098 = vadd.f32 0.0, %v1097
  %v1099 = vpop.f32.mrf.mxu0
  %v1100 = vpop.f32.mrf.mxu0
  %v1101 = vpop.f32.mrf.mxu0
  %1102 = vdwg.mxu0
  %v1103 = vadd.f32 %v1053, %v1098
  %v1104 = vxor.u32 %v1103, 2147483648
  %v1105 = vmul.f32 %v1104, 1.442695
  %v1106 = vpow.pop %v1105
  %v1107 = vadd.f32 %v1106, 1.0
  %v1108 = vrcp.pop %v1107
  %v1109 = vmul.f32 1.0, %v1108
  %v1110 = vadd.f32 %v1098, %v418
  %1112 = vrot.lane.b32.xlu0 %v1110, 64
  %v1113 = vpop.permute.xlu0 %1112
  %v1115 = vmul.f32 %v1109, %v1113
  %1117 = vrot.lane.b32.xlu0 %v1115, 64
  %v1118 = vpop.permute.xlu0 %1117
  %v1120 = vadd.f32 %v1053, %v1118
  %v1121 = vtanh.pop %v1120
  %v1122 = vsub.f32 1.0, %v1109
  %1124 = vrot.lane.b32.xlu0 %v1121, 96
  %v1125 = vpop.permute.xlu0 %1124
  %v1127 = vmul.f32 %v1122, %v1125
  %v1128 = vrot.slane %v966, 6
  %v1130 = vmul.f32 %v1109, %v1128
  %v1131 = vadd.f32 %v1127, %v1130
  %v1132 = vpack.c.bf16 %v1044, %v1044
  %1134 = vrot.lane.b32.xlu0 %v1132, 96
  %v1135 = vpop.permute.xlu0 %1134
  %v1137 = vsel %vm285, %v1135, 0
  %1139 = vmatprep.subr.bf16.mxu0 0
  %1140 = vmatpush1.bf16.msra.mxu0 0
  %1141 = vmatprep.subr.bf16.mxu0 0
  %1142 = vmatpush1.bf16.msra.mxu0 0
  %1143 = vmatprep.subr.bf16.mxu0 0
  %1144 = vmatpush1.bf16.msra.mxu0 0
  %1145 = vmatprep.subr.bf16.mxu0 0
  %1146 = vmatpush1.bf16.msra.mxu0 0
  %1147 = vmatprep.subr.bf16.mxu0 0
  %1148 = vmatpush1.bf16.msra.mxu0 0
  %1149 = vmatprep.subr.bf16.mxu0 0
  %1150 = vmatpush1.bf16.msra.mxu0 0
  %1151 = vmatprep.subr.bf16.mxu0 0
  %1152 = vmatpush1.bf16.msra.mxu0 %v449
  %1153 = vmatprep.subr.bf16.mxu0 0
  %1154 = vmatpush1.bf16.msra.mxu0 %v448
  %1155 = vmatprep.subr.bf16.mxu0 0
  %1156 = vmatpush2.bf16.msra.mxu0 0
  %1157 = vmatprep.subr.bf16.mxu0 0
  %1158 = vmatpush2.bf16.msra.mxu0 0
  %1159 = vmatprep.subr.bf16.mxu0 0
  %1160 = vmatpush2.bf16.msra.mxu0 0
  %1161 = vmatprep.subr.bf16.mxu0 0
  %1162 = vmatpush2.bf16.msra.mxu0 0
  %1163 = vmatprep.subr.bf16.mxu0 0
  %1164 = vmatpush2.bf16.msra.mxu0 0
  %1165 = vmatprep.subr.bf16.mxu0 0
  %1166 = vmatpush2.bf16.msra.mxu0 0
  %1167 = vmatprep.subr.bf16.mxu0 0
  %1168 = vmatpush2.bf16.msra.mxu0 0
  %1169 = vmatprep.subr.bf16.mxu0 0
  %1170 = vmatpush2.bf16.msra.mxu0 0
  %1171 = vmatprep.mubr.bf16.mxu0 0
  %1172 = vmatmul.mubr.bf16.gmra.mxu0 %v1137
  %v1173 = vpop.f32.mrf.mxu0
  %v1174 = vadd.f32 0.0, %v1173
  %v1175 = vpop.f32.mrf.mxu0
  %v1176 = vpop.f32.mrf.mxu0
  %v1177 = vpop.f32.mrf.mxu0
  %1178 = vdwg.mxu0
  %v1180 = vrot.slane %v1174, 2
  %v1182 = vadd.f32 %v1054, %v1180
  %v1183 = vxor.u32 %v1182, 2147483648
  %v1184 = vmul.f32 %v1183, 1.442695
  %v1185 = vpow.pop %v1184
  %v1186 = vadd.f32 %v1185, 1.0
  %v1187 = vrcp.pop %v1186
  %v1188 = vmul.f32 1.0, %v1187
  %v1189 = vadd.f32 %v1174, %v508
  %v1191 = vrot.slane %v1189, 2
  %1192 = vrot.lane.b32.xlu0 %v1191, 64
  %v1193 = vpop.permute.xlu0 %1192
  %v1195 = vmul.f32 %v1188, %v1193
  %1197 = vrot.lane.b32.xlu0 %v1195, 64
  %v1198 = vpop.permute.xlu0 %1197
  %v1200 = vadd.f32 %v1054, %v1198
  %v1201 = vtanh.pop %v1200
  %v1202 = vsub.f32 1.0, %v1188
  %1204 = vrot.lane.b32.xlu0 %v1201, 96
  %v1205 = vpop.permute.xlu0 %1204
  %v1207 = vmul.f32 %v1202, %v1205
  %v1209 = vrot.slane %v1044, 2
  %v1211 = vmul.f32 %v1188, %v1209
  %v1212 = vadd.f32 %v1207, %v1211
  %1214 = vrot.lane.b32.xlu0 %v1131, 96
  %v1215 = vpop.permute.xlu0 %1214
  %1217 = vst.msk [vmem:[#allocation3 + $0x8] sm:$0x3] %vm535, %v1215
  %1218 = vst.msk [vmem:[#allocation3] sm:$0xc0] %vm537, %v1212
  %v1219 = vld [vmem:[#allocation2 + $0x10] sm:$0xc]
  %v1220 = vld [vmem:[#allocation2 + $0x8] sm:$0x30]
  %v1221 = vpack.c.bf16 %v1131, %v1131
  %1223 = vrot.lane.b32.xlu0 %v1221, 96
  %v1224 = vpop.permute.xlu0 %1223
  %v1226 = vsel %vm285, %v1224, 0
  %1228 = vmatprep.subr.bf16.mxu0 0
  %1229 = vmatpush1.bf16.msra.mxu0 0
  %1230 = vmatprep.subr.bf16.mxu0 0
  %1231 = vmatpush1.bf16.msra.mxu0 0
  %1232 = vmatprep.subr.bf16.mxu0 0
  %1233 = vmatpush1.bf16.msra.mxu0 0
  %1234 = vmatprep.subr.bf16.mxu0 0
  %1235 = vmatpush1.bf16.msra.mxu0 0
  %1236 = vmatprep.subr.bf16.mxu0 0
  %1237 = vmatpush1.bf16.msra.mxu0 0
  %1238 = vmatprep.subr.bf16.mxu0 0
  %1239 = vmatpush1.bf16.msra.mxu0 0
  %1240 = vmatprep.subr.bf16.mxu0 0
  %1241 = vmatpush1.bf16.msra.mxu0 %v359
  %1242 = vmatprep.subr.bf16.mxu0 0
  %1243 = vmatpush1.bf16.msra.mxu0 %v358
  %1244 = vmatprep.subr.bf16.mxu0 0
  %1245 = vmatpush2.bf16.msra.mxu0 0
  %1246 = vmatprep.subr.bf16.mxu0 0
  %1247 = vmatpush2.bf16.msra.mxu0 0
  %1248 = vmatprep.subr.bf16.mxu0 0
  %1249 = vmatpush2.bf16.msra.mxu0 0
  %1250 = vmatprep.subr.bf16.mxu0 0
  %1251 = vmatpush2.bf16.msra.mxu0 0
  %1252 = vmatprep.subr.bf16.mxu0 0
  %1253 = vmatpush2.bf16.msra.mxu0 0
  %1254 = vmatprep.subr.bf16.mxu0 0
  %1255 = vmatpush2.bf16.msra.mxu0 0
  %1256 = vmatprep.subr.bf16.mxu0 0
  %1257 = vmatpush2.bf16.msra.mxu0 0
  %1258 = vmatprep.subr.bf16.mxu0 0
  %1259 = vmatpush2.bf16.msra.mxu0 0
  %1260 = vmatprep.mubr.bf16.mxu0 0
  %1261 = vmatmul.mubr.bf16.gmra.mxu0 %v1226
  %v1262 = vpop.f32.mrf.mxu0
  %v1263 = vadd.f32 0.0, %v1262
  %v1264 = vpop.f32.mrf.mxu0
  %v1265 = vpop.f32.mrf.mxu0
  %v1266 = vpop.f32.mrf.mxu0
  %1267 = vdwg.mxu0
  %v1269 = vrot.slane %v1263, 6
  %v1271 = vadd.f32 %v1219, %v1269
  %v1272 = vxor.u32 %v1271, 2147483648
  %v1273 = vmul.f32 %v1272, 1.442695
  %v1274 = vpow.pop %v1273
  %v1275 = vadd.f32 %v1274, 1.0
  %v1276 = vrcp.pop %v1275
  %v1277 = vmul.f32 1.0, %v1276
  %v1278 = vadd.f32 %v1263, %v418
  %v1280 = vrot.slane %v1278, 6
  %1281 = vrot.lane.b32.xlu0 %v1280, 64
  %v1282 = vpop.permute.xlu0 %1281
  %v1284 = vmul.f32 %v1277, %v1282
  %1286 = vrot.lane.b32.xlu0 %v1284, 64
  %v1287 = vpop.permute.xlu0 %1286
  %v1289 = vadd.f32 %v1219, %v1287
  %v1290 = vtanh.pop %v1289
  %v1291 = vsub.f32 1.0, %v1277
  %1293 = vrot.lane.b32.xlu0 %v1290, 96
  %v1294 = vpop.permute.xlu0 %1293
  %v1296 = vmul.f32 %v1291, %v1294
  %v1297 = vrot.slane %v1131, 6
  %v1299 = vmul.f32 %v1277, %v1297
  %v1300 = vadd.f32 %v1296, %v1299
  %v1301 = vpack.c.bf16 %v1212, %v1212
  %v1303 = vrot.slane %v1301, 3
  %1304 = vrot.lane.b32.xlu0 %v1303, 96
  %v1305 = vpop.permute.xlu0 %1304
  %v1307 = vsel %vm285, %v1305, 0
  %1309 = vmatprep.subr.bf16.mxu0 0
  %1310 = vmatpush1.bf16.msra.mxu0 0
  %1311 = vmatprep.subr.bf16.mxu0 0
  %1312 = vmatpush1.bf16.msra.mxu0 0
  %1313 = vmatprep.subr.bf16.mxu0 0
  %1314 = vmatpush1.bf16.msra.mxu0 0
  %1315 = vmatprep.subr.bf16.mxu0 0
  %1316 = vmatpush1.bf16.msra.mxu0 0
  %1317 = vmatprep.subr.bf16.mxu0 0
  %1318 = vmatpush1.bf16.msra.mxu0 0
  %1319 = vmatprep.subr.bf16.mxu0 0
  %1320 = vmatpush1.bf16.msra.mxu0 0
  %1321 = vmatprep.subr.bf16.mxu0 0
  %1322 = vmatpush1.bf16.msra.mxu0 %v449
  %1323 = vmatprep.subr.bf16.mxu0 0
  %1324 = vmatpush1.bf16.msra.mxu0 %v448
  %1325 = vmatprep.subr.bf16.mxu0 0
  %1326 = vmatpush2.bf16.msra.mxu0 0
  %1327 = vmatprep.subr.bf16.mxu0 0
  %1328 = vmatpush2.bf16.msra.mxu0 0
  %1329 = vmatprep.subr.bf16.mxu0 0
  %1330 = vmatpush2.bf16.msra.mxu0 0
  %1331 = vmatprep.subr.bf16.mxu0 0
  %1332 = vmatpush2.bf16.msra.mxu0 0
  %1333 = vmatprep.subr.bf16.mxu0 0
  %1334 = vmatpush2.bf16.msra.mxu0 0
  %1335 = vmatprep.subr.bf16.mxu0 0
  %1336 = vmatpush2.bf16.msra.mxu0 0
  %1337 = vmatprep.subr.bf16.mxu0 0
  %1338 = vmatpush2.bf16.msra.mxu0 0
  %1339 = vmatprep.subr.bf16.mxu0 0
  %1340 = vmatpush2.bf16.msra.mxu0 0
  %1341 = vmatprep.mubr.bf16.mxu0 0
  %1342 = vmatmul.mubr.bf16.gmra.mxu0 %v1307
  %v1343 = vpop.f32.mrf.mxu0
  %v1344 = vadd.f32 0.0, %v1343
  %v1345 = vpop.f32.mrf.mxu0
  %v1346 = vpop.f32.mrf.mxu0
  %v1347 = vpop.f32.mrf.mxu0
  %1348 = vdwg.mxu0
  %v1350 = vrot.slane %v1344, 4
  %v1352 = vadd.f32 %v1220, %v1350
  %v1353 = vxor.u32 %v1352, 2147483648
  %v1354 = vmul.f32 %v1353, 1.442695
  %v1355 = vpow.pop %v1354
  %v1356 = vadd.f32 %v1355, 1.0
  %v1357 = vrcp.pop %v1356
  %v1358 = vmul.f32 1.0, %v1357
  %v1359 = vadd.f32 %v1344, %v508
  %v1361 = vrot.slane %v1359, 4
  %1362 = vrot.lane.b32.xlu0 %v1361, 64
  %v1363 = vpop.permute.xlu0 %1362
  %v1365 = vmul.f32 %v1358, %v1363
  %1367 = vrot.lane.b32.xlu0 %v1365, 64
  %v1368 = vpop.permute.xlu0 %1367
  %v1370 = vadd.f32 %v1220, %v1368
  %v1371 = vtanh.pop %v1370
  %v1372 = vsub.f32 1.0, %v1358
  %1374 = vrot.lane.b32.xlu0 %v1371, 96
  %v1375 = vpop.permute.xlu0 %1374
  %v1377 = vmul.f32 %v1372, %v1375
  %v1379 = vrot.slane %v1212, 2
  %v1381 = vmul.f32 %v1358, %v1379
  %v1382 = vadd.f32 %v1377, %v1381
  %1384 = vrot.lane.b32.xlu0 %v1300, 96
  %v1385 = vpop.permute.xlu0 %1384
  %1387 = vst.msk [vmem:[#allocation3 + $0x8] sm:$0xc] %vm707, %v1385
  %1388 = vst.msk [vmem:[#allocation3] sm:$0x30] %vm709, %v1382
  %v1389 = vld [vmem:[#allocation2 + $0x10] sm:$0x30]
  %v1390 = vld [vmem:[#allocation2 + $0x8] sm:$0xc]
  %v1391 = vpack.c.bf16 %v1300, %v1300
  %v1393 = vrot.slane %v1391, 1
  %1394 = vrot.lane.b32.xlu0 %v1393, 96
  %v1395 = vpop.permute.xlu0 %1394
  %v1397 = vsel %vm285, %v1395, 0
  %1399 = vmatprep.subr.bf16.mxu0 0
  %1400 = vmatpush1.bf16.msra.mxu0 0
  %1401 = vmatprep.subr.bf16.mxu0 0
  %1402 = vmatpush1.bf16.msra.mxu0 0
  %1403 = vmatprep.subr.bf16.mxu0 0
  %1404 = vmatpush1.bf16.msra.mxu0 0
  %1405 = vmatprep.subr.bf16.mxu0 0
  %1406 = vmatpush1.bf16.msra.mxu0 0
  %1407 = vmatprep.subr.bf16.mxu0 0
  %1408 = vmatpush1.bf16.msra.mxu0 0
  %1409 = vmatprep.subr.bf16.mxu0 0
  %1410 = vmatpush1.bf16.msra.mxu0 0
  %1411 = vmatprep.subr.bf16.mxu0 0
  %1412 = vmatpush1.bf16.msra.mxu0 %v359
  %1413 = vmatprep.subr.bf16.mxu0 0
  %1414 = vmatpush1.bf16.msra.mxu0 %v358
  %1415 = vmatprep.subr.bf16.mxu0 0
  %1416 = vmatpush2.bf16.msra.mxu0 0
  %1417 = vmatprep.subr.bf16.mxu0 0
  %1418 = vmatpush2.bf16.msra.mxu0 0
  %1419 = vmatprep.subr.bf16.mxu0 0
  %1420 = vmatpush2.bf16.msra.mxu0 0
  %1421 = vmatprep.subr.bf16.mxu0 0
  %1422 = vmatpush2.bf16.msra.mxu0 0
  %1423 = vmatprep.subr.bf16.mxu0 0
  %1424 = vmatpush2.bf16.msra.mxu0 0
  %1425 = vmatprep.subr.bf16.mxu0 0
  %1426 = vmatpush2.bf16.msra.mxu0 0
  %1427 = vmatprep.subr.bf16.mxu0 0
  %1428 = vmatpush2.bf16.msra.mxu0 0
  %1429 = vmatprep.subr.bf16.mxu0 0
  %1430 = vmatpush2.bf16.msra.mxu0 0
  %1431 = vmatprep.mubr.bf16.mxu0 0
  %1432 = vmatmul.mubr.bf16.gmra.mxu0 %v1397
  %v1433 = vpop.f32.mrf.mxu0
  %v1434 = vadd.f32 0.0, %v1433
  %v1435 = vpop.f32.mrf.mxu0
  %v1436 = vpop.f32.mrf.mxu0
  %v1437 = vpop.f32.mrf.mxu0
  %1438 = vdwg.mxu0
  %v1440 = vrot.slane %v1434, 4
  %v1442 = vadd.f32 %v1389, %v1440
  %v1443 = vxor.u32 %v1442, 2147483648
  %v1444 = vmul.f32 %v1443, 1.442695
  %v1445 = vpow.pop %v1444
  %v1446 = vadd.f32 %v1445, 1.0
  %v1447 = vrcp.pop %v1446
  %v1448 = vmul.f32 1.0, %v1447
  %v1449 = vadd.f32 %v1434, %v418
  %v1451 = vrot.slane %v1449, 4
  %1452 = vrot.lane.b32.xlu0 %v1451, 64
  %v1453 = vpop.permute.xlu0 %1452
  %v1455 = vmul.f32 %v1448, %v1453
  %1457 = vrot.lane.b32.xlu0 %v1455, 64
  %v1458 = vpop.permute.xlu0 %1457
  %v1460 = vadd.f32 %v1389, %v1458
  %v1461 = vtanh.pop %v1460
  %v1462 = vsub.f32 1.0, %v1448
  %1464 = vrot.lane.b32.xlu0 %v1461, 96
  %v1465 = vpop.permute.xlu0 %1464
  %v1467 = vmul.f32 %v1462, %v1465
  %v1468 = vrot.slane %v1300, 6
  %v1470 = vmul.f32 %v1448, %v1468
  %v1471 = vadd.f32 %v1467, %v1470
  %v1472 = vpack.c.bf16 %v1382, %v1382
  %v1474 = vrot.slane %v1472, 2
  %1475 = vrot.lane.b32.xlu0 %v1474, 96
  %v1476 = vpop.permute.xlu0 %1475
  %v1478 = vsel %vm285, %v1476, 0
  %1480 = vmatprep.subr.bf16.mxu0 0
  %1481 = vmatpush1.bf16.msra.mxu0 0
  %1482 = vmatprep.subr.bf16.mxu0 0
  %1483 = vmatpush1.bf16.msra.mxu0 0
  %1484 = vmatprep.subr.bf16.mxu0 0
  %1485 = vmatpush1.bf16.msra.mxu0 0
  %1486 = vmatprep.subr.bf16.mxu0 0
  %1487 = vmatpush1.bf16.msra.mxu0 0
  %1488 = vmatprep.subr.bf16.mxu0 0
  %1489 = vmatpush1.bf16.msra.mxu0 0
  %1490 = vmatprep.subr.bf16.mxu0 0
  %1491 = vmatpush1.bf16.msra.mxu0 0
  %1492 = vmatprep.subr.bf16.mxu0 0
  %1493 = vmatpush1.bf16.msra.mxu0 %v449
  %1494 = vmatprep.subr.bf16.mxu0 0
  %1495 = vmatpush1.bf16.msra.mxu0 %v448
  %1496 = vmatprep.subr.bf16.mxu0 0
  %1497 = vmatpush2.bf16.msra.mxu0 0
  %1498 = vmatprep.subr.bf16.mxu0 0
  %1499 = vmatpush2.bf16.msra.mxu0 0
  %1500 = vmatprep.subr.bf16.mxu0 0
  %1501 = vmatpush2.bf16.msra.mxu0 0
  %1502 = vmatprep.subr.bf16.mxu0 0
  %1503 = vmatpush2.bf16.msra.mxu0 0
  %1504 = vmatprep.subr.bf16.mxu0 0
  %1505 = vmatpush2.bf16.msra.mxu0 0
  %1506 = vmatprep.subr.bf16.mxu0 0
  %1507 = vmatpush2.bf16.msra.mxu0 0
  %1508 = vmatprep.subr.bf16.mxu0 0
  %1509 = vmatpush2.bf16.msra.mxu0 0
  %1510 = vmatprep.subr.bf16.mxu0 0
  %1511 = vmatpush2.bf16.msra.mxu0 0
  %1512 = vmatprep.mubr.bf16.mxu0 0
  %1513 = vmatmul.mubr.bf16.gmra.mxu0 %v1478
  %v1514 = vpop.f32.mrf.mxu0
  %v1515 = vadd.f32 0.0, %v1514
  %v1516 = vpop.f32.mrf.mxu0
  %v1517 = vpop.f32.mrf.mxu0
  %v1518 = vpop.f32.mrf.mxu0
  %1519 = vdwg.mxu0
  %v1521 = vrot.slane %v1515, 6
  %v1523 = vadd.f32 %v1390, %v1521
  %v1524 = vxor.u32 %v1523, 2147483648
  %v1525 = vmul.f32 %v1524, 1.442695
  %v1526 = vpow.pop %v1525
  %v1527 = vadd.f32 %v1526, 1.0
  %v1528 = vrcp.pop %v1527
  %v1529 = vmul.f32 1.0, %v1528
  %v1530 = vadd.f32 %v1515, %v508
  %v1532 = vrot.slane %v1530, 6
  %1533 = vrot.lane.b32.xlu0 %v1532, 64
  %v1534 = vpop.permute.xlu0 %1533
  %v1536 = vmul.f32 %v1529, %v1534
  %1538 = vrot.lane.b32.xlu0 %v1536, 64
  %v1539 = vpop.permute.xlu0 %1538
  %v1541 = vadd.f32 %v1390, %v1539
  %v1542 = vtanh.pop %v1541
  %v1543 = vsub.f32 1.0, %v1529
  %1545 = vrot.lane.b32.xlu0 %v1542, 96
  %v1546 = vpop.permute.xlu0 %1545
  %v1548 = vmul.f32 %v1543, %v1546
  %v1550 = vrot.slane %v1382, 2
  %v1552 = vmul.f32 %v1529, %v1550
  %v1553 = vadd.f32 %v1548, %v1552
  %1555 = vrot.lane.b32.xlu0 %v1471, 96
  %v1556 = vpop.permute.xlu0 %1555
  %1558 = vst.msk [vmem:[#allocation3 + $0x8] sm:$0x30] %vm880, %v1556
  %1559 = vst.msk [vmem:[#allocation3] sm:$0xc] %vm882, %v1553
  %v1560 = vld [vmem:[#allocation2 + $0x10] sm:$0xc0]
  %v1561 = vld [vmem:[#allocation2 + $0x8] sm:$0x3]
  %v1562 = vpack.c.bf16 %v1471, %v1471
  %v1564 = vrot.slane %v1562, 2
  %1565 = vrot.lane.b32.xlu0 %v1564, 96
  %v1566 = vpop.permute.xlu0 %1565
  %v1568 = vsel %vm285, %v1566, 0
  %1570 = vmatprep.subr.bf16.mxu0 0
  %1571 = vmatpush1.bf16.msra.mxu0 0
  %1572 = vmatprep.subr.bf16.mxu0 0
  %1573 = vmatpush1.bf16.msra.mxu0 0
  %1574 = vmatprep.subr.bf16.mxu0 0
  %1575 = vmatpush1.bf16.msra.mxu0 0
  %1576 = vmatprep.subr.bf16.mxu0 0
  %1577 = vmatpush1.bf16.msra.mxu0 0
  %1578 = vmatprep.subr.bf16.mxu0 0
  %1579 = vmatpush1.bf16.msra.mxu0 0
  %1580 = vmatprep.subr.bf16.mxu0 0
  %1581 = vmatpush1.bf16.msra.mxu0 0
  %1582 = vmatprep.subr.bf16.mxu0 0
  %1583 = vmatpush1.bf16.msra.mxu0 %v359
  %1584 = vmatprep.subr.bf16.mxu0 0
  %1585 = vmatpush1.bf16.msra.mxu0 %v358
  %1586 = vmatprep.subr.bf16.mxu0 0
  %1587 = vmatpush2.bf16.msra.mxu0 0
  %1588 = vmatprep.subr.bf16.mxu0 0
  %1589 = vmatpush2.bf16.msra.mxu0 0
  %1590 = vmatprep.subr.bf16.mxu0 0
  %1591 = vmatpush2.bf16.msra.mxu0 0
  %1592 = vmatprep.subr.bf16.mxu0 0
  %1593 = vmatpush2.bf16.msra.mxu0 0
  %1594 = vmatprep.subr.bf16.mxu0 0
  %1595 = vmatpush2.bf16.msra.mxu0 0
  %1596 = vmatprep.subr.bf16.mxu0 0
  %1597 = vmatpush2.bf16.msra.mxu0 0
  %1598 = vmatprep.subr.bf16.mxu0 0
  %1599 = vmatpush2.bf16.msra.mxu0 0
  %1600 = vmatprep.subr.bf16.mxu0 0
  %1601 = vmatpush2.bf16.msra.mxu0 0
  %1602 = vmatprep.mubr.bf16.mxu0 0
  %1603 = vmatmul.mubr.bf16.gmra.mxu0 %v1568
  %v1604 = vpop.f32.mrf.mxu0
  %v1605 = vadd.f32 0.0, %v1604
  %v1606 = vpop.f32.mrf.mxu0
  %v1607 = vpop.f32.mrf.mxu0
  %v1608 = vpop.f32.mrf.mxu0
  %1609 = vdwg.mxu0
  %v1611 = vrot.slane %v1605, 2
  %v1613 = vadd.f32 %v1560, %v1611
  %v1614 = vxor.u32 %v1613, 2147483648
  %v1615 = vmul.f32 %v1614, 1.442695
  %v1616 = vpow.pop %v1615
  %v1617 = vadd.f32 %v1616, 1.0
  %v1618 = vrcp.pop %v1617
  %v1619 = vmul.f32 1.0, %v1618
  %v1620 = vadd.f32 %v1605, %v418
  %v1622 = vrot.slane %v1620, 2
  %1623 = vrot.lane.b32.xlu0 %v1622, 64
  %v1624 = vpop.permute.xlu0 %1623
  %v1626 = vmul.f32 %v1619, %v1624
  %1628 = vrot.lane.b32.xlu0 %v1626, 64
  %v1629 = vpop.permute.xlu0 %1628
  %v1631 = vadd.f32 %v1560, %v1629
  %v1632 = vtanh.pop %v1631
  %v1633 = vsub.f32 1.0, %v1619
  %1635 = vrot.lane.b32.xlu0 %v1632, 96
  %v1636 = vpop.permute.xlu0 %1635
  %v1638 = vmul.f32 %v1633, %v1636
  %v1639 = vrot.slane %v1471, 6
  %v1641 = vmul.f32 %v1619, %v1639
  %v1642 = vadd.f32 %v1638, %v1641
  %v1643 = vpack.c.bf16 %v1553, %v1553
  %v1645 = vrot.slane %v1643, 1
  %1646 = vrot.lane.b32.xlu0 %v1645, 96
  %v1647 = vpop.permute.xlu0 %1646
  %v1649 = vsel %vm285, %v1647, 0
  %1651 = vmatprep.subr.bf16.mxu0 0
  %1652 = vmatpush1.bf16.msra.mxu0 0
  %1653 = vmatprep.subr.bf16.mxu0 0
  %1654 = vmatpush1.bf16.msra.mxu0 0
  %1655 = vmatprep.subr.bf16.mxu0 0
  %1656 = vmatpush1.bf16.msra.mxu0 0
  %1657 = vmatprep.subr.bf16.mxu0 0
  %1658 = vmatpush1.bf16.msra.mxu0 0
  %1659 = vmatprep.subr.bf16.mxu0 0
  %1660 = vmatpush1.bf16.msra.mxu0 0
  %1661 = vmatprep.subr.bf16.mxu0 0
  %1662 = vmatpush1.bf16.msra.mxu0 0
  %1663 = vmatprep.subr.bf16.mxu0 0
  %1664 = vmatpush1.bf16.msra.mxu0 %v449
  %1665 = vmatprep.subr.bf16.mxu0 0
  %1666 = vmatpush1.bf16.msra.mxu0 %v448
  %1667 = vmatprep.subr.bf16.mxu0 0
  %1668 = vmatpush2.bf16.msra.mxu0 0
  %1669 = vmatprep.subr.bf16.mxu0 0
  %1670 = vmatpush2.bf16.msra.mxu0 0
  %1671 = vmatprep.subr.bf16.mxu0 0
  %1672 = vmatpush2.bf16.msra.mxu0 0
  %1673 = vmatprep.subr.bf16.mxu0 0
  %1674 = vmatpush2.bf16.msra.mxu0 0
  %1675 = vmatprep.subr.bf16.mxu0 0
  %1676 = vmatpush2.bf16.msra.mxu0 0
  %1677 = vmatprep.subr.bf16.mxu0 0
  %1678 = vmatpush2.bf16.msra.mxu0 0
  %1679 = vmatprep.subr.bf16.mxu0 0
  %1680 = vmatpush2.bf16.msra.mxu0 0
  %1681 = vmatprep.subr.bf16.mxu0 0
  %1682 = vmatpush2.bf16.msra.mxu0 0
  %1683 = vmatprep.mubr.bf16.mxu0 0
  %1684 = vmatmul.mubr.bf16.gmra.mxu0 %v1649
  %v1685 = vpop.f32.mrf.mxu0
  %v1686 = vadd.f32 0.0, %v1685
  %v1687 = vpop.f32.mrf.mxu0
  %v1688 = vpop.f32.mrf.mxu0
  %v1689 = vpop.f32.mrf.mxu0
  %1690 = vdwg.mxu0
  %v1691 = vadd.f32 %v1561, %v1686
  %v1692 = vxor.u32 %v1691, 2147483648
  %v1693 = vmul.f32 %v1692, 1.442695
  %v1694 = vpow.pop %v1693
  %v1695 = vadd.f32 %v1694, 1.0
  %v1696 = vrcp.pop %v1695
  %v1697 = vmul.f32 1.0, %v1696
  %v1698 = vadd.f32 %v1686, %v508
  %1700 = vrot.lane.b32.xlu0 %v1698, 64
  %v1701 = vpop.permute.xlu0 %1700
  %v1703 = vmul.f32 %v1697, %v1701
  %1705 = vrot.lane.b32.xlu0 %v1703, 64
  %v1706 = vpop.permute.xlu0 %1705
  %v1708 = vadd.f32 %v1561, %v1706
  %v1709 = vtanh.pop %v1708
  %v1710 = vsub.f32 1.0, %v1697
  %1712 = vrot.lane.b32.xlu0 %v1709, 96
  %v1713 = vpop.permute.xlu0 %1712
  %v1715 = vmul.f32 %v1710, %v1713
  %v1717 = vrot.slane %v1553, 2
  %v1719 = vmul.f32 %v1697, %v1717
  %v1720 = vadd.f32 %v1715, %v1719
  %1722 = vrot.lane.b32.xlu0 %v1642, 96
  %v1723 = vpop.permute.xlu0 %1722
  %1725 = vst.msk [vmem:[#allocation3 + $0x8] sm:$0xc0] %vm1049, %v1723
  %1726 = vst.msk [vmem:[#allocation3] sm:$0x3] %vm1051, %v1720
  %v1727 = vld [vmem:[#allocation3] sm:$0xff]
  %v1728 = vld [vmem:[#allocation3 + $0x8] sm:$0xff]
  %v1729 = vld [vmem:[%s43] sm:$0xff]
  %v1730 = vld [vmem:[%s43 + $0x8] sm:$0xff]
  %v1731 = vld [vmem:[%s43 + $0x10] sm:$0xff]
  %v1732 = vld [vmem:[%s43 + $0x18] sm:$0xff]
  %v1733 = vld [vmem:[%s43 + $0x20] sm:$0xff]
  %v1734 = vld [vmem:[%s43 + $0x28] sm:$0xff]
  %v1735 = vld [vmem:[%s43 + $0x30] sm:$0xff]
  %v1736 = vld [vmem:[%s43 + $0x38] sm:$0xff]
  %v1737 = vld [vmem:[%s45] sm:$0xf]
  %v1738 = vpack.c.bf16 %v1728, %v1727
  %v1739 = vld [vmem:[%s19] sm:$0xff]
  %v1740 = vld [vmem:[%s19 + $0x8] sm:$0xf]
  %v1741 = vld [vmem:[%s19 + $0xc] sm:$0xff]
  %v1742 = vld [vmem:[%s19 + $0x14] sm:$0xf]
  %v1743 = vld [vmem:[%s19 + $0x18] sm:$0xff]
  %v1744 = vld [vmem:[%s19 + $0x20] sm:$0xf]
  %v1745 = vld [vmem:[%s19 + $0x24] sm:$0xff]
  %v1746 = vld [vmem:[%s19 + $0x2c] sm:$0xf]
  %v1747 = vld [vmem:[%s19 + $0x30] sm:$0xff]
  %v1748 = vld [vmem:[%s19 + $0x38] sm:$0xf]
  %v1749 = vld [vmem:[%s19 + $0x3c] sm:$0xff]
  %v1750 = vld [vmem:[%s19 + $0x44] sm:$0xf]
  %v1751 = vld [vmem:[%s19 + $0x48] sm:$0xff]
  %v1752 = vld [vmem:[%s19 + $0x50] sm:$0xf]
  %v1753 = vld [vmem:[%s19 + $0x54] sm:$0xff]
  %v1754 = vld [vmem:[%s19 + $0x5c] sm:$0xf]
  %v1755 = vld [vmem:[%s21] sm:$0x7]
  %v1757 = vlaneseq
  %v1758 = vshrl.u32 %v1757, 7
  %v1759 = vsub.s32 0, %v1758
  %v1760 = vrot.slane %v1755, %v1759
  %v1761 = vlaneseq
  %v1762 = vshrl.u32 %v1761, 7
  %v1763 = vsub.s32 1, %v1762
  %v1764 = vrot.slane %v1755, %v1763
  %v1765 = vlaneseq
  %v1766 = vshrl.u32 %v1765, 7
  %v1767 = vsub.s32 2, %v1766
  %v1768 = vrot.slane %v1755, %v1767
  %v1788 = vunpack.c.l.b16 %v1739
  %v1789 = vunpack.c.h.b16 %v1739
  %v1790 = vunpack.c.l.b16 %v1740
  %v1791 = vunpack.c.l.b16 %v1741
  %v1792 = vunpack.c.h.b16 %v1741
  %v1793 = vunpack.c.l.b16 %v1742
  %v1794 = vunpack.c.l.b16 %v1743
  %v1795 = vunpack.c.h.b16 %v1743
  %v1796 = vunpack.c.l.b16 %v1744
  %v1797 = vunpack.c.l.b16 %v1745
  %v1798 = vunpack.c.h.b16 %v1745
  %v1799 = vunpack.c.l.b16 %v1746
  %v1800 = vunpack.c.l.b16 %v1747
  %v1801 = vunpack.c.h.b16 %v1747
  %v1802 = vunpack.c.l.b16 %v1748
  %v1803 = vunpack.c.l.b16 %v1749
  %v1804 = vunpack.c.h.b16 %v1749
  %v1805 = vunpack.c.l.b16 %v1750
  %v1806 = vunpack.c.l.b16 %v1751
  %v1807 = vunpack.c.h.b16 %v1751
  %v1808 = vunpack.c.l.b16 %v1752
  %v1809 = vunpack.c.l.b16 %v1753
  %v1810 = vunpack.c.h.b16 %v1753
  %v1811 = vunpack.c.l.b16 %v1754
  %v1812 = vpack.c.b16 %v1791, %v1788
  %v1813 = vpack.c.b16 %v1792, %v1789
  %v1814 = vpack.c.b16 %v1793, %v1790
  %v1815 = vpack.c.b16 %v1797, %v1794
  %v1816 = vpack.c.b16 %v1798, %v1795
  %v1817 = vpack.c.b16 %v1799, %v1796
  %v1818 = vpack.c.b16 %v1803, %v1800
  %v1819 = vpack.c.b16 %v1804, %v1801
  %v1820 = vpack.c.b16 %v1805, %v1802
  %v1821 = vpack.c.b16 %v1809, %v1806
  %v1822 = vpack.c.b16 %v1810, %v1807
  %v1823 = vpack.c.b16 %v1811, %v1808
  %vm1836 = vcmask 523264
  %v1838 = vsel %vm1836, %v1738, 0
  %1840 = vmatprep.subr.bf16.mxu0 0
  %1841 = vmatpush1.bf16.msra.mxu0 0
  %1842 = vmatprep.subr.bf16.mxu0 0
  %1843 = vmatpush1.bf16.msra.mxu0 0
  %1844 = vmatprep.subr.bf16.mxu0 0
  %1845 = vmatpush1.bf16.msra.mxu0 0
  %1846 = vmatprep.subr.bf16.mxu0 0
  %1847 = vmatpush1.bf16.msra.mxu0 0
  %1848 = vmatprep.subr.bf16.mxu0 %v1822
  %1849 = vmatpush1.bf16.msra.mxu0 %v1821
  %1850 = vmatprep.subr.bf16.mxu0 %v1819
  %1851 = vmatpush1.bf16.msra.mxu0 %v1818
  %1852 = vmatprep.subr.bf16.mxu0 %v1816
  %1853 = vmatpush1.bf16.msra.mxu0 %v1815
  %1854 = vmatprep.subr.bf16.mxu0 %v1813
  %1855 = vmatpush1.bf16.msra.mxu0 %v1812
  %1856 = vmatprep.subr.bf16.mxu0 0
  %1857 = vmatpush2.bf16.msra.mxu0 0
  %1858 = vmatprep.subr.bf16.mxu0 0
  %1859 = vmatpush2.bf16.msra.mxu0 0
  %1860 = vmatprep.subr.bf16.mxu0 0
  %1861 = vmatpush2.bf16.msra.mxu0 0
  %1862 = vmatprep.subr.bf16.mxu0 0
  %1863 = vmatpush2.bf16.msra.mxu0 0
  %1864 = vmatprep.subr.bf16.mxu0 0
  %1865 = vmatpush2.bf16.msra.mxu0 0
  %1866 = vmatprep.subr.bf16.mxu0 0
  %1867 = vmatpush2.bf16.msra.mxu0 0
  %1868 = vmatprep.subr.bf16.mxu0 0
  %1869 = vmatpush2.bf16.msra.mxu0 0
  %1870 = vmatprep.subr.bf16.mxu0 0
  %1871 = vmatpush2.bf16.msra.mxu0 0
  %1872 = vmatprep.mubr.bf16.mxu0 0
  %1873 = vmatmul.mubr.bf16.gmra.mxu0 %v1838
  %v1874 = vpop.f32.mrf.mxu0
  %v1875 = vadd.f32 %v1760, %v1874
  %v1876 = vpop.f32.mrf.mxu0
  %v1877 = vadd.f32 %v1764, %v1876
  %v1878 = vpop.f32.mrf.mxu0
  %v1879 = vadd.f32 %v1760, %v1878
  %v1880 = vpop.f32.mrf.mxu0
  %v1881 = vadd.f32 %v1764, %v1880
  %1882 = vdwg.mxu0
  %1883 = vmatprep.subr.bf16.mxu0 0
  %1884 = vmatpush1.bf16.msra.mxu0 0
  %1885 = vmatprep.subr.bf16.mxu0 0
  %1886 = vmatpush1.bf16.msra.mxu0 0
  %1887 = vmatprep.subr.bf16.mxu0 0
  %1888 = vmatpush1.bf16.msra.mxu0 0
  %1889 = vmatprep.subr.bf16.mxu0 0
  %1890 = vmatpush1.bf16.msra.mxu0 0
  %1891 = vmatprep.subr.bf16.mxu0 0
  %1892 = vmatpush1.bf16.msra.mxu0 %v1823
  %1893 = vmatprep.subr.bf16.mxu0 0
  %1894 = vmatpush1.bf16.msra.mxu0 %v1820
  %1895 = vmatprep.subr.bf16.mxu0 0
  %1896 = vmatpush1.bf16.msra.mxu0 %v1817
  %1897 = vmatprep.subr.bf16.mxu0 0
  %1898 = vmatpush1.bf16.msra.mxu0 %v1814
  %1899 = vmatprep.subr.bf16.mxu0 0
  %1900 = vmatpush2.bf16.msra.mxu0 0
  %1901 = vmatprep.subr.bf16.mxu0 0
  %1902 = vmatpush2.bf16.msra.mxu0 0
  %1903 = vmatprep.subr.bf16.mxu0 0
  %1904 = vmatpush2.bf16.msra.mxu0 0
  %1905 = vmatprep.subr.bf16.mxu0 0
  %1906 = vmatpush2.bf16.msra.mxu0 0
  %1907 = vmatprep.subr.bf16.mxu0 0
  %1908 = vmatpush2.bf16.msra.mxu0 0
  %1909 = vmatprep.subr.bf16.mxu0 0
  %1910 = vmatpush2.bf16.msra.mxu0 0
  %1911 = vmatprep.subr.bf16.mxu0 0
  %1912 = vmatpush2.bf16.msra.mxu0 0
  %1913 = vmatprep.subr.bf16.mxu0 0
  %1914 = vmatpush2.bf16.msra.mxu0 0
  %1915 = vmatprep.mubr.bf16.mxu0 0
  %1916 = vmatmul.mubr.bf16.gmra.mxu0 %v1838
  %v1917 = vpop.f32.mrf.mxu0
  %v1918 = vadd.f32 %v1768, %v1917
  %v1919 = vpop.f32.mrf.mxu0
  %v1920 = vpop.f32.mrf.mxu0
  %v1921 = vadd.f32 %v1768, %v1920
  %v1922 = vpop.f32.mrf.mxu0
  %1923 = vdwg.mxu0
  %v1924 = vmul.f32 %v1875, 0.25
  %v1925 = vmul.f32 %v1879, 0.25
  %v1926 = vld [vmem:[%s47] sm:$0xff]
  %v1927 = vld [vmem:[%s47 + $0x8] sm:$0xff]
  %vm1928 = vcmask 130048
  %v1930 = vsel %vm1928, %v1926, 0
  %v1933 = vsel %vm1928, %v1927, 0
  %1935 = vmatprep.subr.mxu0 0.0
  %1936 = vmatpush1.msra.mxu0 0.0
  %1937 = vmatprep.subr.mxu0 0.0
  %1938 = vmatpush1.msra.mxu0 0.0
  %1939 = vmatprep.subr.mxu0 0.0
  %1940 = vmatpush1.msra.mxu0 0.0
  %1941 = vmatprep.subr.mxu0 0.0
  %1942 = vmatpush1.msra.mxu0 0.0
  %1943 = vmatprep.subr.mxu0 0.0
  %1944 = vmatpush1.msra.mxu0 0.0
  %1945 = vmatprep.subr.mxu0 0.0
  %1946 = vmatpush1.msra.mxu0 0.0
  %1947 = vmatprep.subr.mxu0 0.0
  %1948 = vmatpush1.msra.mxu0 0.0
  %1949 = vmatprep.subr.mxu0 0.0
  %1950 = vmatpush1.msra.mxu0 0.0
  %1951 = vmatprep.subr.mxu0 0.0
  %1952 = vmatpush1.msra.mxu0 0.0
  %1953 = vmatprep.subr.mxu0 0.0
  %1954 = vmatpush1.msra.mxu0 0.0
  %1955 = vmatprep.subr.mxu0 0.0
  %1956 = vmatpush1.msra.mxu0 0.0
  %1957 = vmatprep.subr.mxu0 0.0
  %1958 = vmatpush1.msra.mxu0 0.0
  %1959 = vmatprep.subr.mxu0 0.0
  %1960 = vmatpush1.msra.mxu0 0.0
  %1961 = vmatprep.subr.mxu0 0.0
  %1962 = vmatpush1.msra.mxu0 0.0
  %1963 = vmatprep.subr.mxu0 %v1921
  %1964 = vmatpush1.msra.mxu0 %v1881
  %1965 = vmatprep.subr.mxu0 %v1918
  %1966 = vmatpush1.msra.mxu0 %v1877
  %1967 = vmatprep.subr.mxu0 0.0
  %1968 = vmatpush2.msra.mxu0 0.0
  %1969 = vmatprep.subr.mxu0 0.0
  %1970 = vmatpush2.msra.mxu0 0.0
  %1971 = vmatprep.subr.mxu0 0.0
  %1972 = vmatpush2.msra.mxu0 0.0
  %1973 = vmatprep.subr.mxu0 0.0
  %1974 = vmatpush2.msra.mxu0 0.0
  %1975 = vmatprep.subr.mxu0 0.0
  %1976 = vmatpush2.msra.mxu0 0.0
  %1977 = vmatprep.subr.mxu0 0.0
  %1978 = vmatpush2.msra.mxu0 0.0
  %1979 = vmatprep.subr.mxu0 0.0
  %1980 = vmatpush2.msra.mxu0 0.0
  %1981 = vmatprep.subr.mxu0 0.0
  %1982 = vmatpush2.msra.mxu0 0.0
  %1983 = vmatprep.subr.mxu0 0.0
  %1984 = vmatpush2.msra.mxu0 0.0
  %1985 = vmatprep.subr.mxu0 0.0
  %1986 = vmatpush2.msra.mxu0 0.0
  %1987 = vmatprep.subr.mxu0 0.0
  %1988 = vmatpush2.msra.mxu0 0.0
  %1989 = vmatprep.subr.mxu0 0.0
  %1990 = vmatpush2.msra.mxu0 0.0
  %1991 = vmatprep.subr.mxu0 0.0
  %1992 = vmatpush2.msra.mxu0 0.0
  %1993 = vmatprep.subr.mxu0 0.0
  %1994 = vmatpush2.msra.mxu0 0.0
  %1995 = vmatprep.subr.mxu0 0.0
  %1996 = vmatpush2.msra.mxu0 0.0
  %1997 = vmatprep.subr.mxu0 0.0
  %1998 = vmatpush2.msra.mxu0 0.0
  %1999 = vmatprep.mubr.f32.mxu0 0.0
  %2000 = vmatmul.mubr.f32.gmra.mxu0 %v1930
  %v2001 = vpop.f32.mrf.mxu0
  %v2002 = vadd.f32 0.0, %v2001
  %v2003 = vpop.f32.mrf.mxu0
  %v2004 = vadd.f32 0.0, %v2003
  %2005 = vmatprep.mubr.f32.mxu0 0.0
  %2006 = vmatmul.mubr.f32.gmra.mxu0 %v1933
  %v2007 = vpop.f32.mrf.mxu0
  %v2008 = vadd.f32 0.0, %v2007
  %v2009 = vpop.f32.mrf.mxu0
  %v2010 = vadd.f32 0.0, %v2009
  %2011 = vdwg.mxu0
  %v2012 = vmul.f32 %v1924, %v1877
  %v2013 = vmul.f32 %v1925, %v1881
  %v2015 = vsel %vm1836, %v2012, 0
  %v2018 = vsel %vm1836, %v2013, 0
  %2020 = vmatprep.subr.mxu0 0.0
  %2021 = vmatpush1.msra.mxu0 0.0
  %2022 = vmatprep.subr.mxu0 0.0
  %2023 = vmatpush1.msra.mxu0 0.0
  %2024 = vmatprep.subr.mxu0 0.0
  %2025 = vmatpush1.msra.mxu0 0.0
  %2026 = vmatprep.subr.mxu0 0.0
  %2027 = vmatpush1.msra.mxu0 0.0
  %2028 = vmatprep.subr.mxu0 0.0
  %2029 = vmatpush1.msra.mxu0 0.0
  %2030 = vmatprep.subr.mxu0 0.0
  %2031 = vmatpush1.msra.mxu0 0.0
  %2032 = vmatprep.subr.mxu0 0.0
  %2033 = vmatpush1.msra.mxu0 0.0
  %2034 = vmatprep.subr.mxu0 0.0
  %2035 = vmatpush1.msra.mxu0 0.0
  %2036 = vmatprep.subr.mxu0 0.0
  %2037 = vmatpush1.msra.mxu0 %v1736
  %2038 = vmatprep.subr.mxu0 0.0
  %2039 = vmatpush1.msra.mxu0 %v1735
  %2040 = vmatprep.subr.mxu0 0.0
  %2041 = vmatpush1.msra.mxu0 %v1734
  %2042 = vmatprep.subr.mxu0 0.0
  %2043 = vmatpush1.msra.mxu0 %v1733
  %2044 = vmatprep.subr.mxu0 0.0
  %2045 = vmatpush1.msra.mxu0 %v1732
  %2046 = vmatprep.subr.mxu0 0.0
  %2047 = vmatpush1.msra.mxu0 %v1731
  %2048 = vmatprep.subr.mxu0 0.0
  %2049 = vmatpush1.msra.mxu0 %v1730
  %2050 = vmatprep.subr.mxu0 0.0
  %2051 = vmatpush1.msra.mxu0 %v1729
  %2052 = vmatprep.subr.mxu0 0.0
  %2053 = vmatpush2.msra.mxu0 0.0
  %2054 = vmatprep.subr.mxu0 0.0
  %2055 = vmatpush2.msra.mxu0 0.0
  %2056 = vmatprep.subr.mxu0 0.0
  %2057 = vmatpush2.msra.mxu0 0.0
  %2058 = vmatprep.subr.mxu0 0.0
  %2059 = vmatpush2.msra.mxu0 0.0
  %2060 = vmatprep.subr.mxu0 0.0
  %2061 = vmatpush2.msra.mxu0 0.0
  %2062 = vmatprep.subr.mxu0 0.0
  %2063 = vmatpush2.msra.mxu0 0.0
  %2064 = vmatprep.subr.mxu0 0.0
  %2065 = vmatpush2.msra.mxu0 0.0
  %2066 = vmatprep.subr.mxu0 0.0
  %2067 = vmatpush2.msra.mxu0 0.0
  %2068 = vmatprep.subr.mxu0 0.0
  %2069 = vmatpush2.msra.mxu0 0.0
  %2070 = vmatprep.subr.mxu0 0.0
  %2071 = vmatpush2.msra.mxu0 0.0
  %2072 = vmatprep.subr.mxu0 0.0
  %2073 = vmatpush2.msra.mxu0 0.0
  %2074 = vmatprep.subr.mxu0 0.0
  %2075 = vmatpush2.msra.mxu0 0.0
  %2076 = vmatprep.subr.mxu0 0.0
  %2077 = vmatpush2.msra.mxu0 0.0
  %2078 = vmatprep.subr.mxu0 0.0
  %2079 = vmatpush2.msra.mxu0 0.0
  %2080 = vmatprep.subr.mxu0 0.0
  %2081 = vmatpush2.msra.mxu0 0.0
  %2082 = vmatprep.subr.mxu0 0.0
  %2083 = vmatpush2.msra.mxu0 0.0
  %2084 = vmatprep.mubr.f32.mxu0 0.0
  %2085 = vmatmul.mubr.f32.gmra.mxu0 %v2015
  %v2086 = vpop.f32.mrf.mxu0
  %v2087 = vadd.f32 0.0, %v2086
  %v2088 = vpop.f32.mrf.mxu0
  %2089 = vmatprep.mubr.f32.mxu0 0.0
  %2090 = vmatmul.mubr.f32.gmra.mxu0 %v2018
  %v2091 = vpop.f32.mrf.mxu0
  %v2092 = vadd.f32 0.0, %v2091
  %v2093 = vpop.f32.mrf.mxu0
  %2094 = vdwg.mxu0
  %v2095 = vmul.f32 %v1924, %v2002
  %v2096 = vmul.f32 %v1925, %v2008
  %v2098 = vsel %vm1836, %v2095, 0
  %v2101 = vsel %vm1836, %v2096, 0
  %2103 = vmatprep.subr.mxu0 0.0
  %2104 = vmatpush1.msra.mxu0 0.0
  %2105 = vmatprep.subr.mxu0 0.0
  %2106 = vmatpush1.msra.mxu0 0.0
  %2107 = vmatprep.subr.mxu0 0.0
  %2108 = vmatpush1.msra.mxu0 0.0
  %2109 = vmatprep.subr.mxu0 0.0
  %2110 = vmatpush1.msra.mxu0 0.0
  %2111 = vmatprep.subr.mxu0 0.0
  %2112 = vmatpush1.msra.mxu0 0.0
  %2113 = vmatprep.subr.mxu0 0.0
  %2114 = vmatpush1.msra.mxu0 0.0
  %2115 = vmatprep.subr.mxu0 0.0
  %2116 = vmatpush1.msra.mxu0 0.0
  %2117 = vmatprep.subr.mxu0 0.0
  %2118 = vmatpush1.msra.mxu0 0.0
  %2119 = vmatprep.subr.mxu0 0.0
  %2120 = vmatpush1.msra.mxu0 %v1736
  %2121 = vmatprep.subr.mxu0 0.0
  %2122 = vmatpush1.msra.mxu0 %v1735
  %2123 = vmatprep.subr.mxu0 0.0
  %2124 = vmatpush1.msra.mxu0 %v1734
  %2125 = vmatprep.subr.mxu0 0.0
  %2126 = vmatpush1.msra.mxu0 %v1733
  %2127 = vmatprep.subr.mxu0 0.0
  %2128 = vmatpush1.msra.mxu0 %v1732
  %2129 = vmatprep.subr.mxu0 0.0
  %2130 = vmatpush1.msra.mxu0 %v1731
  %2131 = vmatprep.subr.mxu0 0.0
  %2132 = vmatpush1.msra.mxu0 %v1730
  %2133 = vmatprep.subr.mxu0 0.0
  %2134 = vmatpush1.msra.mxu0 %v1729
  %2135 = vmatprep.subr.mxu0 0.0
  %2136 = vmatpush2.msra.mxu0 0.0
  %2137 = vmatprep.subr.mxu0 0.0
  %2138 = vmatpush2.msra.mxu0 0.0
  %2139 = vmatprep.subr.mxu0 0.0
  %2140 = vmatpush2.msra.mxu0 0.0
  %2141 = vmatprep.subr.mxu0 0.0
  %2142 = vmatpush2.msra.mxu0 0.0
  %2143 = vmatprep.subr.mxu0 0.0
  %2144 = vmatpush2.msra.mxu0 0.0
  %2145 = vmatprep.subr.mxu0 0.0
  %2146 = vmatpush2.msra.mxu0 0.0
  %2147 = vmatprep.subr.mxu0 0.0
  %2148 = vmatpush2.msra.mxu0 0.0
  %2149 = vmatprep.subr.mxu0 0.0
  %2150 = vmatpush2.msra.mxu0 0.0
  %2151 = vmatprep.subr.mxu0 0.0
  %2152 = vmatpush2.msra.mxu0 0.0
  %2153 = vmatprep.subr.mxu0 0.0
  %2154 = vmatpush2.msra.mxu0 0.0
  %2155 = vmatprep.subr.mxu0 0.0
  %2156 = vmatpush2.msra.mxu0 0.0
  %2157 = vmatprep.subr.mxu0 0.0
  %2158 = vmatpush2.msra.mxu0 0.0
  %2159 = vmatprep.subr.mxu0 0.0
  %2160 = vmatpush2.msra.mxu0 0.0
  %2161 = vmatprep.subr.mxu0 0.0
  %2162 = vmatpush2.msra.mxu0 0.0
  %2163 = vmatprep.subr.mxu0 0.0
  %2164 = vmatpush2.msra.mxu0 0.0
  %2165 = vmatprep.subr.mxu0 0.0
  %2166 = vmatpush2.msra.mxu0 0.0
  %2167 = vmatprep.mubr.f32.mxu0 0.0
  %2168 = vmatmul.mubr.f32.gmra.mxu0 %v2098
  %v2169 = vpop.f32.mrf.mxu0
  %v2170 = vadd.f32 0.0, %v2169
  %v2171 = vpop.f32.mrf.mxu0
  %2172 = vmatprep.mubr.f32.mxu0 0.0
  %2173 = vmatmul.mubr.f32.gmra.mxu0 %v2101
  %v2174 = vpop.f32.mrf.mxu0
  %v2175 = vadd.f32 0.0, %v2174
  %v2176 = vpop.f32.mrf.mxu0
  %2177 = vdwg.mxu0
  %v2178 = vmax.f32 %v2087, %v2170
  %v2179 = vmax.f32 %v2092, %v2175
  %v2180 = vsub.f32 %v2087, %v2178
  %v2181 = vsub.f32 %v2092, %v2179
  %v2182 = vmul.f32 %v2180, 1.442695
  %v2183 = vpow.pop %v2182
  %v2184 = vmul.f32 %v2181, 1.442695
  %v2185 = vpow.pop %v2184
  %v2186 = vsub.f32 %v2170, %v2178
  %v2187 = vsub.f32 %v2175, %v2179
  %v2188 = vmul.f32 %v2186, 1.442695
  %v2189 = vpow.pop %v2188
  %v2190 = vmul.f32 %v2187, 1.442695
  %v2191 = vpow.pop %v2190
  %v2192 = vadd.f32 %v2183, %v2189
  %v2193 = vadd.f32 %v2185, %v2191
  %v2194 = vrcp.pop %v2192
  %v2195 = vrcp.pop %v2193
  %v2196 = vmul.f32 %v2183, %v2194
  %v2197 = vmul.f32 %v2185, %v2195
  %vm2198 = vcmask 31744
  %v2200 = vsel %vm2198, %v2196, 0
  %v2203 = vsel %vm2198, %v2197, 0
  %vm2205 = vcmask 1043456
  %v2207 = vsel %vm2205, %v1737, 0
  %2209 = vmatprep.subr.mxu0 0.0
  %2210 = vmatpush1.msra.mxu0 0.0
  %2211 = vmatprep.subr.mxu0 0.0
  %2212 = vmatpush1.msra.mxu0 0.0
  %2213 = vmatprep.subr.mxu0 0.0
  %2214 = vmatpush1.msra.mxu0 0.0
  %2215 = vmatprep.subr.mxu0 0.0
  %2216 = vmatpush1.msra.mxu0 0.0
  %2217 = vmatprep.subr.mxu0 0.0
  %2218 = vmatpush1.msra.mxu0 0.0
  %2219 = vmatprep.subr.mxu0 0.0
  %2220 = vmatpush1.msra.mxu0 0.0
  %2221 = vmatprep.subr.mxu0 0.0
  %2222 = vmatpush1.msra.mxu0 0.0
  %2223 = vmatprep.subr.mxu0 0.0
  %2224 = vmatpush1.msra.mxu0 0.0
  %2225 = vmatprep.subr.mxu0 0.0
  %2226 = vmatpush1.msra.mxu0 0.0
  %2227 = vmatprep.subr.mxu0 0.0
  %2228 = vmatpush1.msra.mxu0 0.0
  %2229 = vmatprep.subr.mxu0 0.0
  %2230 = vmatpush1.msra.mxu0 0.0
  %2231 = vmatprep.subr.mxu0 0.0
  %2232 = vmatpush1.msra.mxu0 0.0
  %2233 = vmatprep.subr.mxu0 0.0
  %2234 = vmatpush1.msra.mxu0 0.0
  %2235 = vmatprep.subr.mxu0 0.0
  %2236 = vmatpush1.msra.mxu0 0.0
  %2237 = vmatprep.subr.mxu0 0.0
  %2238 = vmatpush1.msra.mxu0 0.0
  %2239 = vmatprep.subr.mxu0 0.0
  %2240 = vmatpush1.msra.mxu0 %v2207
  %2241 = vmatprep.subr.mxu0 0.0
  %2242 = vmatpush2.msra.mxu0 0.0
  %2243 = vmatprep.subr.mxu0 0.0
  %2244 = vmatpush2.msra.mxu0 0.0
  %2245 = vmatprep.subr.mxu0 0.0
  %2246 = vmatpush2.msra.mxu0 0.0
  %2247 = vmatprep.subr.mxu0 0.0
  %2248 = vmatpush2.msra.mxu0 0.0
  %2249 = vmatprep.subr.mxu0 0.0
  %2250 = vmatpush2.msra.mxu0 0.0
  %2251 = vmatprep.subr.mxu0 0.0
  %2252 = vmatpush2.msra.mxu0 0.0
  %2253 = vmatprep.subr.mxu0 0.0
  %2254 = vmatpush2.msra.mxu0 0.0
  %2255 = vmatprep.subr.mxu0 0.0
  %2256 = vmatpush2.msra.mxu0 0.0
  %2257 = vmatprep.subr.mxu0 0.0
  %2258 = vmatpush2.msra.mxu0 0.0
  %2259 = vmatprep.subr.mxu0 0.0
  %2260 = vmatpush2.msra.mxu0 0.0
  %2261 = vmatprep.subr.mxu0 0.0
  %2262 = vmatpush2.msra.mxu0 0.0
  %2263 = vmatprep.subr.mxu0 0.0
  %2264 = vmatpush2.msra.mxu0 0.0
  %2265 = vmatprep.subr.mxu0 0.0
  %2266 = vmatpush2.msra.mxu0 0.0
  %2267 = vmatprep.subr.mxu0 0.0
  %2268 = vmatpush2.msra.mxu0 0.0
  %2269 = vmatprep.subr.mxu0 0.0
  %2270 = vmatpush2.msra.mxu0 0.0
  %2271 = vmatprep.subr.mxu0 0.0
  %2272 = vmatpush2.msra.mxu0 0.0
  %2273 = vmatprep.mubr.f32.mxu0 0.0
  %2274 = vmatmul.mubr.f32.gmra.mxu0 %v2200
  %v2275 = vpop.f32.mrf.mxu0
  %v2276 = vadd.f32 0.0, %v2275
  %v2277 = vpop.f32.mrf.mxu0
  %2278 = vmatprep.mubr.f32.mxu0 0.0
  %2279 = vmatmul.mubr.f32.gmra.mxu0 %v2203
  %v2280 = vpop.f32.mrf.mxu0
  %v2281 = vadd.f32 0.0, %v2280
  %v2282 = vpop.f32.mrf.mxu0
  %2283 = vdwg.mxu0
  %v2284 = vmul.f32 %v2276, %v1918
  %v2285 = vmul.f32 %v2281, %v1921
  %v2286 = vmul.f32 %v2189, %v2194
  %v2287 = vmul.f32 %v2191, %v2195
  %v2289 = vsel %vm2198, %v2286, 0
  %v2292 = vsel %vm2198, %v2287, 0
  %2294 = vmatprep.subr.mxu0 0.0
  %2295 = vmatpush1.msra.mxu0 0.0
  %2296 = vmatprep.subr.mxu0 0.0
  %2297 = vmatpush1.msra.mxu0 0.0
  %2298 = vmatprep.subr.mxu0 0.0
  %2299 = vmatpush1.msra.mxu0 0.0
  %2300 = vmatprep.subr.mxu0 0.0
  %2301 = vmatpush1.msra.mxu0 0.0
  %2302 = vmatprep.subr.mxu0 0.0
  %2303 = vmatpush1.msra.mxu0 0.0
  %2304 = vmatprep.subr.mxu0 0.0
  %2305 = vmatpush1.msra.mxu0 0.0
  %2306 = vmatprep.subr.mxu0 0.0
  %2307 = vmatpush1.msra.mxu0 0.0
  %2308 = vmatprep.subr.mxu0 0.0
  %2309 = vmatpush1.msra.mxu0 0.0
  %2310 = vmatprep.subr.mxu0 0.0
  %2311 = vmatpush1.msra.mxu0 0.0
  %2312 = vmatprep.subr.mxu0 0.0
  %2313 = vmatpush1.msra.mxu0 0.0
  %2314 = vmatprep.subr.mxu0 0.0
  %2315 = vmatpush1.msra.mxu0 0.0
  %2316 = vmatprep.subr.mxu0 0.0
  %2317 = vmatpush1.msra.mxu0 0.0
  %2318 = vmatprep.subr.mxu0 0.0
  %2319 = vmatpush1.msra.mxu0 0.0
  %2320 = vmatprep.subr.mxu0 0.0
  %2321 = vmatpush1.msra.mxu0 0.0
  %2322 = vmatprep.subr.mxu0 0.0
  %2323 = vmatpush1.msra.mxu0 0.0
  %2324 = vmatprep.subr.mxu0 0.0
  %2325 = vmatpush1.msra.mxu0 %v2207
  %2326 = vmatprep.subr.mxu0 0.0
  %2327 = vmatpush2.msra.mxu0 0.0
  %2328 = vmatprep.subr.mxu0 0.0
  %2329 = vmatpush2.msra.mxu0 0.0
  %2330 = vmatprep.subr.mxu0 0.0
  %2331 = vmatpush2.msra.mxu0 0.0
  %2332 = vmatprep.subr.mxu0 0.0
  %2333 = vmatpush2.msra.mxu0 0.0
  %2334 = vmatprep.subr.mxu0 0.0
  %2335 = vmatpush2.msra.mxu0 0.0
  %2336 = vmatprep.subr.mxu0 0.0
  %2337 = vmatpush2.msra.mxu0 0.0
  %2338 = vmatprep.subr.mxu0 0.0
  %2339 = vmatpush2.msra.mxu0 0.0
  %2340 = vmatprep.subr.mxu0 0.0
  %2341 = vmatpush2.msra.mxu0 0.0
  %2342 = vmatprep.subr.mxu0 0.0
  %2343 = vmatpush2.msra.mxu0 0.0
  %2344 = vmatprep.subr.mxu0 0.0
  %2345 = vmatpush2.msra.mxu0 0.0
  %2346 = vmatprep.subr.mxu0 0.0
  %2347 = vmatpush2.msra.mxu0 0.0
  %2348 = vmatprep.subr.mxu0 0.0
  %2349 = vmatpush2.msra.mxu0 0.0
  %2350 = vmatprep.subr.mxu0 0.0
  %2351 = vmatpush2.msra.mxu0 0.0
  %2352 = vmatprep.subr.mxu0 0.0
  %2353 = vmatpush2.msra.mxu0 0.0
  %2354 = vmatprep.subr.mxu0 0.0
  %2355 = vmatpush2.msra.mxu0 0.0
  %2356 = vmatprep.subr.mxu0 0.0
  %2357 = vmatpush2.msra.mxu0 0.0
  %2358 = vmatprep.mubr.f32.mxu0 0.0
  %2359 = vmatmul.mubr.f32.gmra.mxu0 %v2289
  %v2360 = vpop.f32.mrf.mxu0
  %v2361 = vadd.f32 0.0, %v2360
  %v2362 = vpop.f32.mrf.mxu0
  %2363 = vmatprep.mubr.f32.mxu0 0.0
  %2364 = vmatmul.mubr.f32.gmra.mxu0 %v2292
  %v2365 = vpop.f32.mrf.mxu0
  %v2366 = vadd.f32 0.0, %v2365
  %v2367 = vpop.f32.mrf.mxu0
  %2368 = vdwg.mxu0
  %v2369 = vmul.f32 %v2361, %v2004
  %v2370 = vmul.f32 %v2366, %v2010
  %v2371 = vadd.f32 %v2284, %v2369
  %v2372 = vadd.f32 %v2285, %v2370
  %v2373 = vpack.c.bf16 %v2372, %v2371
  %v2374 = vld [vmem:[%s23] sm:$0xf]
  %v2375 = vld [vmem:[%s23 + $0x4] sm:$0xf]
  %v2376 = vld [vmem:[%s23 + $0x8] sm:$0xf]
  %v2377 = vld [vmem:[%s23 + $0xc] sm:$0xf]
  %v2378 = vld [vmem:[%s23 + $0x10] sm:$0xf]
  %v2379 = vld [vmem:[%s23 + $0x14] sm:$0xf]
  %v2380 = vld [vmem:[%s23 + $0x18] sm:$0xf]
  %v2381 = vld [vmem:[%s23 + $0x1c] sm:$0xf]
  %v2382 = vld [vmem:[%s25] sm:$0x1]
  %v2384 = vlaneseq
  %v2385 = vshrl.u32 %v2384, 7
  %v2386 = vsub.s32 0, %v2385
  %v2387 = vrot.slane %v2382, %v2386
  %v2397 = vunpack.c.l.b16 %v2374
  %v2398 = vunpack.c.l.b16 %v2375
  %v2399 = vunpack.c.l.b16 %v2376
  %v2400 = vunpack.c.l.b16 %v2377
  %v2401 = vunpack.c.l.b16 %v2378
  %v2402 = vunpack.c.l.b16 %v2379
  %v2403 = vunpack.c.l.b16 %v2380
  %v2404 = vunpack.c.l.b16 %v2381
  %v2405 = vpack.c.b16 %v2398, %v2397
  %v2406 = vpack.c.b16 %v2400, %v2399
  %v2407 = vpack.c.b16 %v2402, %v2401
  %v2408 = vpack.c.b16 %v2404, %v2403
  %v2414 = vsel %vm1836, %v2373, 0
  %2416 = vmatprep.subr.bf16.mxu0 0
  %2417 = vmatpush1.bf16.msra.mxu0 0
  %2418 = vmatprep.subr.bf16.mxu0 0
  %2419 = vmatpush1.bf16.msra.mxu0 0
  %2420 = vmatprep.subr.bf16.mxu0 0
  %2421 = vmatpush1.bf16.msra.mxu0 0
  %2422 = vmatprep.subr.bf16.mxu0 0
  %2423 = vmatpush1.bf16.msra.mxu0 0
  %2424 = vmatprep.subr.bf16.mxu0 0
  %2425 = vmatpush1.bf16.msra.mxu0 %v2408
  %2426 = vmatprep.subr.bf16.mxu0 0
  %2427 = vmatpush1.bf16.msra.mxu0 %v2407
  %2428 = vmatprep.subr.bf16.mxu0 0
  %2429 = vmatpush1.bf16.msra.mxu0 %v2406
  %2430 = vmatprep.subr.bf16.mxu0 0
  %2431 = vmatpush1.bf16.msra.mxu0 %v2405
  %2432 = vmatprep.subr.bf16.mxu0 0
  %2433 = vmatpush2.bf16.msra.mxu0 0
  %2434 = vmatprep.subr.bf16.mxu0 0
  %2435 = vmatpush2.bf16.msra.mxu0 0
  %2436 = vmatprep.subr.bf16.mxu0 0
  %2437 = vmatpush2.bf16.msra.mxu0 0
  %2438 = vmatprep.subr.bf16.mxu0 0
  %2439 = vmatpush2.bf16.msra.mxu0 0
  %2440 = vmatprep.subr.bf16.mxu0 0
  %2441 = vmatpush2.bf16.msra.mxu0 0
  %2442 = vmatprep.subr.bf16.mxu0 0
  %2443 = vmatpush2.bf16.msra.mxu0 0
  %2444 = vmatprep.subr.bf16.mxu0 0
  %2445 = vmatpush2.bf16.msra.mxu0 0
  %2446 = vmatprep.subr.bf16.mxu0 0
  %2447 = vmatpush2.bf16.msra.mxu0 0
  %2448 = vmatprep.mubr.bf16.mxu0 0
  %2449 = vmatmul.mubr.bf16.gmra.mxu0 %v2414
  %v2450 = vpop.f32.mrf.mxu0
  %v2451 = vadd.f32 %v2387, %v2450
  %v2452 = vpop.f32.mrf.mxu0
  %v2453 = vpop.f32.mrf.mxu0
  %v2454 = vadd.f32 %v2387, %v2453
  %v2455 = vpop.f32.mrf.mxu0
  %2456 = vdwg.mxu0
  %v2457 = vadd.f32 %v1727, %v2451
  %v2458 = vadd.f32 %v1728, %v2454
  %v2459 = vld [vmem:[%s27] sm:$0x1]
  %v2460 = vld [vmem:[%s29] sm:$0x1]
  %v2461 = vsel %vm1836, %v2457, 0.0
  %2462 = vadd.xlane.f32.xlu0 %v2461
  %v2463 = vpop.xlane.xlu0 %2462
  %v2464 = vsel %vm1836, %v2458, 0.0
  %2465 = vadd.xlane.f32.xlu0 %v2464
  %v2466 = vpop.xlane.xlu0 %2465
  %v2467 = vrcp.pop 64.0
  %v2468 = vmul.f32 %v2463, %v2467
  %v2469 = vmul.f32 %v2466, %v2467
  %v2470 = vsub.f32 %v2457, %v2468
  %v2471 = vsub.f32 %v2458, %v2469
  %v2472 = vmul.f32 %v2470, %v2470
  %v2473 = vmul.f32 %v2471, %v2471
  %v2474 = vsel %vm1836, %v2472, 0.0
  %2475 = vadd.xlane.f32.xlu0 %v2474
  %v2476 = vpop.xlane.xlu0 %2475
  %v2477 = vsel %vm1836, %v2473, 0.0
  %2478 = vadd.xlane.f32.xlu0 %v2477
  %v2479 = vpop.xlane.xlu0 %2478
  %v2480 = vmul.f32 %v2476, %v2467
  %v2481 = vmul.f32 %v2479, %v2467
  %v2482 = vadd.f32 %v2480, 1e-05
  %v2483 = vadd.f32 %v2481, 1e-05
  %v2484 = vrsqrt.pop %v2482
  %v2485 = vrsqrt.pop %v2483
  %v2486 = vmul.f32 %v2470, %v2484
  %v2487 = vmul.f32 %v2471, %v2485
  %v2489 = vlaneseq
  %v2490 = vshrl.u32 %v2489, 7
  %v2491 = vsub.s32 0, %v2490
  %v2492 = vrot.slane %v2459, %v2491
  %v2494 = vmul.f32 %v2486, %v2492
  %v2495 = vmul.f32 %v2487, %v2492
  %v2497 = vlaneseq
  %v2498 = vshrl.u32 %v2497, 7
  %v2499 = vsub.s32 0, %v2498
  %v2500 = vrot.slane %v2460, %v2499
  %v2502 = vadd.f32 %v2494, %v2500
  %v2503 = vadd.f32 %v2495, %v2500
  %v2504 = vpack.c.bf16 %v2503, %v2502
  %v2505 = vld [vmem:[%s31] sm:$0xff]
  %v2506 = vld [vmem:[%s31 + $0x8] sm:$0xff]
  %v2507 = vld [vmem:[%s31 + $0x10] sm:$0xff]
  %v2508 = vld [vmem:[%s31 + $0x18] sm:$0xff]
  %v2509 = vld [vmem:[%s31 + $0x20] sm:$0xff]
  %v2510 = vld [vmem:[%s31 + $0x28] sm:$0xff]
  %v2511 = vld [vmem:[%s31 + $0x30] sm:$0xff]
  %v2512 = vld [vmem:[%s31 + $0x38] sm:$0xff]
  %v2513 = vld [vmem:[%s31 + $0x40] sm:$0xff]
  %v2514 = vld [vmem:[%s31 + $0x48] sm:$0xff]
  %v2515 = vld [vmem:[%s31 + $0x50] sm:$0xff]
  %v2516 = vld [vmem:[%s31 + $0x58] sm:$0xff]
  %v2517 = vld [vmem:[%s31 + $0x60] sm:$0xff]
  %v2518 = vld [vmem:[%s31 + $0x68] sm:$0xff]
  %v2519 = vld [vmem:[%s31 + $0x70] sm:$0xff]
  %v2520 = vld [vmem:[%s31 + $0x78] sm:$0xff]
  %v2521 = vld [vmem:[%s31 + $0x80] sm:$0xff]
  %v2522 = vld [vmem:[%s31 + $0x88] sm:$0xff]
  %v2523 = vld [vmem:[%s31 + $0x90] sm:$0xff]
  %v2524 = vld [vmem:[%s31 + $0x98] sm:$0xff]
  %v2525 = vld [vmem:[%s31 + $0xa0] sm:$0xff]
  %v2526 = vld [vmem:[%s31 + $0xa8] sm:$0xff]
  %v2527 = vld [vmem:[%s31 + $0xb0] sm:$0xff]
  %v2528 = vld [vmem:[%s31 + $0xb8] sm:$0xff]
  %v2529 = vld [vmem:[%s31 + $0xc0] sm:$0xff]
  %v2530 = vld [vmem:[%s31 + $0xc8] sm:$0xff]
  %v2531 = vld [vmem:[%s31 + $0xd0] sm:$0xff]
  %v2532 = vld [vmem:[%s31 + $0xd8] sm:$0xff]
  %v2533 = vld [vmem:[%s31 + $0xe0] sm:$0xff]
  %v2534 = vld [vmem:[%s31 + $0xe8] sm:$0xff]
  %v2535 = vld [vmem:[%s31 + $0xf0] sm:$0xff]
  %v2536 = vld [vmem:[%s31 + $0xf8] sm:$0xff]
  %v2537 = vld [vmem:[%s31 + $0x100] sm:$0xff]
  %v2538 = vld [vmem:[%s31 + $0x108] sm:$0xff]
  %v2539 = vld [vmem:[%s31 + $0x110] sm:$0xff]
  %v2540 = vld [vmem:[%s31 + $0x118] sm:$0xff]
  %v2541 = vld [vmem:[%s31 + $0x120] sm:$0xff]
  %v2542 = vld [vmem:[%s31 + $0x128] sm:$0xff]
  %v2543 = vld [vmem:[%s31 + $0x130] sm:$0xff]
  %v2544 = vld [vmem:[%s31 + $0x138] sm:$0xff]
  %v2545 = vld [vmem:[%s31 + $0x140] sm:$0xff]
  %v2546 = vld [vmem:[%s31 + $0x148] sm:$0xff]
  %v2547 = vld [vmem:[%s31 + $0x150] sm:$0xff]
  %v2548 = vld [vmem:[%s31 + $0x158] sm:$0xff]
  %v2549 = vld [vmem:[%s31 + $0x160] sm:$0xff]
  %v2550 = vld [vmem:[%s31 + $0x168] sm:$0xff]
  %v2551 = vld [vmem:[%s31 + $0x170] sm:$0xff]
  %v2552 = vld [vmem:[%s31 + $0x178] sm:$0xff]
  %v2553 = vld [vmem:[%s31 + $0x180] sm:$0xff]
  %v2554 = vld [vmem:[%s31 + $0x188] sm:$0xff]
  %v2555 = vld [vmem:[%s31 + $0x190] sm:$0xff]
  %v2556 = vld [vmem:[%s31 + $0x198] sm:$0xff]
  %v2557 = vld [vmem:[%s31 + $0x1a0] sm:$0xff]
  %v2558 = vld [vmem:[%s31 + $0x1a8] sm:$0xff]
  %v2559 = vld [vmem:[%s31 + $0x1b0] sm:$0xff]
  %v2560 = vld [vmem:[%s31 + $0x1b8] sm:$0xff]
  %v2561 = vld [vmem:[%s31 + $0x1c0] sm:$0xff]
  %v2562 = vld [vmem:[%s31 + $0x1c8] sm:$0xff]
  %v2563 = vld [vmem:[%s31 + $0x1d0] sm:$0xff]
  %v2564 = vld [vmem:[%s31 + $0x1d8] sm:$0xff]
  %v2565 = vld [vmem:[%s31 + $0x1e0] sm:$0xff]
  %v2566 = vld [vmem:[%s31 + $0x1e8] sm:$0xff]
  %v2567 = vld [vmem:[%s31 + $0x1f0] sm:$0xff]
  %v2568 = vld [vmem:[%s31 + $0x1f8] sm:$0xff]
  %v2569 = vld [vmem:[%s33] sm:$0xff]
  %v2570 = vld [vmem:[%s33 + $0x8] sm:$0xff]
  %v2573 = vlaneseq
  %v2574 = vshrl.u32 %v2573, 7
  %v2575 = vsub.s32 0, %v2574
  %v2576 = vrot.slane %v2569, %v2575
  %v2577 = vlaneseq
  %v2578 = vshrl.u32 %v2577, 7
  %v2579 = vsub.s32 1, %v2578
  %v2580 = vrot.slane %v2569, %v2579
  %v2581 = vlaneseq
  %v2582 = vshrl.u32 %v2581, 7
  %v2583 = vsub.s32 2, %v2582
  %v2584 = vrot.slane %v2569, %v2583
  %v2585 = vlaneseq
  %v2586 = vshrl.u32 %v2585, 7
  %v2587 = vsub.s32 3, %v2586
  %v2588 = vrot.slane %v2569, %v2587
  %v2589 = vlaneseq
  %v2590 = vshrl.u32 %v2589, 7
  %v2591 = vsub.s32 4, %v2590
  %v2592 = vrot.slane %v2569, %v2591
  %v2593 = vlaneseq
  %v2594 = vshrl.u32 %v2593, 7
  %v2595 = vsub.s32 5, %v2594
  %v2596 = vrot.slane %v2569, %v2595
  %v2597 = vlaneseq
  %v2598 = vshrl.u32 %v2597, 7
  %v2599 = vsub.s32 6, %v2598
  %v2600 = vrot.slane %v2569, %v2599
  %v2601 = vlaneseq
  %v2602 = vshrl.u32 %v2601, 7
  %v2603 = vsub.s32 7, %v2602
  %v2604 = vrot.slane %v2569, %v2603
  %v2605 = vlaneseq
  %v2606 = vshrl.u32 %v2605, 7
  %v2607 = vsub.s32 0, %v2606
  %v2608 = vrot.slane %v2570, %v2607
  %v2609 = vlaneseq
  %v2610 = vshrl.u32 %v2609, 7
  %v2611 = vsub.s32 1, %v2610
  %v2612 = vrot.slane %v2570, %v2611
  %v2613 = vlaneseq
  %v2614 = vshrl.u32 %v2613, 7
  %v2615 = vsub.s32 2, %v2614
  %v2616 = vrot.slane %v2570, %v2615
  %v2617 = vlaneseq
  %v2618 = vshrl.u32 %v2617, 7
  %v2619 = vsub.s32 3, %v2618
  %v2620 = vrot.slane %v2570, %v2619
  %v2621 = vlaneseq
  %v2622 = vshrl.u32 %v2621, 7
  %v2623 = vsub.s32 4, %v2622
  %v2624 = vrot.slane %v2570, %v2623
  %v2625 = vlaneseq
  %v2626 = vshrl.u32 %v2625, 7
  %v2627 = vsub.s32 5, %v2626
  %v2628 = vrot.slane %v2570, %v2627
  %v2629 = vlaneseq
  %v2630 = vshrl.u32 %v2629, 7
  %v2631 = vsub.s32 6, %v2630
  %v2632 = vrot.slane %v2570, %v2631
  %v2633 = vlaneseq
  %v2634 = vshrl.u32 %v2633, 7
  %v2635 = vsub.s32 7, %v2634
  %v2636 = vrot.slane %v2570, %v2635
  %v2717 = vunpack.c.l.b16 %v2505
  %v2718 = vunpack.c.h.b16 %v2505
  %v2719 = vunpack.c.l.b16 %v2506
  %v2720 = vunpack.c.h.b16 %v2506
  %v2721 = vunpack.c.l.b16 %v2507
  %v2722 = vunpack.c.h.b16 %v2507
  %v2723 = vunpack.c.l.b16 %v2508
  %v2724 = vunpack.c.h.b16 %v2508
  %v2725 = vunpack.c.l.b16 %v2509
  %v2726 = vunpack.c.h.b16 %v2509
  %v2727 = vunpack.c.l.b16 %v2510
  %v2728 = vunpack.c.h.b16 %v2510
  %v2729 = vunpack.c.l.b16 %v2511
  %v2730 = vunpack.c.h.b16 %v2511
  %v2731 = vunpack.c.l.b16 %v2512
  %v2732 = vunpack.c.h.b16 %v2512
  %v2733 = vunpack.c.l.b16 %v2513
  %v2734 = vunpack.c.h.b16 %v2513
  %v2735 = vunpack.c.l.b16 %v2514
  %v2736 = vunpack.c.h.b16 %v2514
  %v2737 = vunpack.c.l.b16 %v2515
  %v2738 = vunpack.c.h.b16 %v2515
  %v2739 = vunpack.c.l.b16 %v2516
  %v2740 = vunpack.c.h.b16 %v2516
  %v2741 = vunpack.c.l.b16 %v2517
  %v2742 = vunpack.c.h.b16 %v2517
  %v2743 = vunpack.c.l.b16 %v2518
  %v2744 = vunpack.c.h.b16 %v2518
  %v2745 = vunpack.c.l.b16 %v2519
  %v2746 = vunpack.c.h.b16 %v2519
  %v2747 = vunpack.c.l.b16 %v2520
  %v2748 = vunpack.c.h.b16 %v2520
  %v2749 = vunpack.c.l.b16 %v2521
  %v2750 = vunpack.c.h.b16 %v2521
  %v2751 = vunpack.c.l.b16 %v2522
  %v2752 = vunpack.c.h.b16 %v2522
  %v2753 = vunpack.c.l.b16 %v2523
  %v2754 = vunpack.c.h.b16 %v2523
  %v2755 = vunpack.c.l.b16 %v2524
  %v2756 = vunpack.c.h.b16 %v2524
  %v2757 = vunpack.c.l.b16 %v2525
  %v2758 = vunpack.c.h.b16 %v2525
  %v2759 = vunpack.c.l.b16 %v2526
  %v2760 = vunpack.c.h.b16 %v2526
  %v2761 = vunpack.c.l.b16 %v2527
  %v2762 = vunpack.c.h.b16 %v2527
  %v2763 = vunpack.c.l.b16 %v2528
  %v2764 = vunpack.c.h.b16 %v2528
  %v2765 = vunpack.c.l.b16 %v2529
  %v2766 = vunpack.c.h.b16 %v2529
  %v2767 = vunpack.c.l.b16 %v2530
  %v2768 = vunpack.c.h.b16 %v2530
  %v2769 = vunpack.c.l.b16 %v2531
  %v2770 = vunpack.c.h.b16 %v2531
  %v2771 = vunpack.c.l.b16 %v2532
  %v2772 = vunpack.c.h.b16 %v2532
  %v2773 = vunpack.c.l.b16 %v2533
  %v2774 = vunpack.c.h.b16 %v2533
  %v2775 = vunpack.c.l.b16 %v2534
  %v2776 = vunpack.c.h.b16 %v2534
  %v2777 = vunpack.c.l.b16 %v2535
  %v2778 = vunpack.c.h.b16 %v2535
  %v2779 = vunpack.c.l.b16 %v2536
  %v2780 = vunpack.c.h.b16 %v2536
  %v2781 = vunpack.c.l.b16 %v2537
  %v2782 = vunpack.c.h.b16 %v2537
  %v2783 = vunpack.c.l.b16 %v2538
  %v2784 = vunpack.c.h.b16 %v2538
  %v2785 = vunpack.c.l.b16 %v2539
  %v2786 = vunpack.c.h.b16 %v2539
  %v2787 = vunpack.c.l.b16 %v2540
  %v2788 = vunpack.c.h.b16 %v2540
  %v2789 = vunpack.c.l.b16 %v2541
  %v2790 = vunpack.c.h.b16 %v2541
  %v2791 = vunpack.c.l.b16 %v2542
  %v2792 = vunpack.c.h.b16 %v2542
  %v2793 = vunpack.c.l.b16 %v2543
  %v2794 = vunpack.c.h.b16 %v2543
  %v2795 = vunpack.c.l.b16 %v2544
  %v2796 = vunpack.c.h.b16 %v2544
  %v2797 = vunpack.c.l.b16 %v2545
  %v2798 = vunpack.c.h.b16 %v2545
  %v2799 = vunpack.c.l.b16 %v2546
  %v2800 = vunpack.c.h.b16 %v2546
  %v2801 = vunpack.c.l.b16 %v2547
  %v2802 = vunpack.c.h.b16 %v2547
  %v2803 = vunpack.c.l.b16 %v2548
  %v2804 = vunpack.c.h.b16 %v2548
  %v2805 = vunpack.c.l.b16 %v2549
  %v2806 = vunpack.c.h.b16 %v2549
  %v2807 = vunpack.c.l.b16 %v2550
  %v2808 = vunpack.c.h.b16 %v2550
  %v2809 = vunpack.c.l.b16 %v2551
  %v2810 = vunpack.c.h.b16 %v2551
  %v2811 = vunpack.c.l.b16 %v2552
  %v2812 = vunpack.c.h.b16 %v2552
  %v2813 = vunpack.c.l.b16 %v2553
  %v2814 = vunpack.c.h.b16 %v2553
  %v2815 = vunpack.c.l.b16 %v2554
  %v2816 = vunpack.c.h.b16 %v2554
  %v2817 = vunpack.c.l.b16 %v2555
  %v2818 = vunpack.c.h.b16 %v2555
  %v2819 = vunpack.c.l.b16 %v2556
  %v2820 = vunpack.c.h.b16 %v2556
  %v2821 = vunpack.c.l.b16 %v2557
  %v2822 = vunpack.c.h.b16 %v2557
  %v2823 = vunpack.c.l.b16 %v2558
  %v2824 = vunpack.c.h.b16 %v2558
  %v2825 = vunpack.c.l.b16 %v2559
  %v2826 = vunpack.c.h.b16 %v2559
  %v2827 = vunpack.c.l.b16 %v2560
  %v2828 = vunpack.c.h.b16 %v2560
  %v2829 = vunpack.c.l.b16 %v2561
  %v2830 = vunpack.c.h.b16 %v2561
  %v2831 = vunpack.c.l.b16 %v2562
  %v2832 = vunpack.c.h.b16 %v2562
  %v2833 = vunpack.c.l.b16 %v2563
  %v2834 = vunpack.c.h.b16 %v2563
  %v2835 = vunpack.c.l.b16 %v2564
  %v2836 = vunpack.c.h.b16 %v2564
  %v2837 = vunpack.c.l.b16 %v2565
  %v2838 = vunpack.c.h.b16 %v2565
  %v2839 = vunpack.c.l.b16 %v2566
  %v2840 = vunpack.c.h.b16 %v2566
  %v2841 = vunpack.c.l.b16 %v2567
  %v2842 = vunpack.c.h.b16 %v2567
  %v2843 = vunpack.c.l.b16 %v2568
  %v2844 = vunpack.c.h.b16 %v2568
  %v2845 = vpack.c.b16 %v2733, %v2717
  %v2846 = vpack.c.b16 %v2734, %v2718
  %v2847 = vpack.c.b16 %v2735, %v2719
  %v2848 = vpack.c.b16 %v2736, %v2720
  %v2849 = vpack.c.b16 %v2737, %v2721
  %v2850 = vpack.c.b16 %v2738, %v2722
  %v2851 = vpack.c.b16 %v2739, %v2723
  %v2852 = vpack.c.b16 %v2740, %v2724
  %v2853 = vpack.c.b16 %v2741, %v2725
  %v2854 = vpack.c.b16 %v2742, %v2726
  %v2855 = vpack.c.b16 %v2743, %v2727
  %v2856 = vpack.c.b16 %v2744, %v2728
  %v2857 = vpack.c.b16 %v2745, %v2729
  %v2858 = vpack.c.b16 %v2746, %v2730
  %v2859 = vpack.c.b16 %v2747, %v2731
  %v2860 = vpack.c.b16 %v2748, %v2732
  %v2861 = vpack.c.b16 %v2765, %v2749
  %v2862 = vpack.c.b16 %v2766, %v2750
  %v2863 = vpack.c.b16 %v2767, %v2751
  %v2864 = vpack.c.b16 %v2768, %v2752
  %v2865 = vpack.c.b16 %v2769, %v2753
  %v2866 = vpack.c.b16 %v2770, %v2754
  %v2867 = vpack.c.b16 %v2771, %v2755
  %v2868 = vpack.c.b16 %v2772, %v2756
  %v2869 = vpack.c.b16 %v2773, %v2757
  %v2870 = vpack.c.b16 %v2774, %v2758
  %v2871 = vpack.c.b16 %v2775, %v2759
  %v2872 = vpack.c.b16 %v2776, %v2760
  %v2873 = vpack.c.b16 %v2777, %v2761
  %v2874 = vpack.c.b16 %v2778, %v2762
  %v2875 = vpack.c.b16 %v2779, %v2763
  %v2876 = vpack.c.b16 %v2780, %v2764
  %v2877 = vpack.c.b16 %v2797, %v2781
  %v2878 = vpack.c.b16 %v2798, %v2782
  %v2879 = vpack.c.b16 %v2799, %v2783
  %v2880 = vpack.c.b16 %v2800, %v2784
  %v2881 = vpack.c.b16 %v2801, %v2785
  %v2882 = vpack.c.b16 %v2802, %v2786
  %v2883 = vpack.c.b16 %v2803, %v2787
  %v2884 = vpack.c.b16 %v2804, %v2788
  %v2885 = vpack.c.b16 %v2805, %v2789
  %v2886 = vpack.c.b16 %v2806, %v2790
  %v2887 = vpack.c.b16 %v2807, %v2791
  %v2888 = vpack.c.b16 %v2808, %v2792
  %v2889 = vpack.c.b16 %v2809, %v2793
  %v2890 = vpack.c.b16 %v2810, %v2794
  %v2891 = vpack.c.b16 %v2811, %v2795
  %v2892 = vpack.c.b16 %v2812, %v2796
  %v2893 = vpack.c.b16 %v2829, %v2813
  %v2894 = vpack.c.b16 %v2830, %v2814
  %v2895 = vpack.c.b16 %v2831, %v2815
  %v2896 = vpack.c.b16 %v2832, %v2816
  %v2897 = vpack.c.b16 %v2833, %v2817
  %v2898 = vpack.c.b16 %v2834, %v2818
  %v2899 = vpack.c.b16 %v2835, %v2819
  %v2900 = vpack.c.b16 %v2836, %v2820
  %v2901 = vpack.c.b16 %v2837, %v2821
  %v2902 = vpack.c.b16 %v2838, %v2822
  %v2903 = vpack.c.b16 %v2839, %v2823
  %v2904 = vpack.c.b16 %v2840, %v2824
  %v2905 = vpack.c.b16 %v2841, %v2825
  %v2906 = vpack.c.b16 %v2842, %v2826
  %v2907 = vpack.c.b16 %v2843, %v2827
  %v2908 = vpack.c.b16 %v2844, %v2828
  %v2974 = vsel %vm1836, %v2504, 0
  %2976 = vmatprep.subr.bf16.mxu0 0
  %2977 = vmatpush1.bf16.msra.mxu0 0
  %2978 = vmatprep.subr.bf16.mxu0 0
  %2979 = vmatpush1.bf16.msra.mxu0 0
  %2980 = vmatprep.subr.bf16.mxu0 0
  %2981 = vmatpush1.bf16.msra.mxu0 0
  %2982 = vmatprep.subr.bf16.mxu0 0
  %2983 = vmatpush1.bf16.msra.mxu0 0
  %2984 = vmatprep.subr.bf16.mxu0 %v2894
  %2985 = vmatpush1.bf16.msra.mxu0 %v2893
  %2986 = vmatprep.subr.bf16.mxu0 %v2878
  %2987 = vmatpush1.bf16.msra.mxu0 %v2877
  %2988 = vmatprep.subr.bf16.mxu0 %v2862
  %2989 = vmatpush1.bf16.msra.mxu0 %v2861
  %2990 = vmatprep.subr.bf16.mxu0 %v2846
  %2991 = vmatpush1.bf16.msra.mxu0 %v2845
  %2992 = vmatprep.subr.bf16.mxu0 0
  %2993 = vmatpush2.bf16.msra.mxu0 0
  %2994 = vmatprep.subr.bf16.mxu0 0
  %2995 = vmatpush2.bf16.msra.mxu0 0
  %2996 = vmatprep.subr.bf16.mxu0 0
  %2997 = vmatpush2.bf16.msra.mxu0 0
  %2998 = vmatprep.subr.bf16.mxu0 0
  %2999 = vmatpush2.bf16.msra.mxu0 0
  %3000 = vmatprep.subr.bf16.mxu0 0
  %3001 = vmatpush2.bf16.msra.mxu0 0
  %3002 = vmatprep.subr.bf16.mxu0 0
  %3003 = vmatpush2.bf16.msra.mxu0 0
  %3004 = vmatprep.subr.bf16.mxu0 0
  %3005 = vmatpush2.bf16.msra.mxu0 0
  %3006 = vmatprep.subr.bf16.mxu0 0
  %3007 = vmatpush2.bf16.msra.mxu0 0
  %3008 = vmatprep.mubr.bf16.mxu0 0
  %3009 = vmatmul.mubr.bf16.gmra.mxu0 %v2974
  %v3010 = vpop.f32.mrf.mxu0
  %v3011 = vadd.f32 %v2576, %v3010
  %v3012 = vpop.f32.mrf.mxu0
  %v3013 = vadd.f32 %v2580, %v3012
  %v3014 = vpop.f32.mrf.mxu0
  %v3015 = vadd.f32 %v2576, %v3014
  %v3016 = vpop.f32.mrf.mxu0
  %v3017 = vadd.f32 %v2580, %v3016
  %3018 = vdwg.mxu0
  %3019 = vmatprep.subr.bf16.mxu0 0
  %3020 = vmatpush1.bf16.msra.mxu0 0
  %3021 = vmatprep.subr.bf16.mxu0 0
  %3022 = vmatpush1.bf16.msra.mxu0 0
  %3023 = vmatprep.subr.bf16.mxu0 0
  %3024 = vmatpush1.bf16.msra.mxu0 0
  %3025 = vmatprep.subr.bf16.mxu0 0
  %3026 = vmatpush1.bf16.msra.mxu0 0
  %3027 = vmatprep.subr.bf16.mxu0 %v2896
  %3028 = vmatpush1.bf16.msra.mxu0 %v2895
  %3029 = vmatprep.subr.bf16.mxu0 %v2880
  %3030 = vmatpush1.bf16.msra.mxu0 %v2879
  %3031 = vmatprep.subr.bf16.mxu0 %v2864
  %3032 = vmatpush1.bf16.msra.mxu0 %v2863
  %3033 = vmatprep.subr.bf16.mxu0 %v2848
  %3034 = vmatpush1.bf16.msra.mxu0 %v2847
  %3035 = vmatprep.subr.bf16.mxu0 0
  %3036 = vmatpush2.bf16.msra.mxu0 0
  %3037 = vmatprep.subr.bf16.mxu0 0
  %3038 = vmatpush2.bf16.msra.mxu0 0
  %3039 = vmatprep.subr.bf16.mxu0 0
  %3040 = vmatpush2.bf16.msra.mxu0 0
  %3041 = vmatprep.subr.bf16.mxu0 0
  %3042 = vmatpush2.bf16.msra.mxu0 0
  %3043 = vmatprep.subr.bf16.mxu0 0
  %3044 = vmatpush2.bf16.msra.mxu0 0
  %3045 = vmatprep.subr.bf16.mxu0 0
  %3046 = vmatpush2.bf16.msra.mxu0 0
  %3047 = vmatprep.subr.bf16.mxu0 0
  %3048 = vmatpush2.bf16.msra.mxu0 0
  %3049 = vmatprep.subr.bf16.mxu0 0
  %3050 = vmatpush2.bf16.msra.mxu0 0
  %3051 = vmatprep.mubr.bf16.mxu0 0
  %3052 = vmatmul.mubr.bf16.gmra.mxu0 %v2974
  %v3053 = vpop.f32.mrf.mxu0
  %v3054 = vadd.f32 %v2584, %v3053
  %v3055 = vpop.f32.mrf.mxu0
  %v3056 = vadd.f32 %v2588, %v3055
  %v3057 = vpop.f32.mrf.mxu0
  %v3058 = vadd.f32 %v2584, %v3057
  %v3059 = vpop.f32.mrf.mxu0
  %v3060 = vadd.f32 %v2588, %v3059
  %3061 = vdwg.mxu0
  %3062 = vmatprep.subr.bf16.mxu0 0
  %3063 = vmatpush1.bf16.msra.mxu0 0
  %3064 = vmatprep.subr.bf16.mxu0 0
  %3065 = vmatpush1.bf16.msra.mxu0 0
  %3066 = vmatprep.subr.bf16.mxu0 0
  %3067 = vmatpush1.bf16.msra.mxu0 0
  %3068 = vmatprep.subr.bf16.mxu0 0
  %3069 = vmatpush1.bf16.msra.mxu0 0
  %3070 = vmatprep.subr.bf16.mxu0 %v2898
  %3071 = vmatpush1.bf16.msra.mxu0 %v2897
  %3072 = vmatprep.subr.bf16.mxu0 %v2882
  %3073 = vmatpush1.bf16.msra.mxu0 %v2881
  %3074 = vmatprep.subr.bf16.mxu0 %v2866
  %3075 = vmatpush1.bf16.msra.mxu0 %v2865
  %3076 = vmatprep.subr.bf16.mxu0 %v2850
  %3077 = vmatpush1.bf16.msra.mxu0 %v2849
  %3078 = vmatprep.subr.bf16.mxu0 0
  %3079 = vmatpush2.bf16.msra.mxu0 0
  %3080 = vmatprep.subr.bf16.mxu0 0
  %3081 = vmatpush2.bf16.msra.mxu0 0
  %3082 = vmatprep.subr.bf16.mxu0 0
  %3083 = vmatpush2.bf16.msra.mxu0 0
  %3084 = vmatprep.subr.bf16.mxu0 0
  %3085 = vmatpush2.bf16.msra.mxu0 0
  %3086 = vmatprep.subr.bf16.mxu0 0
  %3087 = vmatpush2.bf16.msra.mxu0 0
  %3088 = vmatprep.subr.bf16.mxu0 0
  %3089 = vmatpush2.bf16.msra.mxu0 0
  %3090 = vmatprep.subr.bf16.mxu0 0
  %3091 = vmatpush2.bf16.msra.mxu0 0
  %3092 = vmatprep.subr.bf16.mxu0 0
  %3093 = vmatpush2.bf16.msra.mxu0 0
  %3094 = vmatprep.mubr.bf16.mxu0 0
  %3095 = vmatmul.mubr.bf16.gmra.mxu0 %v2974
  %v3096 = vpop.f32.mrf.mxu0
  %v3097 = vadd.f32 %v2592, %v3096
  %v3098 = vpop.f32.mrf.mxu0
  %v3099 = vadd.f32 %v2596, %v3098
  %v3100 = vpop.f32.mrf.mxu0
  %v3101 = vadd.f32 %v2592, %v3100
  %v3102 = vpop.f32.mrf.mxu0
  %v3103 = vadd.f32 %v2596, %v3102
  %3104 = vdwg.mxu0
  %3105 = vmatprep.subr.bf16.mxu0 0
  %3106 = vmatpush1.bf16.msra.mxu0 0
  %3107 = vmatprep.subr.bf16.mxu0 0
  %3108 = vmatpush1.bf16.msra.mxu0 0
  %3109 = vmatprep.subr.bf16.mxu0 0
  %3110 = vmatpush1.bf16.msra.mxu0 0
  %3111 = vmatprep.subr.bf16.mxu0 0
  %3112 = vmatpush1.bf16.msra.mxu0 0
  %3113 = vmatprep.subr.bf16.mxu0 %v2900
  %3114 = vmatpush1.bf16.msra.mxu0 %v2899
  %3115 = vmatprep.subr.bf16.mxu0 %v2884
  %3116 = vmatpush1.bf16.msra.mxu0 %v2883
  %3117 = vmatprep.subr.bf16.mxu0 %v2868
  %3118 = vmatpush1.bf16.msra.mxu0 %v2867
  %3119 = vmatprep.subr.bf16.mxu0 %v2852
  %3120 = vmatpush1.bf16.msra.mxu0 %v2851
  %3121 = vmatprep.subr.bf16.mxu0 0
  %3122 = vmatpush2.bf16.msra.mxu0 0
  %3123 = vmatprep.subr.bf16.mxu0 0
  %3124 = vmatpush2.bf16.msra.mxu0 0
  %3125 = vmatprep.subr.bf16.mxu0 0
  %3126 = vmatpush2.bf16.msra.mxu0 0
  %3127 = vmatprep.subr.bf16.mxu0 0
  %3128 = vmatpush2.bf16.msra.mxu0 0
  %3129 = vmatprep.subr.bf16.mxu0 0
  %3130 = vmatpush2.bf16.msra.mxu0 0
  %3131 = vmatprep.subr.bf16.mxu0 0
  %3132 = vmatpush2.bf16.msra.mxu0 0
  %3133 = vmatprep.subr.bf16.mxu0 0
  %3134 = vmatpush2.bf16.msra.mxu0 0
  %3135 = vmatprep.subr.bf16.mxu0 0
  %3136 = vmatpush2.bf16.msra.mxu0 0
  %3137 = vmatprep.mubr.bf16.mxu0 0
  %3138 = vmatmul.mubr.bf16.gmra.mxu0 %v2974
  %v3139 = vpop.f32.mrf.mxu0
  %v3140 = vadd.f32 %v2600, %v3139
  %v3141 = vpop.f32.mrf.mxu0
  %v3142 = vadd.f32 %v2604, %v3141
  %v3143 = vpop.f32.mrf.mxu0
  %v3144 = vadd.f32 %v2600, %v3143
  %v3145 = vpop.f32.mrf.mxu0
  %v3146 = vadd.f32 %v2604, %v3145
  %3147 = vdwg.mxu0
  %3148 = vmatprep.subr.bf16.mxu0 0
  %3149 = vmatpush1.bf16.msra.mxu0 0
  %3150 = vmatprep.subr.bf16.mxu0 0
  %3151 = vmatpush1.bf16.msra.mxu0 0
  %3152 = vmatprep.subr.bf16.mxu0 0
  %3153 = vmatpush1.bf16.msra.mxu0 0
  %3154 = vmatprep.subr.bf16.mxu0 0
  %3155 = vmatpush1.bf16.msra.mxu0 0
  %3156 = vmatprep.subr.bf16.mxu0 %v2902
  %3157 = vmatpush1.bf16.msra.mxu0 %v2901
  %3158 = vmatprep.subr.bf16.mxu0 %v2886
  %3159 = vmatpush1.bf16.msra.mxu0 %v2885
  %3160 = vmatprep.subr.bf16.mxu0 %v2870
  %3161 = vmatpush1.bf16.msra.mxu0 %v2869
  %3162 = vmatprep.subr.bf16.mxu0 %v2854
  %3163 = vmatpush1.bf16.msra.mxu0 %v2853
  %3164 = vmatprep.subr.bf16.mxu0 0
  %3165 = vmatpush2.bf16.msra.mxu0 0
  %3166 = vmatprep.subr.bf16.mxu0 0
  %3167 = vmatpush2.bf16.msra.mxu0 0
  %3168 = vmatprep.subr.bf16.mxu0 0
  %3169 = vmatpush2.bf16.msra.mxu0 0
  %3170 = vmatprep.subr.bf16.mxu0 0
  %3171 = vmatpush2.bf16.msra.mxu0 0
  %3172 = vmatprep.subr.bf16.mxu0 0
  %3173 = vmatpush2.bf16.msra.mxu0 0
  %3174 = vmatprep.subr.bf16.mxu0 0
  %3175 = vmatpush2.bf16.msra.mxu0 0
  %3176 = vmatprep.subr.bf16.mxu0 0
  %3177 = vmatpush2.bf16.msra.mxu0 0
  %3178 = vmatprep.subr.bf16.mxu0 0
  %3179 = vmatpush2.bf16.msra.mxu0 0
  %3180 = vmatprep.mubr.bf16.mxu0 0
  %3181 = vmatmul.mubr.bf16.gmra.mxu0 %v2974
  %v3182 = vpop.f32.mrf.mxu0
  %v3183 = vadd.f32 %v2608, %v3182
  %v3184 = vpop.f32.mrf.mxu0
  %v3185 = vadd.f32 %v2612, %v3184
  %v3186 = vpop.f32.mrf.mxu0
  %v3187 = vadd.f32 %v2608, %v3186
  %v3188 = vpop.f32.mrf.mxu0
  %v3189 = vadd.f32 %v2612, %v3188
  %3190 = vdwg.mxu0
  %3191 = vmatprep.subr.bf16.mxu0 0
  %3192 = vmatpush1.bf16.msra.mxu0 0
  %3193 = vmatprep.subr.bf16.mxu0 0
  %3194 = vmatpush1.bf16.msra.mxu0 0
  %3195 = vmatprep.subr.bf16.mxu0 0
  %3196 = vmatpush1.bf16.msra.mxu0 0
  %3197 = vmatprep.subr.bf16.mxu0 0
  %3198 = vmatpush1.bf16.msra.mxu0 0
  %3199 = vmatprep.subr.bf16.mxu0 %v2904
  %3200 = vmatpush1.bf16.msra.mxu0 %v2903
  %3201 = vmatprep.subr.bf16.mxu0 %v2888
  %3202 = vmatpush1.bf16.msra.mxu0 %v2887
  %3203 = vmatprep.subr.bf16.mxu0 %v2872
  %3204 = vmatpush1.bf16.msra.mxu0 %v2871
  %3205 = vmatprep.subr.bf16.mxu0 %v2856
  %3206 = vmatpush1.bf16.msra.mxu0 %v2855
  %3207 = vmatprep.subr.bf16.mxu0 0
  %3208 = vmatpush2.bf16.msra.mxu0 0
  %3209 = vmatprep.subr.bf16.mxu0 0
  %3210 = vmatpush2.bf16.msra.mxu0 0
  %3211 = vmatprep.subr.bf16.mxu0 0
  %3212 = vmatpush2.bf16.msra.mxu0 0
  %3213 = vmatprep.subr.bf16.mxu0 0
  %3214 = vmatpush2.bf16.msra.mxu0 0
  %3215 = vmatprep.subr.bf16.mxu0 0
  %3216 = vmatpush2.bf16.msra.mxu0 0
  %3217 = vmatprep.subr.bf16.mxu0 0
  %3218 = vmatpush2.bf16.msra.mxu0 0
  %3219 = vmatprep.subr.bf16.mxu0 0
  %3220 = vmatpush2.bf16.msra.mxu0 0
  %3221 = vmatprep.subr.bf16.mxu0 0
  %3222 = vmatpush2.bf16.msra.mxu0 0
  %3223 = vmatprep.mubr.bf16.mxu0 0
  %3224 = vmatmul.mubr.bf16.gmra.mxu0 %v2974
  %v3225 = vpop.f32.mrf.mxu0
  %v3226 = vadd.f32 %v2616, %v3225
  %v3227 = vpop.f32.mrf.mxu0
  %v3228 = vadd.f32 %v2620, %v3227
  %v3229 = vpop.f32.mrf.mxu0
  %v3230 = vadd.f32 %v2616, %v3229
  %v3231 = vpop.f32.mrf.mxu0
  %v3232 = vadd.f32 %v2620, %v3231
  %3233 = vdwg.mxu0
  %3234 = vmatprep.subr.bf16.mxu0 0
  %3235 = vmatpush1.bf16.msra.mxu0 0
  %3236 = vmatprep.subr.bf16.mxu0 0
  %3237 = vmatpush1.bf16.msra.mxu0 0
  %3238 = vmatprep.subr.bf16.mxu0 0
  %3239 = vmatpush1.bf16.msra.mxu0 0
  %3240 = vmatprep.subr.bf16.mxu0 0
  %3241 = vmatpush1.bf16.msra.mxu0 0
  %3242 = vmatprep.subr.bf16.mxu0 %v2906
  %3243 = vmatpush1.bf16.msra.mxu0 %v2905
  %3244 = vmatprep.subr.bf16.mxu0 %v2890
  %3245 = vmatpush1.bf16.msra.mxu0 %v2889
  %3246 = vmatprep.subr.bf16.mxu0 %v2874
  %3247 = vmatpush1.bf16.msra.mxu0 %v2873
  %3248 = vmatprep.subr.bf16.mxu0 %v2858
  %3249 = vmatpush1.bf16.msra.mxu0 %v2857
  %3250 = vmatprep.subr.bf16.mxu0 0
  %3251 = vmatpush2.bf16.msra.mxu0 0
  %3252 = vmatprep.subr.bf16.mxu0 0
  %3253 = vmatpush2.bf16.msra.mxu0 0
  %3254 = vmatprep.subr.bf16.mxu0 0
  %3255 = vmatpush2.bf16.msra.mxu0 0
  %3256 = vmatprep.subr.bf16.mxu0 0
  %3257 = vmatpush2.bf16.msra.mxu0 0
  %3258 = vmatprep.subr.bf16.mxu0 0
  %3259 = vmatpush2.bf16.msra.mxu0 0
  %3260 = vmatprep.subr.bf16.mxu0 0
  %3261 = vmatpush2.bf16.msra.mxu0 0
  %3262 = vmatprep.subr.bf16.mxu0 0
  %3263 = vmatpush2.bf16.msra.mxu0 0
  %3264 = vmatprep.subr.bf16.mxu0 0
  %3265 = vmatpush2.bf16.msra.mxu0 0
  %3266 = vmatprep.mubr.bf16.mxu0 0
  %3267 = vmatmul.mubr.bf16.gmra.mxu0 %v2974
  %v3268 = vpop.f32.mrf.mxu0
  %v3269 = vadd.f32 %v2624, %v3268
  %v3270 = vpop.f32.mrf.mxu0
  %v3271 = vadd.f32 %v2628, %v3270
  %v3272 = vpop.f32.mrf.mxu0
  %v3273 = vadd.f32 %v2624, %v3272
  %v3274 = vpop.f32.mrf.mxu0
  %v3275 = vadd.f32 %v2628, %v3274
  %3276 = vdwg.mxu0
  %3277 = vmatprep.subr.bf16.mxu0 0
  %3278 = vmatpush1.bf16.msra.mxu0 0
  %3279 = vmatprep.subr.bf16.mxu0 0
  %3280 = vmatpush1.bf16.msra.mxu0 0
  %3281 = vmatprep.subr.bf16.mxu0 0
  %3282 = vmatpush1.bf16.msra.mxu0 0
  %3283 = vmatprep.subr.bf16.mxu0 0
  %3284 = vmatpush1.bf16.msra.mxu0 0
  %3285 = vmatprep.subr.bf16.mxu0 %v2908
  %3286 = vmatpush1.bf16.msra.mxu0 %v2907
  %3287 = vmatprep.subr.bf16.mxu0 %v2892
  %3288 = vmatpush1.bf16.msra.mxu0 %v2891
  %3289 = vmatprep.subr.bf16.mxu0 %v2876
  %3290 = vmatpush1.bf16.msra.mxu0 %v2875
  %3291 = vmatprep.subr.bf16.mxu0 %v2860
  %3292 = vmatpush1.bf16.msra.mxu0 %v2859
  %3293 = vmatprep.subr.bf16.mxu0 0
  %3294 = vmatpush2.bf16.msra.mxu0 0
  %3295 = vmatprep.subr.bf16.mxu0 0
  %3296 = vmatpush2.bf16.msra.mxu0 0
  %3297 = vmatprep.subr.bf16.mxu0 0
  %3298 = vmatpush2.bf16.msra.mxu0 0
  %3299 = vmatprep.subr.bf16.mxu0 0
  %3300 = vmatpush2.bf16.msra.mxu0 0
  %3301 = vmatprep.subr.bf16.mxu0 0
  %3302 = vmatpush2.bf16.msra.mxu0 0
  %3303 = vmatprep.subr.bf16.mxu0 0
  %3304 = vmatpush2.bf16.msra.mxu0 0
  %3305 = vmatprep.subr.bf16.mxu0 0
  %3306 = vmatpush2.bf16.msra.mxu0 0
  %3307 = vmatprep.subr.bf16.mxu0 0
  %3308 = vmatpush2.bf16.msra.mxu0 0
  %3309 = vmatprep.mubr.bf16.mxu0 0
  %3310 = vmatmul.mubr.bf16.gmra.mxu0 %v2974
  %v3311 = vpop.f32.mrf.mxu0
  %v3312 = vadd.f32 %v2632, %v3311
  %v3313 = vpop.f32.mrf.mxu0
  %v3314 = vadd.f32 %v2636, %v3313
  %v3315 = vpop.f32.mrf.mxu0
  %v3316 = vadd.f32 %v2632, %v3315
  %v3317 = vpop.f32.mrf.mxu0
  %v3318 = vadd.f32 %v2636, %v3317
  %3319 = vdwg.mxu0
  %v3320 = vmax.f32 %v3011, 0.0
  %v3321 = vmax.f32 %v3013, 0.0
  %v3322 = vmax.f32 %v3054, 0.0
  %v3323 = vmax.f32 %v3056, 0.0
  %v3324 = vmax.f32 %v3097, 0.0
  %v3325 = vmax.f32 %v3099, 0.0
  %v3326 = vmax.f32 %v3140, 0.0
  %v3327 = vmax.f32 %v3142, 0.0
  %v3328 = vmax.f32 %v3183, 0.0
  %v3329 = vmax.f32 %v3185, 0.0
  %v3330 = vmax.f32 %v3226, 0.0
  %v3331 = vmax.f32 %v3228, 0.0
  %v3332 = vmax.f32 %v3269, 0.0
  %v3333 = vmax.f32 %v3271, 0.0
  %v3334 = vmax.f32 %v3312, 0.0
  %v3335 = vmax.f32 %v3314, 0.0
  %v3336 = vmax.f32 %v3015, 0.0
  %v3337 = vmax.f32 %v3017, 0.0
  %v3338 = vmax.f32 %v3058, 0.0
  %v3339 = vmax.f32 %v3060, 0.0
  %v3340 = vmax.f32 %v3101, 0.0
  %v3341 = vmax.f32 %v3103, 0.0
  %v3342 = vmax.f32 %v3144, 0.0
  %v3343 = vmax.f32 %v3146, 0.0
  %v3344 = vmax.f32 %v3187, 0.0
  %v3345 = vmax.f32 %v3189, 0.0
  %v3346 = vmax.f32 %v3230, 0.0
  %v3347 = vmax.f32 %v3232, 0.0
  %v3348 = vmax.f32 %v3273, 0.0
  %v3349 = vmax.f32 %v3275, 0.0
  %v3350 = vmax.f32 %v3316, 0.0
  %v3351 = vmax.f32 %v3318, 0.0
  %v3352 = vpack.c.bf16 %v3336, %v3320
  %v3353 = vpack.c.bf16 %v3337, %v3321
  %v3354 = vpack.c.bf16 %v3338, %v3322
  %v3355 = vpack.c.bf16 %v3339, %v3323
  %v3356 = vpack.c.bf16 %v3340, %v3324
  %v3357 = vpack.c.bf16 %v3341, %v3325
  %v3358 = vpack.c.bf16 %v3342, %v3326
  %v3359 = vpack.c.bf16 %v3343, %v3327
  %v3360 = vpack.c.bf16 %v3344, %v3328
  %v3361 = vpack.c.bf16 %v3345, %v3329
  %v3362 = vpack.c.bf16 %v3346, %v3330
  %v3363 = vpack.c.bf16 %v3347, %v3331
  %v3364 = vpack.c.bf16 %v3348, %v3332
  %v3365 = vpack.c.bf16 %v3349, %v3333
  %v3366 = vpack.c.bf16 %v3350, %v3334
  %v3367 = vpack.c.bf16 %v3351, %v3335
  %v3368 = vld [vmem:[%s35] sm:$0xf]
  %v3369 = vld [vmem:[%s35 + $0x4] sm:$0xf]
  %v3370 = vld [vmem:[%s35 + $0x8] sm:$0xf]
  %v3371 = vld [vmem:[%s35 + $0xc] sm:$0xf]
  %v3372 = vld [vmem:[%s35 + $0x10] sm:$0xf]
  %v3373 = vld [vmem:[%s35 + $0x14] sm:$0xf]
  %v3374 = vld [vmem:[%s35 + $0x18] sm:$0xf]
  %v3375 = vld [vmem:[%s35 + $0x1c] sm:$0xf]
  %v3376 = vld [vmem:[%s35 + $0x20] sm:$0xf]
  %v3377 = vld [vmem:[%s35 + $0x24] sm:$0xf]
  %v3378 = vld [vmem:[%s35 + $0x28] sm:$0xf]
  %v3379 = vld [vmem:[%s35 + $0x2c] sm:$0xf]
  %v3380 = vld [vmem:[%s35 + $0x30] sm:$0xf]
  %v3381 = vld [vmem:[%s35 + $0x34] sm:$0xf]
  %v3382 = vld [vmem:[%s35 + $0x38] sm:$0xf]
  %v3383 = vld [vmem:[%s35 + $0x3c] sm:$0xf]
  %v3384 = vld [vmem:[%s35 + $0x40] sm:$0xf]
  %v3385 = vld [vmem:[%s35 + $0x44] sm:$0xf]
  %v3386 = vld [vmem:[%s35 + $0x48] sm:$0xf]
  %v3387 = vld [vmem:[%s35 + $0x4c] sm:$0xf]
  %v3388 = vld [vmem:[%s35 + $0x50] sm:$0xf]
  %v3389 = vld [vmem:[%s35 + $0x54] sm:$0xf]
  %v3390 = vld [vmem:[%s35 + $0x58] sm:$0xf]
  %v3391 = vld [vmem:[%s35 + $0x5c] sm:$0xf]
  %v3392 = vld [vmem:[%s35 + $0x60] sm:$0xf]
  %v3393 = vld [vmem:[%s35 + $0x64] sm:$0xf]
  %v3394 = vld [vmem:[%s35 + $0x68] sm:$0xf]
  %v3395 = vld [vmem:[%s35 + $0x6c] sm:$0xf]
  %v3396 = vld [vmem:[%s35 + $0x70] sm:$0xf]
  %v3397 = vld [vmem:[%s35 + $0x74] sm:$0xf]
  %v3398 = vld [vmem:[%s35 + $0x78] sm:$0xf]
  %v3399 = vld [vmem:[%s35 + $0x7c] sm:$0xf]
  %v3400 = vld [vmem:[%s35 + $0x80] sm:$0xf]
  %v3401 = vld [vmem:[%s35 + $0x84] sm:$0xf]
  %v3402 = vld [vmem:[%s35 + $0x88] sm:$0xf]
  %v3403 = vld [vmem:[%s35 + $0x8c] sm:$0xf]
  %v3404 = vld [vmem:[%s35 + $0x90] sm:$0xf]
  %v3405 = vld [vmem:[%s35 + $0x94] sm:$0xf]
  %v3406 = vld [vmem:[%s35 + $0x98] sm:$0xf]
  %v3407 = vld [vmem:[%s35 + $0x9c] sm:$0xf]
  %v3408 = vld [vmem:[%s35 + $0xa0] sm:$0xf]
  %v3409 = vld [vmem:[%s35 + $0xa4] sm:$0xf]
  %v3410 = vld [vmem:[%s35 + $0xa8] sm:$0xf]
  %v3411 = vld [vmem:[%s35 + $0xac] sm:$0xf]
  %v3412 = vld [vmem:[%s35 + $0xb0] sm:$0xf]
  %v3413 = vld [vmem:[%s35 + $0xb4] sm:$0xf]
  %v3414 = vld [vmem:[%s35 + $0xb8] sm:$0xf]
  %v3415 = vld [vmem:[%s35 + $0xbc] sm:$0xf]
  %v3416 = vld [vmem:[%s35 + $0xc0] sm:$0xf]
  %v3417 = vld [vmem:[%s35 + $0xc4] sm:$0xf]
  %v3418 = vld [vmem:[%s35 + $0xc8] sm:$0xf]
  %v3419 = vld [vmem:[%s35 + $0xcc] sm:$0xf]
  %v3420 = vld [vmem:[%s35 + $0xd0] sm:$0xf]
  %v3421 = vld [vmem:[%s35 + $0xd4] sm:$0xf]
  %v3422 = vld [vmem:[%s35 + $0xd8] sm:$0xf]
  %v3423 = vld [vmem:[%s35 + $0xdc] sm:$0xf]
  %v3424 = vld [vmem:[%s35 + $0xe0] sm:$0xf]
  %v3425 = vld [vmem:[%s35 + $0xe4] sm:$0xf]
  %v3426 = vld [vmem:[%s35 + $0xe8] sm:$0xf]
  %v3427 = vld [vmem:[%s35 + $0xec] sm:$0xf]
  %v3428 = vld [vmem:[%s35 + $0xf0] sm:$0xf]
  %v3429 = vld [vmem:[%s35 + $0xf4] sm:$0xf]
  %v3430 = vld [vmem:[%s35 + $0xf8] sm:$0xf]
  %v3431 = vld [vmem:[%s35 + $0xfc] sm:$0xf]
  %v3432 = vld [vmem:[%s35 + $0x100] sm:$0xf]
  %v3433 = vld [vmem:[%s35 + $0x104] sm:$0xf]
  %v3434 = vld [vmem:[%s35 + $0x108] sm:$0xf]
  %v3435 = vld [vmem:[%s35 + $0x10c] sm:$0xf]
  %v3436 = vld [vmem:[%s35 + $0x110] sm:$0xf]
  %v3437 = vld [vmem:[%s35 + $0x114] sm:$0xf]
  %v3438 = vld [vmem:[%s35 + $0x118] sm:$0xf]
  %v3439 = vld [vmem:[%s35 + $0x11c] sm:$0xf]
  %v3440 = vld [vmem:[%s35 + $0x120] sm:$0xf]
  %v3441 = vld [vmem:[%s35 + $0x124] sm:$0xf]
  %v3442 = vld [vmem:[%s35 + $0x128] sm:$0xf]
  %v3443 = vld [vmem:[%s35 + $0x12c] sm:$0xf]
  %v3444 = vld [vmem:[%s35 + $0x130] sm:$0xf]
  %v3445 = vld [vmem:[%s35 + $0x134] sm:$0xf]
  %v3446 = vld [vmem:[%s35 + $0x138] sm:$0xf]
  %v3447 = vld [vmem:[%s35 + $0x13c] sm:$0xf]
  %v3448 = vld [vmem:[%s35 + $0x140] sm:$0xf]
  %v3449 = vld [vmem:[%s35 + $0x144] sm:$0xf]
  %v3450 = vld [vmem:[%s35 + $0x148] sm:$0xf]
  %v3451 = vld [vmem:[%s35 + $0x14c] sm:$0xf]
  %v3452 = vld [vmem:[%s35 + $0x150] sm:$0xf]
  %v3453 = vld [vmem:[%s35 + $0x154] sm:$0xf]
  %v3454 = vld [vmem:[%s35 + $0x158] sm:$0xf]
  %v3455 = vld [vmem:[%s35 + $0x15c] sm:$0xf]
  %v3456 = vld [vmem:[%s35 + $0x160] sm:$0xf]
  %v3457 = vld [vmem:[%s35 + $0x164] sm:$0xf]
  %v3458 = vld [vmem:[%s35 + $0x168] sm:$0xf]
  %v3459 = vld [vmem:[%s35 + $0x16c] sm:$0xf]
  %v3460 = vld [vmem:[%s35 + $0x170] sm:$0xf]
  %v3461 = vld [vmem:[%s35 + $0x174] sm:$0xf]
  %v3462 = vld [vmem:[%s35 + $0x178] sm:$0xf]
  %v3463 = vld [vmem:[%s35 + $0x17c] sm:$0xf]
  %v3464 = vld [vmem:[%s35 + $0x180] sm:$0xf]
  %v3465 = vld [vmem:[%s35 + $0x184] sm:$0xf]
  %v3466 = vld [vmem:[%s35 + $0x188] sm:$0xf]
  %v3467 = vld [vmem:[%s35 + $0x18c] sm:$0xf]
  %v3468 = vld [vmem:[%s35 + $0x190] sm:$0xf]
  %v3469 = vld [vmem:[%s35 + $0x194] sm:$0xf]
  %v3470 = vld [vmem:[%s35 + $0x198] sm:$0xf]
  %v3471 = vld [vmem:[%s35 + $0x19c] sm:$0xf]
  %v3472 = vld [vmem:[%s35 + $0x1a0] sm:$0xf]
  %v3473 = vld [vmem:[%s35 + $0x1a4] sm:$0xf]
  %v3474 = vld [vmem:[%s35 + $0x1a8] sm:$0xf]
  %v3475 = vld [vmem:[%s35 + $0x1ac] sm:$0xf]
  %v3476 = vld [vmem:[%s35 + $0x1b0] sm:$0xf]
  %v3477 = vld [vmem:[%s35 + $0x1b4] sm:$0xf]
  %v3478 = vld [vmem:[%s35 + $0x1b8] sm:$0xf]
  %v3479 = vld [vmem:[%s35 + $0x1bc] sm:$0xf]
  %v3480 = vld [vmem:[%s35 + $0x1c0] sm:$0xf]
  %v3481 = vld [vmem:[%s35 + $0x1c4] sm:$0xf]
  %v3482 = vld [vmem:[%s35 + $0x1c8] sm:$0xf]
  %v3483 = vld [vmem:[%s35 + $0x1cc] sm:$0xf]
  %v3484 = vld [vmem:[%s35 + $0x1d0] sm:$0xf]
  %v3485 = vld [vmem:[%s35 + $0x1d4] sm:$0xf]
  %v3486 = vld [vmem:[%s35 + $0x1d8] sm:$0xf]
  %v3487 = vld [vmem:[%s35 + $0x1dc] sm:$0xf]
  %v3488 = vld [vmem:[%s35 + $0x1e0] sm:$0xf]
  %v3489 = vld [vmem:[%s35 + $0x1e4] sm:$0xf]
  %v3490 = vld [vmem:[%s35 + $0x1e8] sm:$0xf]
  %v3491 = vld [vmem:[%s35 + $0x1ec] sm:$0xf]
  %v3492 = vld [vmem:[%s35 + $0x1f0] sm:$0xf]
  %v3493 = vld [vmem:[%s35 + $0x1f4] sm:$0xf]
  %v3494 = vld [vmem:[%s35 + $0x1f8] sm:$0xf]
  %v3495 = vld [vmem:[%s35 + $0x1fc] sm:$0xf]
  %v3496 = vld [vmem:[%s35 + $0x200] sm:$0xf]
  %v3497 = vld [vmem:[%s35 + $0x204] sm:$0xf]
  %v3498 = vld [vmem:[%s35 + $0x208] sm:$0xf]
  %v3499 = vld [vmem:[%s35 + $0x20c] sm:$0xf]
  %v3500 = vld [vmem:[%s35 + $0x210] sm:$0xf]
  %v3501 = vld [vmem:[%s35 + $0x214] sm:$0xf]
  %v3502 = vld [vmem:[%s35 + $0x218] sm:$0xf]
  %v3503 = vld [vmem:[%s35 + $0x21c] sm:$0xf]
  %v3504 = vld [vmem:[%s35 + $0x220] sm:$0xf]
  %v3505 = vld [vmem:[%s35 + $0x224] sm:$0xf]
  %v3506 = vld [vmem:[%s35 + $0x228] sm:$0xf]
  %v3507 = vld [vmem:[%s35 + $0x22c] sm:$0xf]
  %v3508 = vld [vmem:[%s35 + $0x230] sm:$0xf]
  %v3509 = vld [vmem:[%s35 + $0x234] sm:$0xf]
  %v3510 = vld [vmem:[%s35 + $0x238] sm:$0xf]
  %v3511 = vld [vmem:[%s35 + $0x23c] sm:$0xf]
  %v3512 = vld [vmem:[%s35 + $0x240] sm:$0xf]
  %v3513 = vld [vmem:[%s35 + $0x244] sm:$0xf]
  %v3514 = vld [vmem:[%s35 + $0x248] sm:$0xf]
  %v3515 = vld [vmem:[%s35 + $0x24c] sm:$0xf]
  %v3516 = vld [vmem:[%s35 + $0x250] sm:$0xf]
  %v3517 = vld [vmem:[%s35 + $0x254] sm:$0xf]
  %v3518 = vld [vmem:[%s35 + $0x258] sm:$0xf]
  %v3519 = vld [vmem:[%s35 + $0x25c] sm:$0xf]
  %v3520 = vld [vmem:[%s35 + $0x260] sm:$0xf]
  %v3521 = vld [vmem:[%s35 + $0x264] sm:$0xf]
  %v3522 = vld [vmem:[%s35 + $0x268] sm:$0xf]
  %v3523 = vld [vmem:[%s35 + $0x26c] sm:$0xf]
  %v3524 = vld [vmem:[%s35 + $0x270] sm:$0xf]
  %v3525 = vld [vmem:[%s35 + $0x274] sm:$0xf]
  %v3526 = vld [vmem:[%s35 + $0x278] sm:$0xf]
  %v3527 = vld [vmem:[%s35 + $0x27c] sm:$0xf]
  %v3528 = vld [vmem:[%s35 + $0x280] sm:$0xf]
  %v3529 = vld [vmem:[%s35 + $0x284] sm:$0xf]
  %v3530 = vld [vmem:[%s35 + $0x288] sm:$0xf]
  %v3531 = vld [vmem:[%s35 + $0x28c] sm:$0xf]
  %v3532 = vld [vmem:[%s35 + $0x290] sm:$0xf]
  %v3533 = vld [vmem:[%s35 + $0x294] sm:$0xf]
  %v3534 = vld [vmem:[%s35 + $0x298] sm:$0xf]
  %v3535 = vld [vmem:[%s35 + $0x29c] sm:$0xf]
  %v3536 = vld [vmem:[%s35 + $0x2a0] sm:$0xf]
  %v3537 = vld [vmem:[%s35 + $0x2a4] sm:$0xf]
  %v3538 = vld [vmem:[%s35 + $0x2a8] sm:$0xf]
  %v3539 = vld [vmem:[%s35 + $0x2ac] sm:$0xf]
  %v3540 = vld [vmem:[%s35 + $0x2b0] sm:$0xf]
  %v3541 = vld [vmem:[%s35 + $0x2b4] sm:$0xf]
  %v3542 = vld [vmem:[%s35 + $0x2b8] sm:$0xf]
  %v3543 = vld [vmem:[%s35 + $0x2bc] sm:$0xf]
  %v3544 = vld [vmem:[%s35 + $0x2c0] sm:$0xf]
  %v3545 = vld [vmem:[%s35 + $0x2c4] sm:$0xf]
  %v3546 = vld [vmem:[%s35 + $0x2c8] sm:$0xf]
  %v3547 = vld [vmem:[%s35 + $0x2cc] sm:$0xf]
  %v3548 = vld [vmem:[%s35 + $0x2d0] sm:$0xf]
  %v3549 = vld [vmem:[%s35 + $0x2d4] sm:$0xf]
  %v3550 = vld [vmem:[%s35 + $0x2d8] sm:$0xf]
  %v3551 = vld [vmem:[%s35 + $0x2dc] sm:$0xf]
  %v3552 = vld [vmem:[%s35 + $0x2e0] sm:$0xf]
  %v3553 = vld [vmem:[%s35 + $0x2e4] sm:$0xf]
  %v3554 = vld [vmem:[%s35 + $0x2e8] sm:$0xf]
  %v3555 = vld [vmem:[%s35 + $0x2ec] sm:$0xf]
  %v3556 = vld [vmem:[%s35 + $0x2f0] sm:$0xf]
  %v3557 = vld [vmem:[%s35 + $0x2f4] sm:$0xf]
  %v3558 = vld [vmem:[%s35 + $0x2f8] sm:$0xf]
  %v3559 = vld [vmem:[%s35 + $0x2fc] sm:$0xf]
  %v3560 = vld [vmem:[%s35 + $0x300] sm:$0xf]
  %v3561 = vld [vmem:[%s35 + $0x304] sm:$0xf]
  %v3562 = vld [vmem:[%s35 + $0x308] sm:$0xf]
  %v3563 = vld [vmem:[%s35 + $0x30c] sm:$0xf]
  %v3564 = vld [vmem:[%s35 + $0x310] sm:$0xf]
  %v3565 = vld [vmem:[%s35 + $0x314] sm:$0xf]
  %v3566 = vld [vmem:[%s35 + $0x318] sm:$0xf]
  %v3567 = vld [vmem:[%s35 + $0x31c] sm:$0xf]
  %v3568 = vld [vmem:[%s35 + $0x320] sm:$0xf]
  %v3569 = vld [vmem:[%s35 + $0x324] sm:$0xf]
  %v3570 = vld [vmem:[%s35 + $0x328] sm:$0xf]
  %v3571 = vld [vmem:[%s35 + $0x32c] sm:$0xf]
  %v3572 = vld [vmem:[%s35 + $0x330] sm:$0xf]
  %v3573 = vld [vmem:[%s35 + $0x334] sm:$0xf]
  %v3574 = vld [vmem:[%s35 + $0x338] sm:$0xf]
  %v3575 = vld [vmem:[%s35 + $0x33c] sm:$0xf]
  %v3576 = vld [vmem:[%s35 + $0x340] sm:$0xf]
  %v3577 = vld [vmem:[%s35 + $0x344] sm:$0xf]
  %v3578 = vld [vmem:[%s35 + $0x348] sm:$0xf]
  %v3579 = vld [vmem:[%s35 + $0x34c] sm:$0xf]
  %v3580 = vld [vmem:[%s35 + $0x350] sm:$0xf]
  %v3581 = vld [vmem:[%s35 + $0x354] sm:$0xf]
  %v3582 = vld [vmem:[%s35 + $0x358] sm:$0xf]
  %v3583 = vld [vmem:[%s35 + $0x35c] sm:$0xf]
  %v3584 = vld [vmem:[%s35 + $0x360] sm:$0xf]
  %v3585 = vld [vmem:[%s35 + $0x364] sm:$0xf]
  %v3586 = vld [vmem:[%s35 + $0x368] sm:$0xf]
  %v3587 = vld [vmem:[%s35 + $0x36c] sm:$0xf]
  %v3588 = vld [vmem:[%s35 + $0x370] sm:$0xf]
  %v3589 = vld [vmem:[%s35 + $0x374] sm:$0xf]
  %v3590 = vld [vmem:[%s35 + $0x378] sm:$0xf]
  %v3591 = vld [vmem:[%s35 + $0x37c] sm:$0xf]
  %v3592 = vld [vmem:[%s35 + $0x380] sm:$0xf]
  %v3593 = vld [vmem:[%s35 + $0x384] sm:$0xf]
  %v3594 = vld [vmem:[%s35 + $0x388] sm:$0xf]
  %v3595 = vld [vmem:[%s35 + $0x38c] sm:$0xf]
  %v3596 = vld [vmem:[%s35 + $0x390] sm:$0xf]
  %v3597 = vld [vmem:[%s35 + $0x394] sm:$0xf]
  %v3598 = vld [vmem:[%s35 + $0x398] sm:$0xf]
  %v3599 = vld [vmem:[%s35 + $0x39c] sm:$0xf]
  %v3600 = vld [vmem:[%s35 + $0x3a0] sm:$0xf]
  %v3601 = vld [vmem:[%s35 + $0x3a4] sm:$0xf]
  %v3602 = vld [vmem:[%s35 + $0x3a8] sm:$0xf]
  %v3603 = vld [vmem:[%s35 + $0x3ac] sm:$0xf]
  %v3604 = vld [vmem:[%s35 + $0x3b0] sm:$0xf]
  %v3605 = vld [vmem:[%s35 + $0x3b4] sm:$0xf]
  %v3606 = vld [vmem:[%s35 + $0x3b8] sm:$0xf]
  %v3607 = vld [vmem:[%s35 + $0x3bc] sm:$0xf]
  %v3608 = vld [vmem:[%s35 + $0x3c0] sm:$0xf]
  %v3609 = vld [vmem:[%s35 + $0x3c4] sm:$0xf]
  %v3610 = vld [vmem:[%s35 + $0x3c8] sm:$0xf]
  %v3611 = vld [vmem:[%s35 + $0x3cc] sm:$0xf]
  %v3612 = vld [vmem:[%s35 + $0x3d0] sm:$0xf]
  %v3613 = vld [vmem:[%s35 + $0x3d4] sm:$0xf]
  %v3614 = vld [vmem:[%s35 + $0x3d8] sm:$0xf]
  %v3615 = vld [vmem:[%s35 + $0x3dc] sm:$0xf]
  %v3616 = vld [vmem:[%s35 + $0x3e0] sm:$0xf]
  %v3617 = vld [vmem:[%s35 + $0x3e4] sm:$0xf]
  %v3618 = vld [vmem:[%s35 + $0x3e8] sm:$0xf]
  %v3619 = vld [vmem:[%s35 + $0x3ec] sm:$0xf]
  %v3620 = vld [vmem:[%s35 + $0x3f0] sm:$0xf]
  %v3621 = vld [vmem:[%s35 + $0x3f4] sm:$0xf]
  %v3622 = vld [vmem:[%s35 + $0x3f8] sm:$0xf]
  %v3623 = vld [vmem:[%s35 + $0x3fc] sm:$0xf]
  %v3624 = vld [vmem:[%s37] sm:$0x1]
  %v3626 = vlaneseq
  %v3627 = vshrl.u32 %v3626, 7
  %v3628 = vsub.s32 0, %v3627
  %v3629 = vrot.slane %v3624, %v3628
  %v3887 = vunpack.c.l.b16 %v3368
  %v3888 = vunpack.c.l.b16 %v3369
  %v3889 = vunpack.c.l.b16 %v3370
  %v3890 = vunpack.c.l.b16 %v3371
  %v3891 = vunpack.c.l.b16 %v3372
  %v3892 = vunpack.c.l.b16 %v3373
  %v3893 = vunpack.c.l.b16 %v3374
  %v3894 = vunpack.c.l.b16 %v3375
  %v3895 = vunpack.c.l.b16 %v3376
  %v3896 = vunpack.c.l.b16 %v3377
  %v3897 = vunpack.c.l.b16 %v3378
  %v3898 = vunpack.c.l.b16 %v3379
  %v3899 = vunpack.c.l.b16 %v3380
  %v3900 = vunpack.c.l.b16 %v3381
  %v3901 = vunpack.c.l.b16 %v3382
  %v3902 = vunpack.c.l.b16 %v3383
  %v3903 = vunpack.c.l.b16 %v3384
  %v3904 = vunpack.c.l.b16 %v3385
  %v3905 = vunpack.c.l.b16 %v3386
  %v3906 = vunpack.c.l.b16 %v3387
  %v3907 = vunpack.c.l.b16 %v3388
  %v3908 = vunpack.c.l.b16 %v3389
  %v3909 = vunpack.c.l.b16 %v3390
  %v3910 = vunpack.c.l.b16 %v3391
  %v3911 = vunpack.c.l.b16 %v3392
  %v3912 = vunpack.c.l.b16 %v3393
  %v3913 = vunpack.c.l.b16 %v3394
  %v3914 = vunpack.c.l.b16 %v3395
  %v3915 = vunpack.c.l.b16 %v3396
  %v3916 = vunpack.c.l.b16 %v3397
  %v3917 = vunpack.c.l.b16 %v3398
  %v3918 = vunpack.c.l.b16 %v3399
  %v3919 = vunpack.c.l.b16 %v3400
  %v3920 = vunpack.c.l.b16 %v3401
  %v3921 = vunpack.c.l.b16 %v3402
  %v3922 = vunpack.c.l.b16 %v3403
  %v3923 = vunpack.c.l.b16 %v3404
  %v3924 = vunpack.c.l.b16 %v3405
  %v3925 = vunpack.c.l.b16 %v3406
  %v3926 = vunpack.c.l.b16 %v3407
  %v3927 = vunpack.c.l.b16 %v3408
  %v3928 = vunpack.c.l.b16 %v3409
  %v3929 = vunpack.c.l.b16 %v3410
  %v3930 = vunpack.c.l.b16 %v3411
  %v3931 = vunpack.c.l.b16 %v3412
  %v3932 = vunpack.c.l.b16 %v3413
  %v3933 = vunpack.c.l.b16 %v3414
  %v3934 = vunpack.c.l.b16 %v3415
  %v3935 = vunpack.c.l.b16 %v3416
  %v3936 = vunpack.c.l.b16 %v3417
  %v3937 = vunpack.c.l.b16 %v3418
  %v3938 = vunpack.c.l.b16 %v3419
  %v3939 = vunpack.c.l.b16 %v3420
  %v3940 = vunpack.c.l.b16 %v3421
  %v3941 = vunpack.c.l.b16 %v3422
  %v3942 = vunpack.c.l.b16 %v3423
  %v3943 = vunpack.c.l.b16 %v3424
  %v3944 = vunpack.c.l.b16 %v3425
  %v3945 = vunpack.c.l.b16 %v3426
  %v3946 = vunpack.c.l.b16 %v3427
  %v3947 = vunpack.c.l.b16 %v3428
  %v3948 = vunpack.c.l.b16 %v3429
  %v3949 = vunpack.c.l.b16 %v3430
  %v3950 = vunpack.c.l.b16 %v3431
  %v3951 = vunpack.c.l.b16 %v3432
  %v3952 = vunpack.c.l.b16 %v3433
  %v3953 = vunpack.c.l.b16 %v3434
  %v3954 = vunpack.c.l.b16 %v3435
  %v3955 = vunpack.c.l.b16 %v3436
  %v3956 = vunpack.c.l.b16 %v3437
  %v3957 = vunpack.c.l.b16 %v3438
  %v3958 = vunpack.c.l.b16 %v3439
  %v3959 = vunpack.c.l.b16 %v3440
  %v3960 = vunpack.c.l.b16 %v3441
  %v3961 = vunpack.c.l.b16 %v3442
  %v3962 = vunpack.c.l.b16 %v3443
  %v3963 = vunpack.c.l.b16 %v3444
  %v3964 = vunpack.c.l.b16 %v3445
  %v3965 = vunpack.c.l.b16 %v3446
  %v3966 = vunpack.c.l.b16 %v3447
  %v3967 = vunpack.c.l.b16 %v3448
  %v3968 = vunpack.c.l.b16 %v3449
  %v3969 = vunpack.c.l.b16 %v3450
  %v3970 = vunpack.c.l.b16 %v3451
  %v3971 = vunpack.c.l.b16 %v3452
  %v3972 = vunpack.c.l.b16 %v3453
  %v3973 = vunpack.c.l.b16 %v3454
  %v3974 = vunpack.c.l.b16 %v3455
  %v3975 = vunpack.c.l.b16 %v3456
  %v3976 = vunpack.c.l.b16 %v3457
  %v3977 = vunpack.c.l.b16 %v3458
  %v3978 = vunpack.c.l.b16 %v3459
  %v3979 = vunpack.c.l.b16 %v3460
  %v3980 = vunpack.c.l.b16 %v3461
  %v3981 = vunpack.c.l.b16 %v3462
  %v3982 = vunpack.c.l.b16 %v3463
  %v3983 = vunpack.c.l.b16 %v3464
  %v3984 = vunpack.c.l.b16 %v3465
  %v3985 = vunpack.c.l.b16 %v3466
  %v3986 = vunpack.c.l.b16 %v3467
  %v3987 = vunpack.c.l.b16 %v3468
  %v3988 = vunpack.c.l.b16 %v3469
  %v3989 = vunpack.c.l.b16 %v3470
  %v3990 = vunpack.c.l.b16 %v3471
  %v3991 = vunpack.c.l.b16 %v3472
  %v3992 = vunpack.c.l.b16 %v3473
  %v3993 = vunpack.c.l.b16 %v3474
  %v3994 = vunpack.c.l.b16 %v3475
  %v3995 = vunpack.c.l.b16 %v3476
  %v3996 = vunpack.c.l.b16 %v3477
  %v3997 = vunpack.c.l.b16 %v3478
  %v3998 = vunpack.c.l.b16 %v3479
  %v3999 = vunpack.c.l.b16 %v3480
  %v4000 = vunpack.c.l.b16 %v3481
  %v4001 = vunpack.c.l.b16 %v3482
  %v4002 = vunpack.c.l.b16 %v3483
  %v4003 = vunpack.c.l.b16 %v3484
  %v4004 = vunpack.c.l.b16 %v3485
  %v4005 = vunpack.c.l.b16 %v3486
  %v4006 = vunpack.c.l.b16 %v3487
  %v4007 = vunpack.c.l.b16 %v3488
  %v4008 = vunpack.c.l.b16 %v3489
  %v4009 = vunpack.c.l.b16 %v3490
  %v4010 = vunpack.c.l.b16 %v3491
  %v4011 = vunpack.c.l.b16 %v3492
  %v4012 = vunpack.c.l.b16 %v3493
  %v4013 = vunpack.c.l.b16 %v3494
  %v4014 = vunpack.c.l.b16 %v3495
  %v4015 = vunpack.c.l.b16 %v3496
  %v4016 = vunpack.c.l.b16 %v3497
  %v4017 = vunpack.c.l.b16 %v3498
  %v4018 = vunpack.c.l.b16 %v3499
  %v4019 = vunpack.c.l.b16 %v3500
  %v4020 = vunpack.c.l.b16 %v3501
  %v4021 = vunpack.c.l.b16 %v3502
  %v4022 = vunpack.c.l.b16 %v3503
  %v4023 = vunpack.c.l.b16 %v3504
  %v4024 = vunpack.c.l.b16 %v3505
  %v4025 = vunpack.c.l.b16 %v3506
  %v4026 = vunpack.c.l.b16 %v3507
  %v4027 = vunpack.c.l.b16 %v3508
  %v4028 = vunpack.c.l.b16 %v3509
  %v4029 = vunpack.c.l.b16 %v3510
  %v4030 = vunpack.c.l.b16 %v3511
  %v4031 = vunpack.c.l.b16 %v3512
  %v4032 = vunpack.c.l.b16 %v3513
  %v4033 = vunpack.c.l.b16 %v3514
  %v4034 = vunpack.c.l.b16 %v3515
  %v4035 = vunpack.c.l.b16 %v3516
  %v4036 = vunpack.c.l.b16 %v3517
  %v4037 = vunpack.c.l.b16 %v3518
  %v4038 = vunpack.c.l.b16 %v3519
  %v4039 = vunpack.c.l.b16 %v3520
  %v4040 = vunpack.c.l.b16 %v3521
  %v4041 = vunpack.c.l.b16 %v3522
  %v4042 = vunpack.c.l.b16 %v3523
  %v4043 = vunpack.c.l.b16 %v3524
  %v4044 = vunpack.c.l.b16 %v3525
  %v4045 = vunpack.c.l.b16 %v3526
  %v4046 = vunpack.c.l.b16 %v3527
  %v4047 = vunpack.c.l.b16 %v3528
  %v4048 = vunpack.c.l.b16 %v3529
  %v4049 = vunpack.c.l.b16 %v3530
  %v4050 = vunpack.c.l.b16 %v3531
  %v4051 = vunpack.c.l.b16 %v3532
  %v4052 = vunpack.c.l.b16 %v3533
  %v4053 = vunpack.c.l.b16 %v3534
  %v4054 = vunpack.c.l.b16 %v3535
  %v4055 = vunpack.c.l.b16 %v3536
  %v4056 = vunpack.c.l.b16 %v3537
  %v4057 = vunpack.c.l.b16 %v3538
  %v4058 = vunpack.c.l.b16 %v3539
  %v4059 = vunpack.c.l.b16 %v3540
  %v4060 = vunpack.c.l.b16 %v3541
  %v4061 = vunpack.c.l.b16 %v3542
  %v4062 = vunpack.c.l.b16 %v3543
  %v4063 = vunpack.c.l.b16 %v3544
  %v4064 = vunpack.c.l.b16 %v3545
  %v4065 = vunpack.c.l.b16 %v3546
  %v4066 = vunpack.c.l.b16 %v3547
  %v4067 = vunpack.c.l.b16 %v3548
  %v4068 = vunpack.c.l.b16 %v3549
  %v4069 = vunpack.c.l.b16 %v3550
  %v4070 = vunpack.c.l.b16 %v3551
  %v4071 = vunpack.c.l.b16 %v3552
  %v4072 = vunpack.c.l.b16 %v3553
  %v4073 = vunpack.c.l.b16 %v3554
  %v4074 = vunpack.c.l.b16 %v3555
  %v4075 = vunpack.c.l.b16 %v3556
  %v4076 = vunpack.c.l.b16 %v3557
  %v4077 = vunpack.c.l.b16 %v3558
  %v4078 = vunpack.c.l.b16 %v3559
  %v4079 = vunpack.c.l.b16 %v3560
  %v4080 = vunpack.c.l.b16 %v3561
  %v4081 = vunpack.c.l.b16 %v3562
  %v4082 = vunpack.c.l.b16 %v3563
  %v4083 = vunpack.c.l.b16 %v3564
  %v4084 = vunpack.c.l.b16 %v3565
  %v4085 = vunpack.c.l.b16 %v3566
  %v4086 = vunpack.c.l.b16 %v3567
  %v4087 = vunpack.c.l.b16 %v3568
  %v4088 = vunpack.c.l.b16 %v3569
  %v4089 = vunpack.c.l.b16 %v3570
  %v4090 = vunpack.c.l.b16 %v3571
  %v4091 = vunpack.c.l.b16 %v3572
  %v4092 = vunpack.c.l.b16 %v3573
  %v4093 = vunpack.c.l.b16 %v3574
  %v4094 = vunpack.c.l.b16 %v3575
  %v4095 = vunpack.c.l.b16 %v3576
  %v4096 = vunpack.c.l.b16 %v3577
  %v4097 = vunpack.c.l.b16 %v3578
  %v4098 = vunpack.c.l.b16 %v3579
  %v4099 = vunpack.c.l.b16 %v3580
  %v4100 = vunpack.c.l.b16 %v3581
  %v4101 = vunpack.c.l.b16 %v3582
  %v4102 = vunpack.c.l.b16 %v3583
  %v4103 = vunpack.c.l.b16 %v3584
  %v4104 = vunpack.c.l.b16 %v3585
  %v4105 = vunpack.c.l.b16 %v3586
  %v4106 = vunpack.c.l.b16 %v3587
  %v4107 = vunpack.c.l.b16 %v3588
  %v4108 = vunpack.c.l.b16 %v3589
  %v4109 = vunpack.c.l.b16 %v3590
  %v4110 = vunpack.c.l.b16 %v3591
  %v4111 = vunpack.c.l.b16 %v3592
  %v4112 = vunpack.c.l.b16 %v3593
  %v4113 = vunpack.c.l.b16 %v3594
  %v4114 = vunpack.c.l.b16 %v3595
  %v4115 = vunpack.c.l.b16 %v3596
  %v4116 = vunpack.c.l.b16 %v3597
  %v4117 = vunpack.c.l.b16 %v3598
  %v4118 = vunpack.c.l.b16 %v3599
  %v4119 = vunpack.c.l.b16 %v3600
  %v4120 = vunpack.c.l.b16 %v3601
  %v4121 = vunpack.c.l.b16 %v3602
  %v4122 = vunpack.c.l.b16 %v3603
  %v4123 = vunpack.c.l.b16 %v3604
  %v4124 = vunpack.c.l.b16 %v3605
  %v4125 = vunpack.c.l.b16 %v3606
  %v4126 = vunpack.c.l.b16 %v3607
  %v4127 = vunpack.c.l.b16 %v3608
  %v4128 = vunpack.c.l.b16 %v3609
  %v4129 = vunpack.c.l.b16 %v3610
  %v4130 = vunpack.c.l.b16 %v3611
  %v4131 = vunpack.c.l.b16 %v3612
  %v4132 = vunpack.c.l.b16 %v3613
  %v4133 = vunpack.c.l.b16 %v3614
  %v4134 = vunpack.c.l.b16 %v3615
  %v4135 = vunpack.c.l.b16 %v3616
  %v4136 = vunpack.c.l.b16 %v3617
  %v4137 = vunpack.c.l.b16 %v3618
  %v4138 = vunpack.c.l.b16 %v3619
  %v4139 = vunpack.c.l.b16 %v3620
  %v4140 = vunpack.c.l.b16 %v3621
  %v4141 = vunpack.c.l.b16 %v3622
  %v4142 = vunpack.c.l.b16 %v3623
  %v4143 = vpack.c.b16 %v3888, %v3887
  %v4144 = vpack.c.b16 %v3890, %v3889
  %v4145 = vpack.c.b16 %v3892, %v3891
  %v4146 = vpack.c.b16 %v3894, %v3893
  %v4147 = vpack.c.b16 %v3896, %v3895
  %v4148 = vpack.c.b16 %v3898, %v3897
  %v4149 = vpack.c.b16 %v3900, %v3899
  %v4150 = vpack.c.b16 %v3902, %v3901
  %v4151 = vpack.c.b16 %v3904, %v3903
  %v4152 = vpack.c.b16 %v3906, %v3905
  %v4153 = vpack.c.b16 %v3908, %v3907
  %v4154 = vpack.c.b16 %v3910, %v3909
  %v4155 = vpack.c.b16 %v3912, %v3911
  %v4156 = vpack.c.b16 %v3914, %v3913
  %v4157 = vpack.c.b16 %v3916, %v3915
  %v4158 = vpack.c.b16 %v3918, %v3917
  %v4159 = vpack.c.b16 %v3920, %v3919
  %v4160 = vpack.c.b16 %v3922, %v3921
  %v4161 = vpack.c.b16 %v3924, %v3923
  %v4162 = vpack.c.b16 %v3926, %v3925
  %v4163 = vpack.c.b16 %v3928, %v3927
  %v4164 = vpack.c.b16 %v3930, %v3929
  %v4165 = vpack.c.b16 %v3932, %v3931
  %v4166 = vpack.c.b16 %v3934, %v3933
  %v4167 = vpack.c.b16 %v3936, %v3935
  %v4168 = vpack.c.b16 %v3938, %v3937
  %v4169 = vpack.c.b16 %v3940, %v3939
  %v4170 = vpack.c.b16 %v3942, %v3941
  %v4171 = vpack.c.b16 %v3944, %v3943
  %v4172 = vpack.c.b16 %v3946, %v3945
  %v4173 = vpack.c.b16 %v3948, %v3947
  %v4174 = vpack.c.b16 %v3950, %v3949
  %v4175 = vpack.c.b16 %v3952, %v3951
  %v4176 = vpack.c.b16 %v3954, %v3953
  %v4177 = vpack.c.b16 %v3956, %v3955
  %v4178 = vpack.c.b16 %v3958, %v3957
  %v4179 = vpack.c.b16 %v3960, %v3959
  %v4180 = vpack.c.b16 %v3962, %v3961
  %v4181 = vpack.c.b16 %v3964, %v3963
  %v4182 = vpack.c.b16 %v3966, %v3965
  %v4183 = vpack.c.b16 %v3968, %v3967
  %v4184 = vpack.c.b16 %v3970, %v3969
  %v4185 = vpack.c.b16 %v3972, %v3971
  %v4186 = vpack.c.b16 %v3974, %v3973
  %v4187 = vpack.c.b16 %v3976, %v3975
  %v4188 = vpack.c.b16 %v3978, %v3977
  %v4189 = vpack.c.b16 %v3980, %v3979
  %v4190 = vpack.c.b16 %v3982, %v3981
  %v4191 = vpack.c.b16 %v3984, %v3983
  %v4192 = vpack.c.b16 %v3986, %v3985
  %v4193 = vpack.c.b16 %v3988, %v3987
  %v4194 = vpack.c.b16 %v3990, %v3989
  %v4195 = vpack.c.b16 %v3992, %v3991
  %v4196 = vpack.c.b16 %v3994, %v3993
  %v4197 = vpack.c.b16 %v3996, %v3995
  %v4198 = vpack.c.b16 %v3998, %v3997
  %v4199 = vpack.c.b16 %v4000, %v3999
  %v4200 = vpack.c.b16 %v4002, %v4001
  %v4201 = vpack.c.b16 %v4004, %v4003
  %v4202 = vpack.c.b16 %v4006, %v4005
  %v4203 = vpack.c.b16 %v4008, %v4007
  %v4204 = vpack.c.b16 %v4010, %v4009
  %v4205 = vpack.c.b16 %v4012, %v4011
  %v4206 = vpack.c.b16 %v4014, %v4013
  %v4207 = vpack.c.b16 %v4016, %v4015
  %v4208 = vpack.c.b16 %v4018, %v4017
  %v4209 = vpack.c.b16 %v4020, %v4019
  %v4210 = vpack.c.b16 %v4022, %v4021
  %v4211 = vpack.c.b16 %v4024, %v4023
  %v4212 = vpack.c.b16 %v4026, %v4025
  %v4213 = vpack.c.b16 %v4028, %v4027
  %v4214 = vpack.c.b16 %v4030, %v4029
  %v4215 = vpack.c.b16 %v4032, %v4031
  %v4216 = vpack.c.b16 %v4034, %v4033
  %v4217 = vpack.c.b16 %v4036, %v4035
  %v4218 = vpack.c.b16 %v4038, %v4037
  %v4219 = vpack.c.b16 %v4040, %v4039
  %v4220 = vpack.c.b16 %v4042, %v4041
  %v4221 = vpack.c.b16 %v4044, %v4043
  %v4222 = vpack.c.b16 %v4046, %v4045
  %v4223 = vpack.c.b16 %v4048, %v4047
  %v4224 = vpack.c.b16 %v4050, %v4049
  %v4225 = vpack.c.b16 %v4052, %v4051
  %v4226 = vpack.c.b16 %v4054, %v4053
  %v4227 = vpack.c.b16 %v4056, %v4055
  %v4228 = vpack.c.b16 %v4058, %v4057
  %v4229 = vpack.c.b16 %v4060, %v4059
  %v4230 = vpack.c.b16 %v4062, %v4061
  %v4231 = vpack.c.b16 %v4064, %v4063
  %v4232 = vpack.c.b16 %v4066, %v4065
  %v4233 = vpack.c.b16 %v4068, %v4067
  %v4234 = vpack.c.b16 %v4070, %v4069
  %v4235 = vpack.c.b16 %v4072, %v4071
  %v4236 = vpack.c.b16 %v4074, %v4073
  %v4237 = vpack.c.b16 %v4076, %v4075
  %v4238 = vpack.c.b16 %v4078, %v4077
  %v4239 = vpack.c.b16 %v4080, %v4079
  %v4240 = vpack.c.b16 %v4082, %v4081
  %v4241 = vpack.c.b16 %v4084, %v4083
  %v4242 = vpack.c.b16 %v4086, %v4085
  %v4243 = vpack.c.b16 %v4088, %v4087
  %v4244 = vpack.c.b16 %v4090, %v4089
  %v4245 = vpack.c.b16 %v4092, %v4091
  %v4246 = vpack.c.b16 %v4094, %v4093
  %v4247 = vpack.c.b16 %v4096, %v4095
  %v4248 = vpack.c.b16 %v4098, %v4097
  %v4249 = vpack.c.b16 %v4100, %v4099
  %v4250 = vpack.c.b16 %v4102, %v4101
  %v4251 = vpack.c.b16 %v4104, %v4103
  %v4252 = vpack.c.b16 %v4106, %v4105
  %v4253 = vpack.c.b16 %v4108, %v4107
  %v4254 = vpack.c.b16 %v4110, %v4109
  %v4255 = vpack.c.b16 %v4112, %v4111
  %v4256 = vpack.c.b16 %v4114, %v4113
  %v4257 = vpack.c.b16 %v4116, %v4115
  %v4258 = vpack.c.b16 %v4118, %v4117
  %v4259 = vpack.c.b16 %v4120, %v4119
  %v4260 = vpack.c.b16 %v4122, %v4121
  %v4261 = vpack.c.b16 %v4124, %v4123
  %v4262 = vpack.c.b16 %v4126, %v4125
  %v4263 = vpack.c.b16 %v4128, %v4127
  %v4264 = vpack.c.b16 %v4130, %v4129
  %v4265 = vpack.c.b16 %v4132, %v4131
  %v4266 = vpack.c.b16 %v4134, %v4133
  %v4267 = vpack.c.b16 %v4136, %v4135
  %v4268 = vpack.c.b16 %v4138, %v4137
  %v4269 = vpack.c.b16 %v4140, %v4139
  %v4270 = vpack.c.b16 %v4142, %v4141
  %4399 = vmatprep.subr.bf16.mxu0 0
  %4400 = vmatpush1.bf16.msra.mxu0 %v4150
  %4401 = vmatprep.subr.bf16.mxu0 0
  %4402 = vmatpush1.bf16.msra.mxu0 %v4149
  %4403 = vmatprep.subr.bf16.mxu0 0
  %4404 = vmatpush1.bf16.msra.mxu0 %v4148
  %4405 = vmatprep.subr.bf16.mxu0 0
  %4406 = vmatpush1.bf16.msra.mxu0 %v4147
  %4407 = vmatprep.subr.bf16.mxu0 0
  %4408 = vmatpush1.bf16.msra.mxu0 %v4146
  %4409 = vmatprep.subr.bf16.mxu0 0
  %4410 = vmatpush1.bf16.msra.mxu0 %v4145
  %4411 = vmatprep.subr.bf16.mxu0 0
  %4412 = vmatpush1.bf16.msra.mxu0 %v4144
  %4413 = vmatprep.subr.bf16.mxu0 0
  %4414 = vmatpush1.bf16.msra.mxu0 %v4143
  %4415 = vmatprep.subr.bf16.mxu0 0
  %4416 = vmatpush2.bf16.msra.mxu0 %v4158
  %4417 = vmatprep.subr.bf16.mxu0 0
  %4418 = vmatpush2.bf16.msra.mxu0 %v4157
  %4419 = vmatprep.subr.bf16.mxu0 0
  %4420 = vmatpush2.bf16.msra.mxu0 %v4156
  %4421 = vmatprep.subr.bf16.mxu0 0
  %4422 = vmatpush2.bf16.msra.mxu0 %v4155
  %4423 = vmatprep.subr.bf16.mxu0 0
  %4424 = vmatpush2.bf16.msra.mxu0 %v4154
  %4425 = vmatprep.subr.bf16.mxu0 0
  %4426 = vmatpush2.bf16.msra.mxu0 %v4153
  %4427 = vmatprep.subr.bf16.mxu0 0
  %4428 = vmatpush2.bf16.msra.mxu0 %v4152
  %4429 = vmatprep.subr.bf16.mxu0 0
  %4430 = vmatpush2.bf16.msra.mxu0 %v4151
  %4431 = vmatprep.mubr.bf16.mxu0 %v3353
  %4432 = vmatmul.mubr.bf16.gmra.mxu0 %v3352
  %v4433 = vpop.f32.mrf.mxu0
  %v4434 = vadd.f32 %v3629, %v4433
  %v4435 = vpop.f32.mrf.mxu0
  %v4436 = vpop.f32.mrf.mxu0
  %v4437 = vadd.f32 %v3629, %v4436
  %v4438 = vpop.f32.mrf.mxu0
  %4439 = vdwg.mxu0
  %4440 = vmatprep.subr.bf16.mxu0 0
  %4441 = vmatpush1.bf16.msra.mxu0 %v4166
  %4442 = vmatprep.subr.bf16.mxu0 0
  %4443 = vmatpush1.bf16.msra.mxu0 %v4165
  %4444 = vmatprep.subr.bf16.mxu0 0
  %4445 = vmatpush1.bf16.msra.mxu0 %v4164
  %4446 = vmatprep.subr.bf16.mxu0 0
  %4447 = vmatpush1.bf16.msra.mxu0 %v4163
  %4448 = vmatprep.subr.bf16.mxu0 0
  %4449 = vmatpush1.bf16.msra.mxu0 %v4162
  %4450 = vmatprep.subr.bf16.mxu0 0
  %4451 = vmatpush1.bf16.msra.mxu0 %v4161
  %4452 = vmatprep.subr.bf16.mxu0 0
  %4453 = vmatpush1.bf16.msra.mxu0 %v4160
  %4454 = vmatprep.subr.bf16.mxu0 0
  %4455 = vmatpush1.bf16.msra.mxu0 %v4159
  %4456 = vmatprep.subr.bf16.mxu0 0
  %4457 = vmatpush2.bf16.msra.mxu0 %v4174
  %4458 = vmatprep.subr.bf16.mxu0 0
  %4459 = vmatpush2.bf16.msra.mxu0 %v4173
  %4460 = vmatprep.subr.bf16.mxu0 0
  %4461 = vmatpush2.bf16.msra.mxu0 %v4172
  %4462 = vmatprep.subr.bf16.mxu0 0
  %4463 = vmatpush2.bf16.msra.mxu0 %v4171
  %4464 = vmatprep.subr.bf16.mxu0 0
  %4465 = vmatpush2.bf16.msra.mxu0 %v4170
  %4466 = vmatprep.subr.bf16.mxu0 0
  %4467 = vmatpush2.bf16.msra.mxu0 %v4169
  %4468 = vmatprep.subr.bf16.mxu0 0
  %4469 = vmatpush2.bf16.msra.mxu0 %v4168
  %4470 = vmatprep.subr.bf16.mxu0 0
  %4471 = vmatpush2.bf16.msra.mxu0 %v4167
  %4472 = vmatprep.mubr.bf16.mxu0 %v3355
  %4473 = vmatmul.mubr.bf16.gmra.mxu0 %v3354
  %v4474 = vpop.f32.mrf.mxu0
  %v4475 = vadd.f32 %v4434, %v4474
  %v4476 = vpop.f32.mrf.mxu0
  %v4477 = vpop.f32.mrf.mxu0
  %v4478 = vadd.f32 %v4437, %v4477
  %v4479 = vpop.f32.mrf.mxu0
  %4480 = vdwg.mxu0
  %4481 = vmatprep.subr.bf16.mxu0 0
  %4482 = vmatpush1.bf16.msra.mxu0 %v4182
  %4483 = vmatprep.subr.bf16.mxu0 0
  %4484 = vmatpush1.bf16.msra.mxu0 %v4181
  %4485 = vmatprep.subr.bf16.mxu0 0
  %4486 = vmatpush1.bf16.msra.mxu0 %v4180
  %4487 = vmatprep.subr.bf16.mxu0 0
  %4488 = vmatpush1.bf16.msra.mxu0 %v4179
  %4489 = vmatprep.subr.bf16.mxu0 0
  %4490 = vmatpush1.bf16.msra.mxu0 %v4178
  %4491 = vmatprep.subr.bf16.mxu0 0
  %4492 = vmatpush1.bf16.msra.mxu0 %v4177
  %4493 = vmatprep.subr.bf16.mxu0 0
  %4494 = vmatpush1.bf16.msra.mxu0 %v4176
  %4495 = vmatprep.subr.bf16.mxu0 0
  %4496 = vmatpush1.bf16.msra.mxu0 %v4175
  %4497 = vmatprep.subr.bf16.mxu0 0
  %4498 = vmatpush2.bf16.msra.mxu0 %v4190
  %4499 = vmatprep.subr.bf16.mxu0 0
  %4500 = vmatpush2.bf16.msra.mxu0 %v4189
  %4501 = vmatprep.subr.bf16.mxu0 0
  %4502 = vmatpush2.bf16.msra.mxu0 %v4188
  %4503 = vmatprep.subr.bf16.mxu0 0
  %4504 = vmatpush2.bf16.msra.mxu0 %v4187
  %4505 = vmatprep.subr.bf16.mxu0 0
  %4506 = vmatpush2.bf16.msra.mxu0 %v4186
  %4507 = vmatprep.subr.bf16.mxu0 0
  %4508 = vmatpush2.bf16.msra.mxu0 %v4185
  %4509 = vmatprep.subr.bf16.mxu0 0
  %4510 = vmatpush2.bf16.msra.mxu0 %v4184
  %4511 = vmatprep.subr.bf16.mxu0 0
  %4512 = vmatpush2.bf16.msra.mxu0 %v4183
  %4513 = vmatprep.mubr.bf16.mxu0 %v3357
  %4514 = vmatmul.mubr.bf16.gmra.mxu0 %v3356
  %v4515 = vpop.f32.mrf.mxu0
  %v4516 = vadd.f32 %v4475, %v4515
  %v4517 = vpop.f32.mrf.mxu0
  %v4518 = vpop.f32.mrf.mxu0
  %v4519 = vadd.f32 %v4478, %v4518
  %v4520 = vpop.f32.mrf.mxu0
  %4521 = vdwg.mxu0
  %4522 = vmatprep.subr.bf16.mxu0 0
  %4523 = vmatpush1.bf16.msra.mxu0 %v4198
  %4524 = vmatprep.subr.bf16.mxu0 0
  %4525 = vmatpush1.bf16.msra.mxu0 %v4197
  %4526 = vmatprep.subr.bf16.mxu0 0
  %4527 = vmatpush1.bf16.msra.mxu0 %v4196
  %4528 = vmatprep.subr.bf16.mxu0 0
  %4529 = vmatpush1.bf16.msra.mxu0 %v4195
  %4530 = vmatprep.subr.bf16.mxu0 0
  %4531 = vmatpush1.bf16.msra.mxu0 %v4194
  %4532 = vmatprep.subr.bf16.mxu0 0
  %4533 = vmatpush1.bf16.msra.mxu0 %v4193
  %4534 = vmatprep.subr.bf16.mxu0 0
  %4535 = vmatpush1.bf16.msra.mxu0 %v4192
  %4536 = vmatprep.subr.bf16.mxu0 0
  %4537 = vmatpush1.bf16.msra.mxu0 %v4191
  %4538 = vmatprep.subr.bf16.mxu0 0
  %4539 = vmatpush2.bf16.msra.mxu0 %v4206
  %4540 = vmatprep.subr.bf16.mxu0 0
  %4541 = vmatpush2.bf16.msra.mxu0 %v4205
  %4542 = vmatprep.subr.bf16.mxu0 0
  %4543 = vmatpush2.bf16.msra.mxu0 %v4204
  %4544 = vmatprep.subr.bf16.mxu0 0
  %4545 = vmatpush2.bf16.msra.mxu0 %v4203
  %4546 = vmatprep.subr.bf16.mxu0 0
  %4547 = vmatpush2.bf16.msra.mxu0 %v4202
  %4548 = vmatprep.subr.bf16.mxu0 0
  %4549 = vmatpush2.bf16.msra.mxu0 %v4201
  %4550 = vmatprep.subr.bf16.mxu0 0
  %4551 = vmatpush2.bf16.msra.mxu0 %v4200
  %4552 = vmatprep.subr.bf16.mxu0 0
  %4553 = vmatpush2.bf16.msra.mxu0 %v4199
  %4554 = vmatprep.mubr.bf16.mxu0 %v3359
  %4555 = vmatmul.mubr.bf16.gmra.mxu0 %v3358
  %v4556 = vpop.f32.mrf.mxu0
  %v4557 = vadd.f32 %v4516, %v4556
  %v4558 = vpop.f32.mrf.mxu0
  %v4559 = vpop.f32.mrf.mxu0
  %v4560 = vadd.f32 %v4519, %v4559
  %v4561 = vpop.f32.mrf.mxu0
  %4562 = vdwg.mxu0
  %4563 = vmatprep.subr.bf16.mxu0 0
  %4564 = vmatpush1.bf16.msra.mxu0 %v4214
  %4565 = vmatprep.subr.bf16.mxu0 0
  %4566 = vmatpush1.bf16.msra.mxu0 %v4213
  %4567 = vmatprep.subr.bf16.mxu0 0
  %4568 = vmatpush1.bf16.msra.mxu0 %v4212
  %4569 = vmatprep.subr.bf16.mxu0 0
  %4570 = vmatpush1.bf16.msra.mxu0 %v4211
  %4571 = vmatprep.subr.bf16.mxu0 0
  %4572 = vmatpush1.bf16.msra.mxu0 %v4210
  %4573 = vmatprep.subr.bf16.mxu0 0
  %4574 = vmatpush1.bf16.msra.mxu0 %v4209
  %4575 = vmatprep.subr.bf16.mxu0 0
  %4576 = vmatpush1.bf16.msra.mxu0 %v4208
  %4577 = vmatprep.subr.bf16.mxu0 0
  %4578 = vmatpush1.bf16.msra.mxu0 %v4207
  %4579 = vmatprep.subr.bf16.mxu0 0
  %4580 = vmatpush2.bf16.msra.mxu0 %v4222
  %4581 = vmatprep.subr.bf16.mxu0 0
  %4582 = vmatpush2.bf16.msra.mxu0 %v4221
  %4583 = vmatprep.subr.bf16.mxu0 0
  %4584 = vmatpush2.bf16.msra.mxu0 %v4220
  %4585 = vmatprep.subr.bf16.mxu0 0
  %4586 = vmatpush2.bf16.msra.mxu0 %v4219
  %4587 = vmatprep.subr.bf16.mxu0 0
  %4588 = vmatpush2.bf16.msra.mxu0 %v4218
  %4589 = vmatprep.subr.bf16.mxu0 0
  %4590 = vmatpush2.bf16.msra.mxu0 %v4217
  %4591 = vmatprep.subr.bf16.mxu0 0
  %4592 = vmatpush2.bf16.msra.mxu0 %v4216
  %4593 = vmatprep.subr.bf16.mxu0 0
  %4594 = vmatpush2.bf16.msra.mxu0 %v4215
  %4595 = vmatprep.mubr.bf16.mxu0 %v3361
  %4596 = vmatmul.mubr.bf16.gmra.mxu0 %v3360
  %v4597 = vpop.f32.mrf.mxu0
  %v4598 = vadd.f32 %v4557, %v4597
  %v4599 = vpop.f32.mrf.mxu0
  %v4600 = vpop.f32.mrf.mxu0
  %v4601 = vadd.f32 %v4560, %v4600
  %v4602 = vpop.f32.mrf.mxu0
  %4603 = vdwg.mxu0
  %4604 = vmatprep.subr.bf16.mxu0 0
  %4605 = vmatpush1.bf16.msra.mxu0 %v4230
  %4606 = vmatprep.subr.bf16.mxu0 0
  %4607 = vmatpush1.bf16.msra.mxu0 %v4229
  %4608 = vmatprep.subr.bf16.mxu0 0
  %4609 = vmatpush1.bf16.msra.mxu0 %v4228
  %4610 = vmatprep.subr.bf16.mxu0 0
  %4611 = vmatpush1.bf16.msra.mxu0 %v4227
  %4612 = vmatprep.subr.bf16.mxu0 0
  %4613 = vmatpush1.bf16.msra.mxu0 %v4226
  %4614 = vmatprep.subr.bf16.mxu0 0
  %4615 = vmatpush1.bf16.msra.mxu0 %v4225
  %4616 = vmatprep.subr.bf16.mxu0 0
  %4617 = vmatpush1.bf16.msra.mxu0 %v4224
  %4618 = vmatprep.subr.bf16.mxu0 0
  %4619 = vmatpush1.bf16.msra.mxu0 %v4223
  %4620 = vmatprep.subr.bf16.mxu0 0
  %4621 = vmatpush2.bf16.msra.mxu0 %v4238
  %4622 = vmatprep.subr.bf16.mxu0 0
  %4623 = vmatpush2.bf16.msra.mxu0 %v4237
  %4624 = vmatprep.subr.bf16.mxu0 0
  %4625 = vmatpush2.bf16.msra.mxu0 %v4236
  %4626 = vmatprep.subr.bf16.mxu0 0
  %4627 = vmatpush2.bf16.msra.mxu0 %v4235
  %4628 = vmatprep.subr.bf16.mxu0 0
  %4629 = vmatpush2.bf16.msra.mxu0 %v4234
  %4630 = vmatprep.subr.bf16.mxu0 0
  %4631 = vmatpush2.bf16.msra.mxu0 %v4233
  %4632 = vmatprep.subr.bf16.mxu0 0
  %4633 = vmatpush2.bf16.msra.mxu0 %v4232
  %4634 = vmatprep.subr.bf16.mxu0 0
  %4635 = vmatpush2.bf16.msra.mxu0 %v4231
  %4636 = vmatprep.mubr.bf16.mxu0 %v3363
  %4637 = vmatmul.mubr.bf16.gmra.mxu0 %v3362
  %v4638 = vpop.f32.mrf.mxu0
  %v4639 = vadd.f32 %v4598, %v4638
  %v4640 = vpop.f32.mrf.mxu0
  %v4641 = vpop.f32.mrf.mxu0
  %v4642 = vadd.f32 %v4601, %v4641
  %v4643 = vpop.f32.mrf.mxu0
  %4644 = vdwg.mxu0
  %4645 = vmatprep.subr.bf16.mxu0 0
  %4646 = vmatpush1.bf16.msra.mxu0 %v4246
  %4647 = vmatprep.subr.bf16.mxu0 0
  %4648 = vmatpush1.bf16.msra.mxu0 %v4245
  %4649 = vmatprep.subr.bf16.mxu0 0
  %4650 = vmatpush1.bf16.msra.mxu0 %v4244
  %4651 = vmatprep.subr.bf16.mxu0 0
  %4652 = vmatpush1.bf16.msra.mxu0 %v4243
  %4653 = vmatprep.subr.bf16.mxu0 0
  %4654 = vmatpush1.bf16.msra.mxu0 %v4242
  %4655 = vmatprep.subr.bf16.mxu0 0
  %4656 = vmatpush1.bf16.msra.mxu0 %v4241
  %4657 = vmatprep.subr.bf16.mxu0 0
  %4658 = vmatpush1.bf16.msra.mxu0 %v4240
  %4659 = vmatprep.subr.bf16.mxu0 0
  %4660 = vmatpush1.bf16.msra.mxu0 %v4239
  %4661 = vmatprep.subr.bf16.mxu0 0
  %4662 = vmatpush2.bf16.msra.mxu0 %v4254
  %4663 = vmatprep.subr.bf16.mxu0 0
  %4664 = vmatpush2.bf16.msra.mxu0 %v4253
  %4665 = vmatprep.subr.bf16.mxu0 0
  %4666 = vmatpush2.bf16.msra.mxu0 %v4252
  %4667 = vmatprep.subr.bf16.mxu0 0
  %4668 = vmatpush2.bf16.msra.mxu0 %v4251
  %4669 = vmatprep.subr.bf16.mxu0 0
  %4670 = vmatpush2.bf16.msra.mxu0 %v4250
  %4671 = vmatprep.subr.bf16.mxu0 0
  %4672 = vmatpush2.bf16.msra.mxu0 %v4249
  %4673 = vmatprep.subr.bf16.mxu0 0
  %4674 = vmatpush2.bf16.msra.mxu0 %v4248
  %4675 = vmatprep.subr.bf16.mxu0 0
  %4676 = vmatpush2.bf16.msra.mxu0 %v4247
  %4677 = vmatprep.mubr.bf16.mxu0 %v3365
  %4678 = vmatmul.mubr.bf16.gmra.mxu0 %v3364
  %v4679 = vpop.f32.mrf.mxu0
  %v4680 = vadd.f32 %v4639, %v4679
  %v4681 = vpop.f32.mrf.mxu0
  %v4682 = vpop.f32.mrf.mxu0
  %v4683 = vadd.f32 %v4642, %v4682
  %v4684 = vpop.f32.mrf.mxu0
  %4685 = vdwg.mxu0
  %4686 = vmatprep.subr.bf16.mxu0 0
  %4687 = vmatpush1.bf16.msra.mxu0 %v4262
  %4688 = vmatprep.subr.bf16.mxu0 0
  %4689 = vmatpush1.bf16.msra.mxu0 %v4261
  %4690 = vmatprep.subr.bf16.mxu0 0
  %4691 = vmatpush1.bf16.msra.mxu0 %v4260
  %4692 = vmatprep.subr.bf16.mxu0 0
  %4693 = vmatpush1.bf16.msra.mxu0 %v4259
  %4694 = vmatprep.subr.bf16.mxu0 0
  %4695 = vmatpush1.bf16.msra.mxu0 %v4258
  %4696 = vmatprep.subr.bf16.mxu0 0
  %4697 = vmatpush1.bf16.msra.mxu0 %v4257
  %4698 = vmatprep.subr.bf16.mxu0 0
  %4699 = vmatpush1.bf16.msra.mxu0 %v4256
  %4700 = vmatprep.subr.bf16.mxu0 0
  %4701 = vmatpush1.bf16.msra.mxu0 %v4255
  %4702 = vmatprep.subr.bf16.mxu0 0
  %4703 = vmatpush2.bf16.msra.mxu0 %v4270
  %4704 = vmatprep.subr.bf16.mxu0 0
  %4705 = vmatpush2.bf16.msra.mxu0 %v4269
  %4706 = vmatprep.subr.bf16.mxu0 0
  %4707 = vmatpush2.bf16.msra.mxu0 %v4268
  %4708 = vmatprep.subr.bf16.mxu0 0
  %4709 = vmatpush2.bf16.msra.mxu0 %v4267
  %4710 = vmatprep.subr.bf16.mxu0 0
  %4711 = vmatpush2.bf16.msra.mxu0 %v4266
  %4712 = vmatprep.subr.bf16.mxu0 0
  %4713 = vmatpush2.bf16.msra.mxu0 %v4265
  %4714 = vmatprep.subr.bf16.mxu0 0
  %4715 = vmatpush2.bf16.msra.mxu0 %v4264
  %4716 = vmatprep.subr.bf16.mxu0 0
  %4717 = vmatpush2.bf16.msra.mxu0 %v4263
  %4718 = vmatprep.mubr.bf16.mxu0 %v3367
  %4719 = vmatmul.mubr.bf16.gmra.mxu0 %v3366
  %v4720 = vpop.f32.mrf.mxu0
  %v4721 = vadd.f32 %v4680, %v4720
  %v4722 = vpop.f32.mrf.mxu0
  %v4723 = vpop.f32.mrf.mxu0
  %v4724 = vadd.f32 %v4683, %v4723
  %v4725 = vpop.f32.mrf.mxu0
  %4726 = vdwg.mxu0
  %v4727 = vadd.f32 %v2502, %v4721
  %v4728 = vadd.f32 %v2503, %v4724
  %v4729 = vld [vmem:[%s39] sm:$0x1]
  %v4730 = vld [vmem:[%s41] sm:$0x1]
  %v4731 = vsel %vm1836, %v4727, 0.0
  %4732 = vadd.xlane.f32.xlu0 %v4731
  %v4733 = vpop.xlane.xlu0 %4732
  %v4734 = vsel %vm1836, %v4728, 0.0
  %4735 = vadd.xlane.f32.xlu0 %v4734
  %v4736 = vpop.xlane.xlu0 %4735
  %v4737 = vmul.f32 %v4733, %v2467
  %v4738 = vmul.f32 %v4736, %v2467
  %v4739 = vsub.f32 %v4727, %v4737
  %v4740 = vsub.f32 %v4728, %v4738
  %v4741 = vmul.f32 %v4739, %v4739
  %v4742 = vmul.f32 %v4740, %v4740
  %v4743 = vsel %vm1836, %v4741, 0.0
  %4744 = vadd.xlane.f32.xlu0 %v4743
  %v4745 = vpop.xlane.xlu0 %4744
  %v4746 = vsel %vm1836, %v4742, 0.0
  %4747 = vadd.xlane.f32.xlu0 %v4746
  %v4748 = vpop.xlane.xlu0 %4747
  %v4749 = vmul.f32 %v4745, %v2467
  %v4750 = vmul.f32 %v4748, %v2467
  %v4751 = vadd.f32 %v4749, 1e-05
  %v4752 = vadd.f32 %v4750, 1e-05
  %v4753 = vrsqrt.pop %v4751
  %v4754 = vrsqrt.pop %v4752
  %v4755 = vmul.f32 %v4739, %v4753
  %v4756 = vmul.f32 %v4740, %v4754
  %v4758 = vlaneseq
  %v4759 = vshrl.u32 %v4758, 7
  %v4760 = vsub.s32 0, %v4759
  %v4761 = vrot.slane %v4729, %v4760
  %v4763 = vmul.f32 %v4755, %v4761
  %v4764 = vmul.f32 %v4756, %v4761
  %v4766 = vlaneseq
  %v4767 = vshrl.u32 %v4766, 7
  %v4768 = vsub.s32 0, %v4767
  %v4769 = vrot.slane %v4730, %v4768
  %v4771 = vadd.f32 %v4763, %v4769
  %v4772 = vadd.f32 %v4764, %v4769
  %v4773 = vpack.c.bf16 %v4772, %v4771
  %s4774 = scalar_lea.vmem %s19, 96
  %v4775 = vld [vmem:[%s4774] sm:$0xff]
  %v4776 = vld [vmem:[%s4774 + $0x8] sm:$0xf]
  %v4777 = vld [vmem:[%s4774 + $0xc] sm:$0xff]
  %v4778 = vld [vmem:[%s4774 + $0x14] sm:$0xf]
  %v4779 = vld [vmem:[%s4774 + $0x18] sm:$0xff]
  %v4780 = vld [vmem:[%s4774 + $0x20] sm:$0xf]
  %v4781 = vld [vmem:[%s4774 + $0x24] sm:$0xff]
  %v4782 = vld [vmem:[%s4774 + $0x2c] sm:$0xf]
  %v4783 = vld [vmem:[%s4774 + $0x30] sm:$0xff]
  %v4784 = vld [vmem:[%s4774 + $0x38] sm:$0xf]
  %v4785 = vld [vmem:[%s4774 + $0x3c] sm:$0xff]
  %v4786 = vld [vmem:[%s4774 + $0x44] sm:$0xf]
  %v4787 = vld [vmem:[%s4774 + $0x48] sm:$0xff]
  %v4788 = vld [vmem:[%s4774 + $0x50] sm:$0xf]
  %v4789 = vld [vmem:[%s4774 + $0x54] sm:$0xff]
  %v4790 = vld [vmem:[%s4774 + $0x5c] sm:$0xf]
  %s4791 = scalar_lea.vmem %s21, 3
  %v4792 = vld [vmem:[%s4791] sm:$0x7]
  %v4794 = vlaneseq
  %v4795 = vshrl.u32 %v4794, 7
  %v4796 = vsub.s32 0, %v4795
  %v4797 = vrot.slane %v4792, %v4796
  %v4798 = vlaneseq
  %v4799 = vshrl.u32 %v4798, 7
  %v4800 = vsub.s32 1, %v4799
  %v4801 = vrot.slane %v4792, %v4800
  %v4802 = vlaneseq
  %v4803 = vshrl.u32 %v4802, 7
  %v4804 = vsub.s32 2, %v4803
  %v4805 = vrot.slane %v4792, %v4804
  %v4825 = vunpack.c.l.b16 %v4775
  %v4826 = vunpack.c.h.b16 %v4775
  %v4827 = vunpack.c.l.b16 %v4776
  %v4828 = vunpack.c.l.b16 %v4777
  %v4829 = vunpack.c.h.b16 %v4777
  %v4830 = vunpack.c.l.b16 %v4778
  %v4831 = vunpack.c.l.b16 %v4779
  %v4832 = vunpack.c.h.b16 %v4779
  %v4833 = vunpack.c.l.b16 %v4780
  %v4834 = vunpack.c.l.b16 %v4781
  %v4835 = vunpack.c.h.b16 %v4781
  %v4836 = vunpack.c.l.b16 %v4782
  %v4837 = vunpack.c.l.b16 %v4783
  %v4838 = vunpack.c.h.b16 %v4783
  %v4839 = vunpack.c.l.b16 %v4784
  %v4840 = vunpack.c.l.b16 %v4785
  %v4841 = vunpack.c.h.b16 %v4785
  %v4842 = vunpack.c.l.b16 %v4786
  %v4843 = vunpack.c.l.b16 %v4787
  %v4844 = vunpack.c.h.b16 %v4787
  %v4845 = vunpack.c.l.b16 %v4788
  %v4846 = vunpack.c.l.b16 %v4789
  %v4847 = vunpack.c.h.b16 %v4789
  %v4848 = vunpack.c.l.b16 %v4790
  %v4849 = vpack.c.b16 %v4828, %v4825
  %v4850 = vpack.c.b16 %v4829, %v4826
  %v4851 = vpack.c.b16 %v4830, %v4827
  %v4852 = vpack.c.b16 %v4834, %v4831
  %v4853 = vpack.c.b16 %v4835, %v4832
  %v4854 = vpack.c.b16 %v4836, %v4833
  %v4855 = vpack.c.b16 %v4840, %v4837
  %v4856 = vpack.c.b16 %v4841, %v4838
  %v4857 = vpack.c.b16 %v4842, %v4839
  %v4858 = vpack.c.b16 %v4846, %v4843
  %v4859 = vpack.c.b16 %v4847, %v4844
  %v4860 = vpack.c.b16 %v4848, %v4845
  %v4874 = vsel %vm1836, %v4773, 0
  %4876 = vmatprep.subr.bf16.mxu0 0
  %4877 = vmatpush1.bf16.msra.mxu0 0
  %4878 = vmatprep.subr.bf16.mxu0 0
  %4879 = vmatpush1.bf16.msra.mxu0 0
  %4880 = vmatprep.subr.bf16.mxu0 0
  %4881 = vmatpush1.bf16.msra.mxu0 0
  %4882 = vmatprep.subr.bf16.mxu0 0
  %4883 = vmatpush1.bf16.msra.mxu0 0
  %4884 = vmatprep.subr.bf16.mxu0 %v4859
  %4885 = vmatpush1.bf16.msra.mxu0 %v4858
  %4886 = vmatprep.subr.bf16.mxu0 %v4856
  %4887 = vmatpush1.bf16.msra.mxu0 %v4855
  %4888 = vmatprep.subr.bf16.mxu0 %v4853
  %4889 = vmatpush1.bf16.msra.mxu0 %v4852
  %4890 = vmatprep.subr.bf16.mxu0 %v4850
  %4891 = vmatpush1.bf16.msra.mxu0 %v4849
  %4892 = vmatprep.subr.bf16.mxu0 0
  %4893 = vmatpush2.bf16.msra.mxu0 0
  %4894 = vmatprep.subr.bf16.mxu0 0
  %4895 = vmatpush2.bf16.msra.mxu0 0
  %4896 = vmatprep.subr.bf16.mxu0 0
  %4897 = vmatpush2.bf16.msra.mxu0 0
  %4898 = vmatprep.subr.bf16.mxu0 0
  %4899 = vmatpush2.bf16.msra.mxu0 0
  %4900 = vmatprep.subr.bf16.mxu0 0
  %4901 = vmatpush2.bf16.msra.mxu0 0
  %4902 = vmatprep.subr.bf16.mxu0 0
  %4903 = vmatpush2.bf16.msra.mxu0 0
  %4904 = vmatprep.subr.bf16.mxu0 0
  %4905 = vmatpush2.bf16.msra.mxu0 0
  %4906 = vmatprep.subr.bf16.mxu0 0
  %4907 = vmatpush2.bf16.msra.mxu0 0
  %4908 = vmatprep.mubr.bf16.mxu0 0
  %4909 = vmatmul.mubr.bf16.gmra.mxu0 %v4874
  %v4910 = vpop.f32.mrf.mxu0
  %v4911 = vadd.f32 %v4797, %v4910
  %v4912 = vpop.f32.mrf.mxu0
  %v4913 = vadd.f32 %v4801, %v4912
  %v4914 = vpop.f32.mrf.mxu0
  %v4915 = vadd.f32 %v4797, %v4914
  %v4916 = vpop.f32.mrf.mxu0
  %v4917 = vadd.f32 %v4801, %v4916
  %4918 = vdwg.mxu0
  %4919 = vmatprep.subr.bf16.mxu0 0
  %4920 = vmatpush1.bf16.msra.mxu0 0
  %4921 = vmatprep.subr.bf16.mxu0 0
  %4922 = vmatpush1.bf16.msra.mxu0 0
  %4923 = vmatprep.subr.bf16.mxu0 0
  %4924 = vmatpush1.bf16.msra.mxu0 0
  %4925 = vmatprep.subr.bf16.mxu0 0
  %4926 = vmatpush1.bf16.msra.mxu0 0
  %4927 = vmatprep.subr.bf16.mxu0 0
  %4928 = vmatpush1.bf16.msra.mxu0 %v4860
  %4929 = vmatprep.subr.bf16.mxu0 0
  %4930 = vmatpush1.bf16.msra.mxu0 %v4857
  %4931 = vmatprep.subr.bf16.mxu0 0
  %4932 = vmatpush1.bf16.msra.mxu0 %v4854
  %4933 = vmatprep.subr.bf16.mxu0 0
  %4934 = vmatpush1.bf16.msra.mxu0 %v4851
  %4935 = vmatprep.subr.bf16.mxu0 0
  %4936 = vmatpush2.bf16.msra.mxu0 0
  %4937 = vmatprep.subr.bf16.mxu0 0
  %4938 = vmatpush2.bf16.msra.mxu0 0
  %4939 = vmatprep.subr.bf16.mxu0 0
  %4940 = vmatpush2.bf16.msra.mxu0 0
  %4941 = vmatprep.subr.bf16.mxu0 0
  %4942 = vmatpush2.bf16.msra.mxu0 0
  %4943 = vmatprep.subr.bf16.mxu0 0
  %4944 = vmatpush2.bf16.msra.mxu0 0
  %4945 = vmatprep.subr.bf16.mxu0 0
  %4946 = vmatpush2.bf16.msra.mxu0 0
  %4947 = vmatprep.subr.bf16.mxu0 0
  %4948 = vmatpush2.bf16.msra.mxu0 0
  %4949 = vmatprep.subr.bf16.mxu0 0
  %4950 = vmatpush2.bf16.msra.mxu0 0
  %4951 = vmatprep.mubr.bf16.mxu0 0
  %4952 = vmatmul.mubr.bf16.gmra.mxu0 %v4874
  %v4953 = vpop.f32.mrf.mxu0
  %v4954 = vadd.f32 %v4805, %v4953
  %v4955 = vpop.f32.mrf.mxu0
  %v4956 = vpop.f32.mrf.mxu0
  %v4957 = vadd.f32 %v4805, %v4956
  %v4958 = vpop.f32.mrf.mxu0
  %4959 = vdwg.mxu0
  %v4960 = vmul.f32 %v4911, 0.25
  %v4961 = vmul.f32 %v4915, 0.25
  %4962 = vmatprep.subr.mxu0 0.0
  %4963 = vmatpush1.msra.mxu0 0.0
  %4964 = vmatprep.subr.mxu0 0.0
  %4965 = vmatpush1.msra.mxu0 0.0
  %4966 = vmatprep.subr.mxu0 0.0
  %4967 = vmatpush1.msra.mxu0 0.0
  %4968 = vmatprep.subr.mxu0 0.0
  %4969 = vmatpush1.msra.mxu0 0.0
  %4970 = vmatprep.subr.mxu0 0.0
  %4971 = vmatpush1.msra.mxu0 0.0
  %4972 = vmatprep.subr.mxu0 0.0
  %4973 = vmatpush1.msra.mxu0 0.0
  %4974 = vmatprep.subr.mxu0 0.0
  %4975 = vmatpush1.msra.mxu0 0.0
  %4976 = vmatprep.subr.mxu0 0.0
  %4977 = vmatpush1.msra.mxu0 0.0
  %4978 = vmatprep.subr.mxu0 0.0
  %4979 = vmatpush1.msra.mxu0 0.0
  %4980 = vmatprep.subr.mxu0 0.0
  %4981 = vmatpush1.msra.mxu0 0.0
  %4982 = vmatprep.subr.mxu0 0.0
  %4983 = vmatpush1.msra.mxu0 0.0
  %4984 = vmatprep.subr.mxu0 0.0
  %4985 = vmatpush1.msra.mxu0 0.0
  %4986 = vmatprep.subr.mxu0 0.0
  %4987 = vmatpush1.msra.mxu0 0.0
  %4988 = vmatprep.subr.mxu0 0.0
  %4989 = vmatpush1.msra.mxu0 0.0
  %4990 = vmatprep.subr.mxu0 %v4957
  %4991 = vmatpush1.msra.mxu0 %v4917
  %4992 = vmatprep.subr.mxu0 %v4954
  %4993 = vmatpush1.msra.mxu0 %v4913
  %4994 = vmatprep.subr.mxu0 0.0
  %4995 = vmatpush2.msra.mxu0 0.0
  %4996 = vmatprep.subr.mxu0 0.0
  %4997 = vmatpush2.msra.mxu0 0.0
  %4998 = vmatprep.subr.mxu0 0.0
  %4999 = vmatpush2.msra.mxu0 0.0
  %5000 = vmatprep.subr.mxu0 0.0
  %5001 = vmatpush2.msra.mxu0 0.0
  %5002 = vmatprep.subr.mxu0 0.0
  %5003 = vmatpush2.msra.mxu0 0.0
  %5004 = vmatprep.subr.mxu0 0.0
  %5005 = vmatpush2.msra.mxu0 0.0
  %5006 = vmatprep.subr.mxu0 0.0
  %5007 = vmatpush2.msra.mxu0 0.0
  %5008 = vmatprep.subr.mxu0 0.0
  %5009 = vmatpush2.msra.mxu0 0.0
  %5010 = vmatprep.subr.mxu0 0.0
  %5011 = vmatpush2.msra.mxu0 0.0
  %5012 = vmatprep.subr.mxu0 0.0
  %5013 = vmatpush2.msra.mxu0 0.0
  %5014 = vmatprep.subr.mxu0 0.0
  %5015 = vmatpush2.msra.mxu0 0.0
  %5016 = vmatprep.subr.mxu0 0.0
  %5017 = vmatpush2.msra.mxu0 0.0
  %5018 = vmatprep.subr.mxu0 0.0
  %5019 = vmatpush2.msra.mxu0 0.0
  %5020 = vmatprep.subr.mxu0 0.0
  %5021 = vmatpush2.msra.mxu0 0.0
  %5022 = vmatprep.subr.mxu0 0.0
  %5023 = vmatpush2.msra.mxu0 0.0
  %5024 = vmatprep.subr.mxu0 0.0
  %5025 = vmatpush2.msra.mxu0 0.0
  %5026 = vmatprep.mubr.f32.mxu0 0.0
  %5027 = vmatmul.mubr.f32.gmra.mxu0 %v1930
  %v5028 = vpop.f32.mrf.mxu0
  %v5029 = vadd.f32 0.0, %v5028
  %v5030 = vpop.f32.mrf.mxu0
  %v5031 = vadd.f32 0.0, %v5030
  %5032 = vmatprep.mubr.f32.mxu0 0.0
  %5033 = vmatmul.mubr.f32.gmra.mxu0 %v1933
  %v5034 = vpop.f32.mrf.mxu0
  %v5035 = vadd.f32 0.0, %v5034
  %v5036 = vpop.f32.mrf.mxu0
  %v5037 = vadd.f32 0.0, %v5036
  %5038 = vdwg.mxu0
  %v5039 = vmul.f32 %v4960, %v4913
  %v5040 = vmul.f32 %v4961, %v4917
  %v5042 = vsel %vm1836, %v5039, 0
  %v5045 = vsel %vm1836, %v5040, 0
  %5047 = vmatprep.subr.mxu0 0.0
  %5048 = vmatpush1.msra.mxu0 0.0
  %5049 = vmatprep.subr.mxu0 0.0
  %5050 = vmatpush1.msra.mxu0 0.0
  %5051 = vmatprep.subr.mxu0 0.0
  %5052 = vmatpush1.msra.mxu0 0.0
  %5053 = vmatprep.subr.mxu0 0.0
  %5054 = vmatpush1.msra.mxu0 0.0
  %5055 = vmatprep.subr.mxu0 0.0
  %5056 = vmatpush1.msra.mxu0 0.0
  %5057 = vmatprep.subr.mxu0 0.0
  %5058 = vmatpush1.msra.mxu0 0.0
  %5059 = vmatprep.subr.mxu0 0.0
  %5060 = vmatpush1.msra.mxu0 0.0
  %5061 = vmatprep.subr.mxu0 0.0
  %5062 = vmatpush1.msra.mxu0 0.0
  %5063 = vmatprep.subr.mxu0 0.0
  %5064 = vmatpush1.msra.mxu0 %v1736
  %5065 = vmatprep.subr.mxu0 0.0
  %5066 = vmatpush1.msra.mxu0 %v1735
  %5067 = vmatprep.subr.mxu0 0.0
  %5068 = vmatpush1.msra.mxu0 %v1734
  %5069 = vmatprep.subr.mxu0 0.0
  %5070 = vmatpush1.msra.mxu0 %v1733
  %5071 = vmatprep.subr.mxu0 0.0
  %5072 = vmatpush1.msra.mxu0 %v1732
  %5073 = vmatprep.subr.mxu0 0.0
  %5074 = vmatpush1.msra.mxu0 %v1731
  %5075 = vmatprep.subr.mxu0 0.0
  %5076 = vmatpush1.msra.mxu0 %v1730
  %5077 = vmatprep.subr.mxu0 0.0
  %5078 = vmatpush1.msra.mxu0 %v1729
  %5079 = vmatprep.subr.mxu0 0.0
  %5080 = vmatpush2.msra.mxu0 0.0
  %5081 = vmatprep.subr.mxu0 0.0
  %5082 = vmatpush2.msra.mxu0 0.0
  %5083 = vmatprep.subr.mxu0 0.0
  %5084 = vmatpush2.msra.mxu0 0.0
  %5085 = vmatprep.subr.mxu0 0.0
  %5086 = vmatpush2.msra.mxu0 0.0
  %5087 = vmatprep.subr.mxu0 0.0
  %5088 = vmatpush2.msra.mxu0 0.0
  %5089 = vmatprep.subr.mxu0 0.0
  %5090 = vmatpush2.msra.mxu0 0.0
  %5091 = vmatprep.subr.mxu0 0.0
  %5092 = vmatpush2.msra.mxu0 0.0
  %5093 = vmatprep.subr.mxu0 0.0
  %5094 = vmatpush2.msra.mxu0 0.0
  %5095 = vmatprep.subr.mxu0 0.0
  %5096 = vmatpush2.msra.mxu0 0.0
  %5097 = vmatprep.subr.mxu0 0.0
  %5098 = vmatpush2.msra.mxu0 0.0
  %5099 = vmatprep.subr.mxu0 0.0
  %5100 = vmatpush2.msra.mxu0 0.0
  %5101 = vmatprep.subr.mxu0 0.0
  %5102 = vmatpush2.msra.mxu0 0.0
  %5103 = vmatprep.subr.mxu0 0.0
  %5104 = vmatpush2.msra.mxu0 0.0
  %5105 = vmatprep.subr.mxu0 0.0
  %5106 = vmatpush2.msra.mxu0 0.0
  %5107 = vmatprep.subr.mxu0 0.0
  %5108 = vmatpush2.msra.mxu0 0.0
  %5109 = vmatprep.subr.mxu0 0.0
  %5110 = vmatpush2.msra.mxu0 0.0
  %5111 = vmatprep.mubr.f32.mxu0 0.0
  %5112 = vmatmul.mubr.f32.gmra.mxu0 %v5042
  %v5113 = vpop.f32.mrf.mxu0
  %v5114 = vadd.f32 0.0, %v5113
  %v5115 = vpop.f32.mrf.mxu0
  %5116 = vmatprep.mubr.f32.mxu0 0.0
  %5117 = vmatmul.mubr.f32.gmra.mxu0 %v5045
  %v5118 = vpop.f32.mrf.mxu0
  %v5119 = vadd.f32 0.0, %v5118
  %v5120 = vpop.f32.mrf.mxu0
  %5121 = vdwg.mxu0
  %v5122 = vmul.f32 %v4960, %v5029
  %v5123 = vmul.f32 %v4961, %v5035
  %v5125 = vsel %vm1836, %v5122, 0
  %v5128 = vsel %vm1836, %v5123, 0
  %5130 = vmatprep.subr.mxu0 0.0
  %5131 = vmatpush1.msra.mxu0 0.0
  %5132 = vmatprep.subr.mxu0 0.0
  %5133 = vmatpush1.msra.mxu0 0.0
  %5134 = vmatprep.subr.mxu0 0.0
  %5135 = vmatpush1.msra.mxu0 0.0
  %5136 = vmatprep.subr.mxu0 0.0
  %5137 = vmatpush1.msra.mxu0 0.0
  %5138 = vmatprep.subr.mxu0 0.0
  %5139 = vmatpush1.msra.mxu0 0.0
  %5140 = vmatprep.subr.mxu0 0.0
  %5141 = vmatpush1.msra.mxu0 0.0
  %5142 = vmatprep.subr.mxu0 0.0
  %5143 = vmatpush1.msra.mxu0 0.0
  %5144 = vmatprep.subr.mxu0 0.0
  %5145 = vmatpush1.msra.mxu0 0.0
  %5146 = vmatprep.subr.mxu0 0.0
  %5147 = vmatpush1.msra.mxu0 %v1736
  %5148 = vmatprep.subr.mxu0 0.0
  %5149 = vmatpush1.msra.mxu0 %v1735
  %5150 = vmatprep.subr.mxu0 0.0
  %5151 = vmatpush1.msra.mxu0 %v1734
  %5152 = vmatprep.subr.mxu0 0.0
  %5153 = vmatpush1.msra.mxu0 %v1733
  %5154 = vmatprep.subr.mxu0 0.0
  %5155 = vmatpush1.msra.mxu0 %v1732
  %5156 = vmatprep.subr.mxu0 0.0
  %5157 = vmatpush1.msra.mxu0 %v1731
  %5158 = vmatprep.subr.mxu0 0.0
  %5159 = vmatpush1.msra.mxu0 %v1730
  %5160 = vmatprep.subr.mxu0 0.0
  %5161 = vmatpush1.msra.mxu0 %v1729
  %5162 = vmatprep.subr.mxu0 0.0
  %5163 = vmatpush2.msra.mxu0 0.0
  %5164 = vmatprep.subr.mxu0 0.0
  %5165 = vmatpush2.msra.mxu0 0.0
  %5166 = vmatprep.subr.mxu0 0.0
  %5167 = vmatpush2.msra.mxu0 0.0
  %5168 = vmatprep.subr.mxu0 0.0
  %5169 = vmatpush2.msra.mxu0 0.0
  %5170 = vmatprep.subr.mxu0 0.0
  %5171 = vmatpush2.msra.mxu0 0.0
  %5172 = vmatprep.subr.mxu0 0.0
  %5173 = vmatpush2.msra.mxu0 0.0
  %5174 = vmatprep.subr.mxu0 0.0
  %5175 = vmatpush2.msra.mxu0 0.0
  %5176 = vmatprep.subr.mxu0 0.0
  %5177 = vmatpush2.msra.mxu0 0.0
  %5178 = vmatprep.subr.mxu0 0.0
  %5179 = vmatpush2.msra.mxu0 0.0
  %5180 = vmatprep.subr.mxu0 0.0
  %5181 = vmatpush2.msra.mxu0 0.0
  %5182 = vmatprep.subr.mxu0 0.0
  %5183 = vmatpush2.msra.mxu0 0.0
  %5184 = vmatprep.subr.mxu0 0.0
  %5185 = vmatpush2.msra.mxu0 0.0
  %5186 = vmatprep.subr.mxu0 0.0
  %5187 = vmatpush2.msra.mxu0 0.0
  %5188 = vmatprep.subr.mxu0 0.0
  %5189 = vmatpush2.msra.mxu0 0.0
  %5190 = vmatprep.subr.mxu0 0.0
  %5191 = vmatpush2.msra.mxu0 0.0
  %5192 = vmatprep.subr.mxu0 0.0
  %5193 = vmatpush2.msra.mxu0 0.0
  %5194 = vmatprep.mubr.f32.mxu0 0.0
  %5195 = vmatmul.mubr.f32.gmra.mxu0 %v5125
  %v5196 = vpop.f32.mrf.mxu0
  %v5197 = vadd.f32 0.0, %v5196
  %v5198 = vpop.f32.mrf.mxu0
  %5199 = vmatprep.mubr.f32.mxu0 0.0
  %5200 = vmatmul.mubr.f32.gmra.mxu0 %v5128
  %v5201 = vpop.f32.mrf.mxu0
  %v5202 = vadd.f32 0.0, %v5201
  %v5203 = vpop.f32.mrf.mxu0
  %5204 = vdwg.mxu0
  %v5205 = vmax.f32 %v5114, %v5197
  %v5206 = vmax.f32 %v5119, %v5202
  %v5207 = vsub.f32 %v5114, %v5205
  %v5208 = vsub.f32 %v5119, %v5206
  %v5209 = vmul.f32 %v5207, 1.442695
  %v5210 = vpow.pop %v5209
  %v5211 = vmul.f32 %v5208, 1.442695
  %v5212 = vpow.pop %v5211
  %v5213 = vsub.f32 %v5197, %v5205
  %v5214 = vsub.f32 %v5202, %v5206
  %v5215 = vmul.f32 %v5213, 1.442695
  %v5216 = vpow.pop %v5215
  %v5217 = vmul.f32 %v5214, 1.442695
  %v5218 = vpow.pop %v5217
  %v5219 = vadd.f32 %v5210, %v5216
  %v5220 = vadd.f32 %v5212, %v5218
  %v5221 = vrcp.pop %v5219
  %v5222 = vrcp.pop %v5220
  %v5223 = vmul.f32 %v5210, %v5221
  %v5224 = vmul.f32 %v5212, %v5222
  %v5226 = vsel %vm2198, %v5223, 0
  %v5229 = vsel %vm2198, %v5224, 0
  %5231 = vmatprep.subr.mxu0 0.0
  %5232 = vmatpush1.msra.mxu0 0.0
  %5233 = vmatprep.subr.mxu0 0.0
  %5234 = vmatpush1.msra.mxu0 0.0
  %5235 = vmatprep.subr.mxu0 0.0
  %5236 = vmatpush1.msra.mxu0 0.0
  %5237 = vmatprep.subr.mxu0 0.0
  %5238 = vmatpush1.msra.mxu0 0.0
  %5239 = vmatprep.subr.mxu0 0.0
  %5240 = vmatpush1.msra.mxu0 0.0
  %5241 = vmatprep.subr.mxu0 0.0
  %5242 = vmatpush1.msra.mxu0 0.0
  %5243 = vmatprep.subr.mxu0 0.0
  %5244 = vmatpush1.msra.mxu0 0.0
  %5245 = vmatprep.subr.mxu0 0.0
  %5246 = vmatpush1.msra.mxu0 0.0
  %5247 = vmatprep.subr.mxu0 0.0
  %5248 = vmatpush1.msra.mxu0 0.0
  %5249 = vmatprep.subr.mxu0 0.0
  %5250 = vmatpush1.msra.mxu0 0.0
  %5251 = vmatprep.subr.mxu0 0.0
  %5252 = vmatpush1.msra.mxu0 0.0
  %5253 = vmatprep.subr.mxu0 0.0
  %5254 = vmatpush1.msra.mxu0 0.0
  %5255 = vmatprep.subr.mxu0 0.0
  %5256 = vmatpush1.msra.mxu0 0.0
  %5257 = vmatprep.subr.mxu0 0.0
  %5258 = vmatpush1.msra.mxu0 0.0
  %5259 = vmatprep.subr.mxu0 0.0
  %5260 = vmatpush1.msra.mxu0 0.0
  %5261 = vmatprep.subr.mxu0 0.0
  %5262 = vmatpush1.msra.mxu0 %v2207
  %5263 = vmatprep.subr.mxu0 0.0
  %5264 = vmatpush2.msra.mxu0 0.0
  %5265 = vmatprep.subr.mxu0 0.0
  %5266 = vmatpush2.msra.mxu0 0.0
  %5267 = vmatprep.subr.mxu0 0.0
  %5268 = vmatpush2.msra.mxu0 0.0
  %5269 = vmatprep.subr.mxu0 0.0
  %5270 = vmatpush2.msra.mxu0 0.0
  %5271 = vmatprep.subr.mxu0 0.0
  %5272 = vmatpush2.msra.mxu0 0.0
  %5273 = vmatprep.subr.mxu0 0.0
  %5274 = vmatpush2.msra.mxu0 0.0
  %5275 = vmatprep.subr.mxu0 0.0
  %5276 = vmatpush2.msra.mxu0 0.0
  %5277 = vmatprep.subr.mxu0 0.0
  %5278 = vmatpush2.msra.mxu0 0.0
  %5279 = vmatprep.subr.mxu0 0.0
  %5280 = vmatpush2.msra.mxu0 0.0
  %5281 = vmatprep.subr.mxu0 0.0
  %5282 = vmatpush2.msra.mxu0 0.0
  %5283 = vmatprep.subr.mxu0 0.0
  %5284 = vmatpush2.msra.mxu0 0.0
  %5285 = vmatprep.subr.mxu0 0.0
  %5286 = vmatpush2.msra.mxu0 0.0
  %5287 = vmatprep.subr.mxu0 0.0
  %5288 = vmatpush2.msra.mxu0 0.0
  %5289 = vmatprep.subr.mxu0 0.0
  %5290 = vmatpush2.msra.mxu0 0.0
  %5291 = vmatprep.subr.mxu0 0.0
  %5292 = vmatpush2.msra.mxu0 0.0
  %5293 = vmatprep.subr.mxu0 0.0
  %5294 = vmatpush2.msra.mxu0 0.0
  %5295 = vmatprep.mubr.f32.mxu0 0.0
  %5296 = vmatmul.mubr.f32.gmra.mxu0 %v5226
  %v5297 = vpop.f32.mrf.mxu0
  %v5298 = vadd.f32 0.0, %v5297
  %v5299 = vpop.f32.mrf.mxu0
  %5300 = vmatprep.mubr.f32.mxu0 0.0
  %5301 = vmatmul.mubr.f32.gmra.mxu0 %v5229
  %v5302 = vpop.f32.mrf.mxu0
  %v5303 = vadd.f32 0.0, %v5302
  %v5304 = vpop.f32.mrf.mxu0
  %5305 = vdwg.mxu0
  %v5306 = vmul.f32 %v5298, %v4954
  %v5307 = vmul.f32 %v5303, %v4957
  %v5308 = vmul.f32 %v5216, %v5221
  %v5309 = vmul.f32 %v5218, %v5222
  %v5311 = vsel %vm2198, %v5308, 0
  %v5314 = vsel %vm2198, %v5309, 0
  %5316 = vmatprep.subr.mxu0 0.0
  %5317 = vmatpush1.msra.mxu0 0.0
  %5318 = vmatprep.subr.mxu0 0.0
  %5319 = vmatpush1.msra.mxu0 0.0
  %5320 = vmatprep.subr.mxu0 0.0
  %5321 = vmatpush1.msra.mxu0 0.0
  %5322 = vmatprep.subr.mxu0 0.0
  %5323 = vmatpush1.msra.mxu0 0.0
  %5324 = vmatprep.subr.mxu0 0.0
  %5325 = vmatpush1.msra.mxu0 0.0
  %5326 = vmatprep.subr.mxu0 0.0
  %5327 = vmatpush1.msra.mxu0 0.0
  %5328 = vmatprep.subr.mxu0 0.0
  %5329 = vmatpush1.msra.mxu0 0.0
  %5330 = vmatprep.subr.mxu0 0.0
  %5331 = vmatpush1.msra.mxu0 0.0
  %5332 = vmatprep.subr.mxu0 0.0
  %5333 = vmatpush1.msra.mxu0 0.0
  %5334 = vmatprep.subr.mxu0 0.0
  %5335 = vmatpush1.msra.mxu0 0.0
  %5336 = vmatprep.subr.mxu0 0.0
  %5337 = vmatpush1.msra.mxu0 0.0
  %5338 = vmatprep.subr.mxu0 0.0
  %5339 = vmatpush1.msra.mxu0 0.0
  %5340 = vmatprep.subr.mxu0 0.0
  %5341 = vmatpush1.msra.mxu0 0.0
  %5342 = vmatprep.subr.mxu0 0.0
  %5343 = vmatpush1.msra.mxu0 0.0
  %5344 = vmatprep.subr.mxu0 0.0
  %5345 = vmatpush1.msra.mxu0 0.0
  %5346 = vmatprep.subr.mxu0 0.0
  %5347 = vmatpush1.msra.mxu0 %v2207
  %5348 = vmatprep.subr.mxu0 0.0
  %5349 = vmatpush2.msra.mxu0 0.0
  %5350 = vmatprep.subr.mxu0 0.0
  %5351 = vmatpush2.msra.mxu0 0.0
  %5352 = vmatprep.subr.mxu0 0.0
  %5353 = vmatpush2.msra.mxu0 0.0
  %5354 = vmatprep.subr.mxu0 0.0
  %5355 = vmatpush2.msra.mxu0 0.0
  %5356 = vmatprep.subr.mxu0 0.0
  %5357 = vmatpush2.msra.mxu0 0.0
  %5358 = vmatprep.subr.mxu0 0.0
  %5359 = vmatpush2.msra.mxu0 0.0
  %5360 = vmatprep.subr.mxu0 0.0
  %5361 = vmatpush2.msra.mxu0 0.0
  %5362 = vmatprep.subr.mxu0 0.0
  %5363 = vmatpush2.msra.mxu0 0.0
  %5364 = vmatprep.subr.mxu0 0.0
  %5365 = vmatpush2.msra.mxu0 0.0
  %5366 = vmatprep.subr.mxu0 0.0
  %5367 = vmatpush2.msra.mxu0 0.0
  %5368 = vmatprep.subr.mxu0 0.0
  %5369 = vmatpush2.msra.mxu0 0.0
  %5370 = vmatprep.subr.mxu0 0.0
  %5371 = vmatpush2.msra.mxu0 0.0
  %5372 = vmatprep.subr.mxu0 0.0
  %5373 = vmatpush2.msra.mxu0 0.0
  %5374 = vmatprep.subr.mxu0 0.0
  %5375 = vmatpush2.msra.mxu0 0.0
  %5376 = vmatprep.subr.mxu0 0.0
  %5377 = vmatpush2.msra.mxu0 0.0
  %5378 = vmatprep.subr.mxu0 0.0
  %5379 = vmatpush2.msra.mxu0 0.0
  %5380 = vmatprep.mubr.f32.mxu0 0.0
  %5381 = vmatmul.mubr.f32.gmra.mxu0 %v5311
  %v5382 = vpop.f32.mrf.mxu0
  %v5383 = vadd.f32 0.0, %v5382
  %v5384 = vpop.f32.mrf.mxu0
  %5385 = vmatprep.mubr.f32.mxu0 0.0
  %5386 = vmatmul.mubr.f32.gmra.mxu0 %v5314
  %v5387 = vpop.f32.mrf.mxu0
  %v5388 = vadd.f32 0.0, %v5387
  %v5389 = vpop.f32.mrf.mxu0
  %5390 = vdwg.mxu0
  %v5391 = vmul.f32 %v5383, %v5031
  %v5392 = vmul.f32 %v5388, %v5037
  %v5393 = vadd.f32 %v5306, %v5391
  %v5394 = vadd.f32 %v5307, %v5392
  %v5395 = vpack.c.bf16 %v5394, %v5393
  %s5396 = scalar_lea.vmem %s23, 32
  %v5397 = vld [vmem:[%s5396] sm:$0xf]
  %v5398 = vld [vmem:[%s5396 + $0x4] sm:$0xf]
  %v5399 = vld [vmem:[%s5396 + $0x8] sm:$0xf]
  %v5400 = vld [vmem:[%s5396 + $0xc] sm:$0xf]
  %v5401 = vld [vmem:[%s5396 + $0x10] sm:$0xf]
  %v5402 = vld [vmem:[%s5396 + $0x14] sm:$0xf]
  %v5403 = vld [vmem:[%s5396 + $0x18] sm:$0xf]
  %v5404 = vld [vmem:[%s5396 + $0x1c] sm:$0xf]
  %s5405 = scalar_lea.vmem %s25, 1
  %v5406 = vld [vmem:[%s5405] sm:$0x1]
  %v5408 = vlaneseq
  %v5409 = vshrl.u32 %v5408, 7
  %v5410 = vsub.s32 0, %v5409
  %v5411 = vrot.slane %v5406, %v5410
  %v5421 = vunpack.c.l.b16 %v5397
  %v5422 = vunpack.c.l.b16 %v5398
  %v5423 = vunpack.c.l.b16 %v5399
  %v5424 = vunpack.c.l.b16 %v5400
  %v5425 = vunpack.c.l.b16 %v5401
  %v5426 = vunpack.c.l.b16 %v5402
  %v5427 = vunpack.c.l.b16 %v5403
  %v5428 = vunpack.c.l.b16 %v5404
  %v5429 = vpack.c.b16 %v5422, %v5421
  %v5430 = vpack.c.b16 %v5424, %v5423
  %v5431 = vpack.c.b16 %v5426, %v5425
  %v5432 = vpack.c.b16 %v5428, %v5427
  %v5438 = vsel %vm1836, %v5395, 0
  %5440 = vmatprep.subr.bf16.mxu0 0
  %5441 = vmatpush1.bf16.msra.mxu0 0
  %5442 = vmatprep.subr.bf16.mxu0 0
  %5443 = vmatpush1.bf16.msra.mxu0 0
  %5444 = vmatprep.subr.bf16.mxu0 0
  %5445 = vmatpush1.bf16.msra.mxu0 0
  %5446 = vmatprep.subr.bf16.mxu0 0
  %5447 = vmatpush1.bf16.msra.mxu0 0
  %5448 = vmatprep.subr.bf16.mxu0 0
  %5449 = vmatpush1.bf16.msra.mxu0 %v5432
  %5450 = vmatprep.subr.bf16.mxu0 0
  %5451 = vmatpush1.bf16.msra.mxu0 %v5431
  %5452 = vmatprep.subr.bf16.mxu0 0
  %5453 = vmatpush1.bf16.msra.mxu0 %v5430
  %5454 = vmatprep.subr.bf16.mxu0 0
  %5455 = vmatpush1.bf16.msra.mxu0 %v5429
  %5456 = vmatprep.subr.bf16.mxu0 0
  %5457 = vmatpush2.bf16.msra.mxu0 0
  %5458 = vmatprep.subr.bf16.mxu0 0
  %5459 = vmatpush2.bf16.msra.mxu0 0
  %5460 = vmatprep.subr.bf16.mxu0 0
  %5461 = vmatpush2.bf16.msra.mxu0 0
  %5462 = vmatprep.subr.bf16.mxu0 0
  %5463 = vmatpush2.bf16.msra.mxu0 0
  %5464 = vmatprep.subr.bf16.mxu0 0
  %5465 = vmatpush2.bf16.msra.mxu0 0
  %5466 = vmatprep.subr.bf16.mxu0 0
  %5467 = vmatpush2.bf16.msra.mxu0 0
  %5468 = vmatprep.subr.bf16.mxu0 0
  %5469 = vmatpush2.bf16.msra.mxu0 0
  %5470 = vmatprep.subr.bf16.mxu0 0
  %5471 = vmatpush2.bf16.msra.mxu0 0
  %5472 = vmatprep.mubr.bf16.mxu0 0
  %5473 = vmatmul.mubr.bf16.gmra.mxu0 %v5438
  %v5474 = vpop.f32.mrf.mxu0
  %v5475 = vadd.f32 %v5411, %v5474
  %v5476 = vpop.f32.mrf.mxu0
  %v5477 = vpop.f32.mrf.mxu0
  %v5478 = vadd.f32 %v5411, %v5477
  %v5479 = vpop.f32.mrf.mxu0
  %5480 = vdwg.mxu0
  %v5481 = vadd.f32 %v4771, %v5475
  %v5482 = vadd.f32 %v4772, %v5478
  %s5483 = scalar_lea.vmem %s27, 1
  %v5484 = vld [vmem:[%s5483] sm:$0x1]
  %s5485 = scalar_lea.vmem %s29, 1
  %v5486 = vld [vmem:[%s5485] sm:$0x1]
  %v5487 = vsel %vm1836, %v5481, 0.0
  %5488 = vadd.xlane.f32.xlu0 %v5487
  %v5489 = vpop.xlane.xlu0 %5488
  %v5490 = vsel %vm1836, %v5482, 0.0
  %5491 = vadd.xlane.f32.xlu0 %v5490
  %v5492 = vpop.xlane.xlu0 %5491
  %v5493 = vmul.f32 %v5489, %v2467
  %v5494 = vmul.f32 %v5492, %v2467
  %v5495 = vsub.f32 %v5481, %v5493
  %v5496 = vsub.f32 %v5482, %v5494
  %v5497 = vmul.f32 %v5495, %v5495
  %v5498 = vmul.f32 %v5496, %v5496
  %v5499 = vsel %vm1836, %v5497, 0.0
  %5500 = vadd.xlane.f32.xlu0 %v5499
  %v5501 = vpop.xlane.xlu0 %5500
  %v5502 = vsel %vm1836, %v5498, 0.0
  %5503 = vadd.xlane.f32.xlu0 %v5502
  %v5504 = vpop.xlane.xlu0 %5503
  %v5505 = vmul.f32 %v5501, %v2467
  %v5506 = vmul.f32 %v5504, %v2467
  %v5507 = vadd.f32 %v5505, 1e-05
  %v5508 = vadd.f32 %v5506, 1e-05
  %v5509 = vrsqrt.pop %v5507
  %v5510 = vrsqrt.pop %v5508
  %v5511 = vmul.f32 %v5495, %v5509
  %v5512 = vmul.f32 %v5496, %v5510
  %v5514 = vlaneseq
  %v5515 = vshrl.u32 %v5514, 7
  %v5516 = vsub.s32 0, %v5515
  %v5517 = vrot.slane %v5484, %v5516
  %v5519 = vmul.f32 %v5511, %v5517
  %v5520 = vmul.f32 %v5512, %v5517
  %v5522 = vlaneseq
  %v5523 = vshrl.u32 %v5522, 7
  %v5524 = vsub.s32 0, %v5523
  %v5525 = vrot.slane %v5486, %v5524
  %v5527 = vadd.f32 %v5519, %v5525
  %v5528 = vadd.f32 %v5520, %v5525
  %v5529 = vpack.c.bf16 %v5528, %v5527
  %s5530 = scalar_lea.vmem %s31, 512
  %v5531 = vld [vmem:[%s5530] sm:$0xff]
  %v5532 = vld [vmem:[%s5530 + $0x8] sm:$0xff]
  %v5533 = vld [vmem:[%s5530 + $0x10] sm:$0xff]
  %v5534 = vld [vmem:[%s5530 + $0x18] sm:$0xff]
  %v5535 = vld [vmem:[%s5530 + $0x20] sm:$0xff]
  %v5536 = vld [vmem:[%s5530 + $0x28] sm:$0xff]
  %v5537 = vld [vmem:[%s5530 + $0x30] sm:$0xff]
  %v5538 = vld [vmem:[%s5530 + $0x38] sm:$0xff]
  %v5539 = vld [vmem:[%s5530 + $0x40] sm:$0xff]
  %v5540 = vld [vmem:[%s5530 + $0x48] sm:$0xff]
  %v5541 = vld [vmem:[%s5530 + $0x50] sm:$0xff]
  %v5542 = vld [vmem:[%s5530 + $0x58] sm:$0xff]
  %v5543 = vld [vmem:[%s5530 + $0x60] sm:$0xff]
  %v5544 = vld [vmem:[%s5530 + $0x68] sm:$0xff]
  %v5545 = vld [vmem:[%s5530 + $0x70] sm:$0xff]
  %v5546 = vld [vmem:[%s5530 + $0x78] sm:$0xff]
  %v5547 = vld [vmem:[%s5530 + $0x80] sm:$0xff]
  %v5548 = vld [vmem:[%s5530 + $0x88] sm:$0xff]
  %v5549 = vld [vmem:[%s5530 + $0x90] sm:$0xff]
  %v5550 = vld [vmem:[%s5530 + $0x98] sm:$0xff]
  %v5551 = vld [vmem:[%s5530 + $0xa0] sm:$0xff]
  %v5552 = vld [vmem:[%s5530 + $0xa8] sm:$0xff]
  %v5553 = vld [vmem:[%s5530 + $0xb0] sm:$0xff]
  %v5554 = vld [vmem:[%s5530 + $0xb8] sm:$0xff]
  %v5555 = vld [vmem:[%s5530 + $0xc0] sm:$0xff]
  %v5556 = vld [vmem:[%s5530 + $0xc8] sm:$0xff]
  %v5557 = vld [vmem:[%s5530 + $0xd0] sm:$0xff]
  %v5558 = vld [vmem:[%s5530 + $0xd8] sm:$0xff]
  %v5559 = vld [vmem:[%s5530 + $0xe0] sm:$0xff]
  %v5560 = vld [vmem:[%s5530 + $0xe8] sm:$0xff]
  %v5561 = vld [vmem:[%s5530 + $0xf0] sm:$0xff]
  %v5562 = vld [vmem:[%s5530 + $0xf8] sm:$0xff]
  %v5563 = vld [vmem:[%s5530 + $0x100] sm:$0xff]
  %v5564 = vld [vmem:[%s5530 + $0x108] sm:$0xff]
  %v5565 = vld [vmem:[%s5530 + $0x110] sm:$0xff]
  %v5566 = vld [vmem:[%s5530 + $0x118] sm:$0xff]
  %v5567 = vld [vmem:[%s5530 + $0x120] sm:$0xff]
  %v5568 = vld [vmem:[%s5530 + $0x128] sm:$0xff]
  %v5569 = vld [vmem:[%s5530 + $0x130] sm:$0xff]
  %v5570 = vld [vmem:[%s5530 + $0x138] sm:$0xff]
  %v5571 = vld [vmem:[%s5530 + $0x140] sm:$0xff]
  %v5572 = vld [vmem:[%s5530 + $0x148] sm:$0xff]
  %v5573 = vld [vmem:[%s5530 + $0x150] sm:$0xff]
  %v5574 = vld [vmem:[%s5530 + $0x158] sm:$0xff]
  %v5575 = vld [vmem:[%s5530 + $0x160] sm:$0xff]
  %v5576 = vld [vmem:[%s5530 + $0x168] sm:$0xff]
  %v5577 = vld [vmem:[%s5530 + $0x170] sm:$0xff]
  %v5578 = vld [vmem:[%s5530 + $0x178] sm:$0xff]
  %v5579 = vld [vmem:[%s5530 + $0x180] sm:$0xff]
  %v5580 = vld [vmem:[%s5530 + $0x188] sm:$0xff]
  %v5581 = vld [vmem:[%s5530 + $0x190] sm:$0xff]
  %v5582 = vld [vmem:[%s5530 + $0x198] sm:$0xff]
  %v5583 = vld [vmem:[%s5530 + $0x1a0] sm:$0xff]
  %v5584 = vld [vmem:[%s5530 + $0x1a8] sm:$0xff]
  %v5585 = vld [vmem:[%s5530 + $0x1b0] sm:$0xff]
  %v5586 = vld [vmem:[%s5530 + $0x1b8] sm:$0xff]
  %v5587 = vld [vmem:[%s5530 + $0x1c0] sm:$0xff]
  %v5588 = vld [vmem:[%s5530 + $0x1c8] sm:$0xff]
  %v5589 = vld [vmem:[%s5530 + $0x1d0] sm:$0xff]
  %v5590 = vld [vmem:[%s5530 + $0x1d8] sm:$0xff]
  %v5591 = vld [vmem:[%s5530 + $0x1e0] sm:$0xff]
  %v5592 = vld [vmem:[%s5530 + $0x1e8] sm:$0xff]
  %v5593 = vld [vmem:[%s5530 + $0x1f0] sm:$0xff]
  %v5594 = vld [vmem:[%s5530 + $0x1f8] sm:$0xff]
  %s5595 = scalar_lea.vmem %s33, 16
  %v5596 = vld [vmem:[%s5595] sm:$0xff]
  %v5597 = vld [vmem:[%s5595 + $0x8] sm:$0xff]
  %v5600 = vlaneseq
  %v5601 = vshrl.u32 %v5600, 7
  %v5602 = vsub.s32 0, %v5601
  %v5603 = vrot.slane %v5596, %v5602
  %v5604 = vlaneseq
  %v5605 = vshrl.u32 %v5604, 7
  %v5606 = vsub.s32 1, %v5605
  %v5607 = vrot.slane %v5596, %v5606
  %v5608 = vlaneseq
  %v5609 = vshrl.u32 %v5608, 7
  %v5610 = vsub.s32 2, %v5609
  %v5611 = vrot.slane %v5596, %v5610
  %v5612 = vlaneseq
  %v5613 = vshrl.u32 %v5612, 7
  %v5614 = vsub.s32 3, %v5613
  %v5615 = vrot.slane %v5596, %v5614
  %v5616 = vlaneseq
  %v5617 = vshrl.u32 %v5616, 7
  %v5618 = vsub.s32 4, %v5617
  %v5619 = vrot.slane %v5596, %v5618
  %v5620 = vlaneseq
  %v5621 = vshrl.u32 %v5620, 7
  %v5622 = vsub.s32 5, %v5621
  %v5623 = vrot.slane %v5596, %v5622
  %v5624 = vlaneseq
  %v5625 = vshrl.u32 %v5624, 7
  %v5626 = vsub.s32 6, %v5625
  %v5627 = vrot.slane %v5596, %v5626
  %v5628 = vlaneseq
  %v5629 = vshrl.u32 %v5628, 7
  %v5630 = vsub.s32 7, %v5629
  %v5631 = vrot.slane %v5596, %v5630
  %v5632 = vlaneseq
  %v5633 = vshrl.u32 %v5632, 7
  %v5634 = vsub.s32 0, %v5633
  %v5635 = vrot.slane %v5597, %v5634
  %v5636 = vlaneseq
  %v5637 = vshrl.u32 %v5636, 7
  %v5638 = vsub.s32 1, %v5637
  %v5639 = vrot.slane %v5597, %v5638
  %v5640 = vlaneseq
  %v5641 = vshrl.u32 %v5640, 7
  %v5642 = vsub.s32 2, %v5641
  %v5643 = vrot.slane %v5597, %v5642
  %v5644 = vlaneseq
  %v5645 = vshrl.u32 %v5644, 7
  %v5646 = vsub.s32 3, %v5645
  %v5647 = vrot.slane %v5597, %v5646
  %v5648 = vlaneseq
  %v5649 = vshrl.u32 %v5648, 7
  %v5650 = vsub.s32 4, %v5649
  %v5651 = vrot.slane %v5597, %v5650
  %v5652 = vlaneseq
  %v5653 = vshrl.u32 %v5652, 7
  %v5654 = vsub.s32 5, %v5653
  %v5655 = vrot.slane %v5597, %v5654
  %v5656 = vlaneseq
  %v5657 = vshrl.u32 %v5656, 7
  %v5658 = vsub.s32 6, %v5657
  %v5659 = vrot.slane %v5597, %v5658
  %v5660 = vlaneseq
  %v5661 = vshrl.u32 %v5660, 7
  %v5662 = vsub.s32 7, %v5661
  %v5663 = vrot.slane %v5597, %v5662
  %v5744 = vunpack.c.l.b16 %v5531
  %v5745 = vunpack.c.h.b16 %v5531
  %v5746 = vunpack.c.l.b16 %v5532
  %v5747 = vunpack.c.h.b16 %v5532
  %v5748 = vunpack.c.l.b16 %v5533
  %v5749 = vunpack.c.h.b16 %v5533
  %v5750 = vunpack.c.l.b16 %v5534
  %v5751 = vunpack.c.h.b16 %v5534
  %v5752 = vunpack.c.l.b16 %v5535
  %v5753 = vunpack.c.h.b16 %v5535
  %v5754 = vunpack.c.l.b16 %v5536
  %v5755 = vunpack.c.h.b16 %v5536
  %v5756 = vunpack.c.l.b16 %v5537
  %v5757 = vunpack.c.h.b16 %v5537
  %v5758 = vunpack.c.l.b16 %v5538
  %v5759 = vunpack.c.h.b16 %v5538
  %v5760 = vunpack.c.l.b16 %v5539
  %v5761 = vunpack.c.h.b16 %v5539
  %v5762 = vunpack.c.l.b16 %v5540
  %v5763 = vunpack.c.h.b16 %v5540
  %v5764 = vunpack.c.l.b16 %v5541
  %v5765 = vunpack.c.h.b16 %v5541
  %v5766 = vunpack.c.l.b16 %v5542
  %v5767 = vunpack.c.h.b16 %v5542
  %v5768 = vunpack.c.l.b16 %v5543
  %v5769 = vunpack.c.h.b16 %v5543
  %v5770 = vunpack.c.l.b16 %v5544
  %v5771 = vunpack.c.h.b16 %v5544
  %v5772 = vunpack.c.l.b16 %v5545
  %v5773 = vunpack.c.h.b16 %v5545
  %v5774 = vunpack.c.l.b16 %v5546
  %v5775 = vunpack.c.h.b16 %v5546
  %v5776 = vunpack.c.l.b16 %v5547
  %v5777 = vunpack.c.h.b16 %v5547
  %v5778 = vunpack.c.l.b16 %v5548
  %v5779 = vunpack.c.h.b16 %v5548
  %v5780 = vunpack.c.l.b16 %v5549
  %v5781 = vunpack.c.h.b16 %v5549
  %v5782 = vunpack.c.l.b16 %v5550
  %v5783 = vunpack.c.h.b16 %v5550
  %v5784 = vunpack.c.l.b16 %v5551
  %v5785 = vunpack.c.h.b16 %v5551
  %v5786 = vunpack.c.l.b16 %v5552
  %v5787 = vunpack.c.h.b16 %v5552
  %v5788 = vunpack.c.l.b16 %v5553
  %v5789 = vunpack.c.h.b16 %v5553
  %v5790 = vunpack.c.l.b16 %v5554
  %v5791 = vunpack.c.h.b16 %v5554
  %v5792 = vunpack.c.l.b16 %v5555
  %v5793 = vunpack.c.h.b16 %v5555
  %v5794 = vunpack.c.l.b16 %v5556
  %v5795 = vunpack.c.h.b16 %v5556
  %v5796 = vunpack.c.l.b16 %v5557
  %v5797 = vunpack.c.h.b16 %v5557
  %v5798 = vunpack.c.l.b16 %v5558
  %v5799 = vunpack.c.h.b16 %v5558
  %v5800 = vunpack.c.l.b16 %v5559
  %v5801 = vunpack.c.h.b16 %v5559
  %v5802 = vunpack.c.l.b16 %v5560
  %v5803 = vunpack.c.h.b16 %v5560
  %v5804 = vunpack.c.l.b16 %v5561
  %v5805 = vunpack.c.h.b16 %v5561
  %v5806 = vunpack.c.l.b16 %v5562
  %v5807 = vunpack.c.h.b16 %v5562
  %v5808 = vunpack.c.l.b16 %v5563
  %v5809 = vunpack.c.h.b16 %v5563
  %v5810 = vunpack.c.l.b16 %v5564
  %v5811 = vunpack.c.h.b16 %v5564
  %v5812 = vunpack.c.l.b16 %v5565
  %v5813 = vunpack.c.h.b16 %v5565
  %v5814 = vunpack.c.l.b16 %v5566
  %v5815 = vunpack.c.h.b16 %v5566
  %v5816 = vunpack.c.l.b16 %v5567
  %v5817 = vunpack.c.h.b16 %v5567
  %v5818 = vunpack.c.l.b16 %v5568
  %v5819 = vunpack.c.h.b16 %v5568
  %v5820 = vunpack.c.l.b16 %v5569
  %v5821 = vunpack.c.h.b16 %v5569
  %v5822 = vunpack.c.l.b16 %v5570
  %v5823 = vunpack.c.h.b16 %v5570
  %v5824 = vunpack.c.l.b16 %v5571
  %v5825 = vunpack.c.h.b16 %v5571
  %v5826 = vunpack.c.l.b16 %v5572
  %v5827 = vunpack.c.h.b16 %v5572
  %v5828 = vunpack.c.l.b16 %v5573
  %v5829 = vunpack.c.h.b16 %v5573
  %v5830 = vunpack.c.l.b16 %v5574
  %v5831 = vunpack.c.h.b16 %v5574
  %v5832 = vunpack.c.l.b16 %v5575
  %v5833 = vunpack.c.h.b16 %v5575
  %v5834 = vunpack.c.l.b16 %v5576
  %v5835 = vunpack.c.h.b16 %v5576
  %v5836 = vunpack.c.l.b16 %v5577
  %v5837 = vunpack.c.h.b16 %v5577
  %v5838 = vunpack.c.l.b16 %v5578
  %v5839 = vunpack.c.h.b16 %v5578
  %v5840 = vunpack.c.l.b16 %v5579
  %v5841 = vunpack.c.h.b16 %v5579
  %v5842 = vunpack.c.l.b16 %v5580
  %v5843 = vunpack.c.h.b16 %v5580
  %v5844 = vunpack.c.l.b16 %v5581
  %v5845 = vunpack.c.h.b16 %v5581
  %v5846 = vunpack.c.l.b16 %v5582
  %v5847 = vunpack.c.h.b16 %v5582
  %v5848 = vunpack.c.l.b16 %v5583
  %v5849 = vunpack.c.h.b16 %v5583
  %v5850 = vunpack.c.l.b16 %v5584
  %v5851 = vunpack.c.h.b16 %v5584
  %v5852 = vunpack.c.l.b16 %v5585
  %v5853 = vunpack.c.h.b16 %v5585
  %v5854 = vunpack.c.l.b16 %v5586
  %v5855 = vunpack.c.h.b16 %v5586
  %v5856 = vunpack.c.l.b16 %v5587
  %v5857 = vunpack.c.h.b16 %v5587
  %v5858 = vunpack.c.l.b16 %v5588
  %v5859 = vunpack.c.h.b16 %v5588
  %v5860 = vunpack.c.l.b16 %v5589
  %v5861 = vunpack.c.h.b16 %v5589
  %v5862 = vunpack.c.l.b16 %v5590
  %v5863 = vunpack.c.h.b16 %v5590
  %v5864 = vunpack.c.l.b16 %v5591
  %v5865 = vunpack.c.h.b16 %v5591
  %v5866 = vunpack.c.l.b16 %v5592
  %v5867 = vunpack.c.h.b16 %v5592
  %v5868 = vunpack.c.l.b16 %v5593
  %v5869 = vunpack.c.h.b16 %v5593
  %v5870 = vunpack.c.l.b16 %v5594
  %v5871 = vunpack.c.h.b16 %v5594
  %v5872 = vpack.c.b16 %v5760, %v5744
  %v5873 = vpack.c.b16 %v5761, %v5745
  %v5874 = vpack.c.b16 %v5762, %v5746
  %v5875 = vpack.c.b16 %v5763, %v5747
  %v5876 = vpack.c.b16 %v5764, %v5748
  %v5877 = vpack.c.b16 %v5765, %v5749
  %v5878 = vpack.c.b16 %v5766, %v5750
  %v5879 = vpack.c.b16 %v5767, %v5751
  %v5880 = vpack.c.b16 %v5768, %v5752
  %v5881 = vpack.c.b16 %v5769, %v5753
  %v5882 = vpack.c.b16 %v5770, %v5754
  %v5883 = vpack.c.b16 %v5771, %v5755
  %v5884 = vpack.c.b16 %v5772, %v5756
  %v5885 = vpack.c.b16 %v5773, %v5757
  %v5886 = vpack.c.b16 %v5774, %v5758
  %v5887 = vpack.c.b16 %v5775, %v5759
  %v5888 = vpack.c.b16 %v5792, %v5776
  %v5889 = vpack.c.b16 %v5793, %v5777
  %v5890 = vpack.c.b16 %v5794, %v5778
  %v5891 = vpack.c.b16 %v5795, %v5779
  %v5892 = vpack.c.b16 %v5796, %v5780
  %v5893 = vpack.c.b16 %v5797, %v5781
  %v5894 = vpack.c.b16 %v5798, %v5782
  %v5895 = vpack.c.b16 %v5799, %v5783
  %v5896 = vpack.c.b16 %v5800, %v5784
  %v5897 = vpack.c.b16 %v5801, %v5785
  %v5898 = vpack.c.b16 %v5802, %v5786
  %v5899 = vpack.c.b16 %v5803, %v5787
  %v5900 = vpack.c.b16 %v5804, %v5788
  %v5901 = vpack.c.b16 %v5805, %v5789
  %v5902 = vpack.c.b16 %v5806, %v5790
  %v5903 = vpack.c.b16 %v5807, %v5791
  %v5904 = vpack.c.b16 %v5824, %v5808
  %v5905 = vpack.c.b16 %v5825, %v5809
  %v5906 = vpack.c.b16 %v5826, %v5810
  %v5907 = vpack.c.b16 %v5827, %v5811
  %v5908 = vpack.c.b16 %v5828, %v5812
  %v5909 = vpack.c.b16 %v5829, %v5813
  %v5910 = vpack.c.b16 %v5830, %v5814
  %v5911 = vpack.c.b16 %v5831, %v5815
  %v5912 = vpack.c.b16 %v5832, %v5816
  %v5913 = vpack.c.b16 %v5833, %v5817
  %v5914 = vpack.c.b16 %v5834, %v5818
  %v5915 = vpack.c.b16 %v5835, %v5819
  %v5916 = vpack.c.b16 %v5836, %v5820
  %v5917 = vpack.c.b16 %v5837, %v5821
  %v5918 = vpack.c.b16 %v5838, %v5822
  %v5919 = vpack.c.b16 %v5839, %v5823
  %v5920 = vpack.c.b16 %v5856, %v5840
  %v5921 = vpack.c.b16 %v5857, %v5841
  %v5922 = vpack.c.b16 %v5858, %v5842
  %v5923 = vpack.c.b16 %v5859, %v5843
  %v5924 = vpack.c.b16 %v5860, %v5844
  %v5925 = vpack.c.b16 %v5861, %v5845
  %v5926 = vpack.c.b16 %v5862, %v5846
  %v5927 = vpack.c.b16 %v5863, %v5847
  %v5928 = vpack.c.b16 %v5864, %v5848
  %v5929 = vpack.c.b16 %v5865, %v5849
  %v5930 = vpack.c.b16 %v5866, %v5850
  %v5931 = vpack.c.b16 %v5867, %v5851
  %v5932 = vpack.c.b16 %v5868, %v5852
  %v5933 = vpack.c.b16 %v5869, %v5853
  %v5934 = vpack.c.b16 %v5870, %v5854
  %v5935 = vpack.c.b16 %v5871, %v5855
  %v6001 = vsel %vm1836, %v5529, 0
  %6003 = vmatprep.subr.bf16.mxu0 0
  %6004 = vmatpush1.bf16.msra.mxu0 0
  %6005 = vmatprep.subr.bf16.mxu0 0
  %6006 = vmatpush1.bf16.msra.mxu0 0
  %6007 = vmatprep.subr.bf16.mxu0 0
  %6008 = vmatpush1.bf16.msra.mxu0 0
  %6009 = vmatprep.subr.bf16.mxu0 0
  %6010 = vmatpush1.bf16.msra.mxu0 0
  %6011 = vmatprep.subr.bf16.mxu0 %v5921
  %6012 = vmatpush1.bf16.msra.mxu0 %v5920
  %6013 = vmatprep.subr.bf16.mxu0 %v5905
  %6014 = vmatpush1.bf16.msra.mxu0 %v5904
  %6015 = vmatprep.subr.bf16.mxu0 %v5889
  %6016 = vmatpush1.bf16.msra.mxu0 %v5888
  %6017 = vmatprep.subr.bf16.mxu0 %v5873
  %6018 = vmatpush1.bf16.msra.mxu0 %v5872
  %6019 = vmatprep.subr.bf16.mxu0 0
  %6020 = vmatpush2.bf16.msra.mxu0 0
  %6021 = vmatprep.subr.bf16.mxu0 0
  %6022 = vmatpush2.bf16.msra.mxu0 0
  %6023 = vmatprep.subr.bf16.mxu0 0
  %6024 = vmatpush2.bf16.msra.mxu0 0
  %6025 = vmatprep.subr.bf16.mxu0 0
  %6026 = vmatpush2.bf16.msra.mxu0 0
  %6027 = vmatprep.subr.bf16.mxu0 0
  %6028 = vmatpush2.bf16.msra.mxu0 0
  %6029 = vmatprep.subr.bf16.mxu0 0
  %6030 = vmatpush2.bf16.msra.mxu0 0
  %6031 = vmatprep.subr.bf16.mxu0 0
  %6032 = vmatpush2.bf16.msra.mxu0 0
  %6033 = vmatprep.subr.bf16.mxu0 0
  %6034 = vmatpush2.bf16.msra.mxu0 0
  %6035 = vmatprep.mubr.bf16.mxu0 0
  %6036 = vmatmul.mubr.bf16.gmra.mxu0 %v6001
  %v6037 = vpop.f32.mrf.mxu0
  %v6038 = vadd.f32 %v5603, %v6037
  %v6039 = vpop.f32.mrf.mxu0
  %v6040 = vadd.f32 %v5607, %v6039
  %v6041 = vpop.f32.mrf.mxu0
  %v6042 = vadd.f32 %v5603, %v6041
  %v6043 = vpop.f32.mrf.mxu0
  %v6044 = vadd.f32 %v5607, %v6043
  %6045 = vdwg.mxu0
  %6046 = vmatprep.subr.bf16.mxu0 0
  %6047 = vmatpush1.bf16.msra.mxu0 0
  %6048 = vmatprep.subr.bf16.mxu0 0
  %6049 = vmatpush1.bf16.msra.mxu0 0
  %6050 = vmatprep.subr.bf16.mxu0 0
  %6051 = vmatpush1.bf16.msra.mxu0 0
  %6052 = vmatprep.subr.bf16.mxu0 0
  %6053 = vmatpush1.bf16.msra.mxu0 0
  %6054 = vmatprep.subr.bf16.mxu0 %v5923
  %6055 = vmatpush1.bf16.msra.mxu0 %v5922
  %6056 = vmatprep.subr.bf16.mxu0 %v5907
  %6057 = vmatpush1.bf16.msra.mxu0 %v5906
  %6058 = vmatprep.subr.bf16.mxu0 %v5891
  %6059 = vmatpush1.bf16.msra.mxu0 %v5890
  %6060 = vmatprep.subr.bf16.mxu0 %v5875
  %6061 = vmatpush1.bf16.msra.mxu0 %v5874
  %6062 = vmatprep.subr.bf16.mxu0 0
  %6063 = vmatpush2.bf16.msra.mxu0 0
  %6064 = vmatprep.subr.bf16.mxu0 0
  %6065 = vmatpush2.bf16.msra.mxu0 0
  %6066 = vmatprep.subr.bf16.mxu0 0
  %6067 = vmatpush2.bf16.msra.mxu0 0
  %6068 = vmatprep.subr.bf16.mxu0 0
  %6069 = vmatpush2.bf16.msra.mxu0 0
  %6070 = vmatprep.subr.bf16.mxu0 0
  %6071 = vmatpush2.bf16.msra.mxu0 0
  %6072 = vmatprep.subr.bf16.mxu0 0
  %6073 = vmatpush2.bf16.msra.mxu0 0
  %6074 = vmatprep.subr.bf16.mxu0 0
  %6075 = vmatpush2.bf16.msra.mxu0 0
  %6076 = vmatprep.subr.bf16.mxu0 0
  %6077 = vmatpush2.bf16.msra.mxu0 0
  %6078 = vmatprep.mubr.bf16.mxu0 0
  %6079 = vmatmul.mubr.bf16.gmra.mxu0 %v6001
  %v6080 = vpop.f32.mrf.mxu0
  %v6081 = vadd.f32 %v5611, %v6080
  %v6082 = vpop.f32.mrf.mxu0
  %v6083 = vadd.f32 %v5615, %v6082
  %v6084 = vpop.f32.mrf.mxu0
  %v6085 = vadd.f32 %v5611, %v6084
  %v6086 = vpop.f32.mrf.mxu0
  %v6087 = vadd.f32 %v5615, %v6086
  %6088 = vdwg.mxu0
  %6089 = vmatprep.subr.bf16.mxu0 0
  %6090 = vmatpush1.bf16.msra.mxu0 0
  %6091 = vmatprep.subr.bf16.mxu0 0
  %6092 = vmatpush1.bf16.msra.mxu0 0
  %6093 = vmatprep.subr.bf16.mxu0 0
  %6094 = vmatpush1.bf16.msra.mxu0 0
  %6095 = vmatprep.subr.bf16.mxu0 0
  %6096 = vmatpush1.bf16.msra.mxu0 0
  %6097 = vmatprep.subr.bf16.mxu0 %v5925
  %6098 = vmatpush1.bf16.msra.mxu0 %v5924
  %6099 = vmatprep.subr.bf16.mxu0 %v5909
  %6100 = vmatpush1.bf16.msra.mxu0 %v5908
  %6101 = vmatprep.subr.bf16.mxu0 %v5893
  %6102 = vmatpush1.bf16.msra.mxu0 %v5892
  %6103 = vmatprep.subr.bf16.mxu0 %v5877
  %6104 = vmatpush1.bf16.msra.mxu0 %v5876
  %6105 = vmatprep.subr.bf16.mxu0 0
  %6106 = vmatpush2.bf16.msra.mxu0 0
  %6107 = vmatprep.subr.bf16.mxu0 0
  %6108 = vmatpush2.bf16.msra.mxu0 0
  %6109 = vmatprep.subr.bf16.mxu0 0
  %6110 = vmatpush2.bf16.msra.mxu0 0
  %6111 = vmatprep.subr.bf16.mxu0 0
  %6112 = vmatpush2.bf16.msra.mxu0 0
  %6113 = vmatprep.subr.bf16.mxu0 0
  %6114 = vmatpush2.bf16.msra.mxu0 0
  %6115 = vmatprep.subr.bf16.mxu0 0
  %6116 = vmatpush2.bf16.msra.mxu0 0
  %6117 = vmatprep.subr.bf16.mxu0 0
  %6118 = vmatpush2.bf16.msra.mxu0 0
  %6119 = vmatprep.subr.bf16.mxu0 0
  %6120 = vmatpush2.bf16.msra.mxu0 0
  %6121 = vmatprep.mubr.bf16.mxu0 0
  %6122 = vmatmul.mubr.bf16.gmra.mxu0 %v6001
  %v6123 = vpop.f32.mrf.mxu0
  %v6124 = vadd.f32 %v5619, %v6123
  %v6125 = vpop.f32.mrf.mxu0
  %v6126 = vadd.f32 %v5623, %v6125
  %v6127 = vpop.f32.mrf.mxu0
  %v6128 = vadd.f32 %v5619, %v6127
  %v6129 = vpop.f32.mrf.mxu0
  %v6130 = vadd.f32 %v5623, %v6129
  %6131 = vdwg.mxu0
  %6132 = vmatprep.subr.bf16.mxu0 0
  %6133 = vmatpush1.bf16.msra.mxu0 0
  %6134 = vmatprep.subr.bf16.mxu0 0
  %6135 = vmatpush1.bf16.msra.mxu0 0
  %6136 = vmatprep.subr.bf16.mxu0 0
  %6137 = vmatpush1.bf16.msra.mxu0 0
  %6138 = vmatprep.subr.bf16.mxu0 0
  %6139 = vmatpush1.bf16.msra.mxu0 0
  %6140 = vmatprep.subr.bf16.mxu0 %v5927
  %6141 = vmatpush1.bf16.msra.mxu0 %v5926
  %6142 = vmatprep.subr.bf16.mxu0 %v5911
  %6143 = vmatpush1.bf16.msra.mxu0 %v5910
  %6144 = vmatprep.subr.bf16.mxu0 %v5895
  %6145 = vmatpush1.bf16.msra.mxu0 %v5894
  %6146 = vmatprep.subr.bf16.mxu0 %v5879
  %6147 = vmatpush1.bf16.msra.mxu0 %v5878
  %6148 = vmatprep.subr.bf16.mxu0 0
  %6149 = vmatpush2.bf16.msra.mxu0 0
  %6150 = vmatprep.subr.bf16.mxu0 0
  %6151 = vmatpush2.bf16.msra.mxu0 0
  %6152 = vmatprep.subr.bf16.mxu0 0
  %6153 = vmatpush2.bf16.msra.mxu0 0
  %6154 = vmatprep.subr.bf16.mxu0 0
  %6155 = vmatpush2.bf16.msra.mxu0 0
  %6156 = vmatprep.subr.bf16.mxu0 0
  %6157 = vmatpush2.bf16.msra.mxu0 0
  %6158 = vmatprep.subr.bf16.mxu0 0
  %6159 = vmatpush2.bf16.msra.mxu0 0
  %6160 = vmatprep.subr.bf16.mxu0 0
  %6161 = vmatpush2.bf16.msra.mxu0 0
  %6162 = vmatprep.subr.bf16.mxu0 0
  %6163 = vmatpush2.bf16.msra.mxu0 0
  %6164 = vmatprep.mubr.bf16.mxu0 0
  %6165 = vmatmul.mubr.bf16.gmra.mxu0 %v6001
  %v6166 = vpop.f32.mrf.mxu0
  %v6167 = vadd.f32 %v5627, %v6166
  %v6168 = vpop.f32.mrf.mxu0
  %v6169 = vadd.f32 %v5631, %v6168
  %v6170 = vpop.f32.mrf.mxu0
  %v6171 = vadd.f32 %v5627, %v6170
  %v6172 = vpop.f32.mrf.mxu0
  %v6173 = vadd.f32 %v5631, %v6172
  %6174 = vdwg.mxu0
  %6175 = vmatprep.subr.bf16.mxu0 0
  %6176 = vmatpush1.bf16.msra.mxu0 0
  %6177 = vmatprep.subr.bf16.mxu0 0
  %6178 = vmatpush1.bf16.msra.mxu0 0
  %6179 = vmatprep.subr.bf16.mxu0 0
  %6180 = vmatpush1.bf16.msra.mxu0 0
  %6181 = vmatprep.subr.bf16.mxu0 0
  %6182 = vmatpush1.bf16.msra.mxu0 0
  %6183 = vmatprep.subr.bf16.mxu0 %v5929
  %6184 = vmatpush1.bf16.msra.mxu0 %v5928
  %6185 = vmatprep.subr.bf16.mxu0 %v5913
  %6186 = vmatpush1.bf16.msra.mxu0 %v5912
  %6187 = vmatprep.subr.bf16.mxu0 %v5897
  %6188 = vmatpush1.bf16.msra.mxu0 %v5896
  %6189 = vmatprep.subr.bf16.mxu0 %v5881
  %6190 = vmatpush1.bf16.msra.mxu0 %v5880
  %6191 = vmatprep.subr.bf16.mxu0 0
  %6192 = vmatpush2.bf16.msra.mxu0 0
  %6193 = vmatprep.subr.bf16.mxu0 0
  %6194 = vmatpush2.bf16.msra.mxu0 0
  %6195 = vmatprep.subr.bf16.mxu0 0
  %6196 = vmatpush2.bf16.msra.mxu0 0
  %6197 = vmatprep.subr.bf16.mxu0 0
  %6198 = vmatpush2.bf16.msra.mxu0 0
  %6199 = vmatprep.subr.bf16.mxu0 0
  %6200 = vmatpush2.bf16.msra.mxu0 0
  %6201 = vmatprep.subr.bf16.mxu0 0
  %6202 = vmatpush2.bf16.msra.mxu0 0
  %6203 = vmatprep.subr.bf16.mxu0 0
  %6204 = vmatpush2.bf16.msra.mxu0 0
  %6205 = vmatprep.subr.bf16.mxu0 0
  %6206 = vmatpush2.bf16.msra.mxu0 0
  %6207 = vmatprep.mubr.bf16.mxu0 0
  %6208 = vmatmul.mubr.bf16.gmra.mxu0 %v6001
  %v6209 = vpop.f32.mrf.mxu0
  %v6210 = vadd.f32 %v5635, %v6209
  %v6211 = vpop.f32.mrf.mxu0
  %v6212 = vadd.f32 %v5639, %v6211
  %v6213 = vpop.f32.mrf.mxu0
  %v6214 = vadd.f32 %v5635, %v6213
  %v6215 = vpop.f32.mrf.mxu0
  %v6216 = vadd.f32 %v5639, %v6215
  %6217 = vdwg.mxu0
  %6218 = vmatprep.subr.bf16.mxu0 0
  %6219 = vmatpush1.bf16.msra.mxu0 0
  %6220 = vmatprep.subr.bf16.mxu0 0
  %6221 = vmatpush1.bf16.msra.mxu0 0
  %6222 = vmatprep.subr.bf16.mxu0 0
  %6223 = vmatpush1.bf16.msra.mxu0 0
  %6224 = vmatprep.subr.bf16.mxu0 0
  %6225 = vmatpush1.bf16.msra.mxu0 0
  %6226 = vmatprep.subr.bf16.mxu0 %v5931
  %6227 = vmatpush1.bf16.msra.mxu0 %v5930
  %6228 = vmatprep.subr.bf16.mxu0 %v5915
  %6229 = vmatpush1.bf16.msra.mxu0 %v5914
  %6230 = vmatprep.subr.bf16.mxu0 %v5899
  %6231 = vmatpush1.bf16.msra.mxu0 %v5898
  %6232 = vmatprep.subr.bf16.mxu0 %v5883
  %6233 = vmatpush1.bf16.msra.mxu0 %v5882
  %6234 = vmatprep.subr.bf16.mxu0 0
  %6235 = vmatpush2.bf16.msra.mxu0 0
  %6236 = vmatprep.subr.bf16.mxu0 0
  %6237 = vmatpush2.bf16.msra.mxu0 0
  %6238 = vmatprep.subr.bf16.mxu0 0
  %6239 = vmatpush2.bf16.msra.mxu0 0
  %6240 = vmatprep.subr.bf16.mxu0 0
  %6241 = vmatpush2.bf16.msra.mxu0 0
  %6242 = vmatprep.subr.bf16.mxu0 0
  %6243 = vmatpush2.bf16.msra.mxu0 0
  %6244 = vmatprep.subr.bf16.mxu0 0
  %6245 = vmatpush2.bf16.msra.mxu0 0
  %6246 = vmatprep.subr.bf16.mxu0 0
  %6247 = vmatpush2.bf16.msra.mxu0 0
  %6248 = vmatprep.subr.bf16.mxu0 0
  %6249 = vmatpush2.bf16.msra.mxu0 0
  %6250 = vmatprep.mubr.bf16.mxu0 0
  %6251 = vmatmul.mubr.bf16.gmra.mxu0 %v6001
  %v6252 = vpop.f32.mrf.mxu0
  %v6253 = vadd.f32 %v5643, %v6252
  %v6254 = vpop.f32.mrf.mxu0
  %v6255 = vadd.f32 %v5647, %v6254
  %v6256 = vpop.f32.mrf.mxu0
  %v6257 = vadd.f32 %v5643, %v6256
  %v6258 = vpop.f32.mrf.mxu0
  %v6259 = vadd.f32 %v5647, %v6258
  %6260 = vdwg.mxu0
  %6261 = vmatprep.subr.bf16.mxu0 0
  %6262 = vmatpush1.bf16.msra.mxu0 0
  %6263 = vmatprep.subr.bf16.mxu0 0
  %6264 = vmatpush1.bf16.msra.mxu0 0
  %6265 = vmatprep.subr.bf16.mxu0 0
  %6266 = vmatpush1.bf16.msra.mxu0 0
  %6267 = vmatprep.subr.bf16.mxu0 0
  %6268 = vmatpush1.bf16.msra.mxu0 0
  %6269 = vmatprep.subr.bf16.mxu0 %v5933
  %6270 = vmatpush1.bf16.msra.mxu0 %v5932
  %6271 = vmatprep.subr.bf16.mxu0 %v5917
  %6272 = vmatpush1.bf16.msra.mxu0 %v5916
  %6273 = vmatprep.subr.bf16.mxu0 %v5901
  %6274 = vmatpush1.bf16.msra.mxu0 %v5900
  %6275 = vmatprep.subr.bf16.mxu0 %v5885
  %6276 = vmatpush1.bf16.msra.mxu0 %v5884
  %6277 = vmatprep.subr.bf16.mxu0 0
  %6278 = vmatpush2.bf16.msra.mxu0 0
  %6279 = vmatprep.subr.bf16.mxu0 0
  %6280 = vmatpush2.bf16.msra.mxu0 0
  %6281 = vmatprep.subr.bf16.mxu0 0
  %6282 = vmatpush2.bf16.msra.mxu0 0
  %6283 = vmatprep.subr.bf16.mxu0 0
  %6284 = vmatpush2.bf16.msra.mxu0 0
  %6285 = vmatprep.subr.bf16.mxu0 0
  %6286 = vmatpush2.bf16.msra.mxu0 0
  %6287 = vmatprep.subr.bf16.mxu0 0
  %6288 = vmatpush2.bf16.msra.mxu0 0
  %6289 = vmatprep.subr.bf16.mxu0 0
  %6290 = vmatpush2.bf16.msra.mxu0 0
  %6291 = vmatprep.subr.bf16.mxu0 0
  %6292 = vmatpush2.bf16.msra.mxu0 0
  %6293 = vmatprep.mubr.bf16.mxu0 0
  %6294 = vmatmul.mubr.bf16.gmra.mxu0 %v6001
  %v6295 = vpop.f32.mrf.mxu0
  %v6296 = vadd.f32 %v5651, %v6295
  %v6297 = vpop.f32.mrf.mxu0
  %v6298 = vadd.f32 %v5655, %v6297
  %v6299 = vpop.f32.mrf.mxu0
  %v6300 = vadd.f32 %v5651, %v6299
  %v6301 = vpop.f32.mrf.mxu0
  %v6302 = vadd.f32 %v5655, %v6301
  %6303 = vdwg.mxu0
  %6304 = vmatprep.subr.bf16.mxu0 0
  %6305 = vmatpush1.bf16.msra.mxu0 0
  %6306 = vmatprep.subr.bf16.mxu0 0
  %6307 = vmatpush1.bf16.msra.mxu0 0
  %6308 = vmatprep.subr.bf16.mxu0 0
  %6309 = vmatpush1.bf16.msra.mxu0 0
  %6310 = vmatprep.subr.bf16.mxu0 0
  %6311 = vmatpush1.bf16.msra.mxu0 0
  %6312 = vmatprep.subr.bf16.mxu0 %v5935
  %6313 = vmatpush1.bf16.msra.mxu0 %v5934
  %6314 = vmatprep.subr.bf16.mxu0 %v5919
  %6315 = vmatpush1.bf16.msra.mxu0 %v5918
  %6316 = vmatprep.subr.bf16.mxu0 %v5903
  %6317 = vmatpush1.bf16.msra.mxu0 %v5902
  %6318 = vmatprep.subr.bf16.mxu0 %v5887
  %6319 = vmatpush1.bf16.msra.mxu0 %v5886
  %6320 = vmatprep.subr.bf16.mxu0 0
  %6321 = vmatpush2.bf16.msra.mxu0 0
  %6322 = vmatprep.subr.bf16.mxu0 0
  %6323 = vmatpush2.bf16.msra.mxu0 0
  %6324 = vmatprep.subr.bf16.mxu0 0
  %6325 = vmatpush2.bf16.msra.mxu0 0
  %6326 = vmatprep.subr.bf16.mxu0 0
  %6327 = vmatpush2.bf16.msra.mxu0 0
  %6328 = vmatprep.subr.bf16.mxu0 0
  %6329 = vmatpush2.bf16.msra.mxu0 0
  %6330 = vmatprep.subr.bf16.mxu0 0
  %6331 = vmatpush2.bf16.msra.mxu0 0
  %6332 = vmatprep.subr.bf16.mxu0 0
  %6333 = vmatpush2.bf16.msra.mxu0 0
  %6334 = vmatprep.subr.bf16.mxu0 0
  %6335 = vmatpush2.bf16.msra.mxu0 0
  %6336 = vmatprep.mubr.bf16.mxu0 0
  %6337 = vmatmul.mubr.bf16.gmra.mxu0 %v6001
  %v6338 = vpop.f32.mrf.mxu0
  %v6339 = vadd.f32 %v5659, %v6338
  %v6340 = vpop.f32.mrf.mxu0
  %v6341 = vadd.f32 %v5663, %v6340
  %v6342 = vpop.f32.mrf.mxu0
  %v6343 = vadd.f32 %v5659, %v6342
  %v6344 = vpop.f32.mrf.mxu0
  %v6345 = vadd.f32 %v5663, %v6344
  %6346 = vdwg.mxu0
  %v6347 = vmax.f32 %v6038, 0.0
  %v6348 = vmax.f32 %v6040, 0.0
  %v6349 = vmax.f32 %v6081, 0.0
  %v6350 = vmax.f32 %v6083, 0.0
  %v6351 = vmax.f32 %v6124, 0.0
  %v6352 = vmax.f32 %v6126, 0.0
  %v6353 = vmax.f32 %v6167, 0.0
  %v6354 = vmax.f32 %v6169, 0.0
  %v6355 = vmax.f32 %v6210, 0.0
  %v6356 = vmax.f32 %v6212, 0.0
  %v6357 = vmax.f32 %v6253, 0.0
  %v6358 = vmax.f32 %v6255, 0.0
  %v6359 = vmax.f32 %v6296, 0.0
  %v6360 = vmax.f32 %v6298, 0.0
  %v6361 = vmax.f32 %v6339, 0.0
  %v6362 = vmax.f32 %v6341, 0.0
  %v6363 = vmax.f32 %v6042, 0.0
  %v6364 = vmax.f32 %v6044, 0.0
  %v6365 = vmax.f32 %v6085, 0.0
  %v6366 = vmax.f32 %v6087, 0.0
  %v6367 = vmax.f32 %v6128, 0.0
  %v6368 = vmax.f32 %v6130, 0.0
  %v6369 = vmax.f32 %v6171, 0.0
  %v6370 = vmax.f32 %v6173, 0.0
  %v6371 = vmax.f32 %v6214, 0.0
  %v6372 = vmax.f32 %v6216, 0.0
  %v6373 = vmax.f32 %v6257, 0.0
  %v6374 = vmax.f32 %v6259, 0.0
  %v6375 = vmax.f32 %v6300, 0.0
  %v6376 = vmax.f32 %v6302, 0.0
  %v6377 = vmax.f32 %v6343, 0.0
  %v6378 = vmax.f32 %v6345, 0.0
  %v6379 = vpack.c.bf16 %v6363, %v6347
  %v6380 = vpack.c.bf16 %v6364, %v6348
  %v6381 = vpack.c.bf16 %v6365, %v6349
  %v6382 = vpack.c.bf16 %v6366, %v6350
  %v6383 = vpack.c.bf16 %v6367, %v6351
  %v6384 = vpack.c.bf16 %v6368, %v6352
  %v6385 = vpack.c.bf16 %v6369, %v6353
  %v6386 = vpack.c.bf16 %v6370, %v6354
  %v6387 = vpack.c.bf16 %v6371, %v6355
  %v6388 = vpack.c.bf16 %v6372, %v6356
  %v6389 = vpack.c.bf16 %v6373, %v6357
  %v6390 = vpack.c.bf16 %v6374, %v6358
  %v6391 = vpack.c.bf16 %v6375, %v6359
  %v6392 = vpack.c.bf16 %v6376, %v6360
  %v6393 = vpack.c.bf16 %v6377, %v6361
  %v6394 = vpack.c.bf16 %v6378, %v6362
  %s6395 = scalar_lea.vmem %s35, 1024
  %v6396 = vld [vmem:[%s6395] sm:$0xf]
  %v6397 = vld [vmem:[%s6395 + $0x4] sm:$0xf]
  %v6398 = vld [vmem:[%s6395 + $0x8] sm:$0xf]
  %v6399 = vld [vmem:[%s6395 + $0xc] sm:$0xf]
  %v6400 = vld [vmem:[%s6395 + $0x10] sm:$0xf]
  %v6401 = vld [vmem:[%s6395 + $0x14] sm:$0xf]
  %v6402 = vld [vmem:[%s6395 + $0x18] sm:$0xf]
  %v6403 = vld [vmem:[%s6395 + $0x1c] sm:$0xf]
  %v6404 = vld [vmem:[%s6395 + $0x20] sm:$0xf]
  %v6405 = vld [vmem:[%s6395 + $0x24] sm:$0xf]
  %v6406 = vld [vmem:[%s6395 + $0x28] sm:$0xf]
  %v6407 = vld [vmem:[%s6395 + $0x2c] sm:$0xf]
  %v6408 = vld [vmem:[%s6395 + $0x30] sm:$0xf]
  %v6409 = vld [vmem:[%s6395 + $0x34] sm:$0xf]
  %v6410 = vld [vmem:[%s6395 + $0x38] sm:$0xf]
  %v6411 = vld [vmem:[%s6395 + $0x3c] sm:$0xf]
  %v6412 = vld [vmem:[%s6395 + $0x40] sm:$0xf]
  %v6413 = vld [vmem:[%s6395 + $0x44] sm:$0xf]
  %v6414 = vld [vmem:[%s6395 + $0x48] sm:$0xf]
  %v6415 = vld [vmem:[%s6395 + $0x4c] sm:$0xf]
  %v6416 = vld [vmem:[%s6395 + $0x50] sm:$0xf]
  %v6417 = vld [vmem:[%s6395 + $0x54] sm:$0xf]
  %v6418 = vld [vmem:[%s6395 + $0x58] sm:$0xf]
  %v6419 = vld [vmem:[%s6395 + $0x5c] sm:$0xf]
  %v6420 = vld [vmem:[%s6395 + $0x60] sm:$0xf]
  %v6421 = vld [vmem:[%s6395 + $0x64] sm:$0xf]
  %v6422 = vld [vmem:[%s6395 + $0x68] sm:$0xf]
  %v6423 = vld [vmem:[%s6395 + $0x6c] sm:$0xf]
  %v6424 = vld [vmem:[%s6395 + $0x70] sm:$0xf]
  %v6425 = vld [vmem:[%s6395 + $0x74] sm:$0xf]
  %v6426 = vld [vmem:[%s6395 + $0x78] sm:$0xf]
  %v6427 = vld [vmem:[%s6395 + $0x7c] sm:$0xf]
  %v6428 = vld [vmem:[%s6395 + $0x80] sm:$0xf]
  %v6429 = vld [vmem:[%s6395 + $0x84] sm:$0xf]
  %v6430 = vld [vmem:[%s6395 + $0x88] sm:$0xf]
  %v6431 = vld [vmem:[%s6395 + $0x8c] sm:$0xf]
  %v6432 = vld [vmem:[%s6395 + $0x90] sm:$0xf]
  %v6433 = vld [vmem:[%s6395 + $0x94] sm:$0xf]
  %v6434 = vld [vmem:[%s6395 + $0x98] sm:$0xf]
  %v6435 = vld [vmem:[%s6395 + $0x9c] sm:$0xf]
  %v6436 = vld [vmem:[%s6395 + $0xa0] sm:$0xf]
  %v6437 = vld [vmem:[%s6395 + $0xa4] sm:$0xf]
  %v6438 = vld [vmem:[%s6395 + $0xa8] sm:$0xf]
  %v6439 = vld [vmem:[%s6395 + $0xac] sm:$0xf]
  %v6440 = vld [vmem:[%s6395 + $0xb0] sm:$0xf]
  %v6441 = vld [vmem:[%s6395 + $0xb4] sm:$0xf]
  %v6442 = vld [vmem:[%s6395 + $0xb8] sm:$0xf]
  %v6443 = vld [vmem:[%s6395 + $0xbc] sm:$0xf]
  %v6444 = vld [vmem:[%s6395 + $0xc0] sm:$0xf]
  %v6445 = vld [vmem:[%s6395 + $0xc4] sm:$0xf]
  %v6446 = vld [vmem:[%s6395 + $0xc8] sm:$0xf]
  %v6447 = vld [vmem:[%s6395 + $0xcc] sm:$0xf]
  %v6448 = vld [vmem:[%s6395 + $0xd0] sm:$0xf]
  %v6449 = vld [vmem:[%s6395 + $0xd4] sm:$0xf]
  %v6450 = vld [vmem:[%s6395 + $0xd8] sm:$0xf]
  %v6451 = vld [vmem:[%s6395 + $0xdc] sm:$0xf]
  %v6452 = vld [vmem:[%s6395 + $0xe0] sm:$0xf]
  %v6453 = vld [vmem:[%s6395 + $0xe4] sm:$0xf]
  %v6454 = vld [vmem:[%s6395 + $0xe8] sm:$0xf]
  %v6455 = vld [vmem:[%s6395 + $0xec] sm:$0xf]
  %v6456 = vld [vmem:[%s6395 + $0xf0] sm:$0xf]
  %v6457 = vld [vmem:[%s6395 + $0xf4] sm:$0xf]
  %v6458 = vld [vmem:[%s6395 + $0xf8] sm:$0xf]
  %v6459 = vld [vmem:[%s6395 + $0xfc] sm:$0xf]
  %v6460 = vld [vmem:[%s6395 + $0x100] sm:$0xf]
  %v6461 = vld [vmem:[%s6395 + $0x104] sm:$0xf]
  %v6462 = vld [vmem:[%s6395 + $0x108] sm:$0xf]
  %v6463 = vld [vmem:[%s6395 + $0x10c] sm:$0xf]
  %v6464 = vld [vmem:[%s6395 + $0x110] sm:$0xf]
  %v6465 = vld [vmem:[%s6395 + $0x114] sm:$0xf]
  %v6466 = vld [vmem:[%s6395 + $0x118] sm:$0xf]
  %v6467 = vld [vmem:[%s6395 + $0x11c] sm:$0xf]
  %v6468 = vld [vmem:[%s6395 + $0x120] sm:$0xf]
  %v6469 = vld [vmem:[%s6395 + $0x124] sm:$0xf]
  %v6470 = vld [vmem:[%s6395 + $0x128] sm:$0xf]
  %v6471 = vld [vmem:[%s6395 + $0x12c] sm:$0xf]
  %v6472 = vld [vmem:[%s6395 + $0x130] sm:$0xf]
  %v6473 = vld [vmem:[%s6395 + $0x134] sm:$0xf]
  %v6474 = vld [vmem:[%s6395 + $0x138] sm:$0xf]
  %v6475 = vld [vmem:[%s6395 + $0x13c] sm:$0xf]
  %v6476 = vld [vmem:[%s6395 + $0x140] sm:$0xf]
  %v6477 = vld [vmem:[%s6395 + $0x144] sm:$0xf]
  %v6478 = vld [vmem:[%s6395 + $0x148] sm:$0xf]
  %v6479 = vld [vmem:[%s6395 + $0x14c] sm:$0xf]
  %v6480 = vld [vmem:[%s6395 + $0x150] sm:$0xf]
  %v6481 = vld [vmem:[%s6395 + $0x154] sm:$0xf]
  %v6482 = vld [vmem:[%s6395 + $0x158] sm:$0xf]
  %v6483 = vld [vmem:[%s6395 + $0x15c] sm:$0xf]
  %v6484 = vld [vmem:[%s6395 + $0x160] sm:$0xf]
  %v6485 = vld [vmem:[%s6395 + $0x164] sm:$0xf]
  %v6486 = vld [vmem:[%s6395 + $0x168] sm:$0xf]
  %v6487 = vld [vmem:[%s6395 + $0x16c] sm:$0xf]
  %v6488 = vld [vmem:[%s6395 + $0x170] sm:$0xf]
  %v6489 = vld [vmem:[%s6395 + $0x174] sm:$0xf]
  %v6490 = vld [vmem:[%s6395 + $0x178] sm:$0xf]
  %v6491 = vld [vmem:[%s6395 + $0x17c] sm:$0xf]
  %v6492 = vld [vmem:[%s6395 + $0x180] sm:$0xf]
  %v6493 = vld [vmem:[%s6395 + $0x184] sm:$0xf]
  %v6494 = vld [vmem:[%s6395 + $0x188] sm:$0xf]
  %v6495 = vld [vmem:[%s6395 + $0x18c] sm:$0xf]
  %v6496 = vld [vmem:[%s6395 + $0x190] sm:$0xf]
  %v6497 = vld [vmem:[%s6395 + $0x194] sm:$0xf]
  %v6498 = vld [vmem:[%s6395 + $0x198] sm:$0xf]
  %v6499 = vld [vmem:[%s6395 + $0x19c] sm:$0xf]
  %v6500 = vld [vmem:[%s6395 + $0x1a0] sm:$0xf]
  %v6501 = vld [vmem:[%s6395 + $0x1a4] sm:$0xf]
  %v6502 = vld [vmem:[%s6395 + $0x1a8] sm:$0xf]
  %v6503 = vld [vmem:[%s6395 + $0x1ac] sm:$0xf]
  %v6504 = vld [vmem:[%s6395 + $0x1b0] sm:$0xf]
  %v6505 = vld [vmem:[%s6395 + $0x1b4] sm:$0xf]
  %v6506 = vld [vmem:[%s6395 + $0x1b8] sm:$0xf]
  %v6507 = vld [vmem:[%s6395 + $0x1bc] sm:$0xf]
  %v6508 = vld [vmem:[%s6395 + $0x1c0] sm:$0xf]
  %v6509 = vld [vmem:[%s6395 + $0x1c4] sm:$0xf]
  %v6510 = vld [vmem:[%s6395 + $0x1c8] sm:$0xf]
  %v6511 = vld [vmem:[%s6395 + $0x1cc] sm:$0xf]
  %v6512 = vld [vmem:[%s6395 + $0x1d0] sm:$0xf]
  %v6513 = vld [vmem:[%s6395 + $0x1d4] sm:$0xf]
  %v6514 = vld [vmem:[%s6395 + $0x1d8] sm:$0xf]
  %v6515 = vld [vmem:[%s6395 + $0x1dc] sm:$0xf]
  %v6516 = vld [vmem:[%s6395 + $0x1e0] sm:$0xf]
  %v6517 = vld [vmem:[%s6395 + $0x1e4] sm:$0xf]
  %v6518 = vld [vmem:[%s6395 + $0x1e8] sm:$0xf]
  %v6519 = vld [vmem:[%s6395 + $0x1ec] sm:$0xf]
  %v6520 = vld [vmem:[%s6395 + $0x1f0] sm:$0xf]
  %v6521 = vld [vmem:[%s6395 + $0x1f4] sm:$0xf]
  %v6522 = vld [vmem:[%s6395 + $0x1f8] sm:$0xf]
  %v6523 = vld [vmem:[%s6395 + $0x1fc] sm:$0xf]
  %v6524 = vld [vmem:[%s6395 + $0x200] sm:$0xf]
  %v6525 = vld [vmem:[%s6395 + $0x204] sm:$0xf]
  %v6526 = vld [vmem:[%s6395 + $0x208] sm:$0xf]
  %v6527 = vld [vmem:[%s6395 + $0x20c] sm:$0xf]
  %v6528 = vld [vmem:[%s6395 + $0x210] sm:$0xf]
  %v6529 = vld [vmem:[%s6395 + $0x214] sm:$0xf]
  %v6530 = vld [vmem:[%s6395 + $0x218] sm:$0xf]
  %v6531 = vld [vmem:[%s6395 + $0x21c] sm:$0xf]
  %v6532 = vld [vmem:[%s6395 + $0x220] sm:$0xf]
  %v6533 = vld [vmem:[%s6395 + $0x224] sm:$0xf]
  %v6534 = vld [vmem:[%s6395 + $0x228] sm:$0xf]
  %v6535 = vld [vmem:[%s6395 + $0x22c] sm:$0xf]
  %v6536 = vld [vmem:[%s6395 + $0x230] sm:$0xf]
  %v6537 = vld [vmem:[%s6395 + $0x234] sm:$0xf]
  %v6538 = vld [vmem:[%s6395 + $0x238] sm:$0xf]
  %v6539 = vld [vmem:[%s6395 + $0x23c] sm:$0xf]
  %v6540 = vld [vmem:[%s6395 + $0x240] sm:$0xf]
  %v6541 = vld [vmem:[%s6395 + $0x244] sm:$0xf]
  %v6542 = vld [vmem:[%s6395 + $0x248] sm:$0xf]
  %v6543 = vld [vmem:[%s6395 + $0x24c] sm:$0xf]
  %v6544 = vld [vmem:[%s6395 + $0x250] sm:$0xf]
  %v6545 = vld [vmem:[%s6395 + $0x254] sm:$0xf]
  %v6546 = vld [vmem:[%s6395 + $0x258] sm:$0xf]
  %v6547 = vld [vmem:[%s6395 + $0x25c] sm:$0xf]
  %v6548 = vld [vmem:[%s6395 + $0x260] sm:$0xf]
  %v6549 = vld [vmem:[%s6395 + $0x264] sm:$0xf]
  %v6550 = vld [vmem:[%s6395 + $0x268] sm:$0xf]
  %v6551 = vld [vmem:[%s6395 + $0x26c] sm:$0xf]
  %v6552 = vld [vmem:[%s6395 + $0x270] sm:$0xf]
  %v6553 = vld [vmem:[%s6395 + $0x274] sm:$0xf]
  %v6554 = vld [vmem:[%s6395 + $0x278] sm:$0xf]
  %v6555 = vld [vmem:[%s6395 + $0x27c] sm:$0xf]
  %v6556 = vld [vmem:[%s6395 + $0x280] sm:$0xf]
  %v6557 = vld [vmem:[%s6395 + $0x284] sm:$0xf]
  %v6558 = vld [vmem:[%s6395 + $0x288] sm:$0xf]
  %v6559 = vld [vmem:[%s6395 + $0x28c] sm:$0xf]
  %v6560 = vld [vmem:[%s6395 + $0x290] sm:$0xf]
  %v6561 = vld [vmem:[%s6395 + $0x294] sm:$0xf]
  %v6562 = vld [vmem:[%s6395 + $0x298] sm:$0xf]
  %v6563 = vld [vmem:[%s6395 + $0x29c] sm:$0xf]
  %v6564 = vld [vmem:[%s6395 + $0x2a0] sm:$0xf]
  %v6565 = vld [vmem:[%s6395 + $0x2a4] sm:$0xf]
  %v6566 = vld [vmem:[%s6395 + $0x2a8] sm:$0xf]
  %v6567 = vld [vmem:[%s6395 + $0x2ac] sm:$0xf]
  %v6568 = vld [vmem:[%s6395 + $0x2b0] sm:$0xf]
  %v6569 = vld [vmem:[%s6395 + $0x2b4] sm:$0xf]
  %v6570 = vld [vmem:[%s6395 + $0x2b8] sm:$0xf]
  %v6571 = vld [vmem:[%s6395 + $0x2bc] sm:$0xf]
  %v6572 = vld [vmem:[%s6395 + $0x2c0] sm:$0xf]
  %v6573 = vld [vmem:[%s6395 + $0x2c4] sm:$0xf]
  %v6574 = vld [vmem:[%s6395 + $0x2c8] sm:$0xf]
  %v6575 = vld [vmem:[%s6395 + $0x2cc] sm:$0xf]
  %v6576 = vld [vmem:[%s6395 + $0x2d0] sm:$0xf]
  %v6577 = vld [vmem:[%s6395 + $0x2d4] sm:$0xf]
  %v6578 = vld [vmem:[%s6395 + $0x2d8] sm:$0xf]
  %v6579 = vld [vmem:[%s6395 + $0x2dc] sm:$0xf]
  %v6580 = vld [vmem:[%s6395 + $0x2e0] sm:$0xf]
  %v6581 = vld [vmem:[%s6395 + $0x2e4] sm:$0xf]
  %v6582 = vld [vmem:[%s6395 + $0x2e8] sm:$0xf]
  %v6583 = vld [vmem:[%s6395 + $0x2ec] sm:$0xf]
  %v6584 = vld [vmem:[%s6395 + $0x2f0] sm:$0xf]
  %v6585 = vld [vmem:[%s6395 + $0x2f4] sm:$0xf]
  %v6586 = vld [vmem:[%s6395 + $0x2f8] sm:$0xf]
  %v6587 = vld [vmem:[%s6395 + $0x2fc] sm:$0xf]
  %v6588 = vld [vmem:[%s6395 + $0x300] sm:$0xf]
  %v6589 = vld [vmem:[%s6395 + $0x304] sm:$0xf]
  %v6590 = vld [vmem:[%s6395 + $0x308] sm:$0xf]
  %v6591 = vld [vmem:[%s6395 + $0x30c] sm:$0xf]
  %v6592 = vld [vmem:[%s6395 + $0x310] sm:$0xf]
  %v6593 = vld [vmem:[%s6395 + $0x314] sm:$0xf]
  %v6594 = vld [vmem:[%s6395 + $0x318] sm:$0xf]
  %v6595 = vld [vmem:[%s6395 + $0x31c] sm:$0xf]
  %v6596 = vld [vmem:[%s6395 + $0x320] sm:$0xf]
  %v6597 = vld [vmem:[%s6395 + $0x324] sm:$0xf]
  %v6598 = vld [vmem:[%s6395 + $0x328] sm:$0xf]
  %v6599 = vld [vmem:[%s6395 + $0x32c] sm:$0xf]
  %v6600 = vld [vmem:[%s6395 + $0x330] sm:$0xf]
  %v6601 = vld [vmem:[%s6395 + $0x334] sm:$0xf]
  %v6602 = vld [vmem:[%s6395 + $0x338] sm:$0xf]
  %v6603 = vld [vmem:[%s6395 + $0x33c] sm:$0xf]
  %v6604 = vld [vmem:[%s6395 + $0x340] sm:$0xf]
  %v6605 = vld [vmem:[%s6395 + $0x344] sm:$0xf]
  %v6606 = vld [vmem:[%s6395 + $0x348] sm:$0xf]
  %v6607 = vld [vmem:[%s6395 + $0x34c] sm:$0xf]
  %v6608 = vld [vmem:[%s6395 + $0x350] sm:$0xf]
  %v6609 = vld [vmem:[%s6395 + $0x354] sm:$0xf]
  %v6610 = vld [vmem:[%s6395 + $0x358] sm:$0xf]
  %v6611 = vld [vmem:[%s6395 + $0x35c] sm:$0xf]
  %v6612 = vld [vmem:[%s6395 + $0x360] sm:$0xf]
  %v6613 = vld [vmem:[%s6395 + $0x364] sm:$0xf]
  %v6614 = vld [vmem:[%s6395 + $0x368] sm:$0xf]
  %v6615 = vld [vmem:[%s6395 + $0x36c] sm:$0xf]
  %v6616 = vld [vmem:[%s6395 + $0x370] sm:$0xf]
  %v6617 = vld [vmem:[%s6395 + $0x374] sm:$0xf]
  %v6618 = vld [vmem:[%s6395 + $0x378] sm:$0xf]
  %v6619 = vld [vmem:[%s6395 + $0x37c] sm:$0xf]
  %v6620 = vld [vmem:[%s6395 + $0x380] sm:$0xf]
  %v6621 = vld [vmem:[%s6395 + $0x384] sm:$0xf]
  %v6622 = vld [vmem:[%s6395 + $0x388] sm:$0xf]
  %v6623 = vld [vmem:[%s6395 + $0x38c] sm:$0xf]
  %v6624 = vld [vmem:[%s6395 + $0x390] sm:$0xf]
  %v6625 = vld [vmem:[%s6395 + $0x394] sm:$0xf]
  %v6626 = vld [vmem:[%s6395 + $0x398] sm:$0xf]
  %v6627 = vld [vmem:[%s6395 + $0x39c] sm:$0xf]
  %v6628 = vld [vmem:[%s6395 + $0x3a0] sm:$0xf]
  %v6629 = vld [vmem:[%s6395 + $0x3a4] sm:$0xf]
  %v6630 = vld [vmem:[%s6395 + $0x3a8] sm:$0xf]
  %v6631 = vld [vmem:[%s6395 + $0x3ac] sm:$0xf]
  %v6632 = vld [vmem:[%s6395 + $0x3b0] sm:$0xf]
  %v6633 = vld [vmem:[%s6395 + $0x3b4] sm:$0xf]
  %v6634 = vld [vmem:[%s6395 + $0x3b8] sm:$0xf]
  %v6635 = vld [vmem:[%s6395 + $0x3bc] sm:$0xf]
  %v6636 = vld [vmem:[%s6395 + $0x3c0] sm:$0xf]
  %v6637 = vld [vmem:[%s6395 + $0x3c4] sm:$0xf]
  %v6638 = vld [vmem:[%s6395 + $0x3c8] sm:$0xf]
  %v6639 = vld [vmem:[%s6395 + $0x3cc] sm:$0xf]
  %v6640 = vld [vmem:[%s6395 + $0x3d0] sm:$0xf]
  %v6641 = vld [vmem:[%s6395 + $0x3d4] sm:$0xf]
  %v6642 = vld [vmem:[%s6395 + $0x3d8] sm:$0xf]
  %v6643 = vld [vmem:[%s6395 + $0x3dc] sm:$0xf]
  %v6644 = vld [vmem:[%s6395 + $0x3e0] sm:$0xf]
  %v6645 = vld [vmem:[%s6395 + $0x3e4] sm:$0xf]
  %v6646 = vld [vmem:[%s6395 + $0x3e8] sm:$0xf]
  %v6647 = vld [vmem:[%s6395 + $0x3ec] sm:$0xf]
  %v6648 = vld [vmem:[%s6395 + $0x3f0] sm:$0xf]
  %v6649 = vld [vmem:[%s6395 + $0x3f4] sm:$0xf]
  %v6650 = vld [vmem:[%s6395 + $0x3f8] sm:$0xf]
  %v6651 = vld [vmem:[%s6395 + $0x3fc] sm:$0xf]
  %s6652 = scalar_lea.vmem %s37, 1
  %v6653 = vld [vmem:[%s6652] sm:$0x1]
  %v6655 = vlaneseq
  %v6656 = vshrl.u32 %v6655, 7
  %v6657 = vsub.s32 0, %v6656
  %v6658 = vrot.slane %v6653, %v6657
  %v6916 = vunpack.c.l.b16 %v6396
  %v6917 = vunpack.c.l.b16 %v6397
  %v6918 = vunpack.c.l.b16 %v6398
  %v6919 = vunpack.c.l.b16 %v6399
  %v6920 = vunpack.c.l.b16 %v6400
  %v6921 = vunpack.c.l.b16 %v6401
  %v6922 = vunpack.c.l.b16 %v6402
  %v6923 = vunpack.c.l.b16 %v6403
  %v6924 = vunpack.c.l.b16 %v6404
  %v6925 = vunpack.c.l.b16 %v6405
  %v6926 = vunpack.c.l.b16 %v6406
  %v6927 = vunpack.c.l.b16 %v6407
  %v6928 = vunpack.c.l.b16 %v6408
  %v6929 = vunpack.c.l.b16 %v6409
  %v6930 = vunpack.c.l.b16 %v6410
  %v6931 = vunpack.c.l.b16 %v6411
  %v6932 = vunpack.c.l.b16 %v6412
  %v6933 = vunpack.c.l.b16 %v6413
  %v6934 = vunpack.c.l.b16 %v6414
  %v6935 = vunpack.c.l.b16 %v6415
  %v6936 = vunpack.c.l.b16 %v6416
  %v6937 = vunpack.c.l.b16 %v6417
  %v6938 = vunpack.c.l.b16 %v6418
  %v6939 = vunpack.c.l.b16 %v6419
  %v6940 = vunpack.c.l.b16 %v6420
  %v6941 = vunpack.c.l.b16 %v6421
  %v6942 = vunpack.c.l.b16 %v6422
  %v6943 = vunpack.c.l.b16 %v6423
  %v6944 = vunpack.c.l.b16 %v6424
  %v6945 = vunpack.c.l.b16 %v6425
  %v6946 = vunpack.c.l.b16 %v6426
  %v6947 = vunpack.c.l.b16 %v6427
  %v6948 = vunpack.c.l.b16 %v6428
  %v6949 = vunpack.c.l.b16 %v6429
  %v6950 = vunpack.c.l.b16 %v6430
  %v6951 = vunpack.c.l.b16 %v6431
  %v6952 = vunpack.c.l.b16 %v6432
  %v6953 = vunpack.c.l.b16 %v6433
  %v6954 = vunpack.c.l.b16 %v6434
  %v6955 = vunpack.c.l.b16 %v6435
  %v6956 = vunpack.c.l.b16 %v6436
  %v6957 = vunpack.c.l.b16 %v6437
  %v6958 = vunpack.c.l.b16 %v6438
  %v6959 = vunpack.c.l.b16 %v6439
  %v6960 = vunpack.c.l.b16 %v6440
  %v6961 = vunpack.c.l.b16 %v6441
  %v6962 = vunpack.c.l.b16 %v6442
  %v6963 = vunpack.c.l.b16 %v6443
  %v6964 = vunpack.c.l.b16 %v6444
  %v6965 = vunpack.c.l.b16 %v6445
  %v6966 = vunpack.c.l.b16 %v6446
  %v6967 = vunpack.c.l.b16 %v6447
  %v6968 = vunpack.c.l.b16 %v6448
  %v6969 = vunpack.c.l.b16 %v6449
  %v6970 = vunpack.c.l.b16 %v6450
  %v6971 = vunpack.c.l.b16 %v6451
  %v6972 = vunpack.c.l.b16 %v6452
  %v6973 = vunpack.c.l.b16 %v6453
  %v6974 = vunpack.c.l.b16 %v6454
  %v6975 = vunpack.c.l.b16 %v6455
  %v6976 = vunpack.c.l.b16 %v6456
  %v6977 = vunpack.c.l.b16 %v6457
  %v6978 = vunpack.c.l.b16 %v6458
  %v6979 = vunpack.c.l.b16 %v6459
  %v6980 = vunpack.c.l.b16 %v6460
  %v6981 = vunpack.c.l.b16 %v6461
  %v6982 = vunpack.c.l.b16 %v6462
  %v6983 = vunpack.c.l.b16 %v6463
  %v6984 = vunpack.c.l.b16 %v6464
  %v6985 = vunpack.c.l.b16 %v6465
  %v6986 = vunpack.c.l.b16 %v6466
  %v6987 = vunpack.c.l.b16 %v6467
  %v6988 = vunpack.c.l.b16 %v6468
  %v6989 = vunpack.c.l.b16 %v6469
  %v6990 = vunpack.c.l.b16 %v6470
  %v6991 = vunpack.c.l.b16 %v6471
  %v6992 = vunpack.c.l.b16 %v6472
  %v6993 = vunpack.c.l.b16 %v6473
  %v6994 = vunpack.c.l.b16 %v6474
  %v6995 = vunpack.c.l.b16 %v6475
  %v6996 = vunpack.c.l.b16 %v6476
  %v6997 = vunpack.c.l.b16 %v6477
  %v6998 = vunpack.c.l.b16 %v6478
  %v6999 = vunpack.c.l.b16 %v6479
  %v7000 = vunpack.c.l.b16 %v6480
  %v7001 = vunpack.c.l.b16 %v6481
  %v7002 = vunpack.c.l.b16 %v6482
  %v7003 = vunpack.c.l.b16 %v6483
  %v7004 = vunpack.c.l.b16 %v6484
  %v7005 = vunpack.c.l.b16 %v6485
  %v7006 = vunpack.c.l.b16 %v6486
  %v7007 = vunpack.c.l.b16 %v6487
  %v7008 = vunpack.c.l.b16 %v6488
  %v7009 = vunpack.c.l.b16 %v6489
  %v7010 = vunpack.c.l.b16 %v6490
  %v7011 = vunpack.c.l.b16 %v6491
  %v7012 = vunpack.c.l.b16 %v6492
  %v7013 = vunpack.c.l.b16 %v6493
  %v7014 = vunpack.c.l.b16 %v6494
  %v7015 = vunpack.c.l.b16 %v6495
  %v7016 = vunpack.c.l.b16 %v6496
  %v7017 = vunpack.c.l.b16 %v6497
  %v7018 = vunpack.c.l.b16 %v6498
  %v7019 = vunpack.c.l.b16 %v6499
  %v7020 = vunpack.c.l.b16 %v6500
  %v7021 = vunpack.c.l.b16 %v6501
  %v7022 = vunpack.c.l.b16 %v6502
  %v7023 = vunpack.c.l.b16 %v6503
  %v7024 = vunpack.c.l.b16 %v6504
  %v7025 = vunpack.c.l.b16 %v6505
  %v7026 = vunpack.c.l.b16 %v6506
  %v7027 = vunpack.c.l.b16 %v6507
  %v7028 = vunpack.c.l.b16 %v6508
  %v7029 = vunpack.c.l.b16 %v6509
  %v7030 = vunpack.c.l.b16 %v6510
  %v7031 = vunpack.c.l.b16 %v6511
  %v7032 = vunpack.c.l.b16 %v6512
  %v7033 = vunpack.c.l.b16 %v6513
  %v7034 = vunpack.c.l.b16 %v6514
  %v7035 = vunpack.c.l.b16 %v6515
  %v7036 = vunpack.c.l.b16 %v6516
  %v7037 = vunpack.c.l.b16 %v6517
  %v7038 = vunpack.c.l.b16 %v6518
  %v7039 = vunpack.c.l.b16 %v6519
  %v7040 = vunpack.c.l.b16 %v6520
  %v7041 = vunpack.c.l.b16 %v6521
  %v7042 = vunpack.c.l.b16 %v6522
  %v7043 = vunpack.c.l.b16 %v6523
  %v7044 = vunpack.c.l.b16 %v6524
  %v7045 = vunpack.c.l.b16 %v6525
  %v7046 = vunpack.c.l.b16 %v6526
  %v7047 = vunpack.c.l.b16 %v6527
  %v7048 = vunpack.c.l.b16 %v6528
  %v7049 = vunpack.c.l.b16 %v6529
  %v7050 = vunpack.c.l.b16 %v6530
  %v7051 = vunpack.c.l.b16 %v6531
  %v7052 = vunpack.c.l.b16 %v6532
  %v7053 = vunpack.c.l.b16 %v6533
  %v7054 = vunpack.c.l.b16 %v6534
  %v7055 = vunpack.c.l.b16 %v6535
  %v7056 = vunpack.c.l.b16 %v6536
  %v7057 = vunpack.c.l.b16 %v6537
  %v7058 = vunpack.c.l.b16 %v6538
  %v7059 = vunpack.c.l.b16 %v6539
  %v7060 = vunpack.c.l.b16 %v6540
  %v7061 = vunpack.c.l.b16 %v6541
  %v7062 = vunpack.c.l.b16 %v6542
  %v7063 = vunpack.c.l.b16 %v6543
  %v7064 = vunpack.c.l.b16 %v6544
  %v7065 = vunpack.c.l.b16 %v6545
  %v7066 = vunpack.c.l.b16 %v6546
  %v7067 = vunpack.c.l.b16 %v6547
  %v7068 = vunpack.c.l.b16 %v6548
  %v7069 = vunpack.c.l.b16 %v6549
  %v7070 = vunpack.c.l.b16 %v6550
  %v7071 = vunpack.c.l.b16 %v6551
  %v7072 = vunpack.c.l.b16 %v6552
  %v7073 = vunpack.c.l.b16 %v6553
  %v7074 = vunpack.c.l.b16 %v6554
  %v7075 = vunpack.c.l.b16 %v6555
  %v7076 = vunpack.c.l.b16 %v6556
  %v7077 = vunpack.c.l.b16 %v6557
  %v7078 = vunpack.c.l.b16 %v6558
  %v7079 = vunpack.c.l.b16 %v6559
  %v7080 = vunpack.c.l.b16 %v6560
  %v7081 = vunpack.c.l.b16 %v6561
  %v7082 = vunpack.c.l.b16 %v6562
  %v7083 = vunpack.c.l.b16 %v6563
  %v7084 = vunpack.c.l.b16 %v6564
  %v7085 = vunpack.c.l.b16 %v6565
  %v7086 = vunpack.c.l.b16 %v6566
  %v7087 = vunpack.c.l.b16 %v6567
  %v7088 = vunpack.c.l.b16 %v6568
  %v7089 = vunpack.c.l.b16 %v6569
  %v7090 = vunpack.c.l.b16 %v6570
  %v7091 = vunpack.c.l.b16 %v6571
  %v7092 = vunpack.c.l.b16 %v6572
  %v7093 = vunpack.c.l.b16 %v6573
  %v7094 = vunpack.c.l.b16 %v6574
  %v7095 = vunpack.c.l.b16 %v6575
  %v7096 = vunpack.c.l.b16 %v6576
  %v7097 = vunpack.c.l.b16 %v6577
  %v7098 = vunpack.c.l.b16 %v6578
  %v7099 = vunpack.c.l.b16 %v6579
  %v7100 = vunpack.c.l.b16 %v6580
  %v7101 = vunpack.c.l.b16 %v6581
  %v7102 = vunpack.c.l.b16 %v6582
  %v7103 = vunpack.c.l.b16 %v6583
  %v7104 = vunpack.c.l.b16 %v6584
  %v7105 = vunpack.c.l.b16 %v6585
  %v7106 = vunpack.c.l.b16 %v6586
  %v7107 = vunpack.c.l.b16 %v6587
  %v7108 = vunpack.c.l.b16 %v6588
  %v7109 = vunpack.c.l.b16 %v6589
  %v7110 = vunpack.c.l.b16 %v6590
  %v7111 = vunpack.c.l.b16 %v6591
  %v7112 = vunpack.c.l.b16 %v6592
  %v7113 = vunpack.c.l.b16 %v6593
  %v7114 = vunpack.c.l.b16 %v6594
  %v7115 = vunpack.c.l.b16 %v6595
  %v7116 = vunpack.c.l.b16 %v6596
  %v7117 = vunpack.c.l.b16 %v6597
  %v7118 = vunpack.c.l.b16 %v6598
  %v7119 = vunpack.c.l.b16 %v6599
  %v7120 = vunpack.c.l.b16 %v6600
  %v7121 = vunpack.c.l.b16 %v6601
  %v7122 = vunpack.c.l.b16 %v6602
  %v7123 = vunpack.c.l.b16 %v6603
  %v7124 = vunpack.c.l.b16 %v6604
  %v7125 = vunpack.c.l.b16 %v6605
  %v7126 = vunpack.c.l.b16 %v6606
  %v7127 = vunpack.c.l.b16 %v6607
  %v7128 = vunpack.c.l.b16 %v6608
  %v7129 = vunpack.c.l.b16 %v6609
  %v7130 = vunpack.c.l.b16 %v6610
  %v7131 = vunpack.c.l.b16 %v6611
  %v7132 = vunpack.c.l.b16 %v6612
  %v7133 = vunpack.c.l.b16 %v6613
  %v7134 = vunpack.c.l.b16 %v6614
  %v7135 = vunpack.c.l.b16 %v6615
  %v7136 = vunpack.c.l.b16 %v6616
  %v7137 = vunpack.c.l.b16 %v6617
  %v7138 = vunpack.c.l.b16 %v6618
  %v7139 = vunpack.c.l.b16 %v6619
  %v7140 = vunpack.c.l.b16 %v6620
  %v7141 = vunpack.c.l.b16 %v6621
  %v7142 = vunpack.c.l.b16 %v6622
  %v7143 = vunpack.c.l.b16 %v6623
  %v7144 = vunpack.c.l.b16 %v6624
  %v7145 = vunpack.c.l.b16 %v6625
  %v7146 = vunpack.c.l.b16 %v6626
  %v7147 = vunpack.c.l.b16 %v6627
  %v7148 = vunpack.c.l.b16 %v6628
  %v7149 = vunpack.c.l.b16 %v6629
  %v7150 = vunpack.c.l.b16 %v6630
  %v7151 = vunpack.c.l.b16 %v6631
  %v7152 = vunpack.c.l.b16 %v6632
  %v7153 = vunpack.c.l.b16 %v6633
  %v7154 = vunpack.c.l.b16 %v6634
  %v7155 = vunpack.c.l.b16 %v6635
  %v7156 = vunpack.c.l.b16 %v6636
  %v7157 = vunpack.c.l.b16 %v6637
  %v7158 = vunpack.c.l.b16 %v6638
  %v7159 = vunpack.c.l.b16 %v6639
  %v7160 = vunpack.c.l.b16 %v6640
  %v7161 = vunpack.c.l.b16 %v6641
  %v7162 = vunpack.c.l.b16 %v6642
  %v7163 = vunpack.c.l.b16 %v6643
  %v7164 = vunpack.c.l.b16 %v6644
  %v7165 = vunpack.c.l.b16 %v6645
  %v7166 = vunpack.c.l.b16 %v6646
  %v7167 = vunpack.c.l.b16 %v6647
  %v7168 = vunpack.c.l.b16 %v6648
  %v7169 = vunpack.c.l.b16 %v6649
  %v7170 = vunpack.c.l.b16 %v6650
  %v7171 = vunpack.c.l.b16 %v6651
  %v7172 = vpack.c.b16 %v6917, %v6916
  %v7173 = vpack.c.b16 %v6919, %v6918
  %v7174 = vpack.c.b16 %v6921, %v6920
  %v7175 = vpack.c.b16 %v6923, %v6922
  %v7176 = vpack.c.b16 %v6925, %v6924
  %v7177 = vpack.c.b16 %v6927, %v6926
  %v7178 = vpack.c.b16 %v6929, %v6928
  %v7179 = vpack.c.b16 %v6931, %v6930
  %v7180 = vpack.c.b16 %v6933, %v6932
  %v7181 = vpack.c.b16 %v6935, %v6934
  %v7182 = vpack.c.b16 %v6937, %v6936
  %v7183 = vpack.c.b16 %v6939, %v6938
  %v7184 = vpack.c.b16 %v6941, %v6940
  %v7185 = vpack.c.b16 %v6943, %v6942
  %v7186 = vpack.c.b16 %v6945, %v6944
  %v7187 = vpack.c.b16 %v6947, %v6946
  %v7188 = vpack.c.b16 %v6949, %v6948
  %v7189 = vpack.c.b16 %v6951, %v6950
  %v7190 = vpack.c.b16 %v6953, %v6952
  %v7191 = vpack.c.b16 %v6955, %v6954
  %v7192 = vpack.c.b16 %v6957, %v6956
  %v7193 = vpack.c.b16 %v6959, %v6958
  %v7194 = vpack.c.b16 %v6961, %v6960
  %v7195 = vpack.c.b16 %v6963, %v6962
  %v7196 = vpack.c.b16 %v6965, %v6964
  %v7197 = vpack.c.b16 %v6967, %v6966
  %v7198 = vpack.c.b16 %v6969, %v6968
  %v7199 = vpack.c.b16 %v6971, %v6970
  %v7200 = vpack.c.b16 %v6973, %v6972
  %v7201 = vpack.c.b16 %v6975, %v6974
  %v7202 = vpack.c.b16 %v6977, %v6976
  %v7203 = vpack.c.b16 %v6979, %v6978
  %v7204 = vpack.c.b16 %v6981, %v6980
  %v7205 = vpack.c.b16 %v6983, %v6982
  %v7206 = vpack.c.b16 %v6985, %v6984
  %v7207 = vpack.c.b16 %v6987, %v6986
  %v7208 = vpack.c.b16 %v6989, %v6988
  %v7209 = vpack.c.b16 %v6991, %v6990
  %v7210 = vpack.c.b16 %v6993, %v6992
  %v7211 = vpack.c.b16 %v6995, %v6994
  %v7212 = vpack.c.b16 %v6997, %v6996
  %v7213 = vpack.c.b16 %v6999, %v6998
  %v7214 = vpack.c.b16 %v7001, %v7000
  %v7215 = vpack.c.b16 %v7003, %v7002
  %v7216 = vpack.c.b16 %v7005, %v7004
  %v7217 = vpack.c.b16 %v7007, %v7006
  %v7218 = vpack.c.b16 %v7009, %v7008
  %v7219 = vpack.c.b16 %v7011, %v7010
  %v7220 = vpack.c.b16 %v7013, %v7012
  %v7221 = vpack.c.b16 %v7015, %v7014
  %v7222 = vpack.c.b16 %v7017, %v7016
  %v7223 = vpack.c.b16 %v7019, %v7018
  %v7224 = vpack.c.b16 %v7021, %v7020
  %v7225 = vpack.c.b16 %v7023, %v7022
  %v7226 = vpack.c.b16 %v7025, %v7024
  %v7227 = vpack.c.b16 %v7027, %v7026
  %v7228 = vpack.c.b16 %v7029, %v7028
  %v7229 = vpack.c.b16 %v7031, %v7030
  %v7230 = vpack.c.b16 %v7033, %v7032
  %v7231 = vpack.c.b16 %v7035, %v7034
  %v7232 = vpack.c.b16 %v7037, %v7036
  %v7233 = vpack.c.b16 %v7039, %v7038
  %v7234 = vpack.c.b16 %v7041, %v7040
  %v7235 = vpack.c.b16 %v7043, %v7042
  %v7236 = vpack.c.b16 %v7045, %v7044
  %v7237 = vpack.c.b16 %v7047, %v7046
  %v7238 = vpack.c.b16 %v7049, %v7048
  %v7239 = vpack.c.b16 %v7051, %v7050
  %v7240 = vpack.c.b16 %v7053, %v7052
  %v7241 = vpack.c.b16 %v7055, %v7054
  %v7242 = vpack.c.b16 %v7057, %v7056
  %v7243 = vpack.c.b16 %v7059, %v7058
  %v7244 = vpack.c.b16 %v7061, %v7060
  %v7245 = vpack.c.b16 %v7063, %v7062
  %v7246 = vpack.c.b16 %v7065, %v7064
  %v7247 = vpack.c.b16 %v7067, %v7066
  %v7248 = vpack.c.b16 %v7069, %v7068
  %v7249 = vpack.c.b16 %v7071, %v7070
  %v7250 = vpack.c.b16 %v7073, %v7072
  %v7251 = vpack.c.b16 %v7075, %v7074
  %v7252 = vpack.c.b16 %v7077, %v7076
  %v7253 = vpack.c.b16 %v7079, %v7078
  %v7254 = vpack.c.b16 %v7081, %v7080
  %v7255 = vpack.c.b16 %v7083, %v7082
  %v7256 = vpack.c.b16 %v7085, %v7084
  %v7257 = vpack.c.b16 %v7087, %v7086
  %v7258 = vpack.c.b16 %v7089, %v7088
  %v7259 = vpack.c.b16 %v7091, %v7090
  %v7260 = vpack.c.b16 %v7093, %v7092
  %v7261 = vpack.c.b16 %v7095, %v7094
  %v7262 = vpack.c.b16 %v7097, %v7096
  %v7263 = vpack.c.b16 %v7099, %v7098
  %v7264 = vpack.c.b16 %v7101, %v7100
  %v7265 = vpack.c.b16 %v7103, %v7102
  %v7266 = vpack.c.b16 %v7105, %v7104
  %v7267 = vpack.c.b16 %v7107, %v7106
  %v7268 = vpack.c.b16 %v7109, %v7108
  %v7269 = vpack.c.b16 %v7111, %v7110
  %v7270 = vpack.c.b16 %v7113, %v7112
  %v7271 = vpack.c.b16 %v7115, %v7114
  %v7272 = vpack.c.b16 %v7117, %v7116
  %v7273 = vpack.c.b16 %v7119, %v7118
  %v7274 = vpack.c.b16 %v7121, %v7120
  %v7275 = vpack.c.b16 %v7123, %v7122
  %v7276 = vpack.c.b16 %v7125, %v7124
  %v7277 = vpack.c.b16 %v7127, %v7126
  %v7278 = vpack.c.b16 %v7129, %v7128
  %v7279 = vpack.c.b16 %v7131, %v7130
  %v7280 = vpack.c.b16 %v7133, %v7132
  %v7281 = vpack.c.b16 %v7135, %v7134
  %v7282 = vpack.c.b16 %v7137, %v7136
  %v7283 = vpack.c.b16 %v7139, %v7138
  %v7284 = vpack.c.b16 %v7141, %v7140
  %v7285 = vpack.c.b16 %v7143, %v7142
  %v7286 = vpack.c.b16 %v7145, %v7144
  %v7287 = vpack.c.b16 %v7147, %v7146
  %v7288 = vpack.c.b16 %v7149, %v7148
  %v7289 = vpack.c.b16 %v7151, %v7150
  %v7290 = vpack.c.b16 %v7153, %v7152
  %v7291 = vpack.c.b16 %v7155, %v7154
  %v7292 = vpack.c.b16 %v7157, %v7156
  %v7293 = vpack.c.b16 %v7159, %v7158
  %v7294 = vpack.c.b16 %v7161, %v7160
  %v7295 = vpack.c.b16 %v7163, %v7162
  %v7296 = vpack.c.b16 %v7165, %v7164
  %v7297 = vpack.c.b16 %v7167, %v7166
  %v7298 = vpack.c.b16 %v7169, %v7168
  %v7299 = vpack.c.b16 %v7171, %v7170
  %7428 = vmatprep.subr.bf16.mxu0 0
  %7429 = vmatpush1.bf16.msra.mxu0 %v7179
  %7430 = vmatprep.subr.bf16.mxu0 0
  %7431 = vmatpush1.bf16.msra.mxu0 %v7178
  %7432 = vmatprep.subr.bf16.mxu0 0
  %7433 = vmatpush1.bf16.msra.mxu0 %v7177
  %7434 = vmatprep.subr.bf16.mxu0 0
  %7435 = vmatpush1.bf16.msra.mxu0 %v7176
  %7436 = vmatprep.subr.bf16.mxu0 0
  %7437 = vmatpush1.bf16.msra.mxu0 %v7175
  %7438 = vmatprep.subr.bf16.mxu0 0
  %7439 = vmatpush1.bf16.msra.mxu0 %v7174
  %7440 = vmatprep.subr.bf16.mxu0 0
  %7441 = vmatpush1.bf16.msra.mxu0 %v7173
  %7442 = vmatprep.subr.bf16.mxu0 0
  %7443 = vmatpush1.bf16.msra.mxu0 %v7172
  %7444 = vmatprep.subr.bf16.mxu0 0
  %7445 = vmatpush2.bf16.msra.mxu0 %v7187
  %7446 = vmatprep.subr.bf16.mxu0 0
  %7447 = vmatpush2.bf16.msra.mxu0 %v7186
  %7448 = vmatprep.subr.bf16.mxu0 0
  %7449 = vmatpush2.bf16.msra.mxu0 %v7185
  %7450 = vmatprep.subr.bf16.mxu0 0
  %7451 = vmatpush2.bf16.msra.mxu0 %v7184
  %7452 = vmatprep.subr.bf16.mxu0 0
  %7453 = vmatpush2.bf16.msra.mxu0 %v7183
  %7454 = vmatprep.subr.bf16.mxu0 0
  %7455 = vmatpush2.bf16.msra.mxu0 %v7182
  %7456 = vmatprep.subr.bf16.mxu0 0
  %7457 = vmatpush2.bf16.msra.mxu0 %v7181
  %7458 = vmatprep.subr.bf16.mxu0 0
  %7459 = vmatpush2.bf16.msra.mxu0 %v7180
  %7460 = vmatprep.mubr.bf16.mxu0 %v6380
  %7461 = vmatmul.mubr.bf16.gmra.mxu0 %v6379
  %v7462 = vpop.f32.mrf.mxu0
  %v7463 = vadd.f32 %v6658, %v7462
  %v7464 = vpop.f32.mrf.mxu0
  %v7465 = vpop.f32.mrf.mxu0
  %v7466 = vadd.f32 %v6658, %v7465
  %v7467 = vpop.f32.mrf.mxu0
  %7468 = vdwg.mxu0
  %7469 = vmatprep.subr.bf16.mxu0 0
  %7470 = vmatpush1.bf16.msra.mxu0 %v7195
  %7471 = vmatprep.subr.bf16.mxu0 0
  %7472 = vmatpush1.bf16.msra.mxu0 %v7194
  %7473 = vmatprep.subr.bf16.mxu0 0
  %7474 = vmatpush1.bf16.msra.mxu0 %v7193
  %7475 = vmatprep.subr.bf16.mxu0 0
  %7476 = vmatpush1.bf16.msra.mxu0 %v7192
  %7477 = vmatprep.subr.bf16.mxu0 0
  %7478 = vmatpush1.bf16.msra.mxu0 %v7191
  %7479 = vmatprep.subr.bf16.mxu0 0
  %7480 = vmatpush1.bf16.msra.mxu0 %v7190
  %7481 = vmatprep.subr.bf16.mxu0 0
  %7482 = vmatpush1.bf16.msra.mxu0 %v7189
  %7483 = vmatprep.subr.bf16.mxu0 0
  %7484 = vmatpush1.bf16.msra.mxu0 %v7188
  %7485 = vmatprep.subr.bf16.mxu0 0
  %7486 = vmatpush2.bf16.msra.mxu0 %v7203
  %7487 = vmatprep.subr.bf16.mxu0 0
  %7488 = vmatpush2.bf16.msra.mxu0 %v7202
  %7489 = vmatprep.subr.bf16.mxu0 0
  %7490 = vmatpush2.bf16.msra.mxu0 %v7201
  %7491 = vmatprep.subr.bf16.mxu0 0
  %7492 = vmatpush2.bf16.msra.mxu0 %v7200
  %7493 = vmatprep.subr.bf16.mxu0 0
  %7494 = vmatpush2.bf16.msra.mxu0 %v7199
  %7495 = vmatprep.subr.bf16.mxu0 0
  %7496 = vmatpush2.bf16.msra.mxu0 %v7198
  %7497 = vmatprep.subr.bf16.mxu0 0
  %7498 = vmatpush2.bf16.msra.mxu0 %v7197
  %7499 = vmatprep.subr.bf16.mxu0 0
  %7500 = vmatpush2.bf16.msra.mxu0 %v7196
  %7501 = vmatprep.mubr.bf16.mxu0 %v6382
  %7502 = vmatmul.mubr.bf16.gmra.mxu0 %v6381
  %v7503 = vpop.f32.mrf.mxu0
  %v7504 = vadd.f32 %v7463, %v7503
  %v7505 = vpop.f32.mrf.mxu0
  %v7506 = vpop.f32.mrf.mxu0
  %v7507 = vadd.f32 %v7466, %v7506
  %v7508 = vpop.f32.mrf.mxu0
  %7509 = vdwg.mxu0
  %7510 = vmatprep.subr.bf16.mxu0 0
  %7511 = vmatpush1.bf16.msra.mxu0 %v7211
  %7512 = vmatprep.subr.bf16.mxu0 0
  %7513 = vmatpush1.bf16.msra.mxu0 %v7210
  %7514 = vmatprep.subr.bf16.mxu0 0
  %7515 = vmatpush1.bf16.msra.mxu0 %v7209
  %7516 = vmatprep.subr.bf16.mxu0 0
  %7517 = vmatpush1.bf16.msra.mxu0 %v7208
  %7518 = vmatprep.subr.bf16.mxu0 0
  %7519 = vmatpush1.bf16.msra.mxu0 %v7207
  %7520 = vmatprep.subr.bf16.mxu0 0
  %7521 = vmatpush1.bf16.msra.mxu0 %v7206
  %7522 = vmatprep.subr.bf16.mxu0 0
  %7523 = vmatpush1.bf16.msra.mxu0 %v7205
  %7524 = vmatprep.subr.bf16.mxu0 0
  %7525 = vmatpush1.bf16.msra.mxu0 %v7204
  %7526 = vmatprep.subr.bf16.mxu0 0
  %7527 = vmatpush2.bf16.msra.mxu0 %v7219
  %7528 = vmatprep.subr.bf16.mxu0 0
  %7529 = vmatpush2.bf16.msra.mxu0 %v7218
  %7530 = vmatprep.subr.bf16.mxu0 0
  %7531 = vmatpush2.bf16.msra.mxu0 %v7217
  %7532 = vmatprep.subr.bf16.mxu0 0
  %7533 = vmatpush2.bf16.msra.mxu0 %v7216
  %7534 = vmatprep.subr.bf16.mxu0 0
  %7535 = vmatpush2.bf16.msra.mxu0 %v7215
  %7536 = vmatprep.subr.bf16.mxu0 0
  %7537 = vmatpush2.bf16.msra.mxu0 %v7214
  %7538 = vmatprep.subr.bf16.mxu0 0
  %7539 = vmatpush2.bf16.msra.mxu0 %v7213
  %7540 = vmatprep.subr.bf16.mxu0 0
  %7541 = vmatpush2.bf16.msra.mxu0 %v7212
  %7542 = vmatprep.mubr.bf16.mxu0 %v6384
  %7543 = vmatmul.mubr.bf16.gmra.mxu0 %v6383
  %v7544 = vpop.f32.mrf.mxu0
  %v7545 = vadd.f32 %v7504, %v7544
  %v7546 = vpop.f32.mrf.mxu0
  %v7547 = vpop.f32.mrf.mxu0
  %v7548 = vadd.f32 %v7507, %v7547
  %v7549 = vpop.f32.mrf.mxu0
  %7550 = vdwg.mxu0
  %7551 = vmatprep.subr.bf16.mxu0 0
  %7552 = vmatpush1.bf16.msra.mxu0 %v7227
  %7553 = vmatprep.subr.bf16.mxu0 0
  %7554 = vmatpush1.bf16.msra.mxu0 %v7226
  %7555 = vmatprep.subr.bf16.mxu0 0
  %7556 = vmatpush1.bf16.msra.mxu0 %v7225
  %7557 = vmatprep.subr.bf16.mxu0 0
  %7558 = vmatpush1.bf16.msra.mxu0 %v7224
  %7559 = vmatprep.subr.bf16.mxu0 0
  %7560 = vmatpush1.bf16.msra.mxu0 %v7223
  %7561 = vmatprep.subr.bf16.mxu0 0
  %7562 = vmatpush1.bf16.msra.mxu0 %v7222
  %7563 = vmatprep.subr.bf16.mxu0 0
  %7564 = vmatpush1.bf16.msra.mxu0 %v7221
  %7565 = vmatprep.subr.bf16.mxu0 0
  %7566 = vmatpush1.bf16.msra.mxu0 %v7220
  %7567 = vmatprep.subr.bf16.mxu0 0
  %7568 = vmatpush2.bf16.msra.mxu0 %v7235
  %7569 = vmatprep.subr.bf16.mxu0 0
  %7570 = vmatpush2.bf16.msra.mxu0 %v7234
  %7571 = vmatprep.subr.bf16.mxu0 0
  %7572 = vmatpush2.bf16.msra.mxu0 %v7233
  %7573 = vmatprep.subr.bf16.mxu0 0
  %7574 = vmatpush2.bf16.msra.mxu0 %v7232
  %7575 = vmatprep.subr.bf16.mxu0 0
  %7576 = vmatpush2.bf16.msra.mxu0 %v7231
  %7577 = vmatprep.subr.bf16.mxu0 0
  %7578 = vmatpush2.bf16.msra.mxu0 %v7230
  %7579 = vmatprep.subr.bf16.mxu0 0
  %7580 = vmatpush2.bf16.msra.mxu0 %v7229
  %7581 = vmatprep.subr.bf16.mxu0 0
  %7582 = vmatpush2.bf16.msra.mxu0 %v7228
  %7583 = vmatprep.mubr.bf16.mxu0 %v6386
  %7584 = vmatmul.mubr.bf16.gmra.mxu0 %v6385
  %v7585 = vpop.f32.mrf.mxu0
  %v7586 = vadd.f32 %v7545, %v7585
  %v7587 = vpop.f32.mrf.mxu0
  %v7588 = vpop.f32.mrf.mxu0
  %v7589 = vadd.f32 %v7548, %v7588
  %v7590 = vpop.f32.mrf.mxu0
  %7591 = vdwg.mxu0
  %7592 = vmatprep.subr.bf16.mxu0 0
  %7593 = vmatpush1.bf16.msra.mxu0 %v7243
  %7594 = vmatprep.subr.bf16.mxu0 0
  %7595 = vmatpush1.bf16.msra.mxu0 %v7242
  %7596 = vmatprep.subr.bf16.mxu0 0
  %7597 = vmatpush1.bf16.msra.mxu0 %v7241
  %7598 = vmatprep.subr.bf16.mxu0 0
  %7599 = vmatpush1.bf16.msra.mxu0 %v7240
  %7600 = vmatprep.subr.bf16.mxu0 0
  %7601 = vmatpush1.bf16.msra.mxu0 %v7239
  %7602 = vmatprep.subr.bf16.mxu0 0
  %7603 = vmatpush1.bf16.msra.mxu0 %v7238
  %7604 = vmatprep.subr.bf16.mxu0 0
  %7605 = vmatpush1.bf16.msra.mxu0 %v7237
  %7606 = vmatprep.subr.bf16.mxu0 0
  %7607 = vmatpush1.bf16.msra.mxu0 %v7236
  %7608 = vmatprep.subr.bf16.mxu0 0
  %7609 = vmatpush2.bf16.msra.mxu0 %v7251
  %7610 = vmatprep.subr.bf16.mxu0 0
  %7611 = vmatpush2.bf16.msra.mxu0 %v7250
  %7612 = vmatprep.subr.bf16.mxu0 0
  %7613 = vmatpush2.bf16.msra.mxu0 %v7249
  %7614 = vmatprep.subr.bf16.mxu0 0
  %7615 = vmatpush2.bf16.msra.mxu0 %v7248
  %7616 = vmatprep.subr.bf16.mxu0 0
  %7617 = vmatpush2.bf16.msra.mxu0 %v7247
  %7618 = vmatprep.subr.bf16.mxu0 0
  %7619 = vmatpush2.bf16.msra.mxu0 %v7246
  %7620 = vmatprep.subr.bf16.mxu0 0
  %7621 = vmatpush2.bf16.msra.mxu0 %v7245
  %7622 = vmatprep.subr.bf16.mxu0 0
  %7623 = vmatpush2.bf16.msra.mxu0 %v7244
  %7624 = vmatprep.mubr.bf16.mxu0 %v6388
  %7625 = vmatmul.mubr.bf16.gmra.mxu0 %v6387
  %v7626 = vpop.f32.mrf.mxu0
  %v7627 = vadd.f32 %v7586, %v7626
  %v7628 = vpop.f32.mrf.mxu0
  %v7629 = vpop.f32.mrf.mxu0
  %v7630 = vadd.f32 %v7589, %v7629
  %v7631 = vpop.f32.mrf.mxu0
  %7632 = vdwg.mxu0
  %7633 = vmatprep.subr.bf16.mxu0 0
  %7634 = vmatpush1.bf16.msra.mxu0 %v7259
  %7635 = vmatprep.subr.bf16.mxu0 0
  %7636 = vmatpush1.bf16.msra.mxu0 %v7258
  %7637 = vmatprep.subr.bf16.mxu0 0
  %7638 = vmatpush1.bf16.msra.mxu0 %v7257
  %7639 = vmatprep.subr.bf16.mxu0 0
  %7640 = vmatpush1.bf16.msra.mxu0 %v7256
  %7641 = vmatprep.subr.bf16.mxu0 0
  %7642 = vmatpush1.bf16.msra.mxu0 %v7255
  %7643 = vmatprep.subr.bf16.mxu0 0
  %7644 = vmatpush1.bf16.msra.mxu0 %v7254
  %7645 = vmatprep.subr.bf16.mxu0 0
  %7646 = vmatpush1.bf16.msra.mxu0 %v7253
  %7647 = vmatprep.subr.bf16.mxu0 0
  %7648 = vmatpush1.bf16.msra.mxu0 %v7252
  %7649 = vmatprep.subr.bf16.mxu0 0
  %7650 = vmatpush2.bf16.msra.mxu0 %v7267
  %7651 = vmatprep.subr.bf16.mxu0 0
  %7652 = vmatpush2.bf16.msra.mxu0 %v7266
  %7653 = vmatprep.subr.bf16.mxu0 0
  %7654 = vmatpush2.bf16.msra.mxu0 %v7265
  %7655 = vmatprep.subr.bf16.mxu0 0
  %7656 = vmatpush2.bf16.msra.mxu0 %v7264
  %7657 = vmatprep.subr.bf16.mxu0 0
  %7658 = vmatpush2.bf16.msra.mxu0 %v7263
  %7659 = vmatprep.subr.bf16.mxu0 0
  %7660 = vmatpush2.bf16.msra.mxu0 %v7262
  %7661 = vmatprep.subr.bf16.mxu0 0
  %7662 = vmatpush2.bf16.msra.mxu0 %v7261
  %7663 = vmatprep.subr.bf16.mxu0 0
  %7664 = vmatpush2.bf16.msra.mxu0 %v7260
  %7665 = vmatprep.mubr.bf16.mxu0 %v6390
  %7666 = vmatmul.mubr.bf16.gmra.mxu0 %v6389
  %v7667 = vpop.f32.mrf.mxu0
  %v7668 = vadd.f32 %v7627, %v7667
  %v7669 = vpop.f32.mrf.mxu0
  %v7670 = vpop.f32.mrf.mxu0
  %v7671 = vadd.f32 %v7630, %v7670
  %v7672 = vpop.f32.mrf.mxu0
  %7673 = vdwg.mxu0
  %7674 = vmatprep.subr.bf16.mxu0 0
  %7675 = vmatpush1.bf16.msra.mxu0 %v7275
  %7676 = vmatprep.subr.bf16.mxu0 0
  %7677 = vmatpush1.bf16.msra.mxu0 %v7274
  %7678 = vmatprep.subr.bf16.mxu0 0
  %7679 = vmatpush1.bf16.msra.mxu0 %v7273
  %7680 = vmatprep.subr.bf16.mxu0 0
  %7681 = vmatpush1.bf16.msra.mxu0 %v7272
  %7682 = vmatprep.subr.bf16.mxu0 0
  %7683 = vmatpush1.bf16.msra.mxu0 %v7271
  %7684 = vmatprep.subr.bf16.mxu0 0
  %7685 = vmatpush1.bf16.msra.mxu0 %v7270
  %7686 = vmatprep.subr.bf16.mxu0 0
  %7687 = vmatpush1.bf16.msra.mxu0 %v7269
  %7688 = vmatprep.subr.bf16.mxu0 0
  %7689 = vmatpush1.bf16.msra.mxu0 %v7268
  %7690 = vmatprep.subr.bf16.mxu0 0
  %7691 = vmatpush2.bf16.msra.mxu0 %v7283
  %7692 = vmatprep.subr.bf16.mxu0 0
  %7693 = vmatpush2.bf16.msra.mxu0 %v7282
  %7694 = vmatprep.subr.bf16.mxu0 0
  %7695 = vmatpush2.bf16.msra.mxu0 %v7281
  %7696 = vmatprep.subr.bf16.mxu0 0
  %7697 = vmatpush2.bf16.msra.mxu0 %v7280
  %7698 = vmatprep.subr.bf16.mxu0 0
  %7699 = vmatpush2.bf16.msra.mxu0 %v7279
  %7700 = vmatprep.subr.bf16.mxu0 0
  %7701 = vmatpush2.bf16.msra.mxu0 %v7278
  %7702 = vmatprep.subr.bf16.mxu0 0
  %7703 = vmatpush2.bf16.msra.mxu0 %v7277
  %7704 = vmatprep.subr.bf16.mxu0 0
  %7705 = vmatpush2.bf16.msra.mxu0 %v7276
  %7706 = vmatprep.mubr.bf16.mxu0 %v6392
  %7707 = vmatmul.mubr.bf16.gmra.mxu0 %v6391
  %v7708 = vpop.f32.mrf.mxu0
  %v7709 = vadd.f32 %v7668, %v7708
  %v7710 = vpop.f32.mrf.mxu0
  %v7711 = vpop.f32.mrf.mxu0
  %v7712 = vadd.f32 %v7671, %v7711
  %v7713 = vpop.f32.mrf.mxu0
  %7714 = vdwg.mxu0
  %7715 = vmatprep.subr.bf16.mxu0 0
  %7716 = vmatpush1.bf16.msra.mxu0 %v7291
  %7717 = vmatprep.subr.bf16.mxu0 0
  %7718 = vmatpush1.bf16.msra.mxu0 %v7290
  %7719 = vmatprep.subr.bf16.mxu0 0
  %7720 = vmatpush1.bf16.msra.mxu0 %v7289
  %7721 = vmatprep.subr.bf16.mxu0 0
  %7722 = vmatpush1.bf16.msra.mxu0 %v7288
  %7723 = vmatprep.subr.bf16.mxu0 0
  %7724 = vmatpush1.bf16.msra.mxu0 %v7287
  %7725 = vmatprep.subr.bf16.mxu0 0
  %7726 = vmatpush1.bf16.msra.mxu0 %v7286
  %7727 = vmatprep.subr.bf16.mxu0 0
  %7728 = vmatpush1.bf16.msra.mxu0 %v7285
  %7729 = vmatprep.subr.bf16.mxu0 0
  %7730 = vmatpush1.bf16.msra.mxu0 %v7284
  %7731 = vmatprep.subr.bf16.mxu0 0
  %7732 = vmatpush2.bf16.msra.mxu0 %v7299
  %7733 = vmatprep.subr.bf16.mxu0 0
  %7734 = vmatpush2.bf16.msra.mxu0 %v7298
  %7735 = vmatprep.subr.bf16.mxu0 0
  %7736 = vmatpush2.bf16.msra.mxu0 %v7297
  %7737 = vmatprep.subr.bf16.mxu0 0
  %7738 = vmatpush2.bf16.msra.mxu0 %v7296
  %7739 = vmatprep.subr.bf16.mxu0 0
  %7740 = vmatpush2.bf16.msra.mxu0 %v7295
  %7741 = vmatprep.subr.bf16.mxu0 0
  %7742 = vmatpush2.bf16.msra.mxu0 %v7294
  %7743 = vmatprep.subr.bf16.mxu0 0
  %7744 = vmatpush2.bf16.msra.mxu0 %v7293
  %7745 = vmatprep.subr.bf16.mxu0 0
  %7746 = vmatpush2.bf16.msra.mxu0 %v7292
  %7747 = vmatprep.mubr.bf16.mxu0 %v6394
  %7748 = vmatmul.mubr.bf16.gmra.mxu0 %v6393
  %v7749 = vpop.f32.mrf.mxu0
  %v7750 = vadd.f32 %v7709, %v7749
  %v7751 = vpop.f32.mrf.mxu0
  %v7752 = vpop.f32.mrf.mxu0
  %v7753 = vadd.f32 %v7712, %v7752
  %v7754 = vpop.f32.mrf.mxu0
  %7755 = vdwg.mxu0
  %v7756 = vadd.f32 %v5527, %v7750
  %v7757 = vadd.f32 %v5528, %v7753
  %s7758 = scalar_lea.vmem %s39, 1
  %v7759 = vld [vmem:[%s7758] sm:$0x1]
  %s7760 = scalar_lea.vmem %s41, 1
  %v7761 = vld [vmem:[%s7760] sm:$0x1]
  %v7762 = vsel %vm1836, %v7756, 0.0
  %7763 = vadd.xlane.f32.xlu0 %v7762
  %v7764 = vpop.xlane.xlu0 %7763
  %v7765 = vsel %vm1836, %v7757, 0.0
  %7766 = vadd.xlane.f32.xlu0 %v7765
  %v7767 = vpop.xlane.xlu0 %7766
  %v7768 = vmul.f32 %v7764, %v2467
  %v7769 = vmul.f32 %v7767, %v2467
  %v7770 = vsub.f32 %v7756, %v7768
  %v7771 = vsub.f32 %v7757, %v7769
  %v7772 = vmul.f32 %v7770, %v7770
  %v7773 = vmul.f32 %v7771, %v7771
  %v7774 = vsel %vm1836, %v7772, 0.0
  %7775 = vadd.xlane.f32.xlu0 %v7774
  %v7776 = vpop.xlane.xlu0 %7775
  %v7777 = vsel %vm1836, %v7773, 0.0
  %7778 = vadd.xlane.f32.xlu0 %v7777
  %v7779 = vpop.xlane.xlu0 %7778
  %v7780 = vmul.f32 %v7776, %v2467
  %v7781 = vmul.f32 %v7779, %v2467
  %v7782 = vadd.f32 %v7780, 1e-05
  %v7783 = vadd.f32 %v7781, 1e-05
  %v7784 = vrsqrt.pop %v7782
  %v7785 = vrsqrt.pop %v7783
  %v7786 = vmul.f32 %v7770, %v7784
  %v7787 = vmul.f32 %v7771, %v7785
  %v7789 = vlaneseq
  %v7790 = vshrl.u32 %v7789, 7
  %v7791 = vsub.s32 0, %v7790
  %v7792 = vrot.slane %v7759, %v7791
  %v7794 = vmul.f32 %v7786, %v7792
  %v7795 = vmul.f32 %v7787, %v7792
  %v7797 = vlaneseq
  %v7798 = vshrl.u32 %v7797, 7
  %v7799 = vsub.s32 0, %v7798
  %v7800 = vrot.slane %v7761, %v7799
  %v7802 = vadd.f32 %v7794, %v7800
  %v7803 = vadd.f32 %v7795, %v7800
  %v7804 = vld [vmem:[%s3] sm:$0xff]
  %v7805 = vld [vmem:[%s3 + $0x8] sm:$0xff]
  %v7806 = vld [vmem:[%s5] sm:$0xff]
  %v7807 = vld [vmem:[%s5 + $0x8] sm:$0xff]
  %7808 = vset.pattern.permute.xlu0 0
  %7809 = vperm.xlu0 %7808, %v7804
  %v7810 = vpop.permute.xlu0 %7809
  %7811 = vset.pattern.permute.xlu0 0
  %7812 = vperm.xlu0 %7811, %v7805
  %v7813 = vpop.permute.xlu0 %7812
  %vm7814 = vcmp.eq.s32.totalorder %v142, %v7810
  %vm7815 = vcmp.eq.s32.totalorder %v142, %v7813
  %v7816 = vsel %vm7814, 1, 0
  %v7817 = vsel %vm7815, 1, 0
  %v7818 = vcvt.s32.f32 %v7816
  %v7819 = vcvt.s32.f32 %v7817
  %v7820 = vld [vmem:[%s9] sm:$0xff]
  %v7821 = vld [vmem:[%s9 + $0x8] sm:$0x3]
  %vm7822 = vcmask 80896
  %v7824 = vsel %vm7822, %v7818, 0
  %v7827 = vsel %vm7822, %v7819, 0
  %v7830 = vsel %vm169, %v7821, 0
  %7832 = vmatprep.subr.mxu0 0.0
  %7833 = vmatpush1.msra.mxu0 0.0
  %7834 = vmatprep.subr.mxu0 0.0
  %7835 = vmatpush1.msra.mxu0 0.0
  %7836 = vmatprep.subr.mxu0 0.0
  %7837 = vmatpush1.msra.mxu0 0.0
  %7838 = vmatprep.subr.mxu0 0.0
  %7839 = vmatpush1.msra.mxu0 0.0
  %7840 = vmatprep.subr.mxu0 0.0
  %7841 = vmatpush1.msra.mxu0 0.0
  %7842 = vmatprep.subr.mxu0 0.0
  %7843 = vmatpush1.msra.mxu0 0.0
  %7844 = vmatprep.subr.mxu0 0.0
  %7845 = vmatpush1.msra.mxu0 0.0
  %7846 = vmatprep.subr.mxu0 0.0
  %7847 = vmatpush1.msra.mxu0 0.0
  %7848 = vmatprep.subr.mxu0 0.0
  %7849 = vmatpush1.msra.mxu0 0.0
  %7850 = vmatprep.subr.mxu0 0.0
  %7851 = vmatpush1.msra.mxu0 0.0
  %7852 = vmatprep.subr.mxu0 0.0
  %7853 = vmatpush1.msra.mxu0 0.0
  %7854 = vmatprep.subr.mxu0 0.0
  %7855 = vmatpush1.msra.mxu0 0.0
  %7856 = vmatprep.subr.mxu0 0.0
  %7857 = vmatpush1.msra.mxu0 0.0
  %7858 = vmatprep.subr.mxu0 0.0
  %7859 = vmatpush1.msra.mxu0 0.0
  %7860 = vmatprep.subr.mxu0 0.0
  %7861 = vmatpush1.msra.mxu0 %v7830
  %7862 = vmatprep.subr.mxu0 0.0
  %7863 = vmatpush1.msra.mxu0 %v7820
  %7864 = vmatprep.subr.mxu0 0.0
  %7865 = vmatpush2.msra.mxu0 0.0
  %7866 = vmatprep.subr.mxu0 0.0
  %7867 = vmatpush2.msra.mxu0 0.0
  %7868 = vmatprep.subr.mxu0 0.0
  %7869 = vmatpush2.msra.mxu0 0.0
  %7870 = vmatprep.subr.mxu0 0.0
  %7871 = vmatpush2.msra.mxu0 0.0
  %7872 = vmatprep.subr.mxu0 0.0
  %7873 = vmatpush2.msra.mxu0 0.0
  %7874 = vmatprep.subr.mxu0 0.0
  %7875 = vmatpush2.msra.mxu0 0.0
  %7876 = vmatprep.subr.mxu0 0.0
  %7877 = vmatpush2.msra.mxu0 0.0
  %7878 = vmatprep.subr.mxu0 0.0
  %7879 = vmatpush2.msra.mxu0 0.0
  %7880 = vmatprep.subr.mxu0 0.0
  %7881 = vmatpush2.msra.mxu0 0.0
  %7882 = vmatprep.subr.mxu0 0.0
  %7883 = vmatpush2.msra.mxu0 0.0
  %7884 = vmatprep.subr.mxu0 0.0
  %7885 = vmatpush2.msra.mxu0 0.0
  %7886 = vmatprep.subr.mxu0 0.0
  %7887 = vmatpush2.msra.mxu0 0.0
  %7888 = vmatprep.subr.mxu0 0.0
  %7889 = vmatpush2.msra.mxu0 0.0
  %7890 = vmatprep.subr.mxu0 0.0
  %7891 = vmatpush2.msra.mxu0 0.0
  %7892 = vmatprep.subr.mxu0 0.0
  %7893 = vmatpush2.msra.mxu0 0.0
  %7894 = vmatprep.subr.mxu0 0.0
  %7895 = vmatpush2.msra.mxu0 0.0
  %7896 = vmatprep.mubr.f32.mxu0 0.0
  %7897 = vmatmul.mubr.f32.gmra.mxu0 %v7824
  %v7898 = vpop.f32.mrf.mxu0
  %v7899 = vadd.f32 0.0, %v7898
  %v7900 = vpop.f32.mrf.mxu0
  %7901 = vmatprep.mubr.f32.mxu0 0.0
  %7902 = vmatmul.mubr.f32.gmra.mxu0 %v7827
  %v7903 = vpop.f32.mrf.mxu0
  %v7904 = vadd.f32 0.0, %v7903
  %v7905 = vpop.f32.mrf.mxu0
  %7906 = vdwg.mxu0
  %v7907 = vpack.c.bf16 %v7803, %v7802
  %v7908 = vld [vmem:[%s49] sm:$0xf]
  %v7909 = vld [vmem:[%s49 + $0x4] sm:$0xf]
  %v7910 = vld [vmem:[%s49 + $0x8] sm:$0xf]
  %v7911 = vld [vmem:[%s49 + $0xc] sm:$0xf]
  %v7912 = vld [vmem:[%s49 + $0x10] sm:$0xf]
  %v7913 = vld [vmem:[%s49 + $0x14] sm:$0xf]
  %v7914 = vld [vmem:[%s49 + $0x18] sm:$0xf]
  %v7915 = vld [vmem:[%s49 + $0x1c] sm:$0xf]
  %v7916 = vld [vmem:[%s51] sm:$0x1]
  %v7918 = vlaneseq
  %v7919 = vshrl.u32 %v7918, 7
  %v7920 = vsub.s32 0, %v7919
  %v7921 = vrot.slane %v7916, %v7920
  %v7931 = vunpack.c.l.b16 %v7908
  %v7932 = vunpack.c.l.b16 %v7909
  %v7933 = vunpack.c.l.b16 %v7910
  %v7934 = vunpack.c.l.b16 %v7911
  %v7935 = vunpack.c.l.b16 %v7912
  %v7936 = vunpack.c.l.b16 %v7913
  %v7937 = vunpack.c.l.b16 %v7914
  %v7938 = vunpack.c.l.b16 %v7915
  %v7939 = vpack.c.b16 %v7932, %v7931
  %v7940 = vpack.c.b16 %v7934, %v7933
  %v7941 = vpack.c.b16 %v7936, %v7935
  %v7942 = vpack.c.b16 %v7938, %v7937
  %v7948 = vsel %vm1836, %v7907, 0
  %7950 = vmatprep.subr.bf16.mxu0 0
  %7951 = vmatpush1.bf16.msra.mxu0 0
  %7952 = vmatprep.subr.bf16.mxu0 0
  %7953 = vmatpush1.bf16.msra.mxu0 0
  %7954 = vmatprep.subr.bf16.mxu0 0
  %7955 = vmatpush1.bf16.msra.mxu0 0
  %7956 = vmatprep.subr.bf16.mxu0 0
  %7957 = vmatpush1.bf16.msra.mxu0 0
  %7958 = vmatprep.subr.bf16.mxu0 0
  %7959 = vmatpush1.bf16.msra.mxu0 %v7942
  %7960 = vmatprep.subr.bf16.mxu0 0
  %7961 = vmatpush1.bf16.msra.mxu0 %v7941
  %7962 = vmatprep.subr.bf16.mxu0 0
  %7963 = vmatpush1.bf16.msra.mxu0 %v7940
  %7964 = vmatprep.subr.bf16.mxu0 0
  %7965 = vmatpush1.bf16.msra.mxu0 %v7939
  %7966 = vmatprep.subr.bf16.mxu0 0
  %7967 = vmatpush2.bf16.msra.mxu0 0
  %7968 = vmatprep.subr.bf16.mxu0 0
  %7969 = vmatpush2.bf16.msra.mxu0 0
  %7970 = vmatprep.subr.bf16.mxu0 0
  %7971 = vmatpush2.bf16.msra.mxu0 0
  %7972 = vmatprep.subr.bf16.mxu0 0
  %7973 = vmatpush2.bf16.msra.mxu0 0
  %7974 = vmatprep.subr.bf16.mxu0 0
  %7975 = vmatpush2.bf16.msra.mxu0 0
  %7976 = vmatprep.subr.bf16.mxu0 0
  %7977 = vmatpush2.bf16.msra.mxu0 0
  %7978 = vmatprep.subr.bf16.mxu0 0
  %7979 = vmatpush2.bf16.msra.mxu0 0
  %7980 = vmatprep.subr.bf16.mxu0 0
  %7981 = vmatpush2.bf16.msra.mxu0 0
  %7982 = vmatprep.mubr.bf16.mxu0 0
  %7983 = vmatmul.mubr.bf16.gmra.mxu0 %v7948
  %v7984 = vpop.f32.mrf.mxu0
  %v7985 = vadd.f32 %v7921, %v7984
  %v7986 = vpop.f32.mrf.mxu0
  %v7987 = vpop.f32.mrf.mxu0
  %v7988 = vadd.f32 %v7921, %v7987
  %v7989 = vpop.f32.mrf.mxu0
  %7990 = vdwg.mxu0
  %v7991 = vmax.f32 %v7985, 0.0
  %v7992 = vmax.f32 %v7988, 0.0
  %v7993 = vpack.c.bf16 %v7992, %v7991
  %v7994 = vld [vmem:[%s53] sm:$0xf]
  %v7995 = vld [vmem:[%s53 + $0x4] sm:$0xf]
  %v7996 = vld [vmem:[%s53 + $0x8] sm:$0xf]
  %v7997 = vld [vmem:[%s53 + $0xc] sm:$0xf]
  %v7998 = vld [vmem:[%s53 + $0x10] sm:$0xf]
  %v7999 = vld [vmem:[%s53 + $0x14] sm:$0xf]
  %v8000 = vld [vmem:[%s53 + $0x18] sm:$0xf]
  %v8001 = vld [vmem:[%s53 + $0x1c] sm:$0xf]
  %v8002 = vld [vmem:[%s53 + $0x20] sm:$0xf]
  %v8003 = vld [vmem:[%s53 + $0x24] sm:$0xf]
  %v8004 = vld [vmem:[%s53 + $0x28] sm:$0xf]
  %v8005 = vld [vmem:[%s53 + $0x2c] sm:$0xf]
  %v8006 = vld [vmem:[%s53 + $0x30] sm:$0xf]
  %v8007 = vld [vmem:[%s53 + $0x34] sm:$0xf]
  %v8008 = vld [vmem:[%s53 + $0x38] sm:$0xf]
  %v8009 = vld [vmem:[%s53 + $0x3c] sm:$0xf]
  %v8010 = vld [vmem:[%s55] sm:$0x1]
  %v8012 = vlaneseq
  %v8013 = vshrl.u32 %v8012, 7
  %v8014 = vsub.s32 0, %v8013
  %v8015 = vrot.slane %v8010, %v8014
  %v8033 = vunpack.c.l.b16 %v7994
  %v8034 = vunpack.c.l.b16 %v7995
  %v8035 = vunpack.c.l.b16 %v7996
  %v8036 = vunpack.c.l.b16 %v7997
  %v8037 = vunpack.c.l.b16 %v7998
  %v8038 = vunpack.c.l.b16 %v7999
  %v8039 = vunpack.c.l.b16 %v8000
  %v8040 = vunpack.c.l.b16 %v8001
  %v8041 = vunpack.c.l.b16 %v8002
  %v8042 = vunpack.c.l.b16 %v8003
  %v8043 = vunpack.c.l.b16 %v8004
  %v8044 = vunpack.c.l.b16 %v8005
  %v8045 = vunpack.c.l.b16 %v8006
  %v8046 = vunpack.c.l.b16 %v8007
  %v8047 = vunpack.c.l.b16 %v8008
  %v8048 = vunpack.c.l.b16 %v8009
  %v8049 = vpack.c.b16 %v8034, %v8033
  %v8050 = vpack.c.b16 %v8036, %v8035
  %v8051 = vpack.c.b16 %v8038, %v8037
  %v8052 = vpack.c.b16 %v8040, %v8039
  %v8053 = vpack.c.b16 %v8042, %v8041
  %v8054 = vpack.c.b16 %v8044, %v8043
  %v8055 = vpack.c.b16 %v8046, %v8045
  %v8056 = vpack.c.b16 %v8048, %v8047
  %8065 = vmatprep.subr.bf16.mxu0 0
  %8066 = vmatpush1.bf16.msra.mxu0 %v8056
  %8067 = vmatprep.subr.bf16.mxu0 0
  %8068 = vmatpush1.bf16.msra.mxu0 %v8055
  %8069 = vmatprep.subr.bf16.mxu0 0
  %8070 = vmatpush1.bf16.msra.mxu0 %v8054
  %8071 = vmatprep.subr.bf16.mxu0 0
  %8072 = vmatpush1.bf16.msra.mxu0 %v8053
  %8073 = vmatprep.subr.bf16.mxu0 0
  %8074 = vmatpush1.bf16.msra.mxu0 %v8052
  %8075 = vmatprep.subr.bf16.mxu0 0
  %8076 = vmatpush1.bf16.msra.mxu0 %v8051
  %8077 = vmatprep.subr.bf16.mxu0 0
  %8078 = vmatpush1.bf16.msra.mxu0 %v8050
  %8079 = vmatprep.subr.bf16.mxu0 0
  %8080 = vmatpush1.bf16.msra.mxu0 %v8049
  %8081 = vmatprep.subr.bf16.mxu0 0
  %8082 = vmatpush2.bf16.msra.mxu0 0
  %8083 = vmatprep.subr.bf16.mxu0 0
  %8084 = vmatpush2.bf16.msra.mxu0 0
  %8085 = vmatprep.subr.bf16.mxu0 0
  %8086 = vmatpush2.bf16.msra.mxu0 0
  %8087 = vmatprep.subr.bf16.mxu0 0
  %8088 = vmatpush2.bf16.msra.mxu0 0
  %8089 = vmatprep.subr.bf16.mxu0 0
  %8090 = vmatpush2.bf16.msra.mxu0 0
  %8091 = vmatprep.subr.bf16.mxu0 0
  %8092 = vmatpush2.bf16.msra.mxu0 0
  %8093 = vmatprep.subr.bf16.mxu0 0
  %8094 = vmatpush2.bf16.msra.mxu0 0
  %8095 = vmatprep.subr.bf16.mxu0 0
  %8096 = vmatpush2.bf16.msra.mxu0 0
  %8097 = vmatprep.mubr.bf16.mxu0 0
  %8098 = vmatmul.mubr.bf16.gmra.mxu0 %v7993
  %v8099 = vpop.f32.mrf.mxu0
  %v8100 = vadd.f32 %v8015, %v8099
  %v8101 = vpop.f32.mrf.mxu0
  %v8102 = vpop.f32.mrf.mxu0
  %v8103 = vadd.f32 %v8015, %v8102
  %v8104 = vpop.f32.mrf.mxu0
  %8105 = vdwg.mxu0
  %v8106 = vld [vmem:[%s57] sm:$0xf]
  %v8107 = vld [vmem:[%s57 + $0x4] sm:$0xf]
  %v8108 = vld [vmem:[%s57 + $0x8] sm:$0xf]
  %v8109 = vld [vmem:[%s57 + $0xc] sm:$0xf]
  %v8110 = vld [vmem:[%s57 + $0x10] sm:$0xf]
  %v8111 = vld [vmem:[%s57 + $0x14] sm:$0xf]
  %v8112 = vld [vmem:[%s57 + $0x18] sm:$0xf]
  %v8113 = vld [vmem:[%s57 + $0x1c] sm:$0xf]
  %v8114 = vpack.c.bf16 %v7904, %v7899
  %v8115 = vld [vmem:[%s59] sm:$0xf]
  %v8116 = vld [vmem:[%s59 + $0x4] sm:$0xf]
  %v8117 = vld [vmem:[%s59 + $0x8] sm:$0xf]
  %v8118 = vld [vmem:[%s59 + $0xc] sm:$0xf]
  %v8123 = vunpack.c.l.b16 %v8115
  %v8124 = vunpack.c.l.b16 %v8116
  %v8125 = vunpack.c.l.b16 %v8117
  %v8126 = vunpack.c.l.b16 %v8118
  %v8127 = vpack.c.b16 %v8124, %v8123
  %v8128 = vpack.c.b16 %v8126, %v8125
  %v8132 = vsel %vm285, %v8114, 0
  %8134 = vmatprep.subr.bf16.mxu0 0
  %8135 = vmatpush1.bf16.msra.mxu0 0
  %8136 = vmatprep.subr.bf16.mxu0 0
  %8137 = vmatpush1.bf16.msra.mxu0 0
  %8138 = vmatprep.subr.bf16.mxu0 0
  %8139 = vmatpush1.bf16.msra.mxu0 0
  %8140 = vmatprep.subr.bf16.mxu0 0
  %8141 = vmatpush1.bf16.msra.mxu0 0
  %8142 = vmatprep.subr.bf16.mxu0 0
  %8143 = vmatpush1.bf16.msra.mxu0 0
  %8144 = vmatprep.subr.bf16.mxu0 0
  %8145 = vmatpush1.bf16.msra.mxu0 0
  %8146 = vmatprep.subr.bf16.mxu0 0
  %8147 = vmatpush1.bf16.msra.mxu0 %v8128
  %8148 = vmatprep.subr.bf16.mxu0 0
  %8149 = vmatpush1.bf16.msra.mxu0 %v8127
  %8150 = vmatprep.subr.bf16.mxu0 0
  %8151 = vmatpush2.bf16.msra.mxu0 0
  %8152 = vmatprep.subr.bf16.mxu0 0
  %8153 = vmatpush2.bf16.msra.mxu0 0
  %8154 = vmatprep.subr.bf16.mxu0 0
  %8155 = vmatpush2.bf16.msra.mxu0 0
  %8156 = vmatprep.subr.bf16.mxu0 0
  %8157 = vmatpush2.bf16.msra.mxu0 0
  %8158 = vmatprep.subr.bf16.mxu0 0
  %8159 = vmatpush2.bf16.msra.mxu0 0
  %8160 = vmatprep.subr.bf16.mxu0 0
  %8161 = vmatpush2.bf16.msra.mxu0 0
  %8162 = vmatprep.subr.bf16.mxu0 0
  %8163 = vmatpush2.bf16.msra.mxu0 0
  %8164 = vmatprep.subr.bf16.mxu0 0
  %8165 = vmatpush2.bf16.msra.mxu0 0
  %8166 = vmatprep.mubr.bf16.mxu0 0
  %8167 = vmatmul.mubr.bf16.gmra.mxu0 %v8132
  %v8168 = vpop.f32.mrf.mxu0
  %v8169 = vadd.f32 0.0, %v8168
  %v8170 = vpop.f32.mrf.mxu0
  %v8171 = vpop.f32.mrf.mxu0
  %v8172 = vadd.f32 0.0, %v8171
  %v8173 = vpop.f32.mrf.mxu0
  %8174 = vdwg.mxu0
  %v8183 = vunpack.c.l.b16 %v8106
  %v8184 = vunpack.c.l.b16 %v8107
  %v8185 = vunpack.c.l.b16 %v8108
  %v8186 = vunpack.c.l.b16 %v8109
  %v8187 = vunpack.c.l.b16 %v8110
  %v8188 = vunpack.c.l.b16 %v8111
  %v8189 = vunpack.c.l.b16 %v8112
  %v8190 = vunpack.c.l.b16 %v8113
  %v8191 = vpack.c.b16 %v8184, %v8183
  %v8192 = vpack.c.b16 %v8186, %v8185
  %v8193 = vpack.c.b16 %v8188, %v8187
  %v8194 = vpack.c.b16 %v8190, %v8189
  %8199 = vmatprep.subr.bf16.mxu0 0
  %8200 = vmatpush1.bf16.msra.mxu0 0
  %8201 = vmatprep.subr.bf16.mxu0 0
  %8202 = vmatpush1.bf16.msra.mxu0 0
  %8203 = vmatprep.subr.bf16.mxu0 0
  %8204 = vmatpush1.bf16.msra.mxu0 0
  %8205 = vmatprep.subr.bf16.mxu0 0
  %8206 = vmatpush1.bf16.msra.mxu0 0
  %8207 = vmatprep.subr.bf16.mxu0 0
  %8208 = vmatpush1.bf16.msra.mxu0 %v8194
  %8209 = vmatprep.subr.bf16.mxu0 0
  %8210 = vmatpush1.bf16.msra.mxu0 %v8193
  %8211 = vmatprep.subr.bf16.mxu0 0
  %8212 = vmatpush1.bf16.msra.mxu0 %v8192
  %8213 = vmatprep.subr.bf16.mxu0 0
  %8214 = vmatpush1.bf16.msra.mxu0 %v8191
  %8215 = vmatprep.subr.bf16.mxu0 0
  %8216 = vmatpush2.bf16.msra.mxu0 0
  %8217 = vmatprep.subr.bf16.mxu0 0
  %8218 = vmatpush2.bf16.msra.mxu0 0
  %8219 = vmatprep.subr.bf16.mxu0 0
  %8220 = vmatpush2.bf16.msra.mxu0 0
  %8221 = vmatprep.subr.bf16.mxu0 0
  %8222 = vmatpush2.bf16.msra.mxu0 0
  %8223 = vmatprep.subr.bf16.mxu0 0
  %8224 = vmatpush2.bf16.msra.mxu0 0
  %8225 = vmatprep.subr.bf16.mxu0 0
  %8226 = vmatpush2.bf16.msra.mxu0 0
  %8227 = vmatprep.subr.bf16.mxu0 0
  %8228 = vmatpush2.bf16.msra.mxu0 0
  %8229 = vmatprep.subr.bf16.mxu0 0
  %8230 = vmatpush2.bf16.msra.mxu0 0
  %8231 = vmatprep.mubr.bf16.mxu0 0
  %8232 = vmatmul.mubr.bf16.gmra.mxu0 %v7948
  %v8233 = vpop.f32.mrf.mxu0
  %v8234 = vadd.f32 %v8169, %v8233
  %v8235 = vpop.f32.mrf.mxu0
  %v8236 = vpop.f32.mrf.mxu0
  %v8237 = vadd.f32 %v8172, %v8236
  %v8238 = vpop.f32.mrf.mxu0
  %8239 = vdwg.mxu0
  %v8240 = vld [vmem:[%s61] sm:$0x1]
  %v8242 = vlaneseq
  %v8243 = vshrl.u32 %v8242, 7
  %v8244 = vsub.s32 0, %v8243
  %v8245 = vrot.slane %v8240, %v8244
  %v8247 = vadd.f32 %v8234, %v8245
  %v8248 = vadd.f32 %v8237, %v8245
  %v8249 = vmax.f32 %v8247, 0.0
  %v8250 = vmax.f32 %v8248, 0.0
  %v8251 = vpack.c.bf16 %v8250, %v8249
  %v8252 = vld [vmem:[%s63] sm:$0xf]
  %v8253 = vld [vmem:[%s63 + $0x4] sm:$0xf]
  %v8254 = vld [vmem:[%s63 + $0x8] sm:$0xf]
  %v8255 = vld [vmem:[%s63 + $0xc] sm:$0xf]
  %v8256 = vld [vmem:[%s63 + $0x10] sm:$0xf]
  %v8257 = vld [vmem:[%s63 + $0x14] sm:$0xf]
  %v8258 = vld [vmem:[%s63 + $0x18] sm:$0xf]
  %v8259 = vld [vmem:[%s63 + $0x1c] sm:$0xf]
  %v8260 = vld [vmem:[%s63 + $0x20] sm:$0xf]
  %v8261 = vld [vmem:[%s63 + $0x24] sm:$0xf]
  %v8262 = vld [vmem:[%s63 + $0x28] sm:$0xf]
  %v8263 = vld [vmem:[%s63 + $0x2c] sm:$0xf]
  %v8264 = vld [vmem:[%s63 + $0x30] sm:$0xf]
  %v8265 = vld [vmem:[%s63 + $0x34] sm:$0xf]
  %v8266 = vld [vmem:[%s63 + $0x38] sm:$0xf]
  %v8267 = vld [vmem:[%s63 + $0x3c] sm:$0xf]
  %v8268 = vld [vmem:[%s65] sm:$0x1]
  %v8270 = vlaneseq
  %v8271 = vshrl.u32 %v8270, 7
  %v8272 = vsub.s32 0, %v8271
  %v8273 = vrot.slane %v8268, %v8272
  %v8291 = vunpack.c.l.b16 %v8252
  %v8292 = vunpack.c.l.b16 %v8253
  %v8293 = vunpack.c.l.b16 %v8254
  %v8294 = vunpack.c.l.b16 %v8255
  %v8295 = vunpack.c.l.b16 %v8256
  %v8296 = vunpack.c.l.b16 %v8257
  %v8297 = vunpack.c.l.b16 %v8258
  %v8298 = vunpack.c.l.b16 %v8259
  %v8299 = vunpack.c.l.b16 %v8260
  %v8300 = vunpack.c.l.b16 %v8261
  %v8301 = vunpack.c.l.b16 %v8262
  %v8302 = vunpack.c.l.b16 %v8263
  %v8303 = vunpack.c.l.b16 %v8264
  %v8304 = vunpack.c.l.b16 %v8265
  %v8305 = vunpack.c.l.b16 %v8266
  %v8306 = vunpack.c.l.b16 %v8267
  %v8307 = vpack.c.b16 %v8292, %v8291
  %v8308 = vpack.c.b16 %v8294, %v8293
  %v8309 = vpack.c.b16 %v8296, %v8295
  %v8310 = vpack.c.b16 %v8298, %v8297
  %v8311 = vpack.c.b16 %v8300, %v8299
  %v8312 = vpack.c.b16 %v8302, %v8301
  %v8313 = vpack.c.b16 %v8304, %v8303
  %v8314 = vpack.c.b16 %v8306, %v8305
  %8323 = vmatprep.subr.bf16.mxu0 0
  %8324 = vmatpush1.bf16.msra.mxu0 %v8314
  %8325 = vmatprep.subr.bf16.mxu0 0
  %8326 = vmatpush1.bf16.msra.mxu0 %v8313
  %8327 = vmatprep.subr.bf16.mxu0 0
  %8328 = vmatpush1.bf16.msra.mxu0 %v8312
  %8329 = vmatprep.subr.bf16.mxu0 0
  %8330 = vmatpush1.bf16.msra.mxu0 %v8311
  %8331 = vmatprep.subr.bf16.mxu0 0
  %8332 = vmatpush1.bf16.msra.mxu0 %v8310
  %8333 = vmatprep.subr.bf16.mxu0 0
  %8334 = vmatpush1.bf16.msra.mxu0 %v8309
  %8335 = vmatprep.subr.bf16.mxu0 0
  %8336 = vmatpush1.bf16.msra.mxu0 %v8308
  %8337 = vmatprep.subr.bf16.mxu0 0
  %8338 = vmatpush1.bf16.msra.mxu0 %v8307
  %8339 = vmatprep.subr.bf16.mxu0 0
  %8340 = vmatpush2.bf16.msra.mxu0 0
  %8341 = vmatprep.subr.bf16.mxu0 0
  %8342 = vmatpush2.bf16.msra.mxu0 0
  %8343 = vmatprep.subr.bf16.mxu0 0
  %8344 = vmatpush2.bf16.msra.mxu0 0
  %8345 = vmatprep.subr.bf16.mxu0 0
  %8346 = vmatpush2.bf16.msra.mxu0 0
  %8347 = vmatprep.subr.bf16.mxu0 0
  %8348 = vmatpush2.bf16.msra.mxu0 0
  %8349 = vmatprep.subr.bf16.mxu0 0
  %8350 = vmatpush2.bf16.msra.mxu0 0
  %8351 = vmatprep.subr.bf16.mxu0 0
  %8352 = vmatpush2.bf16.msra.mxu0 0
  %8353 = vmatprep.subr.bf16.mxu0 0
  %8354 = vmatpush2.bf16.msra.mxu0 0
  %8355 = vmatprep.mubr.bf16.mxu0 0
  %8356 = vmatmul.mubr.bf16.gmra.mxu0 %v8251
  %v8357 = vpop.f32.mrf.mxu0
  %v8358 = vadd.f32 %v8273, %v8357
  %v8359 = vpop.f32.mrf.mxu0
  %v8360 = vpop.f32.mrf.mxu0
  %v8361 = vadd.f32 %v8273, %v8360
  %v8362 = vpop.f32.mrf.mxu0
  %8363 = vdwg.mxu0
  %8364 = vmax.xlane.f32.xlu0 %v8100
  %v8365 = vpop.xlane.xlu0 %8364
  %8366 = vmax.xlane.f32.xlu0 %v8103
  %v8367 = vpop.xlane.xlu0 %8366
  %v8368 = vsub.f32 %v8100, %v8365
  %v8369 = vsub.f32 %v8103, %v8367
  %v8370 = vmul.f32 %v8368, 1.442695
  %v8371 = vpow.pop %v8370
  %v8372 = vmul.f32 %v8369, 1.442695
  %v8373 = vpow.pop %v8372
  %8374 = vadd.xlane.f32.xlu0 %v8371
  %v8375 = vpop.xlane.xlu0 %8374
  %8376 = vadd.xlane.f32.xlu0 %v8373
  %v8377 = vpop.xlane.xlu0 %8376
  %v8378 = vlog2.pop %v8375
  %v8379 = vmul.f32 %v8378, 0.6931472
  %v8380 = vlog2.pop %v8377
  %v8381 = vmul.f32 %v8380, 0.6931472
  %v8382 = vadd.f32 %v8379, %v8365
  %v8383 = vadd.f32 %v8381, %v8367
  %v8384 = vsel %vm7814, %v8100, 0.0
  %v8385 = vsel %vm7815, %v8103, 0.0
  %8386 = vadd.xlane.f32.xlu0 %v8384
  %v8387 = vpop.xlane.xlu0 %8386
  %8388 = vadd.xlane.f32.xlu0 %v8385
  %v8389 = vpop.xlane.xlu0 %8388
  %v8390 = vsub.f32 %v8382, %v8387
  %v8391 = vsub.f32 %v8383, %v8389
  %8392 = vmax.xlane.f32.xlu0 %v8358
  %v8393 = vpop.xlane.xlu0 %8392
  %8394 = vmax.xlane.f32.xlu0 %v8361
  %v8395 = vpop.xlane.xlu0 %8394
  %v8396 = vsub.f32 %v8358, %v8393
  %v8397 = vsub.f32 %v8361, %v8395
  %v8398 = vmul.f32 %v8396, 1.442695
  %v8399 = vpow.pop %v8398
  %v8400 = vmul.f32 %v8397, 1.442695
  %v8401 = vpow.pop %v8400
  %8402 = vadd.xlane.f32.xlu0 %v8399
  %v8403 = vpop.xlane.xlu0 %8402
  %8404 = vadd.xlane.f32.xlu0 %v8401
  %v8405 = vpop.xlane.xlu0 %8404
  %v8406 = vlog2.pop %v8403
  %v8407 = vmul.f32 %v8406, 0.6931472
  %v8408 = vlog2.pop %v8405
  %v8409 = vmul.f32 %v8408, 0.6931472
  %v8410 = vadd.f32 %v8407, %v8393
  %v8411 = vadd.f32 %v8409, %v8395
  %8412 = vset.pattern.permute.xlu0 0
  %8413 = vperm.xlu0 %8412, %v7806
  %v8414 = vpop.permute.xlu0 %8413
  %8415 = vset.pattern.permute.xlu0 0
  %8416 = vperm.xlu0 %8415, %v7807
  %v8417 = vpop.permute.xlu0 %8416
  %vm8418 = vcmp.eq.s32.totalorder %v142, %v8414
  %vm8419 = vcmp.eq.s32.totalorder %v142, %v8417
  %v8420 = vsel %vm8418, %v8358, 0.0
  %v8421 = vsel %vm8419, %v8361, 0.0
  %8422 = vadd.xlane.f32.xlu0 %v8420
  %v8423 = vpop.xlane.xlu0 %8422
  %8424 = vadd.xlane.f32.xlu0 %v8421
  %v8425 = vpop.xlane.xlu0 %8424
  %v8426 = vsub.f32 %v8410, %v8423
  %v8427 = vsub.f32 %v8411, %v8425
  %vm8428 = vcmp.eq.s32.totalorder %v142, 0
  %v8429 = vsel %vm8428, %v8390, 0.0
  %v8430 = vsel %vm8428, %v8391, 0.0
  %vm8431 = vcmp.eq.s32.totalorder %v142, 1
  %v8432 = vsel %vm8431, %v8426, 0.0
  %v8433 = vsel %vm8431, %v8427, 0.0
  %v8434 = vadd.f32 %v8429, %v8432
  %v8435 = vadd.f32 %v8430, %v8433
  %8436 = vst [vmem:[%s67] sm:$0xff] %v8100
  %8437 = vst [vmem:[%s67 + $0x8] sm:$0xff] %v8358
  %8438 = vst [vmem:[%s67 + $0x10] sm:$0xff] %v8434
  %8439 = vst [vmem:[%s67 + $0x18] sm:$0xff] %v8103
  %8440 = vst [vmem:[%s67 + $0x20] sm:$0xff] %v8361
  %8441 = vst [vmem:[%s67 + $0x28] sm:$0xff] %v8435
  // Predicated region
  $region134: #{forward.1} parent=0 // pred_check
    _
  $region135: #{forward.1} parent=0 // pred_check_branch
    %8443 = sbr.rel (0) target = $region137
  $region136: #{forward.1} parent=0 // pred_region
    _
  $region137: #{forward.1} parent=0 // pred_fallthru
    _
  // Predicated region
  $region138: #{forward.1} parent=0 // pred_check
    _
  $region139: #{forward.1} parent=0 // pred_check_branch
    %8445 = sbr.rel (0) target = $region141
  $region140: #{forward.1} parent=0 // pred_region
    _
  $region141: #{forward.1} parent=0 // pred_fallthru
    _

</llo_original>
